<compile_context>
chip_gen: v5e
topology: v5e:2x2
jax: 0.10.0
libtpu: 0.0.40
codegen_flags: <defaults>
</compile_context>

<pallas_src>
import functools

import jax
import jax.numpy as jnp
from jax.experimental import pallas as pl
from jax.experimental.pallas import tpu as pltpu

MULTIPLIER = 1.0


def _round_up(n, m):
    return ((n + m - 1) // m) * m


def hypernet_kernel(x_ref, w1_ref, b1_ref, w2_ref, b2_ref, o_ref, *, multiplier):
    # x tile stays f32 for the residual; matmul operands are cast to bf16
    # (MXU-native) with f32 accumulation.
    x = x_ref[...]                                                   # (tm, Dp) f32

    h = jnp.dot(x.astype(jnp.bfloat16), w1_ref[...],                 # (tm, Hp) f32
                preferred_element_type=jnp.float32) + b1_ref[...]
    h = jnp.maximum(h, 0.0)                                          # ReLU (VPU)

    y = jnp.dot(h.astype(jnp.bfloat16), w2_ref[...],                 # (tm, Dp) f32
                preferred_element_type=jnp.float32) + b2_ref[...]

    o_ref[...] = (x + y * multiplier).astype(o_ref.dtype)            # residual


def hypernetwork_forward(x, w1, b1, w2, b2, *, multiplier=MULTIPLIER, tm_max=512):
    """x: (M, D) f32; w1: (D, H); b1: (1, H); w2: (H, D); b2: (1, D) (f32).

    Weights are pre-transposed to (in_features, out_features); the wrapper
    pads feature dims to multiples of 128, casts weights to bf16, tiles M,
    and slices the padding back off.
    """
    M, D = x.shape
    H = w1.shape[1]
    assert w1.shape == (D, H) and w2.shape == (H, D)
    assert b1.shape == (1, H) and b2.shape == (1, D)

    # ---- lane-dense padding + row tiling ------------------------------------
    Dp = _round_up(D, 128)
    Hp = _round_up(H, 128)
    tm = min(tm_max, _round_up(M, 8))
    Mp = _round_up(M, tm)
    grid_m = Mp // tm

    xp = jnp.pad(x, ((0, Mp - M), (0, Dp - D)))
    # Zero-padded weight rows/cols and biases contribute exactly 0 (ReLU(0)=0),
    # so padded lanes of the output are 0 and are sliced off below.
    w1p = jnp.pad(w1, ((0, Dp - D), (0, Hp - H))).astype(jnp.bfloat16)
    w2p = jnp.pad(w2, ((0, Hp - H), (0, Dp - D))).astype(jnp.bfloat16)
    b1p = jnp.pad(b1, ((0, 0), (0, Hp - H)))
    b2p = jnp.pad(b2, ((0, 0), (0, Dp - D)))

    # ---- VMEM budget (covers v7x's 64 MiB physical / 32 MiB scoped default) --
    vmem_bytes = (
        2 * (tm * Dp * 4)                 # x tiles, double-buffered, f32
        + 2 * (tm * Dp * 4)               # out tiles, double-buffered, f32
        + 2 * (Dp * Hp + Hp * Dp) * 2     # resident bf16 weights (2 buffers each)
        + 2 * (Hp + Dp) * 4               # biases
        + tm * Hp * 4                     # hidden activation
        + (8 << 20)                       # scratch / spill headroom
    )
    vmem_limit = int(min(max(vmem_bytes, 32 << 20), 48 << 20))

    cost = pl.CostEstimate(
        flops=4 * Mp * Dp * Hp,           # 2 matmuls * 2*M*K*N
        transcendentals=0,
        bytes_accessed=(xp.size * 4 + Mp * Dp * 4
                        + w1p.size * 2 + w2p.size * 2
                        + b1p.size * 4 + b2p.size * 4),
    )

    out_p = pl.pallas_call(
        functools.partial(hypernet_kernel, multiplier=multiplier),
        out_shape=jax.ShapeDtypeStruct((Mp, Dp), x.dtype),
        grid_spec=pltpu.PrefetchScalarGridSpec(
            num_scalar_prefetch=0,
            grid=(grid_m,),
            in_specs=[
                pl.BlockSpec((tm, Dp), lambda i: (i, 0)),   # x: streamed per tile
                pl.BlockSpec((Dp, Hp), lambda i: (0, 0)),   # w1: VMEM-resident
                pl.BlockSpec((1, Hp), lambda i: (0, 0)),    # b1: VMEM-resident
                pl.BlockSpec((Hp, Dp), lambda i: (0, 0)),   # w2: VMEM-resident
                pl.BlockSpec((1, Dp), lambda i: (0, 0)),    # b2: VMEM-resident
            ],
            out_specs=pl.BlockSpec((tm, Dp), lambda i: (i, 0)),
        ),
        compiler_params=pltpu.CompilerParams(
            dimension_semantics=("parallel",),
            vmem_limit_bytes=vmem_limit,
        ),
        input_output_aliases={0: 0},      # residual output reuses the x buffer
        cost_estimate=cost,
    )(xp, w1p, b1p, w2p, b2p)

    return out_p[:M, :D]


def init_params(key, dim):
    """Mirror the torch init: weight ~ N(0, 0.01), bias = 0."""
    k1, k2 = jax.random.split(key)
    hid = 2 * dim  # layer_structure = [1, 2, 1]
    # torch.nn.Linear stores weight as (out, in); pre-transpose to (in, out).
    w1 = (jax.random.normal(k1, (hid, dim), jnp.float32) * 0.01).T   # (dim, hid)
    b1 = jnp.zeros((1, hid), jnp.float32)
    w2 = (jax.random.normal(k2, (dim, hid), jnp.float32) * 0.01).T   # (hid, dim)
    b2 = jnp.zeros((1, dim), jnp.float32)
    return w1, b1, w2, b2


def reference_forward(x, w1, b1, w2, b2, multiplier=MULTIPLIER):
    h = jnp.maximum(x @ w1 + b1, 0.0)
    y = h @ w2 + b2
    return x + y * multiplier


if __name__ == "__main__":
    dim = 320    # SD-like cross-attention context dim; exercises 320 -> 384 lane padding
    seq = 1024   # rows; 2 grid steps at tm=512 -> pipelined + megacore-shardable

    key = jax.random.PRNGKey(0)
    kx, kp = jax.random.split(key)
    x = jax.random.normal(kx, (seq, dim), jnp.float32)
    w1, b1, w2, b2 = init_params(kp, dim)

    ref = reference_forward(x, w1, b1, w2, b2)

    out = hypernetwork_forward(x, w1, b1, w2, b2)
    out = jax.block_until_ready(out)

    assert out.shape == x.shape and out.dtype == x.dtype
    max_err = float(jnp.max(jnp.abs(out - ref)))
    # bf16 matmul inputs with f32 accumulation -> loosen tolerance vs f32 reference.
    assert jnp.allclose(out, ref, atol=1e-2, rtol=1e-2), f"mismatch vs reference (max err {max_err})"

    print("KERNEL_OK")
</pallas_src>

<mosaic_0001>
module attributes {stable_mosaic.version = 11 : i64} {
  func.func @hypernet_kernel(%arg0: i32, %arg1: memref<512x384xf32, #tpu.memory_space<vmem>>, %arg2: memref<384x640xbf16, #tpu.memory_space<vmem>>, %arg3: memref<1x640xf32, #tpu.memory_space<vmem>>, %arg4: memref<640x384xbf16, #tpu.memory_space<vmem>>, %arg5: memref<1x384xf32, #tpu.memory_space<vmem>>, %arg6: memref<512x384xf32, #tpu.memory_space<vmem>>) attributes {dimension_semantics = [#tpu.dimension_semantics<parallel>], iteration_bounds = array<i64: 2>, scalar_prefetch = 0 : i64, scratch_operands = 0 : i64, tpu.core_type = #tpu.core_type<tc>, window_params = [{transform_indices = @transform_0, window_bounds = array<i64: 512, 384>}, {pipeline_mode = #tpu.pipeline_mode<synchronous>, transform_indices = @transform_1, window_bounds = array<i64: 384, 640>}, {pipeline_mode = #tpu.pipeline_mode<synchronous>, transform_indices = @transform_2, window_bounds = array<i64: 1, 640>}, {pipeline_mode = #tpu.pipeline_mode<synchronous>, transform_indices = @transform_3, window_bounds = array<i64: 640, 384>}, {pipeline_mode = #tpu.pipeline_mode<synchronous>, transform_indices = @transform_4, window_bounds = array<i64: 1, 384>}, {transform_indices = @transform_5, window_bounds = array<i64: 512, 384>}]} {
    %c0 = arith.constant 0 : index
    %c0_0 = arith.constant 0 : index
    %0 = vector.load %arg1[%c0, %c0_0] : memref<512x384xf32, #tpu.memory_space<vmem>>, vector<512x384xf32>
    %1 = arith.truncf %0 : vector<512x384xf32> to vector<512x384xbf16>
    %c0_1 = arith.constant 0 : index
    %c0_2 = arith.constant 0 : index
    %2 = vector.load %arg2[%c0_1, %c0_2] : memref<384x640xbf16, #tpu.memory_space<vmem>>, vector<384x640xbf16>
    %cst = arith.constant dense<0.000000e+00> : vector<512x640xf32>
    %3 = tpu.matmul %1, %2, %cst {dimension_numbers = #tpu.dot_dimension_numbers<[1], [0], [0], [1], [0, 0, 1, 1], [], []>} : vector<512x384xbf16>, vector<384x640xbf16>, vector<512x640xf32> -> vector<512x640xf32>
    %c0_3 = arith.constant 0 : index
    %c0_4 = arith.constant 0 : index
    %4 = vector.load %arg3[%c0_3, %c0_4] : memref<1x640xf32, #tpu.memory_space<vmem>>, vector<1x640xf32>
    %5 = vector.broadcast %4 : vector<1x640xf32> to vector<512x640xf32>
    %6 = arith.addf %3, %5 : vector<512x640xf32>
    %cst_5 = arith.constant 0.000000e+00 : f32
    %7 = vector.broadcast %cst_5 : f32 to vector<512x640xf32>
    %8 = arith.maximumf %6, %7 : vector<512x640xf32>
    %9 = arith.truncf %8 : vector<512x640xf32> to vector<512x640xbf16>
    %c0_6 = arith.constant 0 : index
    %c0_7 = arith.constant 0 : index
    %10 = vector.load %arg4[%c0_6, %c0_7] : memref<640x384xbf16, #tpu.memory_space<vmem>>, vector<640x384xbf16>
    %cst_8 = arith.constant dense<0.000000e+00> : vector<512x384xf32>
    %11 = tpu.matmul %9, %10, %cst_8 {dimension_numbers = #tpu.dot_dimension_numbers<[1], [0], [0], [1], [0, 0, 1, 1], [], []>} : vector<512x640xbf16>, vector<640x384xbf16>, vector<512x384xf32> -> vector<512x384xf32>
    %c0_9 = arith.constant 0 : index
    %c0_10 = arith.constant 0 : index
    %12 = vector.load %arg5[%c0_9, %c0_10] : memref<1x384xf32, #tpu.memory_space<vmem>>, vector<1x384xf32>
    %13 = vector.broadcast %12 : vector<1x384xf32> to vector<512x384xf32>
    %14 = arith.addf %11, %13 : vector<512x384xf32>
    %cst_11 = arith.constant 1.000000e+00 : f32
    %15 = vector.broadcast %cst_11 : f32 to vector<512x384xf32>
    %16 = arith.mulf %14, %15 : vector<512x384xf32>
    %17 = arith.addf %0, %16 : vector<512x384xf32>
    %c0_12 = arith.constant 0 : index
    %c0_13 = arith.constant 0 : index
    %18 = vector.load %arg6[%c0_12, %c0_13] : memref<512x384xf32, #tpu.memory_space<vmem>>, vector<512x384xf32>
    tpu.vector_store %arg6[%c0_12, %c0_13], %17 {strides = array<i32>} : memref<512x384xf32, #tpu.memory_space<vmem>>, vector<512x384xf32>,
    return
  }
  func.func @transform_0(%arg0: i32) -> (i32, i32) {
    %c0_i32 = arith.constant 0 : i32
    %c0_i32_0 = arith.constant 0 : i32
    return %arg0, %c0_i32 : i32, i32
  }
  func.func @transform_1(%arg0: i32) -> (i32, i32) {
    %c0_i32 = arith.constant 0 : i32
    %c0_i32_0 = arith.constant 0 : i32
    %c0_i32_1 = arith.constant 0 : i32
    return %c0_i32, %c0_i32_0 : i32, i32
  }
  func.func @transform_2(%arg0: i32) -> (i32, i32) {
    %c0_i32 = arith.constant 0 : i32
    %c0_i32_0 = arith.constant 0 : i32
    %c0_i32_1 = arith.constant 0 : i32
    return %c0_i32, %c0_i32_0 : i32, i32
  }
  func.func @transform_3(%arg0: i32) -> (i32, i32) {
    %c0_i32 = arith.constant 0 : i32
    %c0_i32_0 = arith.constant 0 : i32
    %c0_i32_1 = arith.constant 0 : i32
    return %c0_i32, %c0_i32_0 : i32, i32
  }
  func.func @transform_4(%arg0: i32) -> (i32, i32) {
    %c0_i32 = arith.constant 0 : i32
    %c0_i32_0 = arith.constant 0 : i32
    %c0_i32_1 = arith.constant 0 : i32
    return %c0_i32, %c0_i32_0 : i32, i32
  }
  func.func @transform_5(%arg0: i32) -> (i32, i32) {
    %c0_i32 = arith.constant 0 : i32
    %c0_i32_0 = arith.constant 0 : i32
    return %arg0, %c0_i32 : i32, i32
  }
}

</mosaic_0001>

<llo_original>
// kernel: tpu_custom_call.1
$region0: #{tpu_custom_call.1}
  #allocation0 [shape = 'u32[]', space=smem, size = 0x4, offset = 0x4, fixed_abs, tag = 'smem constant byte address 0x4 - core index']
  #allocation1 [shape = 'u32[72,128]{1,0:T(1,128)}', space=vmem, size = 0x9000, scoped, tag = 'internal scratch']
  %s0 = inlined_call_operand.hbm [shape: f32[1024,384], index: 0, kind: input, shape index: {}, may-alias: {0,5}]
  %s1 = inlined_call_operand.vmem [shape: bf16[384,640], index: 1, kind: input, shape index: {}]
  %s2 = inlined_call_operand.vmem [shape: f32[1,640], index: 2, kind: input, shape index: {}]
  %s3 = inlined_call_operand.vmem [shape: bf16[640,384], index: 3, kind: input, shape index: {}]
  %s4 = inlined_call_operand.vmem [shape: f32[1,384], index: 4, kind: input, shape index: {}]
  %s5 = inlined_call_operand.hbm [shape: f32[1024,384], index: 5, kind: output, shape index: {}, may-alias: {0,5}]
  %s6 = sld [smem:[#allocation0]]
  $region57: #{tpu_custom_call.1} parent=0
    _
  %s8 = ssub.s32 1, %s6
  %s9 = scalar_select 0, %s8, %s6
  $region1: #{tpu_custom_call.1} parent=0
    #allocation2 [shape = 'u8[1572864]{0}', space=vmem, size = 0x180000, scoped, tag = 'input window, operand 0']
    #allocation3 [shape = 's32[2]{0}', space=sflag, size = 0x8, scoped, tag = 'scoped memory for tpu_custom_call.1']
    #allocation4 [shape = 's32[2]{0}', space=sflag, size = 0x8, scoped, tag = 'scoped memory for tpu_custom_call.1']
    #allocation5 [shape = 'u8[1572864]{0}', space=vmem, size = 0x180000, scoped, tag = 'output window, operand 0']
    %10 = vsyncpa [#allocation3], 0
    %s11 = scalar_lea.sflag [#allocation3], 1
    %12 = vsyncpa %s11, 0
    %13 = vsyncpa [#allocation4], 0
    %s14 = scalar_lea.sflag [#allocation4], 1
    %15 = vsyncpa %s14, 0
    loop: start=0, step=1, limit=4
    $region2: #{tpu_custom_call.1} parent=1 // loop_pre_header
      _
    $region3: #{tpu_custom_call.1} parent=1 // loop_header
      %s17 = sphi 0, %s21
      %p18 = scmp.ge.s32.totalorder %s17, 4
      %s27 = sphi 0, %s29
      %s30 = sphi 0, %s27
      %s31 = sphi 0, %s30
      %s47 = sphi 0, %s31
      %s51 = sphi 0, %s51
      %s53 = sphi 0, %s51
      %s54 = sphi 0, %s53
      %s68 = sphi 0, %s54
      %s72 = sphi 0, %s72
      %s74 = sphi 0, %s72
      %s75 = sphi 0, %s74
      %s89 = sphi 0, %s75
      %s93 = sphi 0, %s93
      %s95 = sphi 0, %s93
      %s96 = sphi 0, %s95
      %s110 = sphi 0, %s96
      %s114 = sphi 0, %s114
      %s116 = sphi 0, %s114
      %s117 = sphi 0, %s116
      %s131 = sphi 0, %s117
      %s137 = sphi 0, %s139
      %s140 = sphi 0, %s137
      %s141 = sphi 0, %s140
      %s157 = sphi 0, %s141
    $region4: #{tpu_custom_call.1} parent=1 // loop_header_branch
      %20 = sbr.rel (%p18) target = $region8
    $region5: #{tpu_custom_call.1} parent=1 // loop_body
      %s22 = ssub.s32 %s17, 1
      %s23 = ssub.s32 %s17, 2
      %s24 = sadd.s32 %s17, 1
      %s25 = ssub.s32 %s17, %s24
      %p26 = scmp.eq.s32.totalorder %s25, 0
      %s28 = sadd.s32 %s27, 1
      %s29 = scalar_select %p26, %s27, %s28
      %p32 = pneg %p26
      %p33 = scmp.eq.s32.totalorder %s17, 1
      %p34 = por %p32, %p33
      %p35 = scmp.ne.s32.totalorder %s27, %s30
      %p36 = scmp.eq.s32.totalorder %s17, 0
      %p37 = por %p35, %p36
      %p38 = scmp.ne.s32.totalorder %s27, %s30
      %p39 = scmp.eq.s32.totalorder %s22, 1
      %p40 = por %p38, %p39
      %p41 = scmp.ne.s32.totalorder %s30, %s31
      %p42 = scmp.eq.s32.totalorder %s22, 0
      %p43 = por %p41, %p42
      %p44 = scmp.ne.s32.totalorder %s30, %s31
      %p45 = scmp.eq.s32.totalorder %s23, 1
      %p46 = por %p44, %p45
      %p48 = scmp.ne.s32.totalorder %s31, %s47
      %p49 = scmp.eq.s32.totalorder %s23, 0
      %p50 = por %p48, %p49
      %s52 = sadd.s32 %s51, 1
      %p55 = scmp.eq.s32.totalorder %s17, 1
      %p56 = scmp.ne.s32.totalorder %s51, %s53
      %p57 = scmp.eq.s32.totalorder %s17, 0
      %p58 = por %p56, %p57
      %p59 = scmp.ne.s32.totalorder %s51, %s53
      %p60 = scmp.eq.s32.totalorder %s22, 1
      %p61 = por %p59, %p60
      %p62 = scmp.ne.s32.totalorder %s53, %s54
      %p63 = scmp.eq.s32.totalorder %s22, 0
      %p64 = por %p62, %p63
      %p65 = scmp.ne.s32.totalorder %s53, %s54
      %p66 = scmp.eq.s32.totalorder %s23, 1
      %p67 = por %p65, %p66
      %p69 = scmp.ne.s32.totalorder %s54, %s68
      %p70 = scmp.eq.s32.totalorder %s23, 0
      %p71 = por %p69, %p70
      %s73 = sadd.s32 %s72, 1
      %p76 = scmp.eq.s32.totalorder %s17, 1
      %p77 = scmp.ne.s32.totalorder %s72, %s74
      %p78 = scmp.eq.s32.totalorder %s17, 0
      %p79 = por %p77, %p78
      %p80 = scmp.ne.s32.totalorder %s72, %s74
      %p81 = scmp.eq.s32.totalorder %s22, 1
      %p82 = por %p80, %p81
      %p83 = scmp.ne.s32.totalorder %s74, %s75
      %p84 = scmp.eq.s32.totalorder %s22, 0
      %p85 = por %p83, %p84
      %p86 = scmp.ne.s32.totalorder %s74, %s75
      %p87 = scmp.eq.s32.totalorder %s23, 1
      %p88 = por %p86, %p87
      %p90 = scmp.ne.s32.totalorder %s75, %s89
      %p91 = scmp.eq.s32.totalorder %s23, 0
      %p92 = por %p90, %p91
      %s94 = sadd.s32 %s93, 1
      %p97 = scmp.eq.s32.totalorder %s17, 1
      %p98 = scmp.ne.s32.totalorder %s93, %s95
      %p99 = scmp.eq.s32.totalorder %s17, 0
      %p100 = por %p98, %p99
      %p101 = scmp.ne.s32.totalorder %s93, %s95
      %p102 = scmp.eq.s32.totalorder %s22, 1
      %p103 = por %p101, %p102
      %p104 = scmp.ne.s32.totalorder %s95, %s96
      %p105 = scmp.eq.s32.totalorder %s22, 0
      %p106 = por %p104, %p105
      %p107 = scmp.ne.s32.totalorder %s95, %s96
      %p108 = scmp.eq.s32.totalorder %s23, 1
      %p109 = por %p107, %p108
      %p111 = scmp.ne.s32.totalorder %s96, %s110
      %p112 = scmp.eq.s32.totalorder %s23, 0
      %p113 = por %p111, %p112
      %s115 = sadd.s32 %s114, 1
      %p118 = scmp.eq.s32.totalorder %s17, 1
      %p119 = scmp.ne.s32.totalorder %s114, %s116
      %p120 = scmp.eq.s32.totalorder %s17, 0
      %p121 = por %p119, %p120
      %p122 = scmp.ne.s32.totalorder %s114, %s116
      %p123 = scmp.eq.s32.totalorder %s22, 1
      %p124 = por %p122, %p123
      %p125 = scmp.ne.s32.totalorder %s116, %s117
      %p126 = scmp.eq.s32.totalorder %s22, 0
      %p127 = por %p125, %p126
      %p128 = scmp.ne.s32.totalorder %s116, %s117
      %p129 = scmp.eq.s32.totalorder %s23, 1
      %p130 = por %p128, %p129
      %p132 = scmp.ne.s32.totalorder %s117, %s131
      %p133 = scmp.eq.s32.totalorder %s23, 0
      %p134 = por %p132, %p133
      %s135 = ssub.s32 %s17, %s24
      %p136 = scmp.eq.s32.totalorder %s135, 0
      %s138 = sadd.s32 %s137, 1
      %s139 = scalar_select %p136, %s137, %s138
      %p142 = pneg %p136
      %p143 = scmp.eq.s32.totalorder %s17, 1
      %p144 = por %p142, %p143
      %p145 = scmp.ne.s32.totalorder %s137, %s140
      %p146 = scmp.eq.s32.totalorder %s17, 0
      %p147 = por %p145, %p146
      %p148 = scmp.ne.s32.totalorder %s137, %s140
      %p149 = scmp.eq.s32.totalorder %s22, 1
      %p150 = por %p148, %p149
      %p151 = scmp.ne.s32.totalorder %s140, %s141
      %p152 = scmp.eq.s32.totalorder %s22, 0
      %p153 = por %p151, %p152
      %p154 = scmp.ne.s32.totalorder %s140, %s141
      %p155 = scmp.eq.s32.totalorder %s23, 1
      %p156 = por %p154, %p155
      %p158 = scmp.ne.s32.totalorder %s141, %s157
      %p159 = scmp.eq.s32.totalorder %s23, 0
      %p160 = por %p158, %p159
      %p161 = scmp.le.s32.totalorder 1, %s17
      %p162 = scmp.lt.s32.totalorder %s17, 3
      %p163 = pnand %p161, %p162
      %p164 = pneg %p163
      // Predicated region
      $region9: #{tpu_custom_call.1} parent=5 // pred_check
        _
      $region10: #{tpu_custom_call.1} parent=5 // pred_check_branch
        %166 = sbr.rel (%p163) target = $region12
      $region11: #{tpu_custom_call.1} parent=5 // pred_region
        %s167 = ssub.s32 %s17, 1
        // Predicated region
        $region13: #{tpu_custom_call.1} parent=11 // pred_check
          %p168 = pneg %p64
        $region14: #{tpu_custom_call.1} parent=11 // pred_check_branch
          %170 = sbr.rel (%p168) target = $region16
        $region15: #{tpu_custom_call.1} parent=11 // pred_region
          _
        $region16: #{tpu_custom_call.1} parent=11 // pred_fallthru
          _
        // Predicated region
        $region17: #{tpu_custom_call.1} parent=11 // pred_check
          %p171 = pneg %p85
        $region18: #{tpu_custom_call.1} parent=11 // pred_check_branch
          %173 = sbr.rel (%p171) target = $region20
        $region19: #{tpu_custom_call.1} parent=11 // pred_region
          _
        $region20: #{tpu_custom_call.1} parent=11 // pred_fallthru
          _
        // Predicated region
        $region21: #{tpu_custom_call.1} parent=11 // pred_check
          %p174 = pneg %p106
        $region22: #{tpu_custom_call.1} parent=11 // pred_check_branch
          %176 = sbr.rel (%p174) target = $region24
        $region23: #{tpu_custom_call.1} parent=11 // pred_region
          _
        $region24: #{tpu_custom_call.1} parent=11 // pred_fallthru
          _
        // Predicated region
        $region25: #{tpu_custom_call.1} parent=11 // pred_check
          %p177 = pneg %p127
        $region26: #{tpu_custom_call.1} parent=11 // pred_check_branch
          %179 = sbr.rel (%p177) target = $region28
        $region27: #{tpu_custom_call.1} parent=11 // pred_region
          _
        $region28: #{tpu_custom_call.1} parent=11 // pred_fallthru
          _
      $region12: #{tpu_custom_call.1} parent=5 // pred_fallthru
        _
      %p180 = scmp.lt.s32.totalorder %s17, 2
      // Predicated region
      $region29: #{tpu_custom_call.1} parent=5 // pred_check
        %p181 = pneg %p180
      $region30: #{tpu_custom_call.1} parent=5 // pred_check_branch
        %183 = sbr.rel (%p181) target = $region32
      $region31: #{tpu_custom_call.1} parent=5 // pred_region
        // Predicated region
        $region33: #{tpu_custom_call.1} parent=31 // pred_check
          %p184 = pneg %p37
        $region34: #{tpu_custom_call.1} parent=31 // pred_check_branch
          %186 = sbr.rel (%p184) target = $region36
        $region35: #{tpu_custom_call.1} parent=31 // pred_region
          %s187 = sand.u32 %s27, 1
          %s188 = scalar_lea.sflag [#allocation3], %s187
          %s189 = sand.u32 %s27, 1
          %s190 = smul.addr %s189, 1536
          %s191 = scalar_lea.vmem [#allocation2], %s190
          %s192 = smul.u32 64, %s17
          %194 = vsyncadd %s188, 0
          %s195 = smul.addr %s192, 3
          %s196 = smul.addr %s195, 8
          %s197 = scalar_lea.hbm %s0, %s196
          %s198 = sshll.u32 %s197, 4
          %s199 = int_to_ptr.hbm [resolvable:$true] %s198
          %s200 = sshll.u32 %s191, 4
          %s201 = int_to_ptr.vmem [resolvable:$true] %s200
          %206 = dma.hbm_to_vmem [thread:$0]  %s199, 24576, %s201, %s188, 384, 384, 24
        $region36: #{tpu_custom_call.1} parent=31 // pred_fallthru
          _
      $region32: #{tpu_custom_call.1} parent=5 // pred_fallthru
        _
      %p207 = scmp.le.s32.totalorder 1, %s17
      %p208 = scmp.lt.s32.totalorder %s17, 3
      %p209 = pnand %p207, %p208
      %p210 = pneg %p209
      // Predicated region
      $region37: #{tpu_custom_call.1} parent=5 // pred_check
        _
      $region38: #{tpu_custom_call.1} parent=5 // pred_check_branch
        %212 = sbr.rel (%p209) target = $region40
      $region39: #{tpu_custom_call.1} parent=5 // pred_region
        %s213 = ssub.s32 %s17, 1
        %s214 = sand.u32 %s30, 1
        %s215 = scalar_lea.sflag [#allocation3], %s214
        %s216 = sand.u32 %s30, 1
        %s217 = smul.addr %s216, 1536
        %s218 = scalar_lea.vmem [#allocation2], %s217
        // Predicated region
        $region41: #{tpu_custom_call.1} parent=39 // pred_check
          %p219 = pneg %p43
        $region42: #{tpu_custom_call.1} parent=39 // pred_check_branch
          %221 = sbr.rel (%p219) target = $region44
        $region43: #{tpu_custom_call.1} parent=39 // pred_region
          %223 = dma.done %s215, 24576
        $region44: #{tpu_custom_call.1} parent=39 // pred_fallthru
          _
        %s224 = sand.u32 %s30, 1
        %s225 = scalar_lea.sflag [#allocation3], %s224
        %s226 = sand.u32 %s30, 1
        %s227 = smul.addr %s226, 1536
        %s228 = scalar_lea.vmem [#allocation2], %s227
        %p229 = pneg %p43
        %p230 = pneg %p40
        %p231 = pneg %p64
        %p232 = pneg %p61
        %p233 = pneg %p85
        %p234 = pneg %p82
        %p235 = pneg %p106
        %p236 = pneg %p103
        %p237 = pneg %p127
        %p238 = pneg %p124
        %p239 = pneg %p153
        %p240 = pneg %p150
        %s241 = sand.u32 %s140, 1
        %s242 = scalar_lea.sflag [#allocation4], %s241
        %s243 = sand.u32 %s140, 1
        %s244 = smul.addr %s243, 1536
        %s245 = scalar_lea.vmem [#allocation5], %s244
        %s246 = smul.u32 64, %s22
        %s247 = smul.u32 64, %s22
        %v248 = vld [vmem:[%s218] sm:$0xff]
        %v249 = vld [vmem:[%s218 + $0x8] sm:$0xff]
        %v250 = vld [vmem:[%s218 + $0x10] sm:$0xff]
        %v251 = vld [vmem:[%s218 + $0x18] sm:$0xff]
        %v252 = vld [vmem:[%s218 + $0x20] sm:$0xff]
        %v253 = vld [vmem:[%s218 + $0x28] sm:$0xff]
        %v254 = vld [vmem:[%s218 + $0x30] sm:$0xff]
        %v255 = vld [vmem:[%s218 + $0x38] sm:$0xff]
        %v256 = vld [vmem:[%s218 + $0x40] sm:$0xff]
        %v257 = vld [vmem:[%s218 + $0x48] sm:$0xff]
        %v258 = vld [vmem:[%s218 + $0x50] sm:$0xff]
        %v259 = vld [vmem:[%s218 + $0x58] sm:$0xff]
        %v260 = vld [vmem:[%s218 + $0x60] sm:$0xff]
        %v261 = vld [vmem:[%s218 + $0x68] sm:$0xff]
        %v262 = vld [vmem:[%s218 + $0x70] sm:$0xff]
        %v263 = vld [vmem:[%s218 + $0x78] sm:$0xff]
        %v264 = vld [vmem:[%s218 + $0x80] sm:$0xff]
        %v265 = vld [vmem:[%s218 + $0x88] sm:$0xff]
        %v266 = vld [vmem:[%s218 + $0x90] sm:$0xff]
        %v267 = vld [vmem:[%s218 + $0x98] sm:$0xff]
        %v268 = vld [vmem:[%s218 + $0xa0] sm:$0xff]
        %v269 = vld [vmem:[%s218 + $0xa8] sm:$0xff]
        %v270 = vld [vmem:[%s218 + $0xb0] sm:$0xff]
        %v271 = vld [vmem:[%s218 + $0xb8] sm:$0xff]
        %v272 = vld [vmem:[%s218 + $0xc0] sm:$0xff]
        %v273 = vld [vmem:[%s218 + $0xc8] sm:$0xff]
        %v274 = vld [vmem:[%s218 + $0xd0] sm:$0xff]
        %v275 = vld [vmem:[%s218 + $0xd8] sm:$0xff]
        %v276 = vld [vmem:[%s218 + $0xe0] sm:$0xff]
        %v277 = vld [vmem:[%s218 + $0xe8] sm:$0xff]
        %v278 = vld [vmem:[%s218 + $0xf0] sm:$0xff]
        %v279 = vld [vmem:[%s218 + $0xf8] sm:$0xff]
        %v280 = vld [vmem:[%s218 + $0x100] sm:$0xff]
        %v281 = vld [vmem:[%s218 + $0x108] sm:$0xff]
        %v282 = vld [vmem:[%s218 + $0x110] sm:$0xff]
        %v283 = vld [vmem:[%s218 + $0x118] sm:$0xff]
        %v284 = vld [vmem:[%s218 + $0x120] sm:$0xff]
        %v285 = vld [vmem:[%s218 + $0x128] sm:$0xff]
        %v286 = vld [vmem:[%s218 + $0x130] sm:$0xff]
        %v287 = vld [vmem:[%s218 + $0x138] sm:$0xff]
        %v288 = vld [vmem:[%s218 + $0x140] sm:$0xff]
        %v289 = vld [vmem:[%s218 + $0x148] sm:$0xff]
        %v290 = vld [vmem:[%s218 + $0x150] sm:$0xff]
        %v291 = vld [vmem:[%s218 + $0x158] sm:$0xff]
        %v292 = vld [vmem:[%s218 + $0x160] sm:$0xff]
        %v293 = vld [vmem:[%s218 + $0x168] sm:$0xff]
        %v294 = vld [vmem:[%s218 + $0x170] sm:$0xff]
        %v295 = vld [vmem:[%s218 + $0x178] sm:$0xff]
        %v296 = vld [vmem:[%s218 + $0x180] sm:$0xff]
        %v297 = vld [vmem:[%s218 + $0x188] sm:$0xff]
        %v298 = vld [vmem:[%s218 + $0x190] sm:$0xff]
        %v299 = vld [vmem:[%s218 + $0x198] sm:$0xff]
        %v300 = vld [vmem:[%s218 + $0x1a0] sm:$0xff]
        %v301 = vld [vmem:[%s218 + $0x1a8] sm:$0xff]
        %v302 = vld [vmem:[%s218 + $0x1b0] sm:$0xff]
        %v303 = vld [vmem:[%s218 + $0x1b8] sm:$0xff]
        %v304 = vld [vmem:[%s218 + $0x1c0] sm:$0xff]
        %v305 = vld [vmem:[%s218 + $0x1c8] sm:$0xff]
        %v306 = vld [vmem:[%s218 + $0x1d0] sm:$0xff]
        %v307 = vld [vmem:[%s218 + $0x1d8] sm:$0xff]
        %v308 = vld [vmem:[%s218 + $0x1e0] sm:$0xff]
        %v309 = vld [vmem:[%s218 + $0x1e8] sm:$0xff]
        %v310 = vld [vmem:[%s218 + $0x1f0] sm:$0xff]
        %v311 = vld [vmem:[%s218 + $0x1f8] sm:$0xff]
        %v312 = vld [vmem:[%s218 + $0x200] sm:$0xff]
        %v313 = vld [vmem:[%s218 + $0x208] sm:$0xff]
        %v314 = vld [vmem:[%s218 + $0x210] sm:$0xff]
        %v315 = vld [vmem:[%s218 + $0x218] sm:$0xff]
        %v316 = vld [vmem:[%s218 + $0x220] sm:$0xff]
        %v317 = vld [vmem:[%s218 + $0x228] sm:$0xff]
        %v318 = vld [vmem:[%s218 + $0x230] sm:$0xff]
        %v319 = vld [vmem:[%s218 + $0x238] sm:$0xff]
        %v320 = vld [vmem:[%s218 + $0x240] sm:$0xff]
        %v321 = vld [vmem:[%s218 + $0x248] sm:$0xff]
        %v322 = vld [vmem:[%s218 + $0x250] sm:$0xff]
        %v323 = vld [vmem:[%s218 + $0x258] sm:$0xff]
        %v324 = vld [vmem:[%s218 + $0x260] sm:$0xff]
        %v325 = vld [vmem:[%s218 + $0x268] sm:$0xff]
        %v326 = vld [vmem:[%s218 + $0x270] sm:$0xff]
        %v327 = vld [vmem:[%s218 + $0x278] sm:$0xff]
        %v328 = vld [vmem:[%s218 + $0x280] sm:$0xff]
        %v329 = vld [vmem:[%s218 + $0x288] sm:$0xff]
        %v330 = vld [vmem:[%s218 + $0x290] sm:$0xff]
        %v331 = vld [vmem:[%s218 + $0x298] sm:$0xff]
        %v332 = vld [vmem:[%s218 + $0x2a0] sm:$0xff]
        %v333 = vld [vmem:[%s218 + $0x2a8] sm:$0xff]
        %v334 = vld [vmem:[%s218 + $0x2b0] sm:$0xff]
        %v335 = vld [vmem:[%s218 + $0x2b8] sm:$0xff]
        %v336 = vld [vmem:[%s218 + $0x2c0] sm:$0xff]
        %v337 = vld [vmem:[%s218 + $0x2c8] sm:$0xff]
        %v338 = vld [vmem:[%s218 + $0x2d0] sm:$0xff]
        %v339 = vld [vmem:[%s218 + $0x2d8] sm:$0xff]
        %v340 = vld [vmem:[%s218 + $0x2e0] sm:$0xff]
        %v341 = vld [vmem:[%s218 + $0x2e8] sm:$0xff]
        %v342 = vld [vmem:[%s218 + $0x2f0] sm:$0xff]
        %v343 = vld [vmem:[%s218 + $0x2f8] sm:$0xff]
        %v344 = vld [vmem:[%s218 + $0x300] sm:$0xff]
        %v345 = vld [vmem:[%s218 + $0x308] sm:$0xff]
        %v346 = vld [vmem:[%s218 + $0x310] sm:$0xff]
        %v347 = vld [vmem:[%s218 + $0x318] sm:$0xff]
        %v348 = vld [vmem:[%s218 + $0x320] sm:$0xff]
        %v349 = vld [vmem:[%s218 + $0x328] sm:$0xff]
        %v350 = vld [vmem:[%s218 + $0x330] sm:$0xff]
        %v351 = vld [vmem:[%s218 + $0x338] sm:$0xff]
        %v352 = vld [vmem:[%s218 + $0x340] sm:$0xff]
        %v353 = vld [vmem:[%s218 + $0x348] sm:$0xff]
        %v354 = vld [vmem:[%s218 + $0x350] sm:$0xff]
        %v355 = vld [vmem:[%s218 + $0x358] sm:$0xff]
        %v356 = vld [vmem:[%s218 + $0x360] sm:$0xff]
        %v357 = vld [vmem:[%s218 + $0x368] sm:$0xff]
        %v358 = vld [vmem:[%s218 + $0x370] sm:$0xff]
        %v359 = vld [vmem:[%s218 + $0x378] sm:$0xff]
        %v360 = vld [vmem:[%s218 + $0x380] sm:$0xff]
        %v361 = vld [vmem:[%s218 + $0x388] sm:$0xff]
        %v362 = vld [vmem:[%s218 + $0x390] sm:$0xff]
        %v363 = vld [vmem:[%s218 + $0x398] sm:$0xff]
        %v364 = vld [vmem:[%s218 + $0x3a0] sm:$0xff]
        %v365 = vld [vmem:[%s218 + $0x3a8] sm:$0xff]
        %v366 = vld [vmem:[%s218 + $0x3b0] sm:$0xff]
        %v367 = vld [vmem:[%s218 + $0x3b8] sm:$0xff]
        %v368 = vld [vmem:[%s218 + $0x3c0] sm:$0xff]
        %v369 = vld [vmem:[%s218 + $0x3c8] sm:$0xff]
        %v370 = vld [vmem:[%s218 + $0x3d0] sm:$0xff]
        %v371 = vld [vmem:[%s218 + $0x3d8] sm:$0xff]
        %v372 = vld [vmem:[%s218 + $0x3e0] sm:$0xff]
        %v373 = vld [vmem:[%s218 + $0x3e8] sm:$0xff]
        %v374 = vld [vmem:[%s218 + $0x3f0] sm:$0xff]
        %v375 = vld [vmem:[%s218 + $0x3f8] sm:$0xff]
        %v376 = vld [vmem:[%s218 + $0x400] sm:$0xff]
        %v377 = vld [vmem:[%s218 + $0x408] sm:$0xff]
        %v378 = vld [vmem:[%s218 + $0x410] sm:$0xff]
        %v379 = vld [vmem:[%s218 + $0x418] sm:$0xff]
        %v380 = vld [vmem:[%s218 + $0x420] sm:$0xff]
        %v381 = vld [vmem:[%s218 + $0x428] sm:$0xff]
        %v382 = vld [vmem:[%s218 + $0x430] sm:$0xff]
        %v383 = vld [vmem:[%s218 + $0x438] sm:$0xff]
        %v384 = vld [vmem:[%s218 + $0x440] sm:$0xff]
        %v385 = vld [vmem:[%s218 + $0x448] sm:$0xff]
        %v386 = vld [vmem:[%s218 + $0x450] sm:$0xff]
        %v387 = vld [vmem:[%s218 + $0x458] sm:$0xff]
        %v388 = vld [vmem:[%s218 + $0x460] sm:$0xff]
        %v389 = vld [vmem:[%s218 + $0x468] sm:$0xff]
        %v390 = vld [vmem:[%s218 + $0x470] sm:$0xff]
        %v391 = vld [vmem:[%s218 + $0x478] sm:$0xff]
        %v392 = vld [vmem:[%s218 + $0x480] sm:$0xff]
        %v393 = vld [vmem:[%s218 + $0x488] sm:$0xff]
        %v394 = vld [vmem:[%s218 + $0x490] sm:$0xff]
        %v395 = vld [vmem:[%s218 + $0x498] sm:$0xff]
        %v396 = vld [vmem:[%s218 + $0x4a0] sm:$0xff]
        %v397 = vld [vmem:[%s218 + $0x4a8] sm:$0xff]
        %v398 = vld [vmem:[%s218 + $0x4b0] sm:$0xff]
        %v399 = vld [vmem:[%s218 + $0x4b8] sm:$0xff]
        %v400 = vld [vmem:[%s218 + $0x4c0] sm:$0xff]
        %v401 = vld [vmem:[%s218 + $0x4c8] sm:$0xff]
        %v402 = vld [vmem:[%s218 + $0x4d0] sm:$0xff]
        %v403 = vld [vmem:[%s218 + $0x4d8] sm:$0xff]
        %v404 = vld [vmem:[%s218 + $0x4e0] sm:$0xff]
        %v405 = vld [vmem:[%s218 + $0x4e8] sm:$0xff]
        %v406 = vld [vmem:[%s218 + $0x4f0] sm:$0xff]
        %v407 = vld [vmem:[%s218 + $0x4f8] sm:$0xff]
        %v408 = vld [vmem:[%s218 + $0x500] sm:$0xff]
        %v409 = vld [vmem:[%s218 + $0x508] sm:$0xff]
        %v410 = vld [vmem:[%s218 + $0x510] sm:$0xff]
        %v411 = vld [vmem:[%s218 + $0x518] sm:$0xff]
        %v412 = vld [vmem:[%s218 + $0x520] sm:$0xff]
        %v413 = vld [vmem:[%s218 + $0x528] sm:$0xff]
        %v414 = vld [vmem:[%s218 + $0x530] sm:$0xff]
        %v415 = vld [vmem:[%s218 + $0x538] sm:$0xff]
        %v416 = vld [vmem:[%s218 + $0x540] sm:$0xff]
        %v417 = vld [vmem:[%s218 + $0x548] sm:$0xff]
        %v418 = vld [vmem:[%s218 + $0x550] sm:$0xff]
        %v419 = vld [vmem:[%s218 + $0x558] sm:$0xff]
        %v420 = vld [vmem:[%s218 + $0x560] sm:$0xff]
        %v421 = vld [vmem:[%s218 + $0x568] sm:$0xff]
        %v422 = vld [vmem:[%s218 + $0x570] sm:$0xff]
        %v423 = vld [vmem:[%s218 + $0x578] sm:$0xff]
        %v424 = vld [vmem:[%s218 + $0x580] sm:$0xff]
        %v425 = vld [vmem:[%s218 + $0x588] sm:$0xff]
        %v426 = vld [vmem:[%s218 + $0x590] sm:$0xff]
        %v427 = vld [vmem:[%s218 + $0x598] sm:$0xff]
        %v428 = vld [vmem:[%s218 + $0x5a0] sm:$0xff]
        %v429 = vld [vmem:[%s218 + $0x5a8] sm:$0xff]
        %v430 = vld [vmem:[%s218 + $0x5b0] sm:$0xff]
        %v431 = vld [vmem:[%s218 + $0x5b8] sm:$0xff]
        %v432 = vld [vmem:[%s218 + $0x5c0] sm:$0xff]
        %v433 = vld [vmem:[%s218 + $0x5c8] sm:$0xff]
        %v434 = vld [vmem:[%s218 + $0x5d0] sm:$0xff]
        %v435 = vld [vmem:[%s218 + $0x5d8] sm:$0xff]
        %v436 = vld [vmem:[%s218 + $0x5e0] sm:$0xff]
        %v437 = vld [vmem:[%s218 + $0x5e8] sm:$0xff]
        %v438 = vld [vmem:[%s218 + $0x5f0] sm:$0xff]
        %v439 = vld [vmem:[%s218 + $0x5f8] sm:$0xff]
        %v440 = vpack.c.bf16 %v251, %v248
        %v441 = vpack.c.bf16 %v252, %v249
        %v442 = vpack.c.bf16 %v253, %v250
        %v443 = vpack.c.bf16 %v257, %v254
        %v444 = vpack.c.bf16 %v258, %v255
        %v445 = vpack.c.bf16 %v259, %v256
        %v446 = vpack.c.bf16 %v263, %v260
        %v447 = vpack.c.bf16 %v264, %v261
        %v448 = vpack.c.bf16 %v265, %v262
        %v449 = vpack.c.bf16 %v269, %v266
        %v450 = vpack.c.bf16 %v270, %v267
        %v451 = vpack.c.bf16 %v271, %v268
        %v452 = vpack.c.bf16 %v275, %v272
        %v453 = vpack.c.bf16 %v276, %v273
        %v454 = vpack.c.bf16 %v277, %v274
        %v455 = vpack.c.bf16 %v281, %v278
        %v456 = vpack.c.bf16 %v282, %v279
        %v457 = vpack.c.bf16 %v283, %v280
        %v458 = vpack.c.bf16 %v287, %v284
        %v459 = vpack.c.bf16 %v288, %v285
        %v460 = vpack.c.bf16 %v289, %v286
        %v461 = vpack.c.bf16 %v293, %v290
        %v462 = vpack.c.bf16 %v294, %v291
        %v463 = vpack.c.bf16 %v295, %v292
        %v464 = vpack.c.bf16 %v299, %v296
        %v465 = vpack.c.bf16 %v300, %v297
        %v466 = vpack.c.bf16 %v301, %v298
        %v467 = vpack.c.bf16 %v305, %v302
        %v468 = vpack.c.bf16 %v306, %v303
        %v469 = vpack.c.bf16 %v307, %v304
        %v470 = vpack.c.bf16 %v311, %v308
        %v471 = vpack.c.bf16 %v312, %v309
        %v472 = vpack.c.bf16 %v313, %v310
        %v473 = vpack.c.bf16 %v317, %v314
        %v474 = vpack.c.bf16 %v318, %v315
        %v475 = vpack.c.bf16 %v319, %v316
        %v476 = vpack.c.bf16 %v323, %v320
        %v477 = vpack.c.bf16 %v324, %v321
        %v478 = vpack.c.bf16 %v325, %v322
        %v479 = vpack.c.bf16 %v329, %v326
        %v480 = vpack.c.bf16 %v330, %v327
        %v481 = vpack.c.bf16 %v331, %v328
        %v482 = vpack.c.bf16 %v335, %v332
        %v483 = vpack.c.bf16 %v336, %v333
        %v484 = vpack.c.bf16 %v337, %v334
        %v485 = vpack.c.bf16 %v341, %v338
        %v486 = vpack.c.bf16 %v342, %v339
        %v487 = vpack.c.bf16 %v343, %v340
        %v488 = vpack.c.bf16 %v347, %v344
        %v489 = vpack.c.bf16 %v348, %v345
        %v490 = vpack.c.bf16 %v349, %v346
        %v491 = vpack.c.bf16 %v353, %v350
        %v492 = vpack.c.bf16 %v354, %v351
        %v493 = vpack.c.bf16 %v355, %v352
        %v494 = vpack.c.bf16 %v359, %v356
        %v495 = vpack.c.bf16 %v360, %v357
        %v496 = vpack.c.bf16 %v361, %v358
        %v497 = vpack.c.bf16 %v365, %v362
        %v498 = vpack.c.bf16 %v366, %v363
        %v499 = vpack.c.bf16 %v367, %v364
        %v500 = vpack.c.bf16 %v371, %v368
        %v501 = vpack.c.bf16 %v372, %v369
        %v502 = vpack.c.bf16 %v373, %v370
        %v503 = vpack.c.bf16 %v377, %v374
        %v504 = vpack.c.bf16 %v378, %v375
        %v505 = vpack.c.bf16 %v379, %v376
        %v506 = vpack.c.bf16 %v383, %v380
        %v507 = vpack.c.bf16 %v384, %v381
        %v508 = vpack.c.bf16 %v385, %v382
        %v509 = vpack.c.bf16 %v389, %v386
        %v510 = vpack.c.bf16 %v390, %v387
        %v511 = vpack.c.bf16 %v391, %v388
        %v512 = vpack.c.bf16 %v395, %v392
        %v513 = vpack.c.bf16 %v396, %v393
        %v514 = vpack.c.bf16 %v397, %v394
        %v515 = vpack.c.bf16 %v401, %v398
        %v516 = vpack.c.bf16 %v402, %v399
        %v517 = vpack.c.bf16 %v403, %v400
        %v518 = vpack.c.bf16 %v407, %v404
        %v519 = vpack.c.bf16 %v408, %v405
        %v520 = vpack.c.bf16 %v409, %v406
        %v521 = vpack.c.bf16 %v413, %v410
        %v522 = vpack.c.bf16 %v414, %v411
        %v523 = vpack.c.bf16 %v415, %v412
        %v524 = vpack.c.bf16 %v419, %v416
        %v525 = vpack.c.bf16 %v420, %v417
        %v526 = vpack.c.bf16 %v421, %v418
        %v527 = vpack.c.bf16 %v425, %v422
        %v528 = vpack.c.bf16 %v426, %v423
        %v529 = vpack.c.bf16 %v427, %v424
        %v530 = vpack.c.bf16 %v431, %v428
        %v531 = vpack.c.bf16 %v432, %v429
        %v532 = vpack.c.bf16 %v433, %v430
        %v533 = vpack.c.bf16 %v437, %v434
        %v534 = vpack.c.bf16 %v438, %v435
        %v535 = vpack.c.bf16 %v439, %v436
        %v536 = vld [vmem:[%s1] sm:$0xff]
        %v537 = vld [vmem:[%s1 + $0x8] sm:$0xff]
        %v538 = vld [vmem:[%s1 + $0x10] sm:$0xf]
        %v539 = vld [vmem:[%s1 + $0x14] sm:$0xff]
        %v540 = vld [vmem:[%s1 + $0x1c] sm:$0xff]
        %v541 = vld [vmem:[%s1 + $0x24] sm:$0xf]
        %v542 = vld [vmem:[%s1 + $0x28] sm:$0xff]
        %v543 = vld [vmem:[%s1 + $0x30] sm:$0xff]
        %v544 = vld [vmem:[%s1 + $0x38] sm:$0xf]
        %v545 = vld [vmem:[%s1 + $0x3c] sm:$0xff]
        %v546 = vld [vmem:[%s1 + $0x44] sm:$0xff]
        %v547 = vld [vmem:[%s1 + $0x4c] sm:$0xf]
        %v548 = vld [vmem:[%s1 + $0x50] sm:$0xff]
        %v549 = vld [vmem:[%s1 + $0x58] sm:$0xff]
        %v550 = vld [vmem:[%s1 + $0x60] sm:$0xf]
        %v551 = vld [vmem:[%s1 + $0x64] sm:$0xff]
        %v552 = vld [vmem:[%s1 + $0x6c] sm:$0xff]
        %v553 = vld [vmem:[%s1 + $0x74] sm:$0xf]
        %v554 = vld [vmem:[%s1 + $0x78] sm:$0xff]
        %v555 = vld [vmem:[%s1 + $0x80] sm:$0xff]
        %v556 = vld [vmem:[%s1 + $0x88] sm:$0xf]
        %v557 = vld [vmem:[%s1 + $0x8c] sm:$0xff]
        %v558 = vld [vmem:[%s1 + $0x94] sm:$0xff]
        %v559 = vld [vmem:[%s1 + $0x9c] sm:$0xf]
        %v560 = vld [vmem:[%s1 + $0xa0] sm:$0xff]
        %v561 = vld [vmem:[%s1 + $0xa8] sm:$0xff]
        %v562 = vld [vmem:[%s1 + $0xb0] sm:$0xf]
        %v563 = vld [vmem:[%s1 + $0xb4] sm:$0xff]
        %v564 = vld [vmem:[%s1 + $0xbc] sm:$0xff]
        %v565 = vld [vmem:[%s1 + $0xc4] sm:$0xf]
        %v566 = vld [vmem:[%s1 + $0xc8] sm:$0xff]
        %v567 = vld [vmem:[%s1 + $0xd0] sm:$0xff]
        %v568 = vld [vmem:[%s1 + $0xd8] sm:$0xf]
        %v569 = vld [vmem:[%s1 + $0xdc] sm:$0xff]
        %v570 = vld [vmem:[%s1 + $0xe4] sm:$0xff]
        %v571 = vld [vmem:[%s1 + $0xec] sm:$0xf]
        %v572 = vld [vmem:[%s1 + $0xf0] sm:$0xff]
        %v573 = vld [vmem:[%s1 + $0xf8] sm:$0xff]
        %v574 = vld [vmem:[%s1 + $0x100] sm:$0xf]
        %v575 = vld [vmem:[%s1 + $0x104] sm:$0xff]
        %v576 = vld [vmem:[%s1 + $0x10c] sm:$0xff]
        %v577 = vld [vmem:[%s1 + $0x114] sm:$0xf]
        %v578 = vld [vmem:[%s1 + $0x118] sm:$0xff]
        %v579 = vld [vmem:[%s1 + $0x120] sm:$0xff]
        %v580 = vld [vmem:[%s1 + $0x128] sm:$0xf]
        %v581 = vld [vmem:[%s1 + $0x12c] sm:$0xff]
        %v582 = vld [vmem:[%s1 + $0x134] sm:$0xff]
        %v583 = vld [vmem:[%s1 + $0x13c] sm:$0xf]
        %v584 = vld [vmem:[%s1 + $0x140] sm:$0xff]
        %v585 = vld [vmem:[%s1 + $0x148] sm:$0xff]
        %v586 = vld [vmem:[%s1 + $0x150] sm:$0xf]
        %v587 = vld [vmem:[%s1 + $0x154] sm:$0xff]
        %v588 = vld [vmem:[%s1 + $0x15c] sm:$0xff]
        %v589 = vld [vmem:[%s1 + $0x164] sm:$0xf]
        %v590 = vld [vmem:[%s1 + $0x168] sm:$0xff]
        %v591 = vld [vmem:[%s1 + $0x170] sm:$0xff]
        %v592 = vld [vmem:[%s1 + $0x178] sm:$0xf]
        %v593 = vld [vmem:[%s1 + $0x17c] sm:$0xff]
        %v594 = vld [vmem:[%s1 + $0x184] sm:$0xff]
        %v595 = vld [vmem:[%s1 + $0x18c] sm:$0xf]
        %v596 = vld [vmem:[%s1 + $0x190] sm:$0xff]
        %v597 = vld [vmem:[%s1 + $0x198] sm:$0xff]
        %v598 = vld [vmem:[%s1 + $0x1a0] sm:$0xf]
        %v599 = vld [vmem:[%s1 + $0x1a4] sm:$0xff]
        %v600 = vld [vmem:[%s1 + $0x1ac] sm:$0xff]
        %v601 = vld [vmem:[%s1 + $0x1b4] sm:$0xf]
        %v602 = vld [vmem:[%s1 + $0x1b8] sm:$0xff]
        %v603 = vld [vmem:[%s1 + $0x1c0] sm:$0xff]
        %v604 = vld [vmem:[%s1 + $0x1c8] sm:$0xf]
        %v605 = vld [vmem:[%s1 + $0x1cc] sm:$0xff]
        %v606 = vld [vmem:[%s1 + $0x1d4] sm:$0xff]
        %v607 = vld [vmem:[%s1 + $0x1dc] sm:$0xf]
        %v608 = vld [vmem:[%s1 + $0x1e0] sm:$0xff]
        %v609 = vld [vmem:[%s1 + $0x1e8] sm:$0xff]
        %v610 = vld [vmem:[%s1 + $0x1f0] sm:$0xf]
        %v611 = vld [vmem:[%s1 + $0x1f4] sm:$0xff]
        %v612 = vld [vmem:[%s1 + $0x1fc] sm:$0xff]
        %v613 = vld [vmem:[%s1 + $0x204] sm:$0xf]
        %v614 = vld [vmem:[%s1 + $0x208] sm:$0xff]
        %v615 = vld [vmem:[%s1 + $0x210] sm:$0xff]
        %v616 = vld [vmem:[%s1 + $0x218] sm:$0xf]
        %v617 = vld [vmem:[%s1 + $0x21c] sm:$0xff]
        %v618 = vld [vmem:[%s1 + $0x224] sm:$0xff]
        %v619 = vld [vmem:[%s1 + $0x22c] sm:$0xf]
        %v620 = vld [vmem:[%s1 + $0x230] sm:$0xff]
        %v621 = vld [vmem:[%s1 + $0x238] sm:$0xff]
        %v622 = vld [vmem:[%s1 + $0x240] sm:$0xf]
        %v623 = vld [vmem:[%s1 + $0x244] sm:$0xff]
        %v624 = vld [vmem:[%s1 + $0x24c] sm:$0xff]
        %v625 = vld [vmem:[%s1 + $0x254] sm:$0xf]
        %v626 = vld [vmem:[%s1 + $0x258] sm:$0xff]
        %v627 = vld [vmem:[%s1 + $0x260] sm:$0xff]
        %v628 = vld [vmem:[%s1 + $0x268] sm:$0xf]
        %v629 = vld [vmem:[%s1 + $0x26c] sm:$0xff]
        %v630 = vld [vmem:[%s1 + $0x274] sm:$0xff]
        %v631 = vld [vmem:[%s1 + $0x27c] sm:$0xf]
        %v632 = vld [vmem:[%s1 + $0x280] sm:$0xff]
        %v633 = vld [vmem:[%s1 + $0x288] sm:$0xff]
        %v634 = vld [vmem:[%s1 + $0x290] sm:$0xf]
        %v635 = vld [vmem:[%s1 + $0x294] sm:$0xff]
        %v636 = vld [vmem:[%s1 + $0x29c] sm:$0xff]
        %v637 = vld [vmem:[%s1 + $0x2a4] sm:$0xf]
        %v638 = vld [vmem:[%s1 + $0x2a8] sm:$0xff]
        %v639 = vld [vmem:[%s1 + $0x2b0] sm:$0xff]
        %v640 = vld [vmem:[%s1 + $0x2b8] sm:$0xf]
        %v641 = vld [vmem:[%s1 + $0x2bc] sm:$0xff]
        %v642 = vld [vmem:[%s1 + $0x2c4] sm:$0xff]
        %v643 = vld [vmem:[%s1 + $0x2cc] sm:$0xf]
        %v644 = vld [vmem:[%s1 + $0x2d0] sm:$0xff]
        %v645 = vld [vmem:[%s1 + $0x2d8] sm:$0xff]
        %v646 = vld [vmem:[%s1 + $0x2e0] sm:$0xf]
        %v647 = vld [vmem:[%s1 + $0x2e4] sm:$0xff]
        %v648 = vld [vmem:[%s1 + $0x2ec] sm:$0xff]
        %v649 = vld [vmem:[%s1 + $0x2f4] sm:$0xf]
        %v650 = vld [vmem:[%s1 + $0x2f8] sm:$0xff]
        %v651 = vld [vmem:[%s1 + $0x300] sm:$0xff]
        %v652 = vld [vmem:[%s1 + $0x308] sm:$0xf]
        %v653 = vld [vmem:[%s1 + $0x30c] sm:$0xff]
        %v654 = vld [vmem:[%s1 + $0x314] sm:$0xff]
        %v655 = vld [vmem:[%s1 + $0x31c] sm:$0xf]
        %v656 = vld [vmem:[%s1 + $0x320] sm:$0xff]
        %v657 = vld [vmem:[%s1 + $0x328] sm:$0xff]
        %v658 = vld [vmem:[%s1 + $0x330] sm:$0xf]
        %v659 = vld [vmem:[%s1 + $0x334] sm:$0xff]
        %v660 = vld [vmem:[%s1 + $0x33c] sm:$0xff]
        %v661 = vld [vmem:[%s1 + $0x344] sm:$0xf]
        %v662 = vld [vmem:[%s1 + $0x348] sm:$0xff]
        %v663 = vld [vmem:[%s1 + $0x350] sm:$0xff]
        %v664 = vld [vmem:[%s1 + $0x358] sm:$0xf]
        %v665 = vld [vmem:[%s1 + $0x35c] sm:$0xff]
        %v666 = vld [vmem:[%s1 + $0x364] sm:$0xff]
        %v667 = vld [vmem:[%s1 + $0x36c] sm:$0xf]
        %v668 = vld [vmem:[%s1 + $0x370] sm:$0xff]
        %v669 = vld [vmem:[%s1 + $0x378] sm:$0xff]
        %v670 = vld [vmem:[%s1 + $0x380] sm:$0xf]
        %v671 = vld [vmem:[%s1 + $0x384] sm:$0xff]
        %v672 = vld [vmem:[%s1 + $0x38c] sm:$0xff]
        %v673 = vld [vmem:[%s1 + $0x394] sm:$0xf]
        %v674 = vld [vmem:[%s1 + $0x398] sm:$0xff]
        %v675 = vld [vmem:[%s1 + $0x3a0] sm:$0xff]
        %v676 = vld [vmem:[%s1 + $0x3a8] sm:$0xf]
        %v677 = vld [vmem:[%s1 + $0x3ac] sm:$0xff]
        %v678 = vld [vmem:[%s1 + $0x3b4] sm:$0xff]
        %v679 = vld [vmem:[%s1 + $0x3bc] sm:$0xf]
        %v680 = vld [vmem:[%s2] sm:$0x1f]
        %v682 = vperm.slane %v680, 0
        %v683 = vperm.slane %v680, 1
        %v684 = vperm.slane %v680, 2
        %v685 = vperm.slane %v680, 3
        %v686 = vperm.slane %v680, 4
        %v836 = vunpack.c.l.b16 %v536
        %v837 = vunpack.c.h.b16 %v536
        %v838 = vunpack.c.l.b16 %v537
        %v839 = vunpack.c.h.b16 %v537
        %v840 = vunpack.c.l.b16 %v538
        %v841 = vunpack.c.l.b16 %v539
        %v842 = vunpack.c.h.b16 %v539
        %v843 = vunpack.c.l.b16 %v540
        %v844 = vunpack.c.h.b16 %v540
        %v845 = vunpack.c.l.b16 %v541
        %v846 = vunpack.c.l.b16 %v542
        %v847 = vunpack.c.h.b16 %v542
        %v848 = vunpack.c.l.b16 %v543
        %v849 = vunpack.c.h.b16 %v543
        %v850 = vunpack.c.l.b16 %v544
        %v851 = vunpack.c.l.b16 %v545
        %v852 = vunpack.c.h.b16 %v545
        %v853 = vunpack.c.l.b16 %v546
        %v854 = vunpack.c.h.b16 %v546
        %v855 = vunpack.c.l.b16 %v547
        %v856 = vunpack.c.l.b16 %v548
        %v857 = vunpack.c.h.b16 %v548
        %v858 = vunpack.c.l.b16 %v549
        %v859 = vunpack.c.h.b16 %v549
        %v860 = vunpack.c.l.b16 %v550
        %v861 = vunpack.c.l.b16 %v551
        %v862 = vunpack.c.h.b16 %v551
        %v863 = vunpack.c.l.b16 %v552
        %v864 = vunpack.c.h.b16 %v552
        %v865 = vunpack.c.l.b16 %v553
        %v866 = vunpack.c.l.b16 %v554
        %v867 = vunpack.c.h.b16 %v554
        %v868 = vunpack.c.l.b16 %v555
        %v869 = vunpack.c.h.b16 %v555
        %v870 = vunpack.c.l.b16 %v556
        %v871 = vunpack.c.l.b16 %v557
        %v872 = vunpack.c.h.b16 %v557
        %v873 = vunpack.c.l.b16 %v558
        %v874 = vunpack.c.h.b16 %v558
        %v875 = vunpack.c.l.b16 %v559
        %v876 = vunpack.c.l.b16 %v560
        %v877 = vunpack.c.h.b16 %v560
        %v878 = vunpack.c.l.b16 %v561
        %v879 = vunpack.c.h.b16 %v561
        %v880 = vunpack.c.l.b16 %v562
        %v881 = vunpack.c.l.b16 %v563
        %v882 = vunpack.c.h.b16 %v563
        %v883 = vunpack.c.l.b16 %v564
        %v884 = vunpack.c.h.b16 %v564
        %v885 = vunpack.c.l.b16 %v565
        %v886 = vunpack.c.l.b16 %v566
        %v887 = vunpack.c.h.b16 %v566
        %v888 = vunpack.c.l.b16 %v567
        %v889 = vunpack.c.h.b16 %v567
        %v890 = vunpack.c.l.b16 %v568
        %v891 = vunpack.c.l.b16 %v569
        %v892 = vunpack.c.h.b16 %v569
        %v893 = vunpack.c.l.b16 %v570
        %v894 = vunpack.c.h.b16 %v570
        %v895 = vunpack.c.l.b16 %v571
        %v896 = vunpack.c.l.b16 %v572
        %v897 = vunpack.c.h.b16 %v572
        %v898 = vunpack.c.l.b16 %v573
        %v899 = vunpack.c.h.b16 %v573
        %v900 = vunpack.c.l.b16 %v574
        %v901 = vunpack.c.l.b16 %v575
        %v902 = vunpack.c.h.b16 %v575
        %v903 = vunpack.c.l.b16 %v576
        %v904 = vunpack.c.h.b16 %v576
        %v905 = vunpack.c.l.b16 %v577
        %v906 = vunpack.c.l.b16 %v578
        %v907 = vunpack.c.h.b16 %v578
        %v908 = vunpack.c.l.b16 %v579
        %v909 = vunpack.c.h.b16 %v579
        %v910 = vunpack.c.l.b16 %v580
        %v911 = vunpack.c.l.b16 %v581
        %v912 = vunpack.c.h.b16 %v581
        %v913 = vunpack.c.l.b16 %v582
        %v914 = vunpack.c.h.b16 %v582
        %v915 = vunpack.c.l.b16 %v583
        %v916 = vunpack.c.l.b16 %v584
        %v917 = vunpack.c.h.b16 %v584
        %v918 = vunpack.c.l.b16 %v585
        %v919 = vunpack.c.h.b16 %v585
        %v920 = vunpack.c.l.b16 %v586
        %v921 = vunpack.c.l.b16 %v587
        %v922 = vunpack.c.h.b16 %v587
        %v923 = vunpack.c.l.b16 %v588
        %v924 = vunpack.c.h.b16 %v588
        %v925 = vunpack.c.l.b16 %v589
        %v926 = vunpack.c.l.b16 %v590
        %v927 = vunpack.c.h.b16 %v590
        %v928 = vunpack.c.l.b16 %v591
        %v929 = vunpack.c.h.b16 %v591
        %v930 = vunpack.c.l.b16 %v592
        %v931 = vunpack.c.l.b16 %v593
        %v932 = vunpack.c.h.b16 %v593
        %v933 = vunpack.c.l.b16 %v594
        %v934 = vunpack.c.h.b16 %v594
        %v935 = vunpack.c.l.b16 %v595
        %v936 = vunpack.c.l.b16 %v596
        %v937 = vunpack.c.h.b16 %v596
        %v938 = vunpack.c.l.b16 %v597
        %v939 = vunpack.c.h.b16 %v597
        %v940 = vunpack.c.l.b16 %v598
        %v941 = vunpack.c.l.b16 %v599
        %v942 = vunpack.c.h.b16 %v599
        %v943 = vunpack.c.l.b16 %v600
        %v944 = vunpack.c.h.b16 %v600
        %v945 = vunpack.c.l.b16 %v601
        %v946 = vunpack.c.l.b16 %v602
        %v947 = vunpack.c.h.b16 %v602
        %v948 = vunpack.c.l.b16 %v603
        %v949 = vunpack.c.h.b16 %v603
        %v950 = vunpack.c.l.b16 %v604
        %v951 = vunpack.c.l.b16 %v605
        %v952 = vunpack.c.h.b16 %v605
        %v953 = vunpack.c.l.b16 %v606
        %v954 = vunpack.c.h.b16 %v606
        %v955 = vunpack.c.l.b16 %v607
        %v956 = vunpack.c.l.b16 %v608
        %v957 = vunpack.c.h.b16 %v608
        %v958 = vunpack.c.l.b16 %v609
        %v959 = vunpack.c.h.b16 %v609
        %v960 = vunpack.c.l.b16 %v610
        %v961 = vunpack.c.l.b16 %v611
        %v962 = vunpack.c.h.b16 %v611
        %v963 = vunpack.c.l.b16 %v612
        %v964 = vunpack.c.h.b16 %v612
        %v965 = vunpack.c.l.b16 %v613
        %v966 = vunpack.c.l.b16 %v614
        %v967 = vunpack.c.h.b16 %v614
        %v968 = vunpack.c.l.b16 %v615
        %v969 = vunpack.c.h.b16 %v615
        %v970 = vunpack.c.l.b16 %v616
        %v971 = vunpack.c.l.b16 %v617
        %v972 = vunpack.c.h.b16 %v617
        %v973 = vunpack.c.l.b16 %v618
        %v974 = vunpack.c.h.b16 %v618
        %v975 = vunpack.c.l.b16 %v619
        %v976 = vunpack.c.l.b16 %v620
        %v977 = vunpack.c.h.b16 %v620
        %v978 = vunpack.c.l.b16 %v621
        %v979 = vunpack.c.h.b16 %v621
        %v980 = vunpack.c.l.b16 %v622
        %v981 = vunpack.c.l.b16 %v623
        %v982 = vunpack.c.h.b16 %v623
        %v983 = vunpack.c.l.b16 %v624
        %v984 = vunpack.c.h.b16 %v624
        %v985 = vunpack.c.l.b16 %v625
        %v986 = vunpack.c.l.b16 %v626
        %v987 = vunpack.c.h.b16 %v626
        %v988 = vunpack.c.l.b16 %v627
        %v989 = vunpack.c.h.b16 %v627
        %v990 = vunpack.c.l.b16 %v628
        %v991 = vunpack.c.l.b16 %v629
        %v992 = vunpack.c.h.b16 %v629
        %v993 = vunpack.c.l.b16 %v630
        %v994 = vunpack.c.h.b16 %v630
        %v995 = vunpack.c.l.b16 %v631
        %v996 = vunpack.c.l.b16 %v632
        %v997 = vunpack.c.h.b16 %v632
        %v998 = vunpack.c.l.b16 %v633
        %v999 = vunpack.c.h.b16 %v633
        %v1000 = vunpack.c.l.b16 %v634
        %v1001 = vunpack.c.l.b16 %v635
        %v1002 = vunpack.c.h.b16 %v635
        %v1003 = vunpack.c.l.b16 %v636
        %v1004 = vunpack.c.h.b16 %v636
        %v1005 = vunpack.c.l.b16 %v637
        %v1006 = vunpack.c.l.b16 %v638
        %v1007 = vunpack.c.h.b16 %v638
        %v1008 = vunpack.c.l.b16 %v639
        %v1009 = vunpack.c.h.b16 %v639
        %v1010 = vunpack.c.l.b16 %v640
        %v1011 = vunpack.c.l.b16 %v641
        %v1012 = vunpack.c.h.b16 %v641
        %v1013 = vunpack.c.l.b16 %v642
        %v1014 = vunpack.c.h.b16 %v642
        %v1015 = vunpack.c.l.b16 %v643
        %v1016 = vunpack.c.l.b16 %v644
        %v1017 = vunpack.c.h.b16 %v644
        %v1018 = vunpack.c.l.b16 %v645
        %v1019 = vunpack.c.h.b16 %v645
        %v1020 = vunpack.c.l.b16 %v646
        %v1021 = vunpack.c.l.b16 %v647
        %v1022 = vunpack.c.h.b16 %v647
        %v1023 = vunpack.c.l.b16 %v648
        %v1024 = vunpack.c.h.b16 %v648
        %v1025 = vunpack.c.l.b16 %v649
        %v1026 = vunpack.c.l.b16 %v650
        %v1027 = vunpack.c.h.b16 %v650
        %v1028 = vunpack.c.l.b16 %v651
        %v1029 = vunpack.c.h.b16 %v651
        %v1030 = vunpack.c.l.b16 %v652
        %v1031 = vunpack.c.l.b16 %v653
        %v1032 = vunpack.c.h.b16 %v653
        %v1033 = vunpack.c.l.b16 %v654
        %v1034 = vunpack.c.h.b16 %v654
        %v1035 = vunpack.c.l.b16 %v655
        %v1036 = vunpack.c.l.b16 %v656
        %v1037 = vunpack.c.h.b16 %v656
        %v1038 = vunpack.c.l.b16 %v657
        %v1039 = vunpack.c.h.b16 %v657
        %v1040 = vunpack.c.l.b16 %v658
        %v1041 = vunpack.c.l.b16 %v659
        %v1042 = vunpack.c.h.b16 %v659
        %v1043 = vunpack.c.l.b16 %v660
        %v1044 = vunpack.c.h.b16 %v660
        %v1045 = vunpack.c.l.b16 %v661
        %v1046 = vunpack.c.l.b16 %v662
        %v1047 = vunpack.c.h.b16 %v662
        %v1048 = vunpack.c.l.b16 %v663
        %v1049 = vunpack.c.h.b16 %v663
        %v1050 = vunpack.c.l.b16 %v664
        %v1051 = vunpack.c.l.b16 %v665
        %v1052 = vunpack.c.h.b16 %v665
        %v1053 = vunpack.c.l.b16 %v666
        %v1054 = vunpack.c.h.b16 %v666
        %v1055 = vunpack.c.l.b16 %v667
        %v1056 = vunpack.c.l.b16 %v668
        %v1057 = vunpack.c.h.b16 %v668
        %v1058 = vunpack.c.l.b16 %v669
        %v1059 = vunpack.c.h.b16 %v669
        %v1060 = vunpack.c.l.b16 %v670
        %v1061 = vunpack.c.l.b16 %v671
        %v1062 = vunpack.c.h.b16 %v671
        %v1063 = vunpack.c.l.b16 %v672
        %v1064 = vunpack.c.h.b16 %v672
        %v1065 = vunpack.c.l.b16 %v673
        %v1066 = vunpack.c.l.b16 %v674
        %v1067 = vunpack.c.h.b16 %v674
        %v1068 = vunpack.c.l.b16 %v675
        %v1069 = vunpack.c.h.b16 %v675
        %v1070 = vunpack.c.l.b16 %v676
        %v1071 = vunpack.c.l.b16 %v677
        %v1072 = vunpack.c.h.b16 %v677
        %v1073 = vunpack.c.l.b16 %v678
        %v1074 = vunpack.c.h.b16 %v678
        %v1075 = vunpack.c.l.b16 %v679
        %v1076 = vpack.c.b16 %v841, %v836
        %v1077 = vpack.c.b16 %v842, %v837
        %v1078 = vpack.c.b16 %v843, %v838
        %v1079 = vpack.c.b16 %v844, %v839
        %v1080 = vpack.c.b16 %v845, %v840
        %v1081 = vpack.c.b16 %v851, %v846
        %v1082 = vpack.c.b16 %v852, %v847
        %v1083 = vpack.c.b16 %v853, %v848
        %v1084 = vpack.c.b16 %v854, %v849
        %v1085 = vpack.c.b16 %v855, %v850
        %v1086 = vpack.c.b16 %v861, %v856
        %v1087 = vpack.c.b16 %v862, %v857
        %v1088 = vpack.c.b16 %v863, %v858
        %v1089 = vpack.c.b16 %v864, %v859
        %v1090 = vpack.c.b16 %v865, %v860
        %v1091 = vpack.c.b16 %v871, %v866
        %v1092 = vpack.c.b16 %v872, %v867
        %v1093 = vpack.c.b16 %v873, %v868
        %v1094 = vpack.c.b16 %v874, %v869
        %v1095 = vpack.c.b16 %v875, %v870
        %v1096 = vpack.c.b16 %v881, %v876
        %v1097 = vpack.c.b16 %v882, %v877
        %v1098 = vpack.c.b16 %v883, %v878
        %v1099 = vpack.c.b16 %v884, %v879
        %v1100 = vpack.c.b16 %v885, %v880
        %v1101 = vpack.c.b16 %v891, %v886
        %v1102 = vpack.c.b16 %v892, %v887
        %v1103 = vpack.c.b16 %v893, %v888
        %v1104 = vpack.c.b16 %v894, %v889
        %v1105 = vpack.c.b16 %v895, %v890
        %v1106 = vpack.c.b16 %v901, %v896
        %v1107 = vpack.c.b16 %v902, %v897
        %v1108 = vpack.c.b16 %v903, %v898
        %v1109 = vpack.c.b16 %v904, %v899
        %v1110 = vpack.c.b16 %v905, %v900
        %v1111 = vpack.c.b16 %v911, %v906
        %v1112 = vpack.c.b16 %v912, %v907
        %v1113 = vpack.c.b16 %v913, %v908
        %v1114 = vpack.c.b16 %v914, %v909
        %v1115 = vpack.c.b16 %v915, %v910
        %v1116 = vpack.c.b16 %v921, %v916
        %v1117 = vpack.c.b16 %v922, %v917
        %v1118 = vpack.c.b16 %v923, %v918
        %v1119 = vpack.c.b16 %v924, %v919
        %v1120 = vpack.c.b16 %v925, %v920
        %v1121 = vpack.c.b16 %v931, %v926
        %v1122 = vpack.c.b16 %v932, %v927
        %v1123 = vpack.c.b16 %v933, %v928
        %v1124 = vpack.c.b16 %v934, %v929
        %v1125 = vpack.c.b16 %v935, %v930
        %v1126 = vpack.c.b16 %v941, %v936
        %v1127 = vpack.c.b16 %v942, %v937
        %v1128 = vpack.c.b16 %v943, %v938
        %v1129 = vpack.c.b16 %v944, %v939
        %v1130 = vpack.c.b16 %v945, %v940
        %v1131 = vpack.c.b16 %v951, %v946
        %v1132 = vpack.c.b16 %v952, %v947
        %v1133 = vpack.c.b16 %v953, %v948
        %v1134 = vpack.c.b16 %v954, %v949
        %v1135 = vpack.c.b16 %v955, %v950
        %v1136 = vpack.c.b16 %v961, %v956
        %v1137 = vpack.c.b16 %v962, %v957
        %v1138 = vpack.c.b16 %v963, %v958
        %v1139 = vpack.c.b16 %v964, %v959
        %v1140 = vpack.c.b16 %v965, %v960
        %v1141 = vpack.c.b16 %v971, %v966
        %v1142 = vpack.c.b16 %v972, %v967
        %v1143 = vpack.c.b16 %v973, %v968
        %v1144 = vpack.c.b16 %v974, %v969
        %v1145 = vpack.c.b16 %v975, %v970
        %v1146 = vpack.c.b16 %v981, %v976
        %v1147 = vpack.c.b16 %v982, %v977
        %v1148 = vpack.c.b16 %v983, %v978
        %v1149 = vpack.c.b16 %v984, %v979
        %v1150 = vpack.c.b16 %v985, %v980
        %v1151 = vpack.c.b16 %v991, %v986
        %v1152 = vpack.c.b16 %v992, %v987
        %v1153 = vpack.c.b16 %v993, %v988
        %v1154 = vpack.c.b16 %v994, %v989
        %v1155 = vpack.c.b16 %v995, %v990
        %v1156 = vpack.c.b16 %v1001, %v996
        %v1157 = vpack.c.b16 %v1002, %v997
        %v1158 = vpack.c.b16 %v1003, %v998
        %v1159 = vpack.c.b16 %v1004, %v999
        %v1160 = vpack.c.b16 %v1005, %v1000
        %v1161 = vpack.c.b16 %v1011, %v1006
        %v1162 = vpack.c.b16 %v1012, %v1007
        %v1163 = vpack.c.b16 %v1013, %v1008
        %v1164 = vpack.c.b16 %v1014, %v1009
        %v1165 = vpack.c.b16 %v1015, %v1010
        %v1166 = vpack.c.b16 %v1021, %v1016
        %v1167 = vpack.c.b16 %v1022, %v1017
        %v1168 = vpack.c.b16 %v1023, %v1018
        %v1169 = vpack.c.b16 %v1024, %v1019
        %v1170 = vpack.c.b16 %v1025, %v1020
        %v1171 = vpack.c.b16 %v1031, %v1026
        %v1172 = vpack.c.b16 %v1032, %v1027
        %v1173 = vpack.c.b16 %v1033, %v1028
        %v1174 = vpack.c.b16 %v1034, %v1029
        %v1175 = vpack.c.b16 %v1035, %v1030
        %v1176 = vpack.c.b16 %v1041, %v1036
        %v1177 = vpack.c.b16 %v1042, %v1037
        %v1178 = vpack.c.b16 %v1043, %v1038
        %v1179 = vpack.c.b16 %v1044, %v1039
        %v1180 = vpack.c.b16 %v1045, %v1040
        %v1181 = vpack.c.b16 %v1051, %v1046
        %v1182 = vpack.c.b16 %v1052, %v1047
        %v1183 = vpack.c.b16 %v1053, %v1048
        %v1184 = vpack.c.b16 %v1054, %v1049
        %v1185 = vpack.c.b16 %v1055, %v1050
        %v1186 = vpack.c.b16 %v1061, %v1056
        %v1187 = vpack.c.b16 %v1062, %v1057
        %v1188 = vpack.c.b16 %v1063, %v1058
        %v1189 = vpack.c.b16 %v1064, %v1059
        %v1190 = vpack.c.b16 %v1065, %v1060
        %v1191 = vpack.c.b16 %v1071, %v1066
        %v1192 = vpack.c.b16 %v1072, %v1067
        %v1193 = vpack.c.b16 %v1073, %v1068
        %v1194 = vpack.c.b16 %v1074, %v1069
        %v1195 = vpack.c.b16 %v1075, %v1070
        %1316 = vmatpush.bf16.msra.mxu0 %v1111
        %1317 = vmatpush.bf16.msra.mxu0 %v1106
        %1318 = vmatpush.bf16.msra.mxu0 %v1101
        %1319 = vmatpush.bf16.msra.mxu0 %v1096
        %1320 = vmatpush.bf16.msra.mxu0 %v1091
        %1321 = vmatpush.bf16.msra.mxu0 %v1086
        %1322 = vmatpush.bf16.msra.mxu0 %v1081
        %1323 = vmatpush.bf16.msra.mxu0 %v1076
        %1324 = vmatmul.bf16.gmra.mxu0 %v440
        %v1325 = vpop.f32.mrf.mxu0
        %v1326 = vadd.f32 %v682, %v1325
        %v1327 = vpop.f32.mrf.mxu0
        %v1328 = vadd.f32 %v682, %v1327
        %1329 = vmatmul.bf16.gmra.mxu0 %v443
        %v1330 = vpop.f32.mrf.mxu0
        %v1331 = vadd.f32 %v682, %v1330
        %v1332 = vpop.f32.mrf.mxu0
        %v1333 = vadd.f32 %v682, %v1332
        %1334 = vmatmul.bf16.gmra.mxu0 %v446
        %v1335 = vpop.f32.mrf.mxu0
        %v1336 = vadd.f32 %v682, %v1335
        %v1337 = vpop.f32.mrf.mxu0
        %v1338 = vadd.f32 %v682, %v1337
        %1339 = vmatmul.bf16.gmra.mxu0 %v449
        %v1340 = vpop.f32.mrf.mxu0
        %v1341 = vadd.f32 %v682, %v1340
        %v1342 = vpop.f32.mrf.mxu0
        %v1343 = vadd.f32 %v682, %v1342
        %1344 = vmatmul.bf16.gmra.mxu0 %v452
        %v1345 = vpop.f32.mrf.mxu0
        %v1346 = vadd.f32 %v682, %v1345
        %v1347 = vpop.f32.mrf.mxu0
        %v1348 = vadd.f32 %v682, %v1347
        %1349 = vmatmul.bf16.gmra.mxu0 %v455
        %v1350 = vpop.f32.mrf.mxu0
        %v1351 = vadd.f32 %v682, %v1350
        %v1352 = vpop.f32.mrf.mxu0
        %v1353 = vadd.f32 %v682, %v1352
        %1354 = vmatmul.bf16.gmra.mxu0 %v458
        %v1355 = vpop.f32.mrf.mxu0
        %v1356 = vadd.f32 %v682, %v1355
        %v1357 = vpop.f32.mrf.mxu0
        %v1358 = vadd.f32 %v682, %v1357
        %1359 = vmatmul.bf16.gmra.mxu0 %v461
        %v1360 = vpop.f32.mrf.mxu0
        %v1361 = vadd.f32 %v682, %v1360
        %v1362 = vpop.f32.mrf.mxu0
        %v1363 = vadd.f32 %v682, %v1362
        %1364 = vmatmul.bf16.gmra.mxu0 %v464
        %v1365 = vpop.f32.mrf.mxu0
        %v1366 = vadd.f32 %v682, %v1365
        %v1367 = vpop.f32.mrf.mxu0
        %v1368 = vadd.f32 %v682, %v1367
        %1369 = vmatmul.bf16.gmra.mxu0 %v467
        %v1370 = vpop.f32.mrf.mxu0
        %v1371 = vadd.f32 %v682, %v1370
        %v1372 = vpop.f32.mrf.mxu0
        %v1373 = vadd.f32 %v682, %v1372
        %1374 = vmatmul.bf16.gmra.mxu0 %v470
        %v1375 = vpop.f32.mrf.mxu0
        %v1376 = vadd.f32 %v682, %v1375
        %v1377 = vpop.f32.mrf.mxu0
        %v1378 = vadd.f32 %v682, %v1377
        %1379 = vmatmul.bf16.gmra.mxu0 %v473
        %v1380 = vpop.f32.mrf.mxu0
        %v1381 = vadd.f32 %v682, %v1380
        %v1382 = vpop.f32.mrf.mxu0
        %v1383 = vadd.f32 %v682, %v1382
        %1384 = vmatmul.bf16.gmra.mxu0 %v476
        %v1385 = vpop.f32.mrf.mxu0
        %v1386 = vadd.f32 %v682, %v1385
        %v1387 = vpop.f32.mrf.mxu0
        %v1388 = vadd.f32 %v682, %v1387
        %1389 = vmatmul.bf16.gmra.mxu0 %v479
        %v1390 = vpop.f32.mrf.mxu0
        %v1391 = vadd.f32 %v682, %v1390
        %v1392 = vpop.f32.mrf.mxu0
        %v1393 = vadd.f32 %v682, %v1392
        %1394 = vmatmul.bf16.gmra.mxu0 %v482
        %v1395 = vpop.f32.mrf.mxu0
        %v1396 = vadd.f32 %v682, %v1395
        %v1397 = vpop.f32.mrf.mxu0
        %v1398 = vadd.f32 %v682, %v1397
        %1399 = vmatmul.bf16.gmra.mxu0 %v485
        %v1400 = vpop.f32.mrf.mxu0
        %v1401 = vadd.f32 %v682, %v1400
        %v1402 = vpop.f32.mrf.mxu0
        %v1403 = vadd.f32 %v682, %v1402
        %1404 = vmatmul.bf16.gmra.mxu0 %v488
        %v1405 = vpop.f32.mrf.mxu0
        %v1406 = vadd.f32 %v682, %v1405
        %v1407 = vpop.f32.mrf.mxu0
        %v1408 = vadd.f32 %v682, %v1407
        %1409 = vmatmul.bf16.gmra.mxu0 %v491
        %v1410 = vpop.f32.mrf.mxu0
        %v1411 = vadd.f32 %v682, %v1410
        %v1412 = vpop.f32.mrf.mxu0
        %v1413 = vadd.f32 %v682, %v1412
        %1414 = vmatmul.bf16.gmra.mxu0 %v494
        %v1415 = vpop.f32.mrf.mxu0
        %v1416 = vadd.f32 %v682, %v1415
        %v1417 = vpop.f32.mrf.mxu0
        %v1418 = vadd.f32 %v682, %v1417
        %1419 = vmatmul.bf16.gmra.mxu0 %v497
        %v1420 = vpop.f32.mrf.mxu0
        %v1421 = vadd.f32 %v682, %v1420
        %v1422 = vpop.f32.mrf.mxu0
        %v1423 = vadd.f32 %v682, %v1422
        %1424 = vmatmul.bf16.gmra.mxu0 %v500
        %v1425 = vpop.f32.mrf.mxu0
        %v1426 = vadd.f32 %v682, %v1425
        %v1427 = vpop.f32.mrf.mxu0
        %v1428 = vadd.f32 %v682, %v1427
        %1429 = vmatmul.bf16.gmra.mxu0 %v503
        %v1430 = vpop.f32.mrf.mxu0
        %v1431 = vadd.f32 %v682, %v1430
        %v1432 = vpop.f32.mrf.mxu0
        %v1433 = vadd.f32 %v682, %v1432
        %1434 = vmatmul.bf16.gmra.mxu0 %v506
        %v1435 = vpop.f32.mrf.mxu0
        %v1436 = vadd.f32 %v682, %v1435
        %v1437 = vpop.f32.mrf.mxu0
        %v1438 = vadd.f32 %v682, %v1437
        %1439 = vmatmul.bf16.gmra.mxu0 %v509
        %v1440 = vpop.f32.mrf.mxu0
        %v1441 = vadd.f32 %v682, %v1440
        %v1442 = vpop.f32.mrf.mxu0
        %v1443 = vadd.f32 %v682, %v1442
        %1444 = vmatmul.bf16.gmra.mxu0 %v512
        %v1445 = vpop.f32.mrf.mxu0
        %v1446 = vadd.f32 %v682, %v1445
        %v1447 = vpop.f32.mrf.mxu0
        %v1448 = vadd.f32 %v682, %v1447
        %1449 = vmatmul.bf16.gmra.mxu0 %v515
        %v1450 = vpop.f32.mrf.mxu0
        %v1451 = vadd.f32 %v682, %v1450
        %v1452 = vpop.f32.mrf.mxu0
        %v1453 = vadd.f32 %v682, %v1452
        %1454 = vmatmul.bf16.gmra.mxu0 %v518
        %v1455 = vpop.f32.mrf.mxu0
        %v1456 = vadd.f32 %v682, %v1455
        %v1457 = vpop.f32.mrf.mxu0
        %v1458 = vadd.f32 %v682, %v1457
        %1459 = vmatmul.bf16.gmra.mxu0 %v521
        %v1460 = vpop.f32.mrf.mxu0
        %v1461 = vadd.f32 %v682, %v1460
        %v1462 = vpop.f32.mrf.mxu0
        %v1463 = vadd.f32 %v682, %v1462
        %1464 = vmatmul.bf16.gmra.mxu0 %v524
        %v1465 = vpop.f32.mrf.mxu0
        %v1466 = vadd.f32 %v682, %v1465
        %v1467 = vpop.f32.mrf.mxu0
        %v1468 = vadd.f32 %v682, %v1467
        %1469 = vmatmul.bf16.gmra.mxu0 %v527
        %v1470 = vpop.f32.mrf.mxu0
        %v1471 = vadd.f32 %v682, %v1470
        %v1472 = vpop.f32.mrf.mxu0
        %v1473 = vadd.f32 %v682, %v1472
        %1474 = vmatmul.bf16.gmra.mxu0 %v530
        %v1475 = vpop.f32.mrf.mxu0
        %v1476 = vadd.f32 %v682, %v1475
        %v1477 = vpop.f32.mrf.mxu0
        %v1478 = vadd.f32 %v682, %v1477
        %1479 = vmatmul.bf16.gmra.mxu0 %v533
        %v1480 = vpop.f32.mrf.mxu0
        %v1481 = vadd.f32 %v682, %v1480
        %v1482 = vpop.f32.mrf.mxu0
        %v1483 = vadd.f32 %v682, %v1482
        %1484 = vdwg.mxu0
        %1485 = vmatpush.bf16.msra.mxu0 %v1151
        %1486 = vmatpush.bf16.msra.mxu0 %v1146
        %1487 = vmatpush.bf16.msra.mxu0 %v1141
        %1488 = vmatpush.bf16.msra.mxu0 %v1136
        %1489 = vmatpush.bf16.msra.mxu0 %v1131
        %1490 = vmatpush.bf16.msra.mxu0 %v1126
        %1491 = vmatpush.bf16.msra.mxu0 %v1121
        %1492 = vmatpush.bf16.msra.mxu0 %v1116
        %1493 = vmatmul.bf16.gmra.mxu0 %v441
        %v1494 = vpop.f32.mrf.mxu0
        %v1495 = vadd.f32 %v1326, %v1494
        %v1496 = vpop.f32.mrf.mxu0
        %v1497 = vadd.f32 %v1328, %v1496
        %1498 = vmatmul.bf16.gmra.mxu0 %v444
        %v1499 = vpop.f32.mrf.mxu0
        %v1500 = vadd.f32 %v1331, %v1499
        %v1501 = vpop.f32.mrf.mxu0
        %v1502 = vadd.f32 %v1333, %v1501
        %1503 = vmatmul.bf16.gmra.mxu0 %v447
        %v1504 = vpop.f32.mrf.mxu0
        %v1505 = vadd.f32 %v1336, %v1504
        %v1506 = vpop.f32.mrf.mxu0
        %v1507 = vadd.f32 %v1338, %v1506
        %1508 = vmatmul.bf16.gmra.mxu0 %v450
        %v1509 = vpop.f32.mrf.mxu0
        %v1510 = vadd.f32 %v1341, %v1509
        %v1511 = vpop.f32.mrf.mxu0
        %v1512 = vadd.f32 %v1343, %v1511
        %1513 = vmatmul.bf16.gmra.mxu0 %v453
        %v1514 = vpop.f32.mrf.mxu0
        %v1515 = vadd.f32 %v1346, %v1514
        %v1516 = vpop.f32.mrf.mxu0
        %v1517 = vadd.f32 %v1348, %v1516
        %1518 = vmatmul.bf16.gmra.mxu0 %v456
        %v1519 = vpop.f32.mrf.mxu0
        %v1520 = vadd.f32 %v1351, %v1519
        %v1521 = vpop.f32.mrf.mxu0
        %v1522 = vadd.f32 %v1353, %v1521
        %1523 = vmatmul.bf16.gmra.mxu0 %v459
        %v1524 = vpop.f32.mrf.mxu0
        %v1525 = vadd.f32 %v1356, %v1524
        %v1526 = vpop.f32.mrf.mxu0
        %v1527 = vadd.f32 %v1358, %v1526
        %1528 = vmatmul.bf16.gmra.mxu0 %v462
        %v1529 = vpop.f32.mrf.mxu0
        %v1530 = vadd.f32 %v1361, %v1529
        %v1531 = vpop.f32.mrf.mxu0
        %v1532 = vadd.f32 %v1363, %v1531
        %1533 = vmatmul.bf16.gmra.mxu0 %v465
        %v1534 = vpop.f32.mrf.mxu0
        %v1535 = vadd.f32 %v1366, %v1534
        %v1536 = vpop.f32.mrf.mxu0
        %v1537 = vadd.f32 %v1368, %v1536
        %1538 = vmatmul.bf16.gmra.mxu0 %v468
        %v1539 = vpop.f32.mrf.mxu0
        %v1540 = vadd.f32 %v1371, %v1539
        %v1541 = vpop.f32.mrf.mxu0
        %v1542 = vadd.f32 %v1373, %v1541
        %1543 = vmatmul.bf16.gmra.mxu0 %v471
        %v1544 = vpop.f32.mrf.mxu0
        %v1545 = vadd.f32 %v1376, %v1544
        %v1546 = vpop.f32.mrf.mxu0
        %v1547 = vadd.f32 %v1378, %v1546
        %1548 = vmatmul.bf16.gmra.mxu0 %v474
        %v1549 = vpop.f32.mrf.mxu0
        %v1550 = vadd.f32 %v1381, %v1549
        %v1551 = vpop.f32.mrf.mxu0
        %v1552 = vadd.f32 %v1383, %v1551
        %1553 = vmatmul.bf16.gmra.mxu0 %v477
        %v1554 = vpop.f32.mrf.mxu0
        %v1555 = vadd.f32 %v1386, %v1554
        %v1556 = vpop.f32.mrf.mxu0
        %v1557 = vadd.f32 %v1388, %v1556
        %1558 = vmatmul.bf16.gmra.mxu0 %v480
        %v1559 = vpop.f32.mrf.mxu0
        %v1560 = vadd.f32 %v1391, %v1559
        %v1561 = vpop.f32.mrf.mxu0
        %v1562 = vadd.f32 %v1393, %v1561
        %1563 = vmatmul.bf16.gmra.mxu0 %v483
        %v1564 = vpop.f32.mrf.mxu0
        %v1565 = vadd.f32 %v1396, %v1564
        %v1566 = vpop.f32.mrf.mxu0
        %v1567 = vadd.f32 %v1398, %v1566
        %1568 = vmatmul.bf16.gmra.mxu0 %v486
        %v1569 = vpop.f32.mrf.mxu0
        %v1570 = vadd.f32 %v1401, %v1569
        %v1571 = vpop.f32.mrf.mxu0
        %v1572 = vadd.f32 %v1403, %v1571
        %1573 = vmatmul.bf16.gmra.mxu0 %v489
        %v1574 = vpop.f32.mrf.mxu0
        %v1575 = vadd.f32 %v1406, %v1574
        %v1576 = vpop.f32.mrf.mxu0
        %v1577 = vadd.f32 %v1408, %v1576
        %1578 = vmatmul.bf16.gmra.mxu0 %v492
        %v1579 = vpop.f32.mrf.mxu0
        %v1580 = vadd.f32 %v1411, %v1579
        %v1581 = vpop.f32.mrf.mxu0
        %v1582 = vadd.f32 %v1413, %v1581
        %1583 = vmatmul.bf16.gmra.mxu0 %v495
        %v1584 = vpop.f32.mrf.mxu0
        %v1585 = vadd.f32 %v1416, %v1584
        %v1586 = vpop.f32.mrf.mxu0
        %v1587 = vadd.f32 %v1418, %v1586
        %1588 = vmatmul.bf16.gmra.mxu0 %v498
        %v1589 = vpop.f32.mrf.mxu0
        %v1590 = vadd.f32 %v1421, %v1589
        %v1591 = vpop.f32.mrf.mxu0
        %v1592 = vadd.f32 %v1423, %v1591
        %1593 = vmatmul.bf16.gmra.mxu0 %v501
        %v1594 = vpop.f32.mrf.mxu0
        %v1595 = vadd.f32 %v1426, %v1594
        %v1596 = vpop.f32.mrf.mxu0
        %v1597 = vadd.f32 %v1428, %v1596
        %1598 = vmatmul.bf16.gmra.mxu0 %v504
        %v1599 = vpop.f32.mrf.mxu0
        %v1600 = vadd.f32 %v1431, %v1599
        %v1601 = vpop.f32.mrf.mxu0
        %v1602 = vadd.f32 %v1433, %v1601
        %1603 = vmatmul.bf16.gmra.mxu0 %v507
        %v1604 = vpop.f32.mrf.mxu0
        %v1605 = vadd.f32 %v1436, %v1604
        %v1606 = vpop.f32.mrf.mxu0
        %v1607 = vadd.f32 %v1438, %v1606
        %1608 = vmatmul.bf16.gmra.mxu0 %v510
        %v1609 = vpop.f32.mrf.mxu0
        %v1610 = vadd.f32 %v1441, %v1609
        %v1611 = vpop.f32.mrf.mxu0
        %v1612 = vadd.f32 %v1443, %v1611
        %1613 = vmatmul.bf16.gmra.mxu0 %v513
        %v1614 = vpop.f32.mrf.mxu0
        %v1615 = vadd.f32 %v1446, %v1614
        %v1616 = vpop.f32.mrf.mxu0
        %v1617 = vadd.f32 %v1448, %v1616
        %1618 = vmatmul.bf16.gmra.mxu0 %v516
        %v1619 = vpop.f32.mrf.mxu0
        %v1620 = vadd.f32 %v1451, %v1619
        %v1621 = vpop.f32.mrf.mxu0
        %v1622 = vadd.f32 %v1453, %v1621
        %1623 = vmatmul.bf16.gmra.mxu0 %v519
        %v1624 = vpop.f32.mrf.mxu0
        %v1625 = vadd.f32 %v1456, %v1624
        %v1626 = vpop.f32.mrf.mxu0
        %v1627 = vadd.f32 %v1458, %v1626
        %1628 = vmatmul.bf16.gmra.mxu0 %v522
        %v1629 = vpop.f32.mrf.mxu0
        %v1630 = vadd.f32 %v1461, %v1629
        %v1631 = vpop.f32.mrf.mxu0
        %v1632 = vadd.f32 %v1463, %v1631
        %1633 = vmatmul.bf16.gmra.mxu0 %v525
        %v1634 = vpop.f32.mrf.mxu0
        %v1635 = vadd.f32 %v1466, %v1634
        %v1636 = vpop.f32.mrf.mxu0
        %v1637 = vadd.f32 %v1468, %v1636
        %1638 = vmatmul.bf16.gmra.mxu0 %v528
        %v1639 = vpop.f32.mrf.mxu0
        %v1640 = vadd.f32 %v1471, %v1639
        %v1641 = vpop.f32.mrf.mxu0
        %v1642 = vadd.f32 %v1473, %v1641
        %1643 = vmatmul.bf16.gmra.mxu0 %v531
        %v1644 = vpop.f32.mrf.mxu0
        %v1645 = vadd.f32 %v1476, %v1644
        %v1646 = vpop.f32.mrf.mxu0
        %v1647 = vadd.f32 %v1478, %v1646
        %1648 = vmatmul.bf16.gmra.mxu0 %v534
        %v1649 = vpop.f32.mrf.mxu0
        %v1650 = vadd.f32 %v1481, %v1649
        %v1651 = vpop.f32.mrf.mxu0
        %v1652 = vadd.f32 %v1483, %v1651
        %1653 = vdwg.mxu0
        %1654 = vmatpush.bf16.msra.mxu0 %v1191
        %1655 = vmatpush.bf16.msra.mxu0 %v1186
        %1656 = vmatpush.bf16.msra.mxu0 %v1181
        %1657 = vmatpush.bf16.msra.mxu0 %v1176
        %1658 = vmatpush.bf16.msra.mxu0 %v1171
        %1659 = vmatpush.bf16.msra.mxu0 %v1166
        %1660 = vmatpush.bf16.msra.mxu0 %v1161
        %1661 = vmatpush.bf16.msra.mxu0 %v1156
        %1662 = vmatmul.bf16.gmra.mxu0 %v442
        %v1663 = vpop.f32.mrf.mxu0
        %v1664 = vadd.f32 %v1495, %v1663
        %v1665 = vpop.f32.mrf.mxu0
        %v1666 = vadd.f32 %v1497, %v1665
        %1667 = vmatmul.bf16.gmra.mxu0 %v445
        %v1668 = vpop.f32.mrf.mxu0
        %v1669 = vadd.f32 %v1500, %v1668
        %v1670 = vpop.f32.mrf.mxu0
        %v1671 = vadd.f32 %v1502, %v1670
        %1672 = vmatmul.bf16.gmra.mxu0 %v448
        %v1673 = vpop.f32.mrf.mxu0
        %v1674 = vadd.f32 %v1505, %v1673
        %v1675 = vpop.f32.mrf.mxu0
        %v1676 = vadd.f32 %v1507, %v1675
        %1677 = vmatmul.bf16.gmra.mxu0 %v451
        %v1678 = vpop.f32.mrf.mxu0
        %v1679 = vadd.f32 %v1510, %v1678
        %v1680 = vpop.f32.mrf.mxu0
        %v1681 = vadd.f32 %v1512, %v1680
        %1682 = vmatmul.bf16.gmra.mxu0 %v454
        %v1683 = vpop.f32.mrf.mxu0
        %v1684 = vadd.f32 %v1515, %v1683
        %v1685 = vpop.f32.mrf.mxu0
        %v1686 = vadd.f32 %v1517, %v1685
        %1687 = vmatmul.bf16.gmra.mxu0 %v457
        %v1688 = vpop.f32.mrf.mxu0
        %v1689 = vadd.f32 %v1520, %v1688
        %v1690 = vpop.f32.mrf.mxu0
        %v1691 = vadd.f32 %v1522, %v1690
        %1692 = vmatmul.bf16.gmra.mxu0 %v460
        %v1693 = vpop.f32.mrf.mxu0
        %v1694 = vadd.f32 %v1525, %v1693
        %v1695 = vpop.f32.mrf.mxu0
        %v1696 = vadd.f32 %v1527, %v1695
        %1697 = vmatmul.bf16.gmra.mxu0 %v463
        %v1698 = vpop.f32.mrf.mxu0
        %v1699 = vadd.f32 %v1530, %v1698
        %v1700 = vpop.f32.mrf.mxu0
        %v1701 = vadd.f32 %v1532, %v1700
        %1702 = vmatmul.bf16.gmra.mxu0 %v466
        %v1703 = vpop.f32.mrf.mxu0
        %v1704 = vadd.f32 %v1535, %v1703
        %v1705 = vpop.f32.mrf.mxu0
        %v1706 = vadd.f32 %v1537, %v1705
        %1707 = vmatmul.bf16.gmra.mxu0 %v469
        %v1708 = vpop.f32.mrf.mxu0
        %v1709 = vadd.f32 %v1540, %v1708
        %v1710 = vpop.f32.mrf.mxu0
        %v1711 = vadd.f32 %v1542, %v1710
        %1712 = vmatmul.bf16.gmra.mxu0 %v472
        %v1713 = vpop.f32.mrf.mxu0
        %v1714 = vadd.f32 %v1545, %v1713
        %v1715 = vpop.f32.mrf.mxu0
        %v1716 = vadd.f32 %v1547, %v1715
        %1717 = vmatmul.bf16.gmra.mxu0 %v475
        %v1718 = vpop.f32.mrf.mxu0
        %v1719 = vadd.f32 %v1550, %v1718
        %v1720 = vpop.f32.mrf.mxu0
        %v1721 = vadd.f32 %v1552, %v1720
        %1722 = vmatmul.bf16.gmra.mxu0 %v478
        %v1723 = vpop.f32.mrf.mxu0
        %v1724 = vadd.f32 %v1555, %v1723
        %v1725 = vpop.f32.mrf.mxu0
        %v1726 = vadd.f32 %v1557, %v1725
        %1727 = vmatmul.bf16.gmra.mxu0 %v481
        %v1728 = vpop.f32.mrf.mxu0
        %v1729 = vadd.f32 %v1560, %v1728
        %v1730 = vpop.f32.mrf.mxu0
        %v1731 = vadd.f32 %v1562, %v1730
        %1732 = vmatmul.bf16.gmra.mxu0 %v484
        %v1733 = vpop.f32.mrf.mxu0
        %v1734 = vadd.f32 %v1565, %v1733
        %v1735 = vpop.f32.mrf.mxu0
        %v1736 = vadd.f32 %v1567, %v1735
        %1737 = vmatmul.bf16.gmra.mxu0 %v487
        %v1738 = vpop.f32.mrf.mxu0
        %v1739 = vadd.f32 %v1570, %v1738
        %v1740 = vpop.f32.mrf.mxu0
        %v1741 = vadd.f32 %v1572, %v1740
        %1742 = vmatmul.bf16.gmra.mxu0 %v490
        %v1743 = vpop.f32.mrf.mxu0
        %v1744 = vadd.f32 %v1575, %v1743
        %v1745 = vpop.f32.mrf.mxu0
        %v1746 = vadd.f32 %v1577, %v1745
        %1747 = vmatmul.bf16.gmra.mxu0 %v493
        %v1748 = vpop.f32.mrf.mxu0
        %v1749 = vadd.f32 %v1580, %v1748
        %v1750 = vpop.f32.mrf.mxu0
        %v1751 = vadd.f32 %v1582, %v1750
        %1752 = vmatmul.bf16.gmra.mxu0 %v496
        %v1753 = vpop.f32.mrf.mxu0
        %v1754 = vadd.f32 %v1585, %v1753
        %v1755 = vpop.f32.mrf.mxu0
        %v1756 = vadd.f32 %v1587, %v1755
        %1757 = vmatmul.bf16.gmra.mxu0 %v499
        %v1758 = vpop.f32.mrf.mxu0
        %v1759 = vadd.f32 %v1590, %v1758
        %v1760 = vpop.f32.mrf.mxu0
        %v1761 = vadd.f32 %v1592, %v1760
        %1762 = vmatmul.bf16.gmra.mxu0 %v502
        %v1763 = vpop.f32.mrf.mxu0
        %v1764 = vadd.f32 %v1595, %v1763
        %v1765 = vpop.f32.mrf.mxu0
        %v1766 = vadd.f32 %v1597, %v1765
        %1767 = vmatmul.bf16.gmra.mxu0 %v505
        %v1768 = vpop.f32.mrf.mxu0
        %v1769 = vadd.f32 %v1600, %v1768
        %v1770 = vpop.f32.mrf.mxu0
        %v1771 = vadd.f32 %v1602, %v1770
        %1772 = vmatmul.bf16.gmra.mxu0 %v508
        %v1773 = vpop.f32.mrf.mxu0
        %v1774 = vadd.f32 %v1605, %v1773
        %v1775 = vpop.f32.mrf.mxu0
        %v1776 = vadd.f32 %v1607, %v1775
        %1777 = vmatmul.bf16.gmra.mxu0 %v511
        %v1778 = vpop.f32.mrf.mxu0
        %v1779 = vadd.f32 %v1610, %v1778
        %v1780 = vpop.f32.mrf.mxu0
        %v1781 = vadd.f32 %v1612, %v1780
        %1782 = vmatmul.bf16.gmra.mxu0 %v514
        %v1783 = vpop.f32.mrf.mxu0
        %v1784 = vadd.f32 %v1615, %v1783
        %v1785 = vpop.f32.mrf.mxu0
        %v1786 = vadd.f32 %v1617, %v1785
        %1787 = vmatmul.bf16.gmra.mxu0 %v517
        %v1788 = vpop.f32.mrf.mxu0
        %v1789 = vadd.f32 %v1620, %v1788
        %v1790 = vpop.f32.mrf.mxu0
        %v1791 = vadd.f32 %v1622, %v1790
        %1792 = vmatmul.bf16.gmra.mxu0 %v520
        %v1793 = vpop.f32.mrf.mxu0
        %v1794 = vadd.f32 %v1625, %v1793
        %v1795 = vpop.f32.mrf.mxu0
        %v1796 = vadd.f32 %v1627, %v1795
        %1797 = vmatmul.bf16.gmra.mxu0 %v523
        %v1798 = vpop.f32.mrf.mxu0
        %v1799 = vadd.f32 %v1630, %v1798
        %v1800 = vpop.f32.mrf.mxu0
        %v1801 = vadd.f32 %v1632, %v1800
        %1802 = vmatmul.bf16.gmra.mxu0 %v526
        %v1803 = vpop.f32.mrf.mxu0
        %v1804 = vadd.f32 %v1635, %v1803
        %v1805 = vpop.f32.mrf.mxu0
        %v1806 = vadd.f32 %v1637, %v1805
        %1807 = vmatmul.bf16.gmra.mxu0 %v529
        %v1808 = vpop.f32.mrf.mxu0
        %v1809 = vadd.f32 %v1640, %v1808
        %v1810 = vpop.f32.mrf.mxu0
        %v1811 = vadd.f32 %v1642, %v1810
        %1812 = vmatmul.bf16.gmra.mxu0 %v532
        %v1813 = vpop.f32.mrf.mxu0
        %v1814 = vadd.f32 %v1645, %v1813
        %v1815 = vpop.f32.mrf.mxu0
        %v1816 = vadd.f32 %v1647, %v1815
        %1817 = vmatmul.bf16.gmra.mxu0 %v535
        %v1818 = vpop.f32.mrf.mxu0
        %v1819 = vadd.f32 %v1650, %v1818
        %v1820 = vpop.f32.mrf.mxu0
        %v1821 = vadd.f32 %v1652, %v1820
        %1822 = vdwg.mxu0
        %1823 = vmatpush.bf16.msra.mxu0 %v1112
        %1824 = vmatpush.bf16.msra.mxu0 %v1107
        %1825 = vmatpush.bf16.msra.mxu0 %v1102
        %1826 = vmatpush.bf16.msra.mxu0 %v1097
        %1827 = vmatpush.bf16.msra.mxu0 %v1092
        %1828 = vmatpush.bf16.msra.mxu0 %v1087
        %1829 = vmatpush.bf16.msra.mxu0 %v1082
        %1830 = vmatpush.bf16.msra.mxu0 %v1077
        %1831 = vmatmul.bf16.gmra.mxu0 %v440
        %v1832 = vpop.f32.mrf.mxu0
        %v1833 = vadd.f32 %v683, %v1832
        %v1834 = vpop.f32.mrf.mxu0
        %v1835 = vadd.f32 %v683, %v1834
        %1836 = vmatmul.bf16.gmra.mxu0 %v443
        %v1837 = vpop.f32.mrf.mxu0
        %v1838 = vadd.f32 %v683, %v1837
        %v1839 = vpop.f32.mrf.mxu0
        %v1840 = vadd.f32 %v683, %v1839
        %1841 = vmatmul.bf16.gmra.mxu0 %v446
        %v1842 = vpop.f32.mrf.mxu0
        %v1843 = vadd.f32 %v683, %v1842
        %v1844 = vpop.f32.mrf.mxu0
        %v1845 = vadd.f32 %v683, %v1844
        %1846 = vmatmul.bf16.gmra.mxu0 %v449
        %v1847 = vpop.f32.mrf.mxu0
        %v1848 = vadd.f32 %v683, %v1847
        %v1849 = vpop.f32.mrf.mxu0
        %v1850 = vadd.f32 %v683, %v1849
        %1851 = vmatmul.bf16.gmra.mxu0 %v452
        %v1852 = vpop.f32.mrf.mxu0
        %v1853 = vadd.f32 %v683, %v1852
        %v1854 = vpop.f32.mrf.mxu0
        %v1855 = vadd.f32 %v683, %v1854
        %1856 = vmatmul.bf16.gmra.mxu0 %v455
        %v1857 = vpop.f32.mrf.mxu0
        %v1858 = vadd.f32 %v683, %v1857
        %v1859 = vpop.f32.mrf.mxu0
        %v1860 = vadd.f32 %v683, %v1859
        %1861 = vmatmul.bf16.gmra.mxu0 %v458
        %v1862 = vpop.f32.mrf.mxu0
        %v1863 = vadd.f32 %v683, %v1862
        %v1864 = vpop.f32.mrf.mxu0
        %v1865 = vadd.f32 %v683, %v1864
        %1866 = vmatmul.bf16.gmra.mxu0 %v461
        %v1867 = vpop.f32.mrf.mxu0
        %v1868 = vadd.f32 %v683, %v1867
        %v1869 = vpop.f32.mrf.mxu0
        %v1870 = vadd.f32 %v683, %v1869
        %1871 = vmatmul.bf16.gmra.mxu0 %v464
        %v1872 = vpop.f32.mrf.mxu0
        %v1873 = vadd.f32 %v683, %v1872
        %v1874 = vpop.f32.mrf.mxu0
        %v1875 = vadd.f32 %v683, %v1874
        %1876 = vmatmul.bf16.gmra.mxu0 %v467
        %v1877 = vpop.f32.mrf.mxu0
        %v1878 = vadd.f32 %v683, %v1877
        %v1879 = vpop.f32.mrf.mxu0
        %v1880 = vadd.f32 %v683, %v1879
        %1881 = vmatmul.bf16.gmra.mxu0 %v470
        %v1882 = vpop.f32.mrf.mxu0
        %v1883 = vadd.f32 %v683, %v1882
        %v1884 = vpop.f32.mrf.mxu0
        %v1885 = vadd.f32 %v683, %v1884
        %1886 = vmatmul.bf16.gmra.mxu0 %v473
        %v1887 = vpop.f32.mrf.mxu0
        %v1888 = vadd.f32 %v683, %v1887
        %v1889 = vpop.f32.mrf.mxu0
        %v1890 = vadd.f32 %v683, %v1889
        %1891 = vmatmul.bf16.gmra.mxu0 %v476
        %v1892 = vpop.f32.mrf.mxu0
        %v1893 = vadd.f32 %v683, %v1892
        %v1894 = vpop.f32.mrf.mxu0
        %v1895 = vadd.f32 %v683, %v1894
        %1896 = vmatmul.bf16.gmra.mxu0 %v479
        %v1897 = vpop.f32.mrf.mxu0
        %v1898 = vadd.f32 %v683, %v1897
        %v1899 = vpop.f32.mrf.mxu0
        %v1900 = vadd.f32 %v683, %v1899
        %1901 = vmatmul.bf16.gmra.mxu0 %v482
        %v1902 = vpop.f32.mrf.mxu0
        %v1903 = vadd.f32 %v683, %v1902
        %v1904 = vpop.f32.mrf.mxu0
        %v1905 = vadd.f32 %v683, %v1904
        %1906 = vmatmul.bf16.gmra.mxu0 %v485
        %v1907 = vpop.f32.mrf.mxu0
        %v1908 = vadd.f32 %v683, %v1907
        %v1909 = vpop.f32.mrf.mxu0
        %v1910 = vadd.f32 %v683, %v1909
        %1911 = vmatmul.bf16.gmra.mxu0 %v488
        %v1912 = vpop.f32.mrf.mxu0
        %v1913 = vadd.f32 %v683, %v1912
        %v1914 = vpop.f32.mrf.mxu0
        %v1915 = vadd.f32 %v683, %v1914
        %1916 = vmatmul.bf16.gmra.mxu0 %v491
        %v1917 = vpop.f32.mrf.mxu0
        %v1918 = vadd.f32 %v683, %v1917
        %v1919 = vpop.f32.mrf.mxu0
        %v1920 = vadd.f32 %v683, %v1919
        %1921 = vmatmul.bf16.gmra.mxu0 %v494
        %v1922 = vpop.f32.mrf.mxu0
        %v1923 = vadd.f32 %v683, %v1922
        %v1924 = vpop.f32.mrf.mxu0
        %v1925 = vadd.f32 %v683, %v1924
        %1926 = vmatmul.bf16.gmra.mxu0 %v497
        %v1927 = vpop.f32.mrf.mxu0
        %v1928 = vadd.f32 %v683, %v1927
        %v1929 = vpop.f32.mrf.mxu0
        %v1930 = vadd.f32 %v683, %v1929
        %1931 = vmatmul.bf16.gmra.mxu0 %v500
        %v1932 = vpop.f32.mrf.mxu0
        %v1933 = vadd.f32 %v683, %v1932
        %v1934 = vpop.f32.mrf.mxu0
        %v1935 = vadd.f32 %v683, %v1934
        %1936 = vmatmul.bf16.gmra.mxu0 %v503
        %v1937 = vpop.f32.mrf.mxu0
        %v1938 = vadd.f32 %v683, %v1937
        %v1939 = vpop.f32.mrf.mxu0
        %v1940 = vadd.f32 %v683, %v1939
        %1941 = vmatmul.bf16.gmra.mxu0 %v506
        %v1942 = vpop.f32.mrf.mxu0
        %v1943 = vadd.f32 %v683, %v1942
        %v1944 = vpop.f32.mrf.mxu0
        %v1945 = vadd.f32 %v683, %v1944
        %1946 = vmatmul.bf16.gmra.mxu0 %v509
        %v1947 = vpop.f32.mrf.mxu0
        %v1948 = vadd.f32 %v683, %v1947
        %v1949 = vpop.f32.mrf.mxu0
        %v1950 = vadd.f32 %v683, %v1949
        %1951 = vmatmul.bf16.gmra.mxu0 %v512
        %v1952 = vpop.f32.mrf.mxu0
        %v1953 = vadd.f32 %v683, %v1952
        %v1954 = vpop.f32.mrf.mxu0
        %v1955 = vadd.f32 %v683, %v1954
        %1956 = vmatmul.bf16.gmra.mxu0 %v515
        %v1957 = vpop.f32.mrf.mxu0
        %v1958 = vadd.f32 %v683, %v1957
        %v1959 = vpop.f32.mrf.mxu0
        %v1960 = vadd.f32 %v683, %v1959
        %1961 = vmatmul.bf16.gmra.mxu0 %v518
        %v1962 = vpop.f32.mrf.mxu0
        %v1963 = vadd.f32 %v683, %v1962
        %v1964 = vpop.f32.mrf.mxu0
        %v1965 = vadd.f32 %v683, %v1964
        %1966 = vmatmul.bf16.gmra.mxu0 %v521
        %v1967 = vpop.f32.mrf.mxu0
        %v1968 = vadd.f32 %v683, %v1967
        %v1969 = vpop.f32.mrf.mxu0
        %v1970 = vadd.f32 %v683, %v1969
        %1971 = vmatmul.bf16.gmra.mxu0 %v524
        %v1972 = vpop.f32.mrf.mxu0
        %v1973 = vadd.f32 %v683, %v1972
        %v1974 = vpop.f32.mrf.mxu0
        %v1975 = vadd.f32 %v683, %v1974
        %1976 = vmatmul.bf16.gmra.mxu0 %v527
        %v1977 = vpop.f32.mrf.mxu0
        %v1978 = vadd.f32 %v683, %v1977
        %v1979 = vpop.f32.mrf.mxu0
        %v1980 = vadd.f32 %v683, %v1979
        %1981 = vmatmul.bf16.gmra.mxu0 %v530
        %v1982 = vpop.f32.mrf.mxu0
        %v1983 = vadd.f32 %v683, %v1982
        %v1984 = vpop.f32.mrf.mxu0
        %v1985 = vadd.f32 %v683, %v1984
        %1986 = vmatmul.bf16.gmra.mxu0 %v533
        %v1987 = vpop.f32.mrf.mxu0
        %v1988 = vadd.f32 %v683, %v1987
        %v1989 = vpop.f32.mrf.mxu0
        %v1990 = vadd.f32 %v683, %v1989
        %1991 = vdwg.mxu0
        %1992 = vmatpush.bf16.msra.mxu0 %v1152
        %1993 = vmatpush.bf16.msra.mxu0 %v1147
        %1994 = vmatpush.bf16.msra.mxu0 %v1142
        %1995 = vmatpush.bf16.msra.mxu0 %v1137
        %1996 = vmatpush.bf16.msra.mxu0 %v1132
        %1997 = vmatpush.bf16.msra.mxu0 %v1127
        %1998 = vmatpush.bf16.msra.mxu0 %v1122
        %1999 = vmatpush.bf16.msra.mxu0 %v1117
        %2000 = vmatmul.bf16.gmra.mxu0 %v441
        %v2001 = vpop.f32.mrf.mxu0
        %v2002 = vadd.f32 %v1833, %v2001
        %v2003 = vpop.f32.mrf.mxu0
        %v2004 = vadd.f32 %v1835, %v2003
        %2005 = vmatmul.bf16.gmra.mxu0 %v444
        %v2006 = vpop.f32.mrf.mxu0
        %v2007 = vadd.f32 %v1838, %v2006
        %v2008 = vpop.f32.mrf.mxu0
        %v2009 = vadd.f32 %v1840, %v2008
        %2010 = vmatmul.bf16.gmra.mxu0 %v447
        %v2011 = vpop.f32.mrf.mxu0
        %v2012 = vadd.f32 %v1843, %v2011
        %v2013 = vpop.f32.mrf.mxu0
        %v2014 = vadd.f32 %v1845, %v2013
        %2015 = vmatmul.bf16.gmra.mxu0 %v450
        %v2016 = vpop.f32.mrf.mxu0
        %v2017 = vadd.f32 %v1848, %v2016
        %v2018 = vpop.f32.mrf.mxu0
        %v2019 = vadd.f32 %v1850, %v2018
        %2020 = vmatmul.bf16.gmra.mxu0 %v453
        %v2021 = vpop.f32.mrf.mxu0
        %v2022 = vadd.f32 %v1853, %v2021
        %v2023 = vpop.f32.mrf.mxu0
        %v2024 = vadd.f32 %v1855, %v2023
        %2025 = vmatmul.bf16.gmra.mxu0 %v456
        %v2026 = vpop.f32.mrf.mxu0
        %v2027 = vadd.f32 %v1858, %v2026
        %v2028 = vpop.f32.mrf.mxu0
        %v2029 = vadd.f32 %v1860, %v2028
        %2030 = vmatmul.bf16.gmra.mxu0 %v459
        %v2031 = vpop.f32.mrf.mxu0
        %v2032 = vadd.f32 %v1863, %v2031
        %v2033 = vpop.f32.mrf.mxu0
        %v2034 = vadd.f32 %v1865, %v2033
        %2035 = vmatmul.bf16.gmra.mxu0 %v462
        %v2036 = vpop.f32.mrf.mxu0
        %v2037 = vadd.f32 %v1868, %v2036
        %v2038 = vpop.f32.mrf.mxu0
        %v2039 = vadd.f32 %v1870, %v2038
        %2040 = vmatmul.bf16.gmra.mxu0 %v465
        %v2041 = vpop.f32.mrf.mxu0
        %v2042 = vadd.f32 %v1873, %v2041
        %v2043 = vpop.f32.mrf.mxu0
        %v2044 = vadd.f32 %v1875, %v2043
        %2045 = vmatmul.bf16.gmra.mxu0 %v468
        %v2046 = vpop.f32.mrf.mxu0
        %v2047 = vadd.f32 %v1878, %v2046
        %v2048 = vpop.f32.mrf.mxu0
        %v2049 = vadd.f32 %v1880, %v2048
        %2050 = vmatmul.bf16.gmra.mxu0 %v471
        %v2051 = vpop.f32.mrf.mxu0
        %v2052 = vadd.f32 %v1883, %v2051
        %v2053 = vpop.f32.mrf.mxu0
        %v2054 = vadd.f32 %v1885, %v2053
        %2055 = vmatmul.bf16.gmra.mxu0 %v474
        %v2056 = vpop.f32.mrf.mxu0
        %v2057 = vadd.f32 %v1888, %v2056
        %v2058 = vpop.f32.mrf.mxu0
        %v2059 = vadd.f32 %v1890, %v2058
        %2060 = vmatmul.bf16.gmra.mxu0 %v477
        %v2061 = vpop.f32.mrf.mxu0
        %v2062 = vadd.f32 %v1893, %v2061
        %v2063 = vpop.f32.mrf.mxu0
        %v2064 = vadd.f32 %v1895, %v2063
        %2065 = vmatmul.bf16.gmra.mxu0 %v480
        %v2066 = vpop.f32.mrf.mxu0
        %v2067 = vadd.f32 %v1898, %v2066
        %v2068 = vpop.f32.mrf.mxu0
        %v2069 = vadd.f32 %v1900, %v2068
        %2070 = vmatmul.bf16.gmra.mxu0 %v483
        %v2071 = vpop.f32.mrf.mxu0
        %v2072 = vadd.f32 %v1903, %v2071
        %v2073 = vpop.f32.mrf.mxu0
        %v2074 = vadd.f32 %v1905, %v2073
        %2075 = vmatmul.bf16.gmra.mxu0 %v486
        %v2076 = vpop.f32.mrf.mxu0
        %v2077 = vadd.f32 %v1908, %v2076
        %v2078 = vpop.f32.mrf.mxu0
        %v2079 = vadd.f32 %v1910, %v2078
        %2080 = vmatmul.bf16.gmra.mxu0 %v489
        %v2081 = vpop.f32.mrf.mxu0
        %v2082 = vadd.f32 %v1913, %v2081
        %v2083 = vpop.f32.mrf.mxu0
        %v2084 = vadd.f32 %v1915, %v2083
        %2085 = vmatmul.bf16.gmra.mxu0 %v492
        %v2086 = vpop.f32.mrf.mxu0
        %v2087 = vadd.f32 %v1918, %v2086
        %v2088 = vpop.f32.mrf.mxu0
        %v2089 = vadd.f32 %v1920, %v2088
        %2090 = vmatmul.bf16.gmra.mxu0 %v495
        %v2091 = vpop.f32.mrf.mxu0
        %v2092 = vadd.f32 %v1923, %v2091
        %v2093 = vpop.f32.mrf.mxu0
        %v2094 = vadd.f32 %v1925, %v2093
        %2095 = vmatmul.bf16.gmra.mxu0 %v498
        %v2096 = vpop.f32.mrf.mxu0
        %v2097 = vadd.f32 %v1928, %v2096
        %v2098 = vpop.f32.mrf.mxu0
        %v2099 = vadd.f32 %v1930, %v2098
        %2100 = vmatmul.bf16.gmra.mxu0 %v501
        %v2101 = vpop.f32.mrf.mxu0
        %v2102 = vadd.f32 %v1933, %v2101
        %v2103 = vpop.f32.mrf.mxu0
        %v2104 = vadd.f32 %v1935, %v2103
        %2105 = vmatmul.bf16.gmra.mxu0 %v504
        %v2106 = vpop.f32.mrf.mxu0
        %v2107 = vadd.f32 %v1938, %v2106
        %v2108 = vpop.f32.mrf.mxu0
        %v2109 = vadd.f32 %v1940, %v2108
        %2110 = vmatmul.bf16.gmra.mxu0 %v507
        %v2111 = vpop.f32.mrf.mxu0
        %v2112 = vadd.f32 %v1943, %v2111
        %v2113 = vpop.f32.mrf.mxu0
        %v2114 = vadd.f32 %v1945, %v2113
        %2115 = vmatmul.bf16.gmra.mxu0 %v510
        %v2116 = vpop.f32.mrf.mxu0
        %v2117 = vadd.f32 %v1948, %v2116
        %v2118 = vpop.f32.mrf.mxu0
        %v2119 = vadd.f32 %v1950, %v2118
        %2120 = vmatmul.bf16.gmra.mxu0 %v513
        %v2121 = vpop.f32.mrf.mxu0
        %v2122 = vadd.f32 %v1953, %v2121
        %v2123 = vpop.f32.mrf.mxu0
        %v2124 = vadd.f32 %v1955, %v2123
        %2125 = vmatmul.bf16.gmra.mxu0 %v516
        %v2126 = vpop.f32.mrf.mxu0
        %v2127 = vadd.f32 %v1958, %v2126
        %v2128 = vpop.f32.mrf.mxu0
        %v2129 = vadd.f32 %v1960, %v2128
        %2130 = vmatmul.bf16.gmra.mxu0 %v519
        %v2131 = vpop.f32.mrf.mxu0
        %v2132 = vadd.f32 %v1963, %v2131
        %v2133 = vpop.f32.mrf.mxu0
        %v2134 = vadd.f32 %v1965, %v2133
        %2135 = vmatmul.bf16.gmra.mxu0 %v522
        %v2136 = vpop.f32.mrf.mxu0
        %v2137 = vadd.f32 %v1968, %v2136
        %v2138 = vpop.f32.mrf.mxu0
        %v2139 = vadd.f32 %v1970, %v2138
        %2140 = vmatmul.bf16.gmra.mxu0 %v525
        %v2141 = vpop.f32.mrf.mxu0
        %v2142 = vadd.f32 %v1973, %v2141
        %v2143 = vpop.f32.mrf.mxu0
        %v2144 = vadd.f32 %v1975, %v2143
        %2145 = vmatmul.bf16.gmra.mxu0 %v528
        %v2146 = vpop.f32.mrf.mxu0
        %v2147 = vadd.f32 %v1978, %v2146
        %v2148 = vpop.f32.mrf.mxu0
        %v2149 = vadd.f32 %v1980, %v2148
        %2150 = vmatmul.bf16.gmra.mxu0 %v531
        %v2151 = vpop.f32.mrf.mxu0
        %v2152 = vadd.f32 %v1983, %v2151
        %v2153 = vpop.f32.mrf.mxu0
        %v2154 = vadd.f32 %v1985, %v2153
        %2155 = vmatmul.bf16.gmra.mxu0 %v534
        %v2156 = vpop.f32.mrf.mxu0
        %v2157 = vadd.f32 %v1988, %v2156
        %v2158 = vpop.f32.mrf.mxu0
        %v2159 = vadd.f32 %v1990, %v2158
        %2160 = vdwg.mxu0
        %2161 = vmatpush.bf16.msra.mxu0 %v1192
        %2162 = vmatpush.bf16.msra.mxu0 %v1187
        %2163 = vmatpush.bf16.msra.mxu0 %v1182
        %2164 = vmatpush.bf16.msra.mxu0 %v1177
        %2165 = vmatpush.bf16.msra.mxu0 %v1172
        %2166 = vmatpush.bf16.msra.mxu0 %v1167
        %2167 = vmatpush.bf16.msra.mxu0 %v1162
        %2168 = vmatpush.bf16.msra.mxu0 %v1157
        %2169 = vmatmul.bf16.gmra.mxu0 %v442
        %v2170 = vpop.f32.mrf.mxu0
        %v2171 = vadd.f32 %v2002, %v2170
        %v2172 = vpop.f32.mrf.mxu0
        %v2173 = vadd.f32 %v2004, %v2172
        %2174 = vmatmul.bf16.gmra.mxu0 %v445
        %v2175 = vpop.f32.mrf.mxu0
        %v2176 = vadd.f32 %v2007, %v2175
        %v2177 = vpop.f32.mrf.mxu0
        %v2178 = vadd.f32 %v2009, %v2177
        %2179 = vmatmul.bf16.gmra.mxu0 %v448
        %v2180 = vpop.f32.mrf.mxu0
        %v2181 = vadd.f32 %v2012, %v2180
        %v2182 = vpop.f32.mrf.mxu0
        %v2183 = vadd.f32 %v2014, %v2182
        %2184 = vmatmul.bf16.gmra.mxu0 %v451
        %v2185 = vpop.f32.mrf.mxu0
        %v2186 = vadd.f32 %v2017, %v2185
        %v2187 = vpop.f32.mrf.mxu0
        %v2188 = vadd.f32 %v2019, %v2187
        %2189 = vmatmul.bf16.gmra.mxu0 %v454
        %v2190 = vpop.f32.mrf.mxu0
        %v2191 = vadd.f32 %v2022, %v2190
        %v2192 = vpop.f32.mrf.mxu0
        %v2193 = vadd.f32 %v2024, %v2192
        %2194 = vmatmul.bf16.gmra.mxu0 %v457
        %v2195 = vpop.f32.mrf.mxu0
        %v2196 = vadd.f32 %v2027, %v2195
        %v2197 = vpop.f32.mrf.mxu0
        %v2198 = vadd.f32 %v2029, %v2197
        %2199 = vmatmul.bf16.gmra.mxu0 %v460
        %v2200 = vpop.f32.mrf.mxu0
        %v2201 = vadd.f32 %v2032, %v2200
        %v2202 = vpop.f32.mrf.mxu0
        %v2203 = vadd.f32 %v2034, %v2202
        %2204 = vmatmul.bf16.gmra.mxu0 %v463
        %v2205 = vpop.f32.mrf.mxu0
        %v2206 = vadd.f32 %v2037, %v2205
        %v2207 = vpop.f32.mrf.mxu0
        %v2208 = vadd.f32 %v2039, %v2207
        %2209 = vmatmul.bf16.gmra.mxu0 %v466
        %v2210 = vpop.f32.mrf.mxu0
        %v2211 = vadd.f32 %v2042, %v2210
        %v2212 = vpop.f32.mrf.mxu0
        %v2213 = vadd.f32 %v2044, %v2212
        %2214 = vmatmul.bf16.gmra.mxu0 %v469
        %v2215 = vpop.f32.mrf.mxu0
        %v2216 = vadd.f32 %v2047, %v2215
        %v2217 = vpop.f32.mrf.mxu0
        %v2218 = vadd.f32 %v2049, %v2217
        %2219 = vmatmul.bf16.gmra.mxu0 %v472
        %v2220 = vpop.f32.mrf.mxu0
        %v2221 = vadd.f32 %v2052, %v2220
        %v2222 = vpop.f32.mrf.mxu0
        %v2223 = vadd.f32 %v2054, %v2222
        %2224 = vmatmul.bf16.gmra.mxu0 %v475
        %v2225 = vpop.f32.mrf.mxu0
        %v2226 = vadd.f32 %v2057, %v2225
        %v2227 = vpop.f32.mrf.mxu0
        %v2228 = vadd.f32 %v2059, %v2227
        %2229 = vmatmul.bf16.gmra.mxu0 %v478
        %v2230 = vpop.f32.mrf.mxu0
        %v2231 = vadd.f32 %v2062, %v2230
        %v2232 = vpop.f32.mrf.mxu0
        %v2233 = vadd.f32 %v2064, %v2232
        %2234 = vmatmul.bf16.gmra.mxu0 %v481
        %v2235 = vpop.f32.mrf.mxu0
        %v2236 = vadd.f32 %v2067, %v2235
        %v2237 = vpop.f32.mrf.mxu0
        %v2238 = vadd.f32 %v2069, %v2237
        %2239 = vmatmul.bf16.gmra.mxu0 %v484
        %v2240 = vpop.f32.mrf.mxu0
        %v2241 = vadd.f32 %v2072, %v2240
        %v2242 = vpop.f32.mrf.mxu0
        %v2243 = vadd.f32 %v2074, %v2242
        %2244 = vmatmul.bf16.gmra.mxu0 %v487
        %v2245 = vpop.f32.mrf.mxu0
        %v2246 = vadd.f32 %v2077, %v2245
        %v2247 = vpop.f32.mrf.mxu0
        %v2248 = vadd.f32 %v2079, %v2247
        %2249 = vmatmul.bf16.gmra.mxu0 %v490
        %v2250 = vpop.f32.mrf.mxu0
        %v2251 = vadd.f32 %v2082, %v2250
        %v2252 = vpop.f32.mrf.mxu0
        %v2253 = vadd.f32 %v2084, %v2252
        %2254 = vmatmul.bf16.gmra.mxu0 %v493
        %v2255 = vpop.f32.mrf.mxu0
        %v2256 = vadd.f32 %v2087, %v2255
        %v2257 = vpop.f32.mrf.mxu0
        %v2258 = vadd.f32 %v2089, %v2257
        %2259 = vmatmul.bf16.gmra.mxu0 %v496
        %v2260 = vpop.f32.mrf.mxu0
        %v2261 = vadd.f32 %v2092, %v2260
        %v2262 = vpop.f32.mrf.mxu0
        %v2263 = vadd.f32 %v2094, %v2262
        %2264 = vmatmul.bf16.gmra.mxu0 %v499
        %v2265 = vpop.f32.mrf.mxu0
        %v2266 = vadd.f32 %v2097, %v2265
        %v2267 = vpop.f32.mrf.mxu0
        %v2268 = vadd.f32 %v2099, %v2267
        %2269 = vmatmul.bf16.gmra.mxu0 %v502
        %v2270 = vpop.f32.mrf.mxu0
        %v2271 = vadd.f32 %v2102, %v2270
        %v2272 = vpop.f32.mrf.mxu0
        %v2273 = vadd.f32 %v2104, %v2272
        %2274 = vmatmul.bf16.gmra.mxu0 %v505
        %v2275 = vpop.f32.mrf.mxu0
        %v2276 = vadd.f32 %v2107, %v2275
        %v2277 = vpop.f32.mrf.mxu0
        %v2278 = vadd.f32 %v2109, %v2277
        %2279 = vmatmul.bf16.gmra.mxu0 %v508
        %v2280 = vpop.f32.mrf.mxu0
        %v2281 = vadd.f32 %v2112, %v2280
        %v2282 = vpop.f32.mrf.mxu0
        %v2283 = vadd.f32 %v2114, %v2282
        %2284 = vmatmul.bf16.gmra.mxu0 %v511
        %v2285 = vpop.f32.mrf.mxu0
        %v2286 = vadd.f32 %v2117, %v2285
        %v2287 = vpop.f32.mrf.mxu0
        %v2288 = vadd.f32 %v2119, %v2287
        %2289 = vmatmul.bf16.gmra.mxu0 %v514
        %v2290 = vpop.f32.mrf.mxu0
        %v2291 = vadd.f32 %v2122, %v2290
        %v2292 = vpop.f32.mrf.mxu0
        %v2293 = vadd.f32 %v2124, %v2292
        %2294 = vmatmul.bf16.gmra.mxu0 %v517
        %v2295 = vpop.f32.mrf.mxu0
        %v2296 = vadd.f32 %v2127, %v2295
        %v2297 = vpop.f32.mrf.mxu0
        %v2298 = vadd.f32 %v2129, %v2297
        %2299 = vmatmul.bf16.gmra.mxu0 %v520
        %v2300 = vpop.f32.mrf.mxu0
        %v2301 = vadd.f32 %v2132, %v2300
        %v2302 = vpop.f32.mrf.mxu0
        %v2303 = vadd.f32 %v2134, %v2302
        %2304 = vmatmul.bf16.gmra.mxu0 %v523
        %v2305 = vpop.f32.mrf.mxu0
        %v2306 = vadd.f32 %v2137, %v2305
        %v2307 = vpop.f32.mrf.mxu0
        %v2308 = vadd.f32 %v2139, %v2307
        %2309 = vmatmul.bf16.gmra.mxu0 %v526
        %v2310 = vpop.f32.mrf.mxu0
        %v2311 = vadd.f32 %v2142, %v2310
        %v2312 = vpop.f32.mrf.mxu0
        %v2313 = vadd.f32 %v2144, %v2312
        %2314 = vmatmul.bf16.gmra.mxu0 %v529
        %v2315 = vpop.f32.mrf.mxu0
        %v2316 = vadd.f32 %v2147, %v2315
        %v2317 = vpop.f32.mrf.mxu0
        %v2318 = vadd.f32 %v2149, %v2317
        %2319 = vmatmul.bf16.gmra.mxu0 %v532
        %v2320 = vpop.f32.mrf.mxu0
        %v2321 = vadd.f32 %v2152, %v2320
        %v2322 = vpop.f32.mrf.mxu0
        %v2323 = vadd.f32 %v2154, %v2322
        %2324 = vmatmul.bf16.gmra.mxu0 %v535
        %v2325 = vpop.f32.mrf.mxu0
        %v2326 = vadd.f32 %v2157, %v2325
        %v2327 = vpop.f32.mrf.mxu0
        %v2328 = vadd.f32 %v2159, %v2327
        %2329 = vdwg.mxu0
        %2330 = vmatpush.bf16.msra.mxu0 %v1113
        %2331 = vmatpush.bf16.msra.mxu0 %v1108
        %2332 = vmatpush.bf16.msra.mxu0 %v1103
        %2333 = vmatpush.bf16.msra.mxu0 %v1098
        %2334 = vmatpush.bf16.msra.mxu0 %v1093
        %2335 = vmatpush.bf16.msra.mxu0 %v1088
        %2336 = vmatpush.bf16.msra.mxu0 %v1083
        %2337 = vmatpush.bf16.msra.mxu0 %v1078
        %2338 = vmatmul.bf16.gmra.mxu0 %v440
        %v2339 = vpop.f32.mrf.mxu0
        %v2340 = vadd.f32 %v684, %v2339
        %v2341 = vpop.f32.mrf.mxu0
        %v2342 = vadd.f32 %v684, %v2341
        %2343 = vmatmul.bf16.gmra.mxu0 %v443
        %v2344 = vpop.f32.mrf.mxu0
        %v2345 = vadd.f32 %v684, %v2344
        %v2346 = vpop.f32.mrf.mxu0
        %v2347 = vadd.f32 %v684, %v2346
        %2348 = vmatmul.bf16.gmra.mxu0 %v446
        %v2349 = vpop.f32.mrf.mxu0
        %v2350 = vadd.f32 %v684, %v2349
        %v2351 = vpop.f32.mrf.mxu0
        %v2352 = vadd.f32 %v684, %v2351
        %2353 = vmatmul.bf16.gmra.mxu0 %v449
        %v2354 = vpop.f32.mrf.mxu0
        %v2355 = vadd.f32 %v684, %v2354
        %v2356 = vpop.f32.mrf.mxu0
        %v2357 = vadd.f32 %v684, %v2356
        %2358 = vmatmul.bf16.gmra.mxu0 %v452
        %v2359 = vpop.f32.mrf.mxu0
        %v2360 = vadd.f32 %v684, %v2359
        %v2361 = vpop.f32.mrf.mxu0
        %v2362 = vadd.f32 %v684, %v2361
        %2363 = vmatmul.bf16.gmra.mxu0 %v455
        %v2364 = vpop.f32.mrf.mxu0
        %v2365 = vadd.f32 %v684, %v2364
        %v2366 = vpop.f32.mrf.mxu0
        %v2367 = vadd.f32 %v684, %v2366
        %2368 = vmatmul.bf16.gmra.mxu0 %v458
        %v2369 = vpop.f32.mrf.mxu0
        %v2370 = vadd.f32 %v684, %v2369
        %v2371 = vpop.f32.mrf.mxu0
        %v2372 = vadd.f32 %v684, %v2371
        %2373 = vmatmul.bf16.gmra.mxu0 %v461
        %v2374 = vpop.f32.mrf.mxu0
        %v2375 = vadd.f32 %v684, %v2374
        %v2376 = vpop.f32.mrf.mxu0
        %v2377 = vadd.f32 %v684, %v2376
        %2378 = vmatmul.bf16.gmra.mxu0 %v464
        %v2379 = vpop.f32.mrf.mxu0
        %v2380 = vadd.f32 %v684, %v2379
        %v2381 = vpop.f32.mrf.mxu0
        %v2382 = vadd.f32 %v684, %v2381
        %2383 = vmatmul.bf16.gmra.mxu0 %v467
        %v2384 = vpop.f32.mrf.mxu0
        %v2385 = vadd.f32 %v684, %v2384
        %v2386 = vpop.f32.mrf.mxu0
        %v2387 = vadd.f32 %v684, %v2386
        %2388 = vmatmul.bf16.gmra.mxu0 %v470
        %v2389 = vpop.f32.mrf.mxu0
        %v2390 = vadd.f32 %v684, %v2389
        %v2391 = vpop.f32.mrf.mxu0
        %v2392 = vadd.f32 %v684, %v2391
        %2393 = vmatmul.bf16.gmra.mxu0 %v473
        %v2394 = vpop.f32.mrf.mxu0
        %v2395 = vadd.f32 %v684, %v2394
        %v2396 = vpop.f32.mrf.mxu0
        %v2397 = vadd.f32 %v684, %v2396
        %2398 = vmatmul.bf16.gmra.mxu0 %v476
        %v2399 = vpop.f32.mrf.mxu0
        %v2400 = vadd.f32 %v684, %v2399
        %v2401 = vpop.f32.mrf.mxu0
        %v2402 = vadd.f32 %v684, %v2401
        %2403 = vmatmul.bf16.gmra.mxu0 %v479
        %v2404 = vpop.f32.mrf.mxu0
        %v2405 = vadd.f32 %v684, %v2404
        %v2406 = vpop.f32.mrf.mxu0
        %v2407 = vadd.f32 %v684, %v2406
        %2408 = vmatmul.bf16.gmra.mxu0 %v482
        %v2409 = vpop.f32.mrf.mxu0
        %v2410 = vadd.f32 %v684, %v2409
        %v2411 = vpop.f32.mrf.mxu0
        %v2412 = vadd.f32 %v684, %v2411
        %2413 = vmatmul.bf16.gmra.mxu0 %v485
        %v2414 = vpop.f32.mrf.mxu0
        %v2415 = vadd.f32 %v684, %v2414
        %v2416 = vpop.f32.mrf.mxu0
        %v2417 = vadd.f32 %v684, %v2416
        %2418 = vmatmul.bf16.gmra.mxu0 %v488
        %v2419 = vpop.f32.mrf.mxu0
        %v2420 = vadd.f32 %v684, %v2419
        %v2421 = vpop.f32.mrf.mxu0
        %v2422 = vadd.f32 %v684, %v2421
        %2423 = vmatmul.bf16.gmra.mxu0 %v491
        %v2424 = vpop.f32.mrf.mxu0
        %v2425 = vadd.f32 %v684, %v2424
        %v2426 = vpop.f32.mrf.mxu0
        %v2427 = vadd.f32 %v684, %v2426
        %2428 = vmatmul.bf16.gmra.mxu0 %v494
        %v2429 = vpop.f32.mrf.mxu0
        %v2430 = vadd.f32 %v684, %v2429
        %v2431 = vpop.f32.mrf.mxu0
        %v2432 = vadd.f32 %v684, %v2431
        %2433 = vmatmul.bf16.gmra.mxu0 %v497
        %v2434 = vpop.f32.mrf.mxu0
        %v2435 = vadd.f32 %v684, %v2434
        %v2436 = vpop.f32.mrf.mxu0
        %v2437 = vadd.f32 %v684, %v2436
        %2438 = vmatmul.bf16.gmra.mxu0 %v500
        %v2439 = vpop.f32.mrf.mxu0
        %v2440 = vadd.f32 %v684, %v2439
        %v2441 = vpop.f32.mrf.mxu0
        %v2442 = vadd.f32 %v684, %v2441
        %2443 = vmatmul.bf16.gmra.mxu0 %v503
        %v2444 = vpop.f32.mrf.mxu0
        %v2445 = vadd.f32 %v684, %v2444
        %v2446 = vpop.f32.mrf.mxu0
        %v2447 = vadd.f32 %v684, %v2446
        %2448 = vmatmul.bf16.gmra.mxu0 %v506
        %v2449 = vpop.f32.mrf.mxu0
        %v2450 = vadd.f32 %v684, %v2449
        %v2451 = vpop.f32.mrf.mxu0
        %v2452 = vadd.f32 %v684, %v2451
        %2453 = vmatmul.bf16.gmra.mxu0 %v509
        %v2454 = vpop.f32.mrf.mxu0
        %v2455 = vadd.f32 %v684, %v2454
        %v2456 = vpop.f32.mrf.mxu0
        %v2457 = vadd.f32 %v684, %v2456
        %2458 = vmatmul.bf16.gmra.mxu0 %v512
        %v2459 = vpop.f32.mrf.mxu0
        %v2460 = vadd.f32 %v684, %v2459
        %v2461 = vpop.f32.mrf.mxu0
        %v2462 = vadd.f32 %v684, %v2461
        %2463 = vmatmul.bf16.gmra.mxu0 %v515
        %v2464 = vpop.f32.mrf.mxu0
        %v2465 = vadd.f32 %v684, %v2464
        %v2466 = vpop.f32.mrf.mxu0
        %v2467 = vadd.f32 %v684, %v2466
        %2468 = vmatmul.bf16.gmra.mxu0 %v518
        %v2469 = vpop.f32.mrf.mxu0
        %v2470 = vadd.f32 %v684, %v2469
        %v2471 = vpop.f32.mrf.mxu0
        %v2472 = vadd.f32 %v684, %v2471
        %2473 = vmatmul.bf16.gmra.mxu0 %v521
        %v2474 = vpop.f32.mrf.mxu0
        %v2475 = vadd.f32 %v684, %v2474
        %v2476 = vpop.f32.mrf.mxu0
        %v2477 = vadd.f32 %v684, %v2476
        %2478 = vmatmul.bf16.gmra.mxu0 %v524
        %v2479 = vpop.f32.mrf.mxu0
        %v2480 = vadd.f32 %v684, %v2479
        %v2481 = vpop.f32.mrf.mxu0
        %v2482 = vadd.f32 %v684, %v2481
        %2483 = vmatmul.bf16.gmra.mxu0 %v527
        %v2484 = vpop.f32.mrf.mxu0
        %v2485 = vadd.f32 %v684, %v2484
        %v2486 = vpop.f32.mrf.mxu0
        %v2487 = vadd.f32 %v684, %v2486
        %2488 = vmatmul.bf16.gmra.mxu0 %v530
        %v2489 = vpop.f32.mrf.mxu0
        %v2490 = vadd.f32 %v684, %v2489
        %v2491 = vpop.f32.mrf.mxu0
        %v2492 = vadd.f32 %v684, %v2491
        %2493 = vmatmul.bf16.gmra.mxu0 %v533
        %v2494 = vpop.f32.mrf.mxu0
        %v2495 = vadd.f32 %v684, %v2494
        %v2496 = vpop.f32.mrf.mxu0
        %v2497 = vadd.f32 %v684, %v2496
        %2498 = vdwg.mxu0
        %2499 = vmatpush.bf16.msra.mxu0 %v1153
        %2500 = vmatpush.bf16.msra.mxu0 %v1148
        %2501 = vmatpush.bf16.msra.mxu0 %v1143
        %2502 = vmatpush.bf16.msra.mxu0 %v1138
        %2503 = vmatpush.bf16.msra.mxu0 %v1133
        %2504 = vmatpush.bf16.msra.mxu0 %v1128
        %2505 = vmatpush.bf16.msra.mxu0 %v1123
        %2506 = vmatpush.bf16.msra.mxu0 %v1118
        %2507 = vmatmul.bf16.gmra.mxu0 %v441
        %v2508 = vpop.f32.mrf.mxu0
        %v2509 = vadd.f32 %v2340, %v2508
        %v2510 = vpop.f32.mrf.mxu0
        %v2511 = vadd.f32 %v2342, %v2510
        %2512 = vmatmul.bf16.gmra.mxu0 %v444
        %v2513 = vpop.f32.mrf.mxu0
        %v2514 = vadd.f32 %v2345, %v2513
        %v2515 = vpop.f32.mrf.mxu0
        %v2516 = vadd.f32 %v2347, %v2515
        %2517 = vmatmul.bf16.gmra.mxu0 %v447
        %v2518 = vpop.f32.mrf.mxu0
        %v2519 = vadd.f32 %v2350, %v2518
        %v2520 = vpop.f32.mrf.mxu0
        %v2521 = vadd.f32 %v2352, %v2520
        %2522 = vmatmul.bf16.gmra.mxu0 %v450
        %v2523 = vpop.f32.mrf.mxu0
        %v2524 = vadd.f32 %v2355, %v2523
        %v2525 = vpop.f32.mrf.mxu0
        %v2526 = vadd.f32 %v2357, %v2525
        %2527 = vmatmul.bf16.gmra.mxu0 %v453
        %v2528 = vpop.f32.mrf.mxu0
        %v2529 = vadd.f32 %v2360, %v2528
        %v2530 = vpop.f32.mrf.mxu0
        %v2531 = vadd.f32 %v2362, %v2530
        %2532 = vmatmul.bf16.gmra.mxu0 %v456
        %v2533 = vpop.f32.mrf.mxu0
        %v2534 = vadd.f32 %v2365, %v2533
        %v2535 = vpop.f32.mrf.mxu0
        %v2536 = vadd.f32 %v2367, %v2535
        %2537 = vmatmul.bf16.gmra.mxu0 %v459
        %v2538 = vpop.f32.mrf.mxu0
        %v2539 = vadd.f32 %v2370, %v2538
        %v2540 = vpop.f32.mrf.mxu0
        %v2541 = vadd.f32 %v2372, %v2540
        %2542 = vmatmul.bf16.gmra.mxu0 %v462
        %v2543 = vpop.f32.mrf.mxu0
        %v2544 = vadd.f32 %v2375, %v2543
        %v2545 = vpop.f32.mrf.mxu0
        %v2546 = vadd.f32 %v2377, %v2545
        %2547 = vmatmul.bf16.gmra.mxu0 %v465
        %v2548 = vpop.f32.mrf.mxu0
        %v2549 = vadd.f32 %v2380, %v2548
        %v2550 = vpop.f32.mrf.mxu0
        %v2551 = vadd.f32 %v2382, %v2550
        %2552 = vmatmul.bf16.gmra.mxu0 %v468
        %v2553 = vpop.f32.mrf.mxu0
        %v2554 = vadd.f32 %v2385, %v2553
        %v2555 = vpop.f32.mrf.mxu0
        %v2556 = vadd.f32 %v2387, %v2555
        %2557 = vmatmul.bf16.gmra.mxu0 %v471
        %v2558 = vpop.f32.mrf.mxu0
        %v2559 = vadd.f32 %v2390, %v2558
        %v2560 = vpop.f32.mrf.mxu0
        %v2561 = vadd.f32 %v2392, %v2560
        %2562 = vmatmul.bf16.gmra.mxu0 %v474
        %v2563 = vpop.f32.mrf.mxu0
        %v2564 = vadd.f32 %v2395, %v2563
        %v2565 = vpop.f32.mrf.mxu0
        %v2566 = vadd.f32 %v2397, %v2565
        %2567 = vmatmul.bf16.gmra.mxu0 %v477
        %v2568 = vpop.f32.mrf.mxu0
        %v2569 = vadd.f32 %v2400, %v2568
        %v2570 = vpop.f32.mrf.mxu0
        %v2571 = vadd.f32 %v2402, %v2570
        %2572 = vmatmul.bf16.gmra.mxu0 %v480
        %v2573 = vpop.f32.mrf.mxu0
        %v2574 = vadd.f32 %v2405, %v2573
        %v2575 = vpop.f32.mrf.mxu0
        %v2576 = vadd.f32 %v2407, %v2575
        %2577 = vmatmul.bf16.gmra.mxu0 %v483
        %v2578 = vpop.f32.mrf.mxu0
        %v2579 = vadd.f32 %v2410, %v2578
        %v2580 = vpop.f32.mrf.mxu0
        %v2581 = vadd.f32 %v2412, %v2580
        %2582 = vmatmul.bf16.gmra.mxu0 %v486
        %v2583 = vpop.f32.mrf.mxu0
        %v2584 = vadd.f32 %v2415, %v2583
        %v2585 = vpop.f32.mrf.mxu0
        %v2586 = vadd.f32 %v2417, %v2585
        %2587 = vmatmul.bf16.gmra.mxu0 %v489
        %v2588 = vpop.f32.mrf.mxu0
        %v2589 = vadd.f32 %v2420, %v2588
        %v2590 = vpop.f32.mrf.mxu0
        %v2591 = vadd.f32 %v2422, %v2590
        %2592 = vmatmul.bf16.gmra.mxu0 %v492
        %v2593 = vpop.f32.mrf.mxu0
        %v2594 = vadd.f32 %v2425, %v2593
        %v2595 = vpop.f32.mrf.mxu0
        %v2596 = vadd.f32 %v2427, %v2595
        %2597 = vmatmul.bf16.gmra.mxu0 %v495
        %v2598 = vpop.f32.mrf.mxu0
        %v2599 = vadd.f32 %v2430, %v2598
        %v2600 = vpop.f32.mrf.mxu0
        %v2601 = vadd.f32 %v2432, %v2600
        %2602 = vmatmul.bf16.gmra.mxu0 %v498
        %v2603 = vpop.f32.mrf.mxu0
        %v2604 = vadd.f32 %v2435, %v2603
        %v2605 = vpop.f32.mrf.mxu0
        %v2606 = vadd.f32 %v2437, %v2605
        %2607 = vmatmul.bf16.gmra.mxu0 %v501
        %v2608 = vpop.f32.mrf.mxu0
        %v2609 = vadd.f32 %v2440, %v2608
        %v2610 = vpop.f32.mrf.mxu0
        %v2611 = vadd.f32 %v2442, %v2610
        %2612 = vmatmul.bf16.gmra.mxu0 %v504
        %v2613 = vpop.f32.mrf.mxu0
        %v2614 = vadd.f32 %v2445, %v2613
        %v2615 = vpop.f32.mrf.mxu0
        %v2616 = vadd.f32 %v2447, %v2615
        %2617 = vmatmul.bf16.gmra.mxu0 %v507
        %v2618 = vpop.f32.mrf.mxu0
        %v2619 = vadd.f32 %v2450, %v2618
        %v2620 = vpop.f32.mrf.mxu0
        %v2621 = vadd.f32 %v2452, %v2620
        %2622 = vmatmul.bf16.gmra.mxu0 %v510
        %v2623 = vpop.f32.mrf.mxu0
        %v2624 = vadd.f32 %v2455, %v2623
        %v2625 = vpop.f32.mrf.mxu0
        %v2626 = vadd.f32 %v2457, %v2625
        %2627 = vmatmul.bf16.gmra.mxu0 %v513
        %v2628 = vpop.f32.mrf.mxu0
        %v2629 = vadd.f32 %v2460, %v2628
        %v2630 = vpop.f32.mrf.mxu0
        %v2631 = vadd.f32 %v2462, %v2630
        %2632 = vmatmul.bf16.gmra.mxu0 %v516
        %v2633 = vpop.f32.mrf.mxu0
        %v2634 = vadd.f32 %v2465, %v2633
        %v2635 = vpop.f32.mrf.mxu0
        %v2636 = vadd.f32 %v2467, %v2635
        %2637 = vmatmul.bf16.gmra.mxu0 %v519
        %v2638 = vpop.f32.mrf.mxu0
        %v2639 = vadd.f32 %v2470, %v2638
        %v2640 = vpop.f32.mrf.mxu0
        %v2641 = vadd.f32 %v2472, %v2640
        %2642 = vmatmul.bf16.gmra.mxu0 %v522
        %v2643 = vpop.f32.mrf.mxu0
        %v2644 = vadd.f32 %v2475, %v2643
        %v2645 = vpop.f32.mrf.mxu0
        %v2646 = vadd.f32 %v2477, %v2645
        %2647 = vmatmul.bf16.gmra.mxu0 %v525
        %v2648 = vpop.f32.mrf.mxu0
        %v2649 = vadd.f32 %v2480, %v2648
        %v2650 = vpop.f32.mrf.mxu0
        %v2651 = vadd.f32 %v2482, %v2650
        %2652 = vmatmul.bf16.gmra.mxu0 %v528
        %v2653 = vpop.f32.mrf.mxu0
        %v2654 = vadd.f32 %v2485, %v2653
        %v2655 = vpop.f32.mrf.mxu0
        %v2656 = vadd.f32 %v2487, %v2655
        %2657 = vmatmul.bf16.gmra.mxu0 %v531
        %v2658 = vpop.f32.mrf.mxu0
        %v2659 = vadd.f32 %v2490, %v2658
        %v2660 = vpop.f32.mrf.mxu0
        %v2661 = vadd.f32 %v2492, %v2660
        %2662 = vmatmul.bf16.gmra.mxu0 %v534
        %v2663 = vpop.f32.mrf.mxu0
        %v2664 = vadd.f32 %v2495, %v2663
        %v2665 = vpop.f32.mrf.mxu0
        %v2666 = vadd.f32 %v2497, %v2665
        %2667 = vdwg.mxu0
        %2668 = vmatpush.bf16.msra.mxu0 %v1193
        %2669 = vmatpush.bf16.msra.mxu0 %v1188
        %2670 = vmatpush.bf16.msra.mxu0 %v1183
        %2671 = vmatpush.bf16.msra.mxu0 %v1178
        %2672 = vmatpush.bf16.msra.mxu0 %v1173
        %2673 = vmatpush.bf16.msra.mxu0 %v1168
        %2674 = vmatpush.bf16.msra.mxu0 %v1163
        %2675 = vmatpush.bf16.msra.mxu0 %v1158
        %2676 = vmatmul.bf16.gmra.mxu0 %v442
        %v2677 = vpop.f32.mrf.mxu0
        %v2678 = vadd.f32 %v2509, %v2677
        %v2679 = vpop.f32.mrf.mxu0
        %v2680 = vadd.f32 %v2511, %v2679
        %2681 = vmatmul.bf16.gmra.mxu0 %v445
        %v2682 = vpop.f32.mrf.mxu0
        %v2683 = vadd.f32 %v2514, %v2682
        %v2684 = vpop.f32.mrf.mxu0
        %v2685 = vadd.f32 %v2516, %v2684
        %2686 = vmatmul.bf16.gmra.mxu0 %v448
        %v2687 = vpop.f32.mrf.mxu0
        %v2688 = vadd.f32 %v2519, %v2687
        %v2689 = vpop.f32.mrf.mxu0
        %v2690 = vadd.f32 %v2521, %v2689
        %2691 = vmatmul.bf16.gmra.mxu0 %v451
        %v2692 = vpop.f32.mrf.mxu0
        %v2693 = vadd.f32 %v2524, %v2692
        %v2694 = vpop.f32.mrf.mxu0
        %v2695 = vadd.f32 %v2526, %v2694
        %2696 = vmatmul.bf16.gmra.mxu0 %v454
        %v2697 = vpop.f32.mrf.mxu0
        %v2698 = vadd.f32 %v2529, %v2697
        %v2699 = vpop.f32.mrf.mxu0
        %v2700 = vadd.f32 %v2531, %v2699
        %2701 = vmatmul.bf16.gmra.mxu0 %v457
        %v2702 = vpop.f32.mrf.mxu0
        %v2703 = vadd.f32 %v2534, %v2702
        %v2704 = vpop.f32.mrf.mxu0
        %v2705 = vadd.f32 %v2536, %v2704
        %2706 = vmatmul.bf16.gmra.mxu0 %v460
        %v2707 = vpop.f32.mrf.mxu0
        %v2708 = vadd.f32 %v2539, %v2707
        %v2709 = vpop.f32.mrf.mxu0
        %v2710 = vadd.f32 %v2541, %v2709
        %2711 = vmatmul.bf16.gmra.mxu0 %v463
        %v2712 = vpop.f32.mrf.mxu0
        %v2713 = vadd.f32 %v2544, %v2712
        %v2714 = vpop.f32.mrf.mxu0
        %v2715 = vadd.f32 %v2546, %v2714
        %2716 = vmatmul.bf16.gmra.mxu0 %v466
        %v2717 = vpop.f32.mrf.mxu0
        %v2718 = vadd.f32 %v2549, %v2717
        %v2719 = vpop.f32.mrf.mxu0
        %v2720 = vadd.f32 %v2551, %v2719
        %2721 = vmatmul.bf16.gmra.mxu0 %v469
        %v2722 = vpop.f32.mrf.mxu0
        %v2723 = vadd.f32 %v2554, %v2722
        %v2724 = vpop.f32.mrf.mxu0
        %v2725 = vadd.f32 %v2556, %v2724
        %2726 = vmatmul.bf16.gmra.mxu0 %v472
        %v2727 = vpop.f32.mrf.mxu0
        %v2728 = vadd.f32 %v2559, %v2727
        %v2729 = vpop.f32.mrf.mxu0
        %v2730 = vadd.f32 %v2561, %v2729
        %2731 = vmatmul.bf16.gmra.mxu0 %v475
        %v2732 = vpop.f32.mrf.mxu0
        %v2733 = vadd.f32 %v2564, %v2732
        %v2734 = vpop.f32.mrf.mxu0
        %v2735 = vadd.f32 %v2566, %v2734
        %2736 = vmatmul.bf16.gmra.mxu0 %v478
        %v2737 = vpop.f32.mrf.mxu0
        %v2738 = vadd.f32 %v2569, %v2737
        %v2739 = vpop.f32.mrf.mxu0
        %v2740 = vadd.f32 %v2571, %v2739
        %2741 = vmatmul.bf16.gmra.mxu0 %v481
        %v2742 = vpop.f32.mrf.mxu0
        %v2743 = vadd.f32 %v2574, %v2742
        %v2744 = vpop.f32.mrf.mxu0
        %v2745 = vadd.f32 %v2576, %v2744
        %2746 = vmatmul.bf16.gmra.mxu0 %v484
        %v2747 = vpop.f32.mrf.mxu0
        %v2748 = vadd.f32 %v2579, %v2747
        %v2749 = vpop.f32.mrf.mxu0
        %v2750 = vadd.f32 %v2581, %v2749
        %2751 = vmatmul.bf16.gmra.mxu0 %v487
        %v2752 = vpop.f32.mrf.mxu0
        %v2753 = vadd.f32 %v2584, %v2752
        %v2754 = vpop.f32.mrf.mxu0
        %v2755 = vadd.f32 %v2586, %v2754
        %2756 = vmatmul.bf16.gmra.mxu0 %v490
        %v2757 = vpop.f32.mrf.mxu0
        %v2758 = vadd.f32 %v2589, %v2757
        %v2759 = vpop.f32.mrf.mxu0
        %v2760 = vadd.f32 %v2591, %v2759
        %2761 = vmatmul.bf16.gmra.mxu0 %v493
        %v2762 = vpop.f32.mrf.mxu0
        %v2763 = vadd.f32 %v2594, %v2762
        %v2764 = vpop.f32.mrf.mxu0
        %v2765 = vadd.f32 %v2596, %v2764
        %2766 = vmatmul.bf16.gmra.mxu0 %v496
        %v2767 = vpop.f32.mrf.mxu0
        %v2768 = vadd.f32 %v2599, %v2767
        %v2769 = vpop.f32.mrf.mxu0
        %v2770 = vadd.f32 %v2601, %v2769
        %2771 = vmatmul.bf16.gmra.mxu0 %v499
        %v2772 = vpop.f32.mrf.mxu0
        %v2773 = vadd.f32 %v2604, %v2772
        %v2774 = vpop.f32.mrf.mxu0
        %v2775 = vadd.f32 %v2606, %v2774
        %2776 = vmatmul.bf16.gmra.mxu0 %v502
        %v2777 = vpop.f32.mrf.mxu0
        %v2778 = vadd.f32 %v2609, %v2777
        %v2779 = vpop.f32.mrf.mxu0
        %v2780 = vadd.f32 %v2611, %v2779
        %2781 = vmatmul.bf16.gmra.mxu0 %v505
        %v2782 = vpop.f32.mrf.mxu0
        %v2783 = vadd.f32 %v2614, %v2782
        %v2784 = vpop.f32.mrf.mxu0
        %v2785 = vadd.f32 %v2616, %v2784
        %2786 = vmatmul.bf16.gmra.mxu0 %v508
        %v2787 = vpop.f32.mrf.mxu0
        %v2788 = vadd.f32 %v2619, %v2787
        %v2789 = vpop.f32.mrf.mxu0
        %v2790 = vadd.f32 %v2621, %v2789
        %2791 = vmatmul.bf16.gmra.mxu0 %v511
        %v2792 = vpop.f32.mrf.mxu0
        %v2793 = vadd.f32 %v2624, %v2792
        %v2794 = vpop.f32.mrf.mxu0
        %v2795 = vadd.f32 %v2626, %v2794
        %2796 = vmatmul.bf16.gmra.mxu0 %v514
        %v2797 = vpop.f32.mrf.mxu0
        %v2798 = vadd.f32 %v2629, %v2797
        %v2799 = vpop.f32.mrf.mxu0
        %v2800 = vadd.f32 %v2631, %v2799
        %2801 = vmatmul.bf16.gmra.mxu0 %v517
        %v2802 = vpop.f32.mrf.mxu0
        %v2803 = vadd.f32 %v2634, %v2802
        %v2804 = vpop.f32.mrf.mxu0
        %v2805 = vadd.f32 %v2636, %v2804
        %2806 = vmatmul.bf16.gmra.mxu0 %v520
        %v2807 = vpop.f32.mrf.mxu0
        %v2808 = vadd.f32 %v2639, %v2807
        %v2809 = vpop.f32.mrf.mxu0
        %v2810 = vadd.f32 %v2641, %v2809
        %2811 = vmatmul.bf16.gmra.mxu0 %v523
        %v2812 = vpop.f32.mrf.mxu0
        %v2813 = vadd.f32 %v2644, %v2812
        %v2814 = vpop.f32.mrf.mxu0
        %v2815 = vadd.f32 %v2646, %v2814
        %2816 = vmatmul.bf16.gmra.mxu0 %v526
        %v2817 = vpop.f32.mrf.mxu0
        %v2818 = vadd.f32 %v2649, %v2817
        %v2819 = vpop.f32.mrf.mxu0
        %v2820 = vadd.f32 %v2651, %v2819
        %2821 = vmatmul.bf16.gmra.mxu0 %v529
        %v2822 = vpop.f32.mrf.mxu0
        %v2823 = vadd.f32 %v2654, %v2822
        %v2824 = vpop.f32.mrf.mxu0
        %v2825 = vadd.f32 %v2656, %v2824
        %2826 = vmatmul.bf16.gmra.mxu0 %v532
        %v2827 = vpop.f32.mrf.mxu0
        %v2828 = vadd.f32 %v2659, %v2827
        %v2829 = vpop.f32.mrf.mxu0
        %v2830 = vadd.f32 %v2661, %v2829
        %2831 = vmatmul.bf16.gmra.mxu0 %v535
        %v2832 = vpop.f32.mrf.mxu0
        %v2833 = vadd.f32 %v2664, %v2832
        %v2834 = vpop.f32.mrf.mxu0
        %v2835 = vadd.f32 %v2666, %v2834
        %2836 = vdwg.mxu0
        %2837 = vmatpush.bf16.msra.mxu0 %v1114
        %2838 = vmatpush.bf16.msra.mxu0 %v1109
        %2839 = vmatpush.bf16.msra.mxu0 %v1104
        %2840 = vmatpush.bf16.msra.mxu0 %v1099
        %2841 = vmatpush.bf16.msra.mxu0 %v1094
        %2842 = vmatpush.bf16.msra.mxu0 %v1089
        %2843 = vmatpush.bf16.msra.mxu0 %v1084
        %2844 = vmatpush.bf16.msra.mxu0 %v1079
        %2845 = vmatmul.bf16.gmra.mxu0 %v440
        %v2846 = vpop.f32.mrf.mxu0
        %v2847 = vadd.f32 %v685, %v2846
        %v2848 = vpop.f32.mrf.mxu0
        %v2849 = vadd.f32 %v685, %v2848
        %2850 = vmatmul.bf16.gmra.mxu0 %v443
        %v2851 = vpop.f32.mrf.mxu0
        %v2852 = vadd.f32 %v685, %v2851
        %v2853 = vpop.f32.mrf.mxu0
        %v2854 = vadd.f32 %v685, %v2853
        %2855 = vmatmul.bf16.gmra.mxu0 %v446
        %v2856 = vpop.f32.mrf.mxu0
        %v2857 = vadd.f32 %v685, %v2856
        %v2858 = vpop.f32.mrf.mxu0
        %v2859 = vadd.f32 %v685, %v2858
        %2860 = vmatmul.bf16.gmra.mxu0 %v449
        %v2861 = vpop.f32.mrf.mxu0
        %v2862 = vadd.f32 %v685, %v2861
        %v2863 = vpop.f32.mrf.mxu0
        %v2864 = vadd.f32 %v685, %v2863
        %2865 = vmatmul.bf16.gmra.mxu0 %v452
        %v2866 = vpop.f32.mrf.mxu0
        %v2867 = vadd.f32 %v685, %v2866
        %v2868 = vpop.f32.mrf.mxu0
        %v2869 = vadd.f32 %v685, %v2868
        %2870 = vmatmul.bf16.gmra.mxu0 %v455
        %v2871 = vpop.f32.mrf.mxu0
        %v2872 = vadd.f32 %v685, %v2871
        %v2873 = vpop.f32.mrf.mxu0
        %v2874 = vadd.f32 %v685, %v2873
        %2875 = vmatmul.bf16.gmra.mxu0 %v458
        %v2876 = vpop.f32.mrf.mxu0
        %v2877 = vadd.f32 %v685, %v2876
        %v2878 = vpop.f32.mrf.mxu0
        %v2879 = vadd.f32 %v685, %v2878
        %2880 = vmatmul.bf16.gmra.mxu0 %v461
        %v2881 = vpop.f32.mrf.mxu0
        %v2882 = vadd.f32 %v685, %v2881
        %v2883 = vpop.f32.mrf.mxu0
        %v2884 = vadd.f32 %v685, %v2883
        %2885 = vmatmul.bf16.gmra.mxu0 %v464
        %v2886 = vpop.f32.mrf.mxu0
        %v2887 = vadd.f32 %v685, %v2886
        %v2888 = vpop.f32.mrf.mxu0
        %v2889 = vadd.f32 %v685, %v2888
        %2890 = vmatmul.bf16.gmra.mxu0 %v467
        %v2891 = vpop.f32.mrf.mxu0
        %v2892 = vadd.f32 %v685, %v2891
        %v2893 = vpop.f32.mrf.mxu0
        %v2894 = vadd.f32 %v685, %v2893
        %2895 = vmatmul.bf16.gmra.mxu0 %v470
        %v2896 = vpop.f32.mrf.mxu0
        %v2897 = vadd.f32 %v685, %v2896
        %v2898 = vpop.f32.mrf.mxu0
        %v2899 = vadd.f32 %v685, %v2898
        %2900 = vmatmul.bf16.gmra.mxu0 %v473
        %v2901 = vpop.f32.mrf.mxu0
        %v2902 = vadd.f32 %v685, %v2901
        %v2903 = vpop.f32.mrf.mxu0
        %v2904 = vadd.f32 %v685, %v2903
        %2905 = vmatmul.bf16.gmra.mxu0 %v476
        %v2906 = vpop.f32.mrf.mxu0
        %v2907 = vadd.f32 %v685, %v2906
        %v2908 = vpop.f32.mrf.mxu0
        %v2909 = vadd.f32 %v685, %v2908
        %2910 = vmatmul.bf16.gmra.mxu0 %v479
        %v2911 = vpop.f32.mrf.mxu0
        %v2912 = vadd.f32 %v685, %v2911
        %v2913 = vpop.f32.mrf.mxu0
        %v2914 = vadd.f32 %v685, %v2913
        %2915 = vmatmul.bf16.gmra.mxu0 %v482
        %v2916 = vpop.f32.mrf.mxu0
        %v2917 = vadd.f32 %v685, %v2916
        %v2918 = vpop.f32.mrf.mxu0
        %v2919 = vadd.f32 %v685, %v2918
        %2920 = vmatmul.bf16.gmra.mxu0 %v485
        %v2921 = vpop.f32.mrf.mxu0
        %v2922 = vadd.f32 %v685, %v2921
        %v2923 = vpop.f32.mrf.mxu0
        %v2924 = vadd.f32 %v685, %v2923
        %2925 = vmatmul.bf16.gmra.mxu0 %v488
        %v2926 = vpop.f32.mrf.mxu0
        %v2927 = vadd.f32 %v685, %v2926
        %v2928 = vpop.f32.mrf.mxu0
        %v2929 = vadd.f32 %v685, %v2928
        %2930 = vmatmul.bf16.gmra.mxu0 %v491
        %v2931 = vpop.f32.mrf.mxu0
        %v2932 = vadd.f32 %v685, %v2931
        %v2933 = vpop.f32.mrf.mxu0
        %v2934 = vadd.f32 %v685, %v2933
        %2935 = vmatmul.bf16.gmra.mxu0 %v494
        %v2936 = vpop.f32.mrf.mxu0
        %v2937 = vadd.f32 %v685, %v2936
        %v2938 = vpop.f32.mrf.mxu0
        %v2939 = vadd.f32 %v685, %v2938
        %2940 = vmatmul.bf16.gmra.mxu0 %v497
        %v2941 = vpop.f32.mrf.mxu0
        %v2942 = vadd.f32 %v685, %v2941
        %v2943 = vpop.f32.mrf.mxu0
        %v2944 = vadd.f32 %v685, %v2943
        %2945 = vmatmul.bf16.gmra.mxu0 %v500
        %v2946 = vpop.f32.mrf.mxu0
        %v2947 = vadd.f32 %v685, %v2946
        %v2948 = vpop.f32.mrf.mxu0
        %v2949 = vadd.f32 %v685, %v2948
        %2950 = vmatmul.bf16.gmra.mxu0 %v503
        %v2951 = vpop.f32.mrf.mxu0
        %v2952 = vadd.f32 %v685, %v2951
        %v2953 = vpop.f32.mrf.mxu0
        %v2954 = vadd.f32 %v685, %v2953
        %2955 = vmatmul.bf16.gmra.mxu0 %v506
        %v2956 = vpop.f32.mrf.mxu0
        %v2957 = vadd.f32 %v685, %v2956
        %v2958 = vpop.f32.mrf.mxu0
        %v2959 = vadd.f32 %v685, %v2958
        %2960 = vmatmul.bf16.gmra.mxu0 %v509
        %v2961 = vpop.f32.mrf.mxu0
        %v2962 = vadd.f32 %v685, %v2961
        %v2963 = vpop.f32.mrf.mxu0
        %v2964 = vadd.f32 %v685, %v2963
        %2965 = vmatmul.bf16.gmra.mxu0 %v512
        %v2966 = vpop.f32.mrf.mxu0
        %v2967 = vadd.f32 %v685, %v2966
        %v2968 = vpop.f32.mrf.mxu0
        %v2969 = vadd.f32 %v685, %v2968
        %2970 = vmatmul.bf16.gmra.mxu0 %v515
        %v2971 = vpop.f32.mrf.mxu0
        %v2972 = vadd.f32 %v685, %v2971
        %v2973 = vpop.f32.mrf.mxu0
        %v2974 = vadd.f32 %v685, %v2973
        %2975 = vmatmul.bf16.gmra.mxu0 %v518
        %v2976 = vpop.f32.mrf.mxu0
        %v2977 = vadd.f32 %v685, %v2976
        %v2978 = vpop.f32.mrf.mxu0
        %v2979 = vadd.f32 %v685, %v2978
        %2980 = vmatmul.bf16.gmra.mxu0 %v521
        %v2981 = vpop.f32.mrf.mxu0
        %v2982 = vadd.f32 %v685, %v2981
        %v2983 = vpop.f32.mrf.mxu0
        %v2984 = vadd.f32 %v685, %v2983
        %2985 = vmatmul.bf16.gmra.mxu0 %v524
        %v2986 = vpop.f32.mrf.mxu0
        %v2987 = vadd.f32 %v685, %v2986
        %v2988 = vpop.f32.mrf.mxu0
        %v2989 = vadd.f32 %v685, %v2988
        %2990 = vmatmul.bf16.gmra.mxu0 %v527
        %v2991 = vpop.f32.mrf.mxu0
        %v2992 = vadd.f32 %v685, %v2991
        %v2993 = vpop.f32.mrf.mxu0
        %v2994 = vadd.f32 %v685, %v2993
        %2995 = vmatmul.bf16.gmra.mxu0 %v530
        %v2996 = vpop.f32.mrf.mxu0
        %v2997 = vadd.f32 %v685, %v2996
        %v2998 = vpop.f32.mrf.mxu0
        %v2999 = vadd.f32 %v685, %v2998
        %3000 = vmatmul.bf16.gmra.mxu0 %v533
        %v3001 = vpop.f32.mrf.mxu0
        %v3002 = vadd.f32 %v685, %v3001
        %v3003 = vpop.f32.mrf.mxu0
        %v3004 = vadd.f32 %v685, %v3003
        %3005 = vdwg.mxu0
        %3006 = vmatpush.bf16.msra.mxu0 %v1154
        %3007 = vmatpush.bf16.msra.mxu0 %v1149
        %3008 = vmatpush.bf16.msra.mxu0 %v1144
        %3009 = vmatpush.bf16.msra.mxu0 %v1139
        %3010 = vmatpush.bf16.msra.mxu0 %v1134
        %3011 = vmatpush.bf16.msra.mxu0 %v1129
        %3012 = vmatpush.bf16.msra.mxu0 %v1124
        %3013 = vmatpush.bf16.msra.mxu0 %v1119
        %3014 = vmatmul.bf16.gmra.mxu0 %v441
        %v3015 = vpop.f32.mrf.mxu0
        %v3016 = vadd.f32 %v2847, %v3015
        %v3017 = vpop.f32.mrf.mxu0
        %v3018 = vadd.f32 %v2849, %v3017
        %3019 = vmatmul.bf16.gmra.mxu0 %v444
        %v3020 = vpop.f32.mrf.mxu0
        %v3021 = vadd.f32 %v2852, %v3020
        %v3022 = vpop.f32.mrf.mxu0
        %v3023 = vadd.f32 %v2854, %v3022
        %3024 = vmatmul.bf16.gmra.mxu0 %v447
        %v3025 = vpop.f32.mrf.mxu0
        %v3026 = vadd.f32 %v2857, %v3025
        %v3027 = vpop.f32.mrf.mxu0
        %v3028 = vadd.f32 %v2859, %v3027
        %3029 = vmatmul.bf16.gmra.mxu0 %v450
        %v3030 = vpop.f32.mrf.mxu0
        %v3031 = vadd.f32 %v2862, %v3030
        %v3032 = vpop.f32.mrf.mxu0
        %v3033 = vadd.f32 %v2864, %v3032
        %3034 = vmatmul.bf16.gmra.mxu0 %v453
        %v3035 = vpop.f32.mrf.mxu0
        %v3036 = vadd.f32 %v2867, %v3035
        %v3037 = vpop.f32.mrf.mxu0
        %v3038 = vadd.f32 %v2869, %v3037
        %3039 = vmatmul.bf16.gmra.mxu0 %v456
        %v3040 = vpop.f32.mrf.mxu0
        %v3041 = vadd.f32 %v2872, %v3040
        %v3042 = vpop.f32.mrf.mxu0
        %v3043 = vadd.f32 %v2874, %v3042
        %3044 = vmatmul.bf16.gmra.mxu0 %v459
        %v3045 = vpop.f32.mrf.mxu0
        %v3046 = vadd.f32 %v2877, %v3045
        %v3047 = vpop.f32.mrf.mxu0
        %v3048 = vadd.f32 %v2879, %v3047
        %3049 = vmatmul.bf16.gmra.mxu0 %v462
        %v3050 = vpop.f32.mrf.mxu0
        %v3051 = vadd.f32 %v2882, %v3050
        %v3052 = vpop.f32.mrf.mxu0
        %v3053 = vadd.f32 %v2884, %v3052
        %3054 = vmatmul.bf16.gmra.mxu0 %v465
        %v3055 = vpop.f32.mrf.mxu0
        %v3056 = vadd.f32 %v2887, %v3055
        %v3057 = vpop.f32.mrf.mxu0
        %v3058 = vadd.f32 %v2889, %v3057
        %3059 = vmatmul.bf16.gmra.mxu0 %v468
        %v3060 = vpop.f32.mrf.mxu0
        %v3061 = vadd.f32 %v2892, %v3060
        %v3062 = vpop.f32.mrf.mxu0
        %v3063 = vadd.f32 %v2894, %v3062
        %3064 = vmatmul.bf16.gmra.mxu0 %v471
        %v3065 = vpop.f32.mrf.mxu0
        %v3066 = vadd.f32 %v2897, %v3065
        %v3067 = vpop.f32.mrf.mxu0
        %v3068 = vadd.f32 %v2899, %v3067
        %3069 = vmatmul.bf16.gmra.mxu0 %v474
        %v3070 = vpop.f32.mrf.mxu0
        %v3071 = vadd.f32 %v2902, %v3070
        %v3072 = vpop.f32.mrf.mxu0
        %v3073 = vadd.f32 %v2904, %v3072
        %3074 = vmatmul.bf16.gmra.mxu0 %v477
        %v3075 = vpop.f32.mrf.mxu0
        %v3076 = vadd.f32 %v2907, %v3075
        %v3077 = vpop.f32.mrf.mxu0
        %v3078 = vadd.f32 %v2909, %v3077
        %3079 = vmatmul.bf16.gmra.mxu0 %v480
        %v3080 = vpop.f32.mrf.mxu0
        %v3081 = vadd.f32 %v2912, %v3080
        %v3082 = vpop.f32.mrf.mxu0
        %v3083 = vadd.f32 %v2914, %v3082
        %3084 = vmatmul.bf16.gmra.mxu0 %v483
        %v3085 = vpop.f32.mrf.mxu0
        %v3086 = vadd.f32 %v2917, %v3085
        %v3087 = vpop.f32.mrf.mxu0
        %v3088 = vadd.f32 %v2919, %v3087
        %3089 = vmatmul.bf16.gmra.mxu0 %v486
        %v3090 = vpop.f32.mrf.mxu0
        %v3091 = vadd.f32 %v2922, %v3090
        %v3092 = vpop.f32.mrf.mxu0
        %v3093 = vadd.f32 %v2924, %v3092
        %3094 = vmatmul.bf16.gmra.mxu0 %v489
        %v3095 = vpop.f32.mrf.mxu0
        %v3096 = vadd.f32 %v2927, %v3095
        %v3097 = vpop.f32.mrf.mxu0
        %v3098 = vadd.f32 %v2929, %v3097
        %3099 = vmatmul.bf16.gmra.mxu0 %v492
        %v3100 = vpop.f32.mrf.mxu0
        %v3101 = vadd.f32 %v2932, %v3100
        %v3102 = vpop.f32.mrf.mxu0
        %v3103 = vadd.f32 %v2934, %v3102
        %3104 = vmatmul.bf16.gmra.mxu0 %v495
        %v3105 = vpop.f32.mrf.mxu0
        %v3106 = vadd.f32 %v2937, %v3105
        %v3107 = vpop.f32.mrf.mxu0
        %v3108 = vadd.f32 %v2939, %v3107
        %3109 = vmatmul.bf16.gmra.mxu0 %v498
        %v3110 = vpop.f32.mrf.mxu0
        %v3111 = vadd.f32 %v2942, %v3110
        %v3112 = vpop.f32.mrf.mxu0
        %v3113 = vadd.f32 %v2944, %v3112
        %3114 = vmatmul.bf16.gmra.mxu0 %v501
        %v3115 = vpop.f32.mrf.mxu0
        %v3116 = vadd.f32 %v2947, %v3115
        %v3117 = vpop.f32.mrf.mxu0
        %v3118 = vadd.f32 %v2949, %v3117
        %3119 = vmatmul.bf16.gmra.mxu0 %v504
        %v3120 = vpop.f32.mrf.mxu0
        %v3121 = vadd.f32 %v2952, %v3120
        %v3122 = vpop.f32.mrf.mxu0
        %v3123 = vadd.f32 %v2954, %v3122
        %3124 = vmatmul.bf16.gmra.mxu0 %v507
        %v3125 = vpop.f32.mrf.mxu0
        %v3126 = vadd.f32 %v2957, %v3125
        %v3127 = vpop.f32.mrf.mxu0
        %v3128 = vadd.f32 %v2959, %v3127
        %3129 = vmatmul.bf16.gmra.mxu0 %v510
        %v3130 = vpop.f32.mrf.mxu0
        %v3131 = vadd.f32 %v2962, %v3130
        %v3132 = vpop.f32.mrf.mxu0
        %v3133 = vadd.f32 %v2964, %v3132
        %3134 = vmatmul.bf16.gmra.mxu0 %v513
        %v3135 = vpop.f32.mrf.mxu0
        %v3136 = vadd.f32 %v2967, %v3135
        %v3137 = vpop.f32.mrf.mxu0
        %v3138 = vadd.f32 %v2969, %v3137
        %3139 = vmatmul.bf16.gmra.mxu0 %v516
        %v3140 = vpop.f32.mrf.mxu0
        %v3141 = vadd.f32 %v2972, %v3140
        %v3142 = vpop.f32.mrf.mxu0
        %v3143 = vadd.f32 %v2974, %v3142
        %3144 = vmatmul.bf16.gmra.mxu0 %v519
        %v3145 = vpop.f32.mrf.mxu0
        %v3146 = vadd.f32 %v2977, %v3145
        %v3147 = vpop.f32.mrf.mxu0
        %v3148 = vadd.f32 %v2979, %v3147
        %3149 = vmatmul.bf16.gmra.mxu0 %v522
        %v3150 = vpop.f32.mrf.mxu0
        %v3151 = vadd.f32 %v2982, %v3150
        %v3152 = vpop.f32.mrf.mxu0
        %v3153 = vadd.f32 %v2984, %v3152
        %3154 = vmatmul.bf16.gmra.mxu0 %v525
        %v3155 = vpop.f32.mrf.mxu0
        %v3156 = vadd.f32 %v2987, %v3155
        %v3157 = vpop.f32.mrf.mxu0
        %v3158 = vadd.f32 %v2989, %v3157
        %3159 = vmatmul.bf16.gmra.mxu0 %v528
        %v3160 = vpop.f32.mrf.mxu0
        %v3161 = vadd.f32 %v2992, %v3160
        %v3162 = vpop.f32.mrf.mxu0
        %v3163 = vadd.f32 %v2994, %v3162
        %3164 = vmatmul.bf16.gmra.mxu0 %v531
        %v3165 = vpop.f32.mrf.mxu0
        %v3166 = vadd.f32 %v2997, %v3165
        %v3167 = vpop.f32.mrf.mxu0
        %v3168 = vadd.f32 %v2999, %v3167
        %3169 = vmatmul.bf16.gmra.mxu0 %v534
        %v3170 = vpop.f32.mrf.mxu0
        %v3171 = vadd.f32 %v3002, %v3170
        %v3172 = vpop.f32.mrf.mxu0
        %v3173 = vadd.f32 %v3004, %v3172
        %3174 = vdwg.mxu0
        %3175 = vmatpush.bf16.msra.mxu0 %v1194
        %3176 = vmatpush.bf16.msra.mxu0 %v1189
        %3177 = vmatpush.bf16.msra.mxu0 %v1184
        %3178 = vmatpush.bf16.msra.mxu0 %v1179
        %3179 = vmatpush.bf16.msra.mxu0 %v1174
        %3180 = vmatpush.bf16.msra.mxu0 %v1169
        %3181 = vmatpush.bf16.msra.mxu0 %v1164
        %3182 = vmatpush.bf16.msra.mxu0 %v1159
        %3183 = vmatmul.bf16.gmra.mxu0 %v442
        %v3184 = vpop.f32.mrf.mxu0
        %v3185 = vadd.f32 %v3016, %v3184
        %v3186 = vpop.f32.mrf.mxu0
        %v3187 = vadd.f32 %v3018, %v3186
        %3188 = vmatmul.bf16.gmra.mxu0 %v445
        %v3189 = vpop.f32.mrf.mxu0
        %v3190 = vadd.f32 %v3021, %v3189
        %v3191 = vpop.f32.mrf.mxu0
        %v3192 = vadd.f32 %v3023, %v3191
        %3193 = vmatmul.bf16.gmra.mxu0 %v448
        %v3194 = vpop.f32.mrf.mxu0
        %v3195 = vadd.f32 %v3026, %v3194
        %v3196 = vpop.f32.mrf.mxu0
        %v3197 = vadd.f32 %v3028, %v3196
        %3198 = vmatmul.bf16.gmra.mxu0 %v451
        %v3199 = vpop.f32.mrf.mxu0
        %v3200 = vadd.f32 %v3031, %v3199
        %v3201 = vpop.f32.mrf.mxu0
        %v3202 = vadd.f32 %v3033, %v3201
        %3203 = vmatmul.bf16.gmra.mxu0 %v454
        %v3204 = vpop.f32.mrf.mxu0
        %v3205 = vadd.f32 %v3036, %v3204
        %v3206 = vpop.f32.mrf.mxu0
        %v3207 = vadd.f32 %v3038, %v3206
        %3208 = vmatmul.bf16.gmra.mxu0 %v457
        %v3209 = vpop.f32.mrf.mxu0
        %v3210 = vadd.f32 %v3041, %v3209
        %v3211 = vpop.f32.mrf.mxu0
        %v3212 = vadd.f32 %v3043, %v3211
        %3213 = vmatmul.bf16.gmra.mxu0 %v460
        %v3214 = vpop.f32.mrf.mxu0
        %v3215 = vadd.f32 %v3046, %v3214
        %v3216 = vpop.f32.mrf.mxu0
        %v3217 = vadd.f32 %v3048, %v3216
        %3218 = vmatmul.bf16.gmra.mxu0 %v463
        %v3219 = vpop.f32.mrf.mxu0
        %v3220 = vadd.f32 %v3051, %v3219
        %v3221 = vpop.f32.mrf.mxu0
        %v3222 = vadd.f32 %v3053, %v3221
        %3223 = vmatmul.bf16.gmra.mxu0 %v466
        %v3224 = vpop.f32.mrf.mxu0
        %v3225 = vadd.f32 %v3056, %v3224
        %v3226 = vpop.f32.mrf.mxu0
        %v3227 = vadd.f32 %v3058, %v3226
        %3228 = vmatmul.bf16.gmra.mxu0 %v469
        %v3229 = vpop.f32.mrf.mxu0
        %v3230 = vadd.f32 %v3061, %v3229
        %v3231 = vpop.f32.mrf.mxu0
        %v3232 = vadd.f32 %v3063, %v3231
        %3233 = vmatmul.bf16.gmra.mxu0 %v472
        %v3234 = vpop.f32.mrf.mxu0
        %v3235 = vadd.f32 %v3066, %v3234
        %v3236 = vpop.f32.mrf.mxu0
        %v3237 = vadd.f32 %v3068, %v3236
        %3238 = vmatmul.bf16.gmra.mxu0 %v475
        %v3239 = vpop.f32.mrf.mxu0
        %v3240 = vadd.f32 %v3071, %v3239
        %v3241 = vpop.f32.mrf.mxu0
        %v3242 = vadd.f32 %v3073, %v3241
        %3243 = vmatmul.bf16.gmra.mxu0 %v478
        %v3244 = vpop.f32.mrf.mxu0
        %v3245 = vadd.f32 %v3076, %v3244
        %v3246 = vpop.f32.mrf.mxu0
        %v3247 = vadd.f32 %v3078, %v3246
        %3248 = vmatmul.bf16.gmra.mxu0 %v481
        %v3249 = vpop.f32.mrf.mxu0
        %v3250 = vadd.f32 %v3081, %v3249
        %v3251 = vpop.f32.mrf.mxu0
        %v3252 = vadd.f32 %v3083, %v3251
        %3253 = vmatmul.bf16.gmra.mxu0 %v484
        %v3254 = vpop.f32.mrf.mxu0
        %v3255 = vadd.f32 %v3086, %v3254
        %v3256 = vpop.f32.mrf.mxu0
        %v3257 = vadd.f32 %v3088, %v3256
        %3258 = vmatmul.bf16.gmra.mxu0 %v487
        %v3259 = vpop.f32.mrf.mxu0
        %v3260 = vadd.f32 %v3091, %v3259
        %v3261 = vpop.f32.mrf.mxu0
        %v3262 = vadd.f32 %v3093, %v3261
        %3263 = vmatmul.bf16.gmra.mxu0 %v490
        %v3264 = vpop.f32.mrf.mxu0
        %v3265 = vadd.f32 %v3096, %v3264
        %v3266 = vpop.f32.mrf.mxu0
        %v3267 = vadd.f32 %v3098, %v3266
        %3268 = vmatmul.bf16.gmra.mxu0 %v493
        %v3269 = vpop.f32.mrf.mxu0
        %v3270 = vadd.f32 %v3101, %v3269
        %v3271 = vpop.f32.mrf.mxu0
        %v3272 = vadd.f32 %v3103, %v3271
        %3273 = vmatmul.bf16.gmra.mxu0 %v496
        %v3274 = vpop.f32.mrf.mxu0
        %v3275 = vadd.f32 %v3106, %v3274
        %v3276 = vpop.f32.mrf.mxu0
        %v3277 = vadd.f32 %v3108, %v3276
        %3278 = vmatmul.bf16.gmra.mxu0 %v499
        %v3279 = vpop.f32.mrf.mxu0
        %v3280 = vadd.f32 %v3111, %v3279
        %v3281 = vpop.f32.mrf.mxu0
        %v3282 = vadd.f32 %v3113, %v3281
        %3283 = vmatmul.bf16.gmra.mxu0 %v502
        %v3284 = vpop.f32.mrf.mxu0
        %v3285 = vadd.f32 %v3116, %v3284
        %v3286 = vpop.f32.mrf.mxu0
        %v3287 = vadd.f32 %v3118, %v3286
        %3288 = vmatmul.bf16.gmra.mxu0 %v505
        %v3289 = vpop.f32.mrf.mxu0
        %v3290 = vadd.f32 %v3121, %v3289
        %v3291 = vpop.f32.mrf.mxu0
        %v3292 = vadd.f32 %v3123, %v3291
        %3293 = vmatmul.bf16.gmra.mxu0 %v508
        %v3294 = vpop.f32.mrf.mxu0
        %v3295 = vadd.f32 %v3126, %v3294
        %v3296 = vpop.f32.mrf.mxu0
        %v3297 = vadd.f32 %v3128, %v3296
        %3298 = vmatmul.bf16.gmra.mxu0 %v511
        %v3299 = vpop.f32.mrf.mxu0
        %v3300 = vadd.f32 %v3131, %v3299
        %v3301 = vpop.f32.mrf.mxu0
        %v3302 = vadd.f32 %v3133, %v3301
        %3303 = vmatmul.bf16.gmra.mxu0 %v514
        %v3304 = vpop.f32.mrf.mxu0
        %v3305 = vadd.f32 %v3136, %v3304
        %v3306 = vpop.f32.mrf.mxu0
        %v3307 = vadd.f32 %v3138, %v3306
        %3308 = vmatmul.bf16.gmra.mxu0 %v517
        %v3309 = vpop.f32.mrf.mxu0
        %v3310 = vadd.f32 %v3141, %v3309
        %v3311 = vpop.f32.mrf.mxu0
        %v3312 = vadd.f32 %v3143, %v3311
        %3313 = vmatmul.bf16.gmra.mxu0 %v520
        %v3314 = vpop.f32.mrf.mxu0
        %v3315 = vadd.f32 %v3146, %v3314
        %v3316 = vpop.f32.mrf.mxu0
        %v3317 = vadd.f32 %v3148, %v3316
        %3318 = vmatmul.bf16.gmra.mxu0 %v523
        %v3319 = vpop.f32.mrf.mxu0
        %v3320 = vadd.f32 %v3151, %v3319
        %v3321 = vpop.f32.mrf.mxu0
        %v3322 = vadd.f32 %v3153, %v3321
        %3323 = vmatmul.bf16.gmra.mxu0 %v526
        %v3324 = vpop.f32.mrf.mxu0
        %v3325 = vadd.f32 %v3156, %v3324
        %v3326 = vpop.f32.mrf.mxu0
        %v3327 = vadd.f32 %v3158, %v3326
        %3328 = vmatmul.bf16.gmra.mxu0 %v529
        %v3329 = vpop.f32.mrf.mxu0
        %v3330 = vadd.f32 %v3161, %v3329
        %v3331 = vpop.f32.mrf.mxu0
        %v3332 = vadd.f32 %v3163, %v3331
        %3333 = vmatmul.bf16.gmra.mxu0 %v532
        %v3334 = vpop.f32.mrf.mxu0
        %v3335 = vadd.f32 %v3166, %v3334
        %v3336 = vpop.f32.mrf.mxu0
        %v3337 = vadd.f32 %v3168, %v3336
        %3338 = vmatmul.bf16.gmra.mxu0 %v535
        %v3339 = vpop.f32.mrf.mxu0
        %v3340 = vadd.f32 %v3171, %v3339
        %v3341 = vpop.f32.mrf.mxu0
        %v3342 = vadd.f32 %v3173, %v3341
        %3343 = vdwg.mxu0
        %3344 = vmatpush.bf16.msra.mxu0 %v1115
        %3345 = vmatpush.bf16.msra.mxu0 %v1110
        %3346 = vmatpush.bf16.msra.mxu0 %v1105
        %3347 = vmatpush.bf16.msra.mxu0 %v1100
        %3348 = vmatpush.bf16.msra.mxu0 %v1095
        %3349 = vmatpush.bf16.msra.mxu0 %v1090
        %3350 = vmatpush.bf16.msra.mxu0 %v1085
        %3351 = vmatpush.bf16.msra.mxu0 %v1080
        %3352 = vmatmul.bf16.gmra.mxu0 %v440
        %v3353 = vpop.f32.mrf.mxu0
        %v3354 = vadd.f32 %v686, %v3353
        %v3355 = vpop.f32.mrf.mxu0
        %v3356 = vadd.f32 %v686, %v3355
        %3357 = vmatmul.bf16.gmra.mxu0 %v443
        %v3358 = vpop.f32.mrf.mxu0
        %v3359 = vadd.f32 %v686, %v3358
        %v3360 = vpop.f32.mrf.mxu0
        %v3361 = vadd.f32 %v686, %v3360
        %3362 = vmatmul.bf16.gmra.mxu0 %v446
        %v3363 = vpop.f32.mrf.mxu0
        %v3364 = vadd.f32 %v686, %v3363
        %v3365 = vpop.f32.mrf.mxu0
        %v3366 = vadd.f32 %v686, %v3365
        %3367 = vmatmul.bf16.gmra.mxu0 %v449
        %v3368 = vpop.f32.mrf.mxu0
        %v3369 = vadd.f32 %v686, %v3368
        %v3370 = vpop.f32.mrf.mxu0
        %v3371 = vadd.f32 %v686, %v3370
        %3372 = vmatmul.bf16.gmra.mxu0 %v452
        %v3373 = vpop.f32.mrf.mxu0
        %v3374 = vadd.f32 %v686, %v3373
        %v3375 = vpop.f32.mrf.mxu0
        %v3376 = vadd.f32 %v686, %v3375
        %3377 = vmatmul.bf16.gmra.mxu0 %v455
        %v3378 = vpop.f32.mrf.mxu0
        %v3379 = vadd.f32 %v686, %v3378
        %v3380 = vpop.f32.mrf.mxu0
        %v3381 = vadd.f32 %v686, %v3380
        %3382 = vmatmul.bf16.gmra.mxu0 %v458
        %v3383 = vpop.f32.mrf.mxu0
        %v3384 = vadd.f32 %v686, %v3383
        %v3385 = vpop.f32.mrf.mxu0
        %v3386 = vadd.f32 %v686, %v3385
        %3387 = vmatmul.bf16.gmra.mxu0 %v461
        %v3388 = vpop.f32.mrf.mxu0
        %v3389 = vadd.f32 %v686, %v3388
        %v3390 = vpop.f32.mrf.mxu0
        %v3391 = vadd.f32 %v686, %v3390
        %3392 = vmatmul.bf16.gmra.mxu0 %v464
        %v3393 = vpop.f32.mrf.mxu0
        %v3394 = vadd.f32 %v686, %v3393
        %v3395 = vpop.f32.mrf.mxu0
        %v3396 = vadd.f32 %v686, %v3395
        %3397 = vmatmul.bf16.gmra.mxu0 %v467
        %v3398 = vpop.f32.mrf.mxu0
        %v3399 = vadd.f32 %v686, %v3398
        %v3400 = vpop.f32.mrf.mxu0
        %v3401 = vadd.f32 %v686, %v3400
        %3402 = vmatmul.bf16.gmra.mxu0 %v470
        %v3403 = vpop.f32.mrf.mxu0
        %v3404 = vadd.f32 %v686, %v3403
        %v3405 = vpop.f32.mrf.mxu0
        %v3406 = vadd.f32 %v686, %v3405
        %3407 = vmatmul.bf16.gmra.mxu0 %v473
        %v3408 = vpop.f32.mrf.mxu0
        %v3409 = vadd.f32 %v686, %v3408
        %v3410 = vpop.f32.mrf.mxu0
        %v3411 = vadd.f32 %v686, %v3410
        %3412 = vmatmul.bf16.gmra.mxu0 %v476
        %v3413 = vpop.f32.mrf.mxu0
        %v3414 = vadd.f32 %v686, %v3413
        %v3415 = vpop.f32.mrf.mxu0
        %v3416 = vadd.f32 %v686, %v3415
        %3417 = vmatmul.bf16.gmra.mxu0 %v479
        %v3418 = vpop.f32.mrf.mxu0
        %v3419 = vadd.f32 %v686, %v3418
        %v3420 = vpop.f32.mrf.mxu0
        %v3421 = vadd.f32 %v686, %v3420
        %3422 = vmatmul.bf16.gmra.mxu0 %v482
        %v3423 = vpop.f32.mrf.mxu0
        %v3424 = vadd.f32 %v686, %v3423
        %v3425 = vpop.f32.mrf.mxu0
        %v3426 = vadd.f32 %v686, %v3425
        %3427 = vmatmul.bf16.gmra.mxu0 %v485
        %v3428 = vpop.f32.mrf.mxu0
        %v3429 = vadd.f32 %v686, %v3428
        %v3430 = vpop.f32.mrf.mxu0
        %v3431 = vadd.f32 %v686, %v3430
        %3432 = vmatmul.bf16.gmra.mxu0 %v488
        %v3433 = vpop.f32.mrf.mxu0
        %v3434 = vadd.f32 %v686, %v3433
        %v3435 = vpop.f32.mrf.mxu0
        %v3436 = vadd.f32 %v686, %v3435
        %3437 = vmatmul.bf16.gmra.mxu0 %v491
        %v3438 = vpop.f32.mrf.mxu0
        %v3439 = vadd.f32 %v686, %v3438
        %v3440 = vpop.f32.mrf.mxu0
        %v3441 = vadd.f32 %v686, %v3440
        %3442 = vmatmul.bf16.gmra.mxu0 %v494
        %v3443 = vpop.f32.mrf.mxu0
        %v3444 = vadd.f32 %v686, %v3443
        %v3445 = vpop.f32.mrf.mxu0
        %v3446 = vadd.f32 %v686, %v3445
        %3447 = vmatmul.bf16.gmra.mxu0 %v497
        %v3448 = vpop.f32.mrf.mxu0
        %v3449 = vadd.f32 %v686, %v3448
        %v3450 = vpop.f32.mrf.mxu0
        %v3451 = vadd.f32 %v686, %v3450
        %3452 = vmatmul.bf16.gmra.mxu0 %v500
        %v3453 = vpop.f32.mrf.mxu0
        %v3454 = vadd.f32 %v686, %v3453
        %v3455 = vpop.f32.mrf.mxu0
        %v3456 = vadd.f32 %v686, %v3455
        %3457 = vmatmul.bf16.gmra.mxu0 %v503
        %v3458 = vpop.f32.mrf.mxu0
        %v3459 = vadd.f32 %v686, %v3458
        %v3460 = vpop.f32.mrf.mxu0
        %v3461 = vadd.f32 %v686, %v3460
        %3462 = vmatmul.bf16.gmra.mxu0 %v506
        %v3463 = vpop.f32.mrf.mxu0
        %v3464 = vadd.f32 %v686, %v3463
        %v3465 = vpop.f32.mrf.mxu0
        %v3466 = vadd.f32 %v686, %v3465
        %3467 = vmatmul.bf16.gmra.mxu0 %v509
        %v3468 = vpop.f32.mrf.mxu0
        %v3469 = vadd.f32 %v686, %v3468
        %v3470 = vpop.f32.mrf.mxu0
        %v3471 = vadd.f32 %v686, %v3470
        %3472 = vmatmul.bf16.gmra.mxu0 %v512
        %v3473 = vpop.f32.mrf.mxu0
        %v3474 = vadd.f32 %v686, %v3473
        %v3475 = vpop.f32.mrf.mxu0
        %v3476 = vadd.f32 %v686, %v3475
        %3477 = vmatmul.bf16.gmra.mxu0 %v515
        %v3478 = vpop.f32.mrf.mxu0
        %v3479 = vadd.f32 %v686, %v3478
        %v3480 = vpop.f32.mrf.mxu0
        %v3481 = vadd.f32 %v686, %v3480
        %3482 = vmatmul.bf16.gmra.mxu0 %v518
        %v3483 = vpop.f32.mrf.mxu0
        %v3484 = vadd.f32 %v686, %v3483
        %v3485 = vpop.f32.mrf.mxu0
        %v3486 = vadd.f32 %v686, %v3485
        %3487 = vmatmul.bf16.gmra.mxu0 %v521
        %v3488 = vpop.f32.mrf.mxu0
        %v3489 = vadd.f32 %v686, %v3488
        %v3490 = vpop.f32.mrf.mxu0
        %v3491 = vadd.f32 %v686, %v3490
        %3492 = vmatmul.bf16.gmra.mxu0 %v524
        %v3493 = vpop.f32.mrf.mxu0
        %v3494 = vadd.f32 %v686, %v3493
        %v3495 = vpop.f32.mrf.mxu0
        %v3496 = vadd.f32 %v686, %v3495
        %3497 = vmatmul.bf16.gmra.mxu0 %v527
        %v3498 = vpop.f32.mrf.mxu0
        %v3499 = vadd.f32 %v686, %v3498
        %v3500 = vpop.f32.mrf.mxu0
        %v3501 = vadd.f32 %v686, %v3500
        %3502 = vmatmul.bf16.gmra.mxu0 %v530
        %v3503 = vpop.f32.mrf.mxu0
        %v3504 = vadd.f32 %v686, %v3503
        %v3505 = vpop.f32.mrf.mxu0
        %v3506 = vadd.f32 %v686, %v3505
        %3507 = vmatmul.bf16.gmra.mxu0 %v533
        %v3508 = vpop.f32.mrf.mxu0
        %v3509 = vadd.f32 %v686, %v3508
        %v3510 = vpop.f32.mrf.mxu0
        %v3511 = vadd.f32 %v686, %v3510
        %3512 = vdwg.mxu0
        %3513 = vmatpush.bf16.msra.mxu0 %v1155
        %3514 = vmatpush.bf16.msra.mxu0 %v1150
        %3515 = vmatpush.bf16.msra.mxu0 %v1145
        %3516 = vmatpush.bf16.msra.mxu0 %v1140
        %3517 = vmatpush.bf16.msra.mxu0 %v1135
        %3518 = vmatpush.bf16.msra.mxu0 %v1130
        %3519 = vmatpush.bf16.msra.mxu0 %v1125
        %3520 = vmatpush.bf16.msra.mxu0 %v1120
        %3521 = vmatmul.bf16.gmra.mxu0 %v441
        %v3522 = vpop.f32.mrf.mxu0
        %v3523 = vadd.f32 %v3354, %v3522
        %v3524 = vpop.f32.mrf.mxu0
        %v3525 = vadd.f32 %v3356, %v3524
        %3526 = vmatmul.bf16.gmra.mxu0 %v444
        %v3527 = vpop.f32.mrf.mxu0
        %v3528 = vadd.f32 %v3359, %v3527
        %v3529 = vpop.f32.mrf.mxu0
        %v3530 = vadd.f32 %v3361, %v3529
        %3531 = vmatmul.bf16.gmra.mxu0 %v447
        %v3532 = vpop.f32.mrf.mxu0
        %v3533 = vadd.f32 %v3364, %v3532
        %v3534 = vpop.f32.mrf.mxu0
        %v3535 = vadd.f32 %v3366, %v3534
        %3536 = vmatmul.bf16.gmra.mxu0 %v450
        %v3537 = vpop.f32.mrf.mxu0
        %v3538 = vadd.f32 %v3369, %v3537
        %v3539 = vpop.f32.mrf.mxu0
        %v3540 = vadd.f32 %v3371, %v3539
        %3541 = vmatmul.bf16.gmra.mxu0 %v453
        %v3542 = vpop.f32.mrf.mxu0
        %v3543 = vadd.f32 %v3374, %v3542
        %v3544 = vpop.f32.mrf.mxu0
        %v3545 = vadd.f32 %v3376, %v3544
        %3546 = vmatmul.bf16.gmra.mxu0 %v456
        %v3547 = vpop.f32.mrf.mxu0
        %v3548 = vadd.f32 %v3379, %v3547
        %v3549 = vpop.f32.mrf.mxu0
        %v3550 = vadd.f32 %v3381, %v3549
        %3551 = vmatmul.bf16.gmra.mxu0 %v459
        %v3552 = vpop.f32.mrf.mxu0
        %v3553 = vadd.f32 %v3384, %v3552
        %v3554 = vpop.f32.mrf.mxu0
        %v3555 = vadd.f32 %v3386, %v3554
        %3556 = vmatmul.bf16.gmra.mxu0 %v462
        %v3557 = vpop.f32.mrf.mxu0
        %v3558 = vadd.f32 %v3389, %v3557
        %v3559 = vpop.f32.mrf.mxu0
        %v3560 = vadd.f32 %v3391, %v3559
        %3561 = vmatmul.bf16.gmra.mxu0 %v465
        %v3562 = vpop.f32.mrf.mxu0
        %v3563 = vadd.f32 %v3394, %v3562
        %v3564 = vpop.f32.mrf.mxu0
        %v3565 = vadd.f32 %v3396, %v3564
        %3566 = vmatmul.bf16.gmra.mxu0 %v468
        %v3567 = vpop.f32.mrf.mxu0
        %v3568 = vadd.f32 %v3399, %v3567
        %v3569 = vpop.f32.mrf.mxu0
        %v3570 = vadd.f32 %v3401, %v3569
        %3571 = vmatmul.bf16.gmra.mxu0 %v471
        %v3572 = vpop.f32.mrf.mxu0
        %v3573 = vadd.f32 %v3404, %v3572
        %v3574 = vpop.f32.mrf.mxu0
        %v3575 = vadd.f32 %v3406, %v3574
        %3576 = vmatmul.bf16.gmra.mxu0 %v474
        %v3577 = vpop.f32.mrf.mxu0
        %v3578 = vadd.f32 %v3409, %v3577
        %v3579 = vpop.f32.mrf.mxu0
        %v3580 = vadd.f32 %v3411, %v3579
        %3581 = vmatmul.bf16.gmra.mxu0 %v477
        %v3582 = vpop.f32.mrf.mxu0
        %v3583 = vadd.f32 %v3414, %v3582
        %v3584 = vpop.f32.mrf.mxu0
        %v3585 = vadd.f32 %v3416, %v3584
        %3586 = vmatmul.bf16.gmra.mxu0 %v480
        %v3587 = vpop.f32.mrf.mxu0
        %v3588 = vadd.f32 %v3419, %v3587
        %v3589 = vpop.f32.mrf.mxu0
        %v3590 = vadd.f32 %v3421, %v3589
        %3591 = vmatmul.bf16.gmra.mxu0 %v483
        %v3592 = vpop.f32.mrf.mxu0
        %v3593 = vadd.f32 %v3424, %v3592
        %v3594 = vpop.f32.mrf.mxu0
        %v3595 = vadd.f32 %v3426, %v3594
        %3596 = vmatmul.bf16.gmra.mxu0 %v486
        %v3597 = vpop.f32.mrf.mxu0
        %v3598 = vadd.f32 %v3429, %v3597
        %v3599 = vpop.f32.mrf.mxu0
        %v3600 = vadd.f32 %v3431, %v3599
        %3601 = vmatmul.bf16.gmra.mxu0 %v489
        %v3602 = vpop.f32.mrf.mxu0
        %v3603 = vadd.f32 %v3434, %v3602
        %v3604 = vpop.f32.mrf.mxu0
        %v3605 = vadd.f32 %v3436, %v3604
        %3606 = vmatmul.bf16.gmra.mxu0 %v492
        %v3607 = vpop.f32.mrf.mxu0
        %v3608 = vadd.f32 %v3439, %v3607
        %v3609 = vpop.f32.mrf.mxu0
        %v3610 = vadd.f32 %v3441, %v3609
        %3611 = vmatmul.bf16.gmra.mxu0 %v495
        %v3612 = vpop.f32.mrf.mxu0
        %v3613 = vadd.f32 %v3444, %v3612
        %v3614 = vpop.f32.mrf.mxu0
        %v3615 = vadd.f32 %v3446, %v3614
        %3616 = vmatmul.bf16.gmra.mxu0 %v498
        %v3617 = vpop.f32.mrf.mxu0
        %v3618 = vadd.f32 %v3449, %v3617
        %v3619 = vpop.f32.mrf.mxu0
        %v3620 = vadd.f32 %v3451, %v3619
        %3621 = vmatmul.bf16.gmra.mxu0 %v501
        %v3622 = vpop.f32.mrf.mxu0
        %v3623 = vadd.f32 %v3454, %v3622
        %v3624 = vpop.f32.mrf.mxu0
        %v3625 = vadd.f32 %v3456, %v3624
        %3626 = vmatmul.bf16.gmra.mxu0 %v504
        %v3627 = vpop.f32.mrf.mxu0
        %v3628 = vadd.f32 %v3459, %v3627
        %v3629 = vpop.f32.mrf.mxu0
        %v3630 = vadd.f32 %v3461, %v3629
        %3631 = vmatmul.bf16.gmra.mxu0 %v507
        %v3632 = vpop.f32.mrf.mxu0
        %v3633 = vadd.f32 %v3464, %v3632
        %v3634 = vpop.f32.mrf.mxu0
        %v3635 = vadd.f32 %v3466, %v3634
        %3636 = vmatmul.bf16.gmra.mxu0 %v510
        %v3637 = vpop.f32.mrf.mxu0
        %v3638 = vadd.f32 %v3469, %v3637
        %v3639 = vpop.f32.mrf.mxu0
        %v3640 = vadd.f32 %v3471, %v3639
        %3641 = vmatmul.bf16.gmra.mxu0 %v513
        %v3642 = vpop.f32.mrf.mxu0
        %v3643 = vadd.f32 %v3474, %v3642
        %v3644 = vpop.f32.mrf.mxu0
        %v3645 = vadd.f32 %v3476, %v3644
        %3646 = vmatmul.bf16.gmra.mxu0 %v516
        %v3647 = vpop.f32.mrf.mxu0
        %v3648 = vadd.f32 %v3479, %v3647
        %v3649 = vpop.f32.mrf.mxu0
        %v3650 = vadd.f32 %v3481, %v3649
        %3651 = vmatmul.bf16.gmra.mxu0 %v519
        %v3652 = vpop.f32.mrf.mxu0
        %v3653 = vadd.f32 %v3484, %v3652
        %v3654 = vpop.f32.mrf.mxu0
        %v3655 = vadd.f32 %v3486, %v3654
        %3656 = vmatmul.bf16.gmra.mxu0 %v522
        %v3657 = vpop.f32.mrf.mxu0
        %v3658 = vadd.f32 %v3489, %v3657
        %v3659 = vpop.f32.mrf.mxu0
        %v3660 = vadd.f32 %v3491, %v3659
        %3661 = vmatmul.bf16.gmra.mxu0 %v525
        %v3662 = vpop.f32.mrf.mxu0
        %v3663 = vadd.f32 %v3494, %v3662
        %v3664 = vpop.f32.mrf.mxu0
        %v3665 = vadd.f32 %v3496, %v3664
        %3666 = vmatmul.bf16.gmra.mxu0 %v528
        %v3667 = vpop.f32.mrf.mxu0
        %v3668 = vadd.f32 %v3499, %v3667
        %v3669 = vpop.f32.mrf.mxu0
        %v3670 = vadd.f32 %v3501, %v3669
        %3671 = vmatmul.bf16.gmra.mxu0 %v531
        %v3672 = vpop.f32.mrf.mxu0
        %v3673 = vadd.f32 %v3504, %v3672
        %v3674 = vpop.f32.mrf.mxu0
        %v3675 = vadd.f32 %v3506, %v3674
        %3676 = vmatmul.bf16.gmra.mxu0 %v534
        %v3677 = vpop.f32.mrf.mxu0
        %v3678 = vadd.f32 %v3509, %v3677
        %v3679 = vpop.f32.mrf.mxu0
        %v3680 = vadd.f32 %v3511, %v3679
        %3681 = vdwg.mxu0
        %3682 = vmatpush.bf16.msra.mxu0 %v1195
        %3683 = vmatpush.bf16.msra.mxu0 %v1190
        %3684 = vmatpush.bf16.msra.mxu0 %v1185
        %3685 = vmatpush.bf16.msra.mxu0 %v1180
        %3686 = vmatpush.bf16.msra.mxu0 %v1175
        %3687 = vmatpush.bf16.msra.mxu0 %v1170
        %3688 = vmatpush.bf16.msra.mxu0 %v1165
        %3689 = vmatpush.bf16.msra.mxu0 %v1160
        %3690 = vmatmul.bf16.gmra.mxu0 %v442
        %v3691 = vpop.f32.mrf.mxu0
        %v3692 = vadd.f32 %v3523, %v3691
        %v3693 = vpop.f32.mrf.mxu0
        %v3694 = vadd.f32 %v3525, %v3693
        %3695 = vmatmul.bf16.gmra.mxu0 %v445
        %v3696 = vpop.f32.mrf.mxu0
        %v3697 = vadd.f32 %v3528, %v3696
        %v3698 = vpop.f32.mrf.mxu0
        %v3699 = vadd.f32 %v3530, %v3698
        %3700 = vmatmul.bf16.gmra.mxu0 %v448
        %v3701 = vpop.f32.mrf.mxu0
        %v3702 = vadd.f32 %v3533, %v3701
        %v3703 = vpop.f32.mrf.mxu0
        %v3704 = vadd.f32 %v3535, %v3703
        %3705 = vmatmul.bf16.gmra.mxu0 %v451
        %v3706 = vpop.f32.mrf.mxu0
        %v3707 = vadd.f32 %v3538, %v3706
        %v3708 = vpop.f32.mrf.mxu0
        %v3709 = vadd.f32 %v3540, %v3708
        %3710 = vmatmul.bf16.gmra.mxu0 %v454
        %v3711 = vpop.f32.mrf.mxu0
        %v3712 = vadd.f32 %v3543, %v3711
        %v3713 = vpop.f32.mrf.mxu0
        %v3714 = vadd.f32 %v3545, %v3713
        %3715 = vmatmul.bf16.gmra.mxu0 %v457
        %v3716 = vpop.f32.mrf.mxu0
        %v3717 = vadd.f32 %v3548, %v3716
        %v3718 = vpop.f32.mrf.mxu0
        %v3719 = vadd.f32 %v3550, %v3718
        %3720 = vmatmul.bf16.gmra.mxu0 %v460
        %v3721 = vpop.f32.mrf.mxu0
        %v3722 = vadd.f32 %v3553, %v3721
        %v3723 = vpop.f32.mrf.mxu0
        %v3724 = vadd.f32 %v3555, %v3723
        %3725 = vmatmul.bf16.gmra.mxu0 %v463
        %v3726 = vpop.f32.mrf.mxu0
        %v3727 = vadd.f32 %v3558, %v3726
        %v3728 = vpop.f32.mrf.mxu0
        %v3729 = vadd.f32 %v3560, %v3728
        %3730 = vmatmul.bf16.gmra.mxu0 %v466
        %v3731 = vpop.f32.mrf.mxu0
        %v3732 = vadd.f32 %v3563, %v3731
        %v3733 = vpop.f32.mrf.mxu0
        %v3734 = vadd.f32 %v3565, %v3733
        %3735 = vmatmul.bf16.gmra.mxu0 %v469
        %v3736 = vpop.f32.mrf.mxu0
        %v3737 = vadd.f32 %v3568, %v3736
        %v3738 = vpop.f32.mrf.mxu0
        %v3739 = vadd.f32 %v3570, %v3738
        %3740 = vmatmul.bf16.gmra.mxu0 %v472
        %v3741 = vpop.f32.mrf.mxu0
        %v3742 = vadd.f32 %v3573, %v3741
        %v3743 = vpop.f32.mrf.mxu0
        %v3744 = vadd.f32 %v3575, %v3743
        %3745 = vmatmul.bf16.gmra.mxu0 %v475
        %v3746 = vpop.f32.mrf.mxu0
        %v3747 = vadd.f32 %v3578, %v3746
        %v3748 = vpop.f32.mrf.mxu0
        %v3749 = vadd.f32 %v3580, %v3748
        %3750 = vmatmul.bf16.gmra.mxu0 %v478
        %v3751 = vpop.f32.mrf.mxu0
        %v3752 = vadd.f32 %v3583, %v3751
        %v3753 = vpop.f32.mrf.mxu0
        %v3754 = vadd.f32 %v3585, %v3753
        %3755 = vmatmul.bf16.gmra.mxu0 %v481
        %v3756 = vpop.f32.mrf.mxu0
        %v3757 = vadd.f32 %v3588, %v3756
        %v3758 = vpop.f32.mrf.mxu0
        %v3759 = vadd.f32 %v3590, %v3758
        %3760 = vmatmul.bf16.gmra.mxu0 %v484
        %v3761 = vpop.f32.mrf.mxu0
        %v3762 = vadd.f32 %v3593, %v3761
        %v3763 = vpop.f32.mrf.mxu0
        %v3764 = vadd.f32 %v3595, %v3763
        %3765 = vmatmul.bf16.gmra.mxu0 %v487
        %v3766 = vpop.f32.mrf.mxu0
        %v3767 = vadd.f32 %v3598, %v3766
        %v3768 = vpop.f32.mrf.mxu0
        %v3769 = vadd.f32 %v3600, %v3768
        %3770 = vmatmul.bf16.gmra.mxu0 %v490
        %v3771 = vpop.f32.mrf.mxu0
        %v3772 = vadd.f32 %v3603, %v3771
        %v3773 = vpop.f32.mrf.mxu0
        %v3774 = vadd.f32 %v3605, %v3773
        %3775 = vmatmul.bf16.gmra.mxu0 %v493
        %v3776 = vpop.f32.mrf.mxu0
        %v3777 = vadd.f32 %v3608, %v3776
        %v3778 = vpop.f32.mrf.mxu0
        %v3779 = vadd.f32 %v3610, %v3778
        %3780 = vmatmul.bf16.gmra.mxu0 %v496
        %v3781 = vpop.f32.mrf.mxu0
        %v3782 = vadd.f32 %v3613, %v3781
        %v3783 = vpop.f32.mrf.mxu0
        %v3784 = vadd.f32 %v3615, %v3783
        %3785 = vmatmul.bf16.gmra.mxu0 %v499
        %v3786 = vpop.f32.mrf.mxu0
        %v3787 = vadd.f32 %v3618, %v3786
        %v3788 = vpop.f32.mrf.mxu0
        %v3789 = vadd.f32 %v3620, %v3788
        %3790 = vmatmul.bf16.gmra.mxu0 %v502
        %v3791 = vpop.f32.mrf.mxu0
        %v3792 = vadd.f32 %v3623, %v3791
        %v3793 = vpop.f32.mrf.mxu0
        %v3794 = vadd.f32 %v3625, %v3793
        %3795 = vmatmul.bf16.gmra.mxu0 %v505
        %v3796 = vpop.f32.mrf.mxu0
        %v3797 = vadd.f32 %v3628, %v3796
        %v3798 = vpop.f32.mrf.mxu0
        %v3799 = vadd.f32 %v3630, %v3798
        %3800 = vmatmul.bf16.gmra.mxu0 %v508
        %v3801 = vpop.f32.mrf.mxu0
        %v3802 = vadd.f32 %v3633, %v3801
        %v3803 = vpop.f32.mrf.mxu0
        %v3804 = vadd.f32 %v3635, %v3803
        %3805 = vmatmul.bf16.gmra.mxu0 %v511
        %v3806 = vpop.f32.mrf.mxu0
        %v3807 = vadd.f32 %v3638, %v3806
        %v3808 = vpop.f32.mrf.mxu0
        %v3809 = vadd.f32 %v3640, %v3808
        %3810 = vmatmul.bf16.gmra.mxu0 %v514
        %v3811 = vpop.f32.mrf.mxu0
        %v3812 = vadd.f32 %v3643, %v3811
        %v3813 = vpop.f32.mrf.mxu0
        %v3814 = vadd.f32 %v3645, %v3813
        %3815 = vmatmul.bf16.gmra.mxu0 %v517
        %v3816 = vpop.f32.mrf.mxu0
        %v3817 = vadd.f32 %v3648, %v3816
        %v3818 = vpop.f32.mrf.mxu0
        %v3819 = vadd.f32 %v3650, %v3818
        %3820 = vmatmul.bf16.gmra.mxu0 %v520
        %v3821 = vpop.f32.mrf.mxu0
        %v3822 = vadd.f32 %v3653, %v3821
        %v3823 = vpop.f32.mrf.mxu0
        %v3824 = vadd.f32 %v3655, %v3823
        %3825 = vmatmul.bf16.gmra.mxu0 %v523
        %v3826 = vpop.f32.mrf.mxu0
        %v3827 = vadd.f32 %v3658, %v3826
        %v3828 = vpop.f32.mrf.mxu0
        %v3829 = vadd.f32 %v3660, %v3828
        %3830 = vmatmul.bf16.gmra.mxu0 %v526
        %v3831 = vpop.f32.mrf.mxu0
        %v3832 = vadd.f32 %v3663, %v3831
        %v3833 = vpop.f32.mrf.mxu0
        %v3834 = vadd.f32 %v3665, %v3833
        %3835 = vmatmul.bf16.gmra.mxu0 %v529
        %v3836 = vpop.f32.mrf.mxu0
        %v3837 = vadd.f32 %v3668, %v3836
        %v3838 = vpop.f32.mrf.mxu0
        %v3839 = vadd.f32 %v3670, %v3838
        %3840 = vmatmul.bf16.gmra.mxu0 %v532
        %v3841 = vpop.f32.mrf.mxu0
        %v3842 = vadd.f32 %v3673, %v3841
        %v3843 = vpop.f32.mrf.mxu0
        %v3844 = vadd.f32 %v3675, %v3843
        %3845 = vmatmul.bf16.gmra.mxu0 %v535
        %v3846 = vpop.f32.mrf.mxu0
        %v3847 = vadd.f32 %v3678, %v3846
        %v3848 = vpop.f32.mrf.mxu0
        %v3849 = vadd.f32 %v3680, %v3848
        %3850 = vdwg.mxu0
        %v3851 = vmax.f32 %v1664, 0.0
        %v3852 = vmax.f32 %v2171, 0.0
        %v3853 = vmax.f32 %v2678, 0.0
        %v3854 = vmax.f32 %v3185, 0.0
        %v3855 = vmax.f32 %v3692, 0.0
        %v3856 = vmax.f32 %v1666, 0.0
        %v3857 = vmax.f32 %v2173, 0.0
        %v3858 = vmax.f32 %v2680, 0.0
        %v3859 = vmax.f32 %v3187, 0.0
        %v3860 = vmax.f32 %v3694, 0.0
        %v3861 = vmax.f32 %v1669, 0.0
        %v3862 = vmax.f32 %v2176, 0.0
        %v3863 = vmax.f32 %v2683, 0.0
        %v3864 = vmax.f32 %v3190, 0.0
        %v3865 = vmax.f32 %v3697, 0.0
        %v3866 = vmax.f32 %v1671, 0.0
        %v3867 = vmax.f32 %v2178, 0.0
        %v3868 = vmax.f32 %v2685, 0.0
        %v3869 = vmax.f32 %v3192, 0.0
        %v3870 = vmax.f32 %v3699, 0.0
        %v3871 = vmax.f32 %v1674, 0.0
        %v3872 = vmax.f32 %v2181, 0.0
        %v3873 = vmax.f32 %v2688, 0.0
        %v3874 = vmax.f32 %v3195, 0.0
        %v3875 = vmax.f32 %v3702, 0.0
        %v3876 = vmax.f32 %v1676, 0.0
        %v3877 = vmax.f32 %v2183, 0.0
        %v3878 = vmax.f32 %v2690, 0.0
        %v3879 = vmax.f32 %v3197, 0.0
        %v3880 = vmax.f32 %v3704, 0.0
        %v3881 = vmax.f32 %v1679, 0.0
        %v3882 = vmax.f32 %v2186, 0.0
        %v3883 = vmax.f32 %v2693, 0.0
        %v3884 = vmax.f32 %v3200, 0.0
        %v3885 = vmax.f32 %v3707, 0.0
        %v3886 = vmax.f32 %v1681, 0.0
        %v3887 = vmax.f32 %v2188, 0.0
        %v3888 = vmax.f32 %v2695, 0.0
        %v3889 = vmax.f32 %v3202, 0.0
        %v3890 = vmax.f32 %v3709, 0.0
        %v3891 = vmax.f32 %v1684, 0.0
        %v3892 = vmax.f32 %v2191, 0.0
        %v3893 = vmax.f32 %v2698, 0.0
        %v3894 = vmax.f32 %v3205, 0.0
        %v3895 = vmax.f32 %v3712, 0.0
        %v3896 = vmax.f32 %v1686, 0.0
        %v3897 = vmax.f32 %v2193, 0.0
        %v3898 = vmax.f32 %v2700, 0.0
        %v3899 = vmax.f32 %v3207, 0.0
        %v3900 = vmax.f32 %v3714, 0.0
        %v3901 = vmax.f32 %v1689, 0.0
        %v3902 = vmax.f32 %v2196, 0.0
        %v3903 = vmax.f32 %v2703, 0.0
        %v3904 = vmax.f32 %v3210, 0.0
        %v3905 = vmax.f32 %v3717, 0.0
        %v3906 = vmax.f32 %v1691, 0.0
        %v3907 = vmax.f32 %v2198, 0.0
        %v3908 = vmax.f32 %v2705, 0.0
        %v3909 = vmax.f32 %v3212, 0.0
        %v3910 = vmax.f32 %v3719, 0.0
        %v3911 = vmax.f32 %v1694, 0.0
        %v3912 = vmax.f32 %v2201, 0.0
        %v3913 = vmax.f32 %v2708, 0.0
        %v3914 = vmax.f32 %v3215, 0.0
        %v3915 = vmax.f32 %v3722, 0.0
        %v3916 = vmax.f32 %v1696, 0.0
        %v3917 = vmax.f32 %v2203, 0.0
        %v3918 = vmax.f32 %v2710, 0.0
        %v3919 = vmax.f32 %v3217, 0.0
        %v3920 = vmax.f32 %v3724, 0.0
        %v3921 = vmax.f32 %v1699, 0.0
        %v3922 = vmax.f32 %v2206, 0.0
        %v3923 = vmax.f32 %v2713, 0.0
        %v3924 = vmax.f32 %v3220, 0.0
        %v3925 = vmax.f32 %v3727, 0.0
        %v3926 = vmax.f32 %v1701, 0.0
        %v3927 = vmax.f32 %v2208, 0.0
        %v3928 = vmax.f32 %v2715, 0.0
        %v3929 = vmax.f32 %v3222, 0.0
        %v3930 = vmax.f32 %v3729, 0.0
        %v3931 = vmax.f32 %v1704, 0.0
        %v3932 = vmax.f32 %v2211, 0.0
        %v3933 = vmax.f32 %v2718, 0.0
        %v3934 = vmax.f32 %v3225, 0.0
        %v3935 = vmax.f32 %v3732, 0.0
        %v3936 = vmax.f32 %v1706, 0.0
        %v3937 = vmax.f32 %v2213, 0.0
        %v3938 = vmax.f32 %v2720, 0.0
        %v3939 = vmax.f32 %v3227, 0.0
        %v3940 = vmax.f32 %v3734, 0.0
        %v3941 = vmax.f32 %v1709, 0.0
        %v3942 = vmax.f32 %v2216, 0.0
        %v3943 = vmax.f32 %v2723, 0.0
        %v3944 = vmax.f32 %v3230, 0.0
        %v3945 = vmax.f32 %v3737, 0.0
        %v3946 = vmax.f32 %v1711, 0.0
        %v3947 = vmax.f32 %v2218, 0.0
        %v3948 = vmax.f32 %v2725, 0.0
        %v3949 = vmax.f32 %v3232, 0.0
        %v3950 = vmax.f32 %v3739, 0.0
        %v3951 = vmax.f32 %v1714, 0.0
        %v3952 = vmax.f32 %v2221, 0.0
        %v3953 = vmax.f32 %v2728, 0.0
        %v3954 = vmax.f32 %v3235, 0.0
        %v3955 = vmax.f32 %v3742, 0.0
        %v3956 = vmax.f32 %v1716, 0.0
        %v3957 = vmax.f32 %v2223, 0.0
        %v3958 = vmax.f32 %v2730, 0.0
        %v3959 = vmax.f32 %v3237, 0.0
        %v3960 = vmax.f32 %v3744, 0.0
        %v3961 = vmax.f32 %v1719, 0.0
        %v3962 = vmax.f32 %v2226, 0.0
        %v3963 = vmax.f32 %v2733, 0.0
        %v3964 = vmax.f32 %v3240, 0.0
        %v3965 = vmax.f32 %v3747, 0.0
        %v3966 = vmax.f32 %v1721, 0.0
        %v3967 = vmax.f32 %v2228, 0.0
        %v3968 = vmax.f32 %v2735, 0.0
        %v3969 = vmax.f32 %v3242, 0.0
        %v3970 = vmax.f32 %v3749, 0.0
        %v3971 = vmax.f32 %v1724, 0.0
        %v3972 = vmax.f32 %v2231, 0.0
        %v3973 = vmax.f32 %v2738, 0.0
        %v3974 = vmax.f32 %v3245, 0.0
        %v3975 = vmax.f32 %v3752, 0.0
        %v3976 = vmax.f32 %v1726, 0.0
        %v3977 = vmax.f32 %v2233, 0.0
        %v3978 = vmax.f32 %v2740, 0.0
        %v3979 = vmax.f32 %v3247, 0.0
        %v3980 = vmax.f32 %v3754, 0.0
        %v3981 = vmax.f32 %v1729, 0.0
        %v3982 = vmax.f32 %v2236, 0.0
        %v3983 = vmax.f32 %v2743, 0.0
        %v3984 = vmax.f32 %v3250, 0.0
        %v3985 = vmax.f32 %v3757, 0.0
        %v3986 = vmax.f32 %v1731, 0.0
        %v3987 = vmax.f32 %v2238, 0.0
        %v3988 = vmax.f32 %v2745, 0.0
        %v3989 = vmax.f32 %v3252, 0.0
        %v3990 = vmax.f32 %v3759, 0.0
        %v3991 = vmax.f32 %v1734, 0.0
        %v3992 = vmax.f32 %v2241, 0.0
        %v3993 = vmax.f32 %v2748, 0.0
        %v3994 = vmax.f32 %v3255, 0.0
        %v3995 = vmax.f32 %v3762, 0.0
        %v3996 = vmax.f32 %v1736, 0.0
        %v3997 = vmax.f32 %v2243, 0.0
        %v3998 = vmax.f32 %v2750, 0.0
        %v3999 = vmax.f32 %v3257, 0.0
        %v4000 = vmax.f32 %v3764, 0.0
        %v4001 = vmax.f32 %v1739, 0.0
        %v4002 = vmax.f32 %v2246, 0.0
        %v4003 = vmax.f32 %v2753, 0.0
        %v4004 = vmax.f32 %v3260, 0.0
        %v4005 = vmax.f32 %v3767, 0.0
        %v4006 = vmax.f32 %v1741, 0.0
        %v4007 = vmax.f32 %v2248, 0.0
        %v4008 = vmax.f32 %v2755, 0.0
        %v4009 = vmax.f32 %v3262, 0.0
        %v4010 = vmax.f32 %v3769, 0.0
        %v4011 = vmax.f32 %v1744, 0.0
        %v4012 = vmax.f32 %v2251, 0.0
        %v4013 = vmax.f32 %v2758, 0.0
        %v4014 = vmax.f32 %v3265, 0.0
        %v4015 = vmax.f32 %v3772, 0.0
        %v4016 = vmax.f32 %v1746, 0.0
        %v4017 = vmax.f32 %v2253, 0.0
        %v4018 = vmax.f32 %v2760, 0.0
        %v4019 = vmax.f32 %v3267, 0.0
        %v4020 = vmax.f32 %v3774, 0.0
        %v4021 = vmax.f32 %v1749, 0.0
        %v4022 = vmax.f32 %v2256, 0.0
        %v4023 = vmax.f32 %v2763, 0.0
        %v4024 = vmax.f32 %v3270, 0.0
        %v4025 = vmax.f32 %v3777, 0.0
        %v4026 = vmax.f32 %v1751, 0.0
        %v4027 = vmax.f32 %v2258, 0.0
        %v4028 = vmax.f32 %v2765, 0.0
        %v4029 = vmax.f32 %v3272, 0.0
        %v4030 = vmax.f32 %v3779, 0.0
        %v4031 = vmax.f32 %v1754, 0.0
        %v4032 = vmax.f32 %v2261, 0.0
        %v4033 = vmax.f32 %v2768, 0.0
        %v4034 = vmax.f32 %v3275, 0.0
        %v4035 = vmax.f32 %v3782, 0.0
        %v4036 = vmax.f32 %v1756, 0.0
        %v4037 = vmax.f32 %v2263, 0.0
        %v4038 = vmax.f32 %v2770, 0.0
        %v4039 = vmax.f32 %v3277, 0.0
        %v4040 = vmax.f32 %v3784, 0.0
        %v4041 = vmax.f32 %v1759, 0.0
        %v4042 = vmax.f32 %v2266, 0.0
        %v4043 = vmax.f32 %v2773, 0.0
        %v4044 = vmax.f32 %v3280, 0.0
        %v4045 = vmax.f32 %v3787, 0.0
        %v4046 = vmax.f32 %v1761, 0.0
        %v4047 = vmax.f32 %v2268, 0.0
        %v4048 = vmax.f32 %v2775, 0.0
        %v4049 = vmax.f32 %v3282, 0.0
        %v4050 = vmax.f32 %v3789, 0.0
        %v4051 = vmax.f32 %v1764, 0.0
        %v4052 = vmax.f32 %v2271, 0.0
        %v4053 = vmax.f32 %v2778, 0.0
        %v4054 = vmax.f32 %v3285, 0.0
        %v4055 = vmax.f32 %v3792, 0.0
        %v4056 = vmax.f32 %v1766, 0.0
        %v4057 = vmax.f32 %v2273, 0.0
        %v4058 = vmax.f32 %v2780, 0.0
        %v4059 = vmax.f32 %v3287, 0.0
        %v4060 = vmax.f32 %v3794, 0.0
        %v4061 = vmax.f32 %v1769, 0.0
        %v4062 = vmax.f32 %v2276, 0.0
        %v4063 = vmax.f32 %v2783, 0.0
        %v4064 = vmax.f32 %v3290, 0.0
        %v4065 = vmax.f32 %v3797, 0.0
        %v4066 = vmax.f32 %v1771, 0.0
        %v4067 = vmax.f32 %v2278, 0.0
        %v4068 = vmax.f32 %v2785, 0.0
        %v4069 = vmax.f32 %v3292, 0.0
        %v4070 = vmax.f32 %v3799, 0.0
        %v4071 = vmax.f32 %v1774, 0.0
        %v4072 = vmax.f32 %v2281, 0.0
        %v4073 = vmax.f32 %v2788, 0.0
        %v4074 = vmax.f32 %v3295, 0.0
        %v4075 = vmax.f32 %v3802, 0.0
        %v4076 = vmax.f32 %v1776, 0.0
        %v4077 = vmax.f32 %v2283, 0.0
        %v4078 = vmax.f32 %v2790, 0.0
        %v4079 = vmax.f32 %v3297, 0.0
        %v4080 = vmax.f32 %v3804, 0.0
        %v4081 = vmax.f32 %v1779, 0.0
        %v4082 = vmax.f32 %v2286, 0.0
        %v4083 = vmax.f32 %v2793, 0.0
        %v4084 = vmax.f32 %v3300, 0.0
        %v4085 = vmax.f32 %v3807, 0.0
        %v4086 = vmax.f32 %v1781, 0.0
        %v4087 = vmax.f32 %v2288, 0.0
        %v4088 = vmax.f32 %v2795, 0.0
        %v4089 = vmax.f32 %v3302, 0.0
        %v4090 = vmax.f32 %v3809, 0.0
        %v4091 = vmax.f32 %v1784, 0.0
        %v4092 = vmax.f32 %v2291, 0.0
        %v4093 = vmax.f32 %v2798, 0.0
        %v4094 = vmax.f32 %v3305, 0.0
        %v4095 = vmax.f32 %v3812, 0.0
        %v4096 = vmax.f32 %v1786, 0.0
        %v4097 = vmax.f32 %v2293, 0.0
        %v4098 = vmax.f32 %v2800, 0.0
        %v4099 = vmax.f32 %v3307, 0.0
        %v4100 = vmax.f32 %v3814, 0.0
        %v4101 = vmax.f32 %v1789, 0.0
        %v4102 = vmax.f32 %v2296, 0.0
        %v4103 = vmax.f32 %v2803, 0.0
        %v4104 = vmax.f32 %v3310, 0.0
        %v4105 = vmax.f32 %v3817, 0.0
        %v4106 = vmax.f32 %v1791, 0.0
        %v4107 = vmax.f32 %v2298, 0.0
        %v4108 = vmax.f32 %v2805, 0.0
        %v4109 = vmax.f32 %v3312, 0.0
        %v4110 = vmax.f32 %v3819, 0.0
        %v4111 = vmax.f32 %v1794, 0.0
        %v4112 = vmax.f32 %v2301, 0.0
        %v4113 = vmax.f32 %v2808, 0.0
        %v4114 = vmax.f32 %v3315, 0.0
        %v4115 = vmax.f32 %v3822, 0.0
        %v4116 = vmax.f32 %v1796, 0.0
        %v4117 = vmax.f32 %v2303, 0.0
        %v4118 = vmax.f32 %v2810, 0.0
        %v4119 = vmax.f32 %v3317, 0.0
        %v4120 = vmax.f32 %v3824, 0.0
        %v4121 = vmax.f32 %v1799, 0.0
        %v4122 = vmax.f32 %v2306, 0.0
        %v4123 = vmax.f32 %v2813, 0.0
        %v4124 = vmax.f32 %v3320, 0.0
        %v4125 = vmax.f32 %v3827, 0.0
        %v4126 = vmax.f32 %v1801, 0.0
        %v4127 = vmax.f32 %v2308, 0.0
        %v4128 = vmax.f32 %v2815, 0.0
        %v4129 = vmax.f32 %v3322, 0.0
        %v4130 = vmax.f32 %v3829, 0.0
        %v4131 = vmax.f32 %v1804, 0.0
        %v4132 = vmax.f32 %v2311, 0.0
        %v4133 = vmax.f32 %v2818, 0.0
        %v4134 = vmax.f32 %v3325, 0.0
        %v4135 = vmax.f32 %v3832, 0.0
        %v4136 = vmax.f32 %v1806, 0.0
        %v4137 = vmax.f32 %v2313, 0.0
        %v4138 = vmax.f32 %v2820, 0.0
        %v4139 = vmax.f32 %v3327, 0.0
        %v4140 = vmax.f32 %v3834, 0.0
        %v4141 = vmax.f32 %v1809, 0.0
        %v4142 = vmax.f32 %v2316, 0.0
        %v4143 = vmax.f32 %v2823, 0.0
        %v4144 = vmax.f32 %v3330, 0.0
        %v4145 = vmax.f32 %v3837, 0.0
        %v4146 = vmax.f32 %v1811, 0.0
        %v4147 = vmax.f32 %v2318, 0.0
        %v4148 = vmax.f32 %v2825, 0.0
        %v4149 = vmax.f32 %v3332, 0.0
        %v4150 = vmax.f32 %v3839, 0.0
        %v4151 = vmax.f32 %v1814, 0.0
        %v4152 = vmax.f32 %v2321, 0.0
        %v4153 = vmax.f32 %v2828, 0.0
        %v4154 = vmax.f32 %v3335, 0.0
        %v4155 = vmax.f32 %v3842, 0.0
        %v4156 = vmax.f32 %v1816, 0.0
        %v4157 = vmax.f32 %v2323, 0.0
        %v4158 = vmax.f32 %v2830, 0.0
        %v4159 = vmax.f32 %v3337, 0.0
        %v4160 = vmax.f32 %v3844, 0.0
        %v4161 = vmax.f32 %v1819, 0.0
        %v4162 = vmax.f32 %v2326, 0.0
        %v4163 = vmax.f32 %v2833, 0.0
        %v4164 = vmax.f32 %v3340, 0.0
        %v4165 = vmax.f32 %v3847, 0.0
        %v4166 = vmax.f32 %v1821, 0.0
        %v4167 = vmax.f32 %v2328, 0.0
        %v4168 = vmax.f32 %v2835, 0.0
        %v4169 = vmax.f32 %v3342, 0.0
        %v4170 = vmax.f32 %v3849, 0.0
        %v4171 = vpack.c.bf16 %v3856, %v3851
        %v4172 = vpack.c.bf16 %v3857, %v3852
        %v4173 = vpack.c.bf16 %v3858, %v3853
        %v4174 = vpack.c.bf16 %v3859, %v3854
        %v4175 = vpack.c.bf16 %v3860, %v3855
        %v4176 = vpack.c.bf16 %v3866, %v3861
        %v4177 = vpack.c.bf16 %v3867, %v3862
        %v4178 = vpack.c.bf16 %v3868, %v3863
        %v4179 = vpack.c.bf16 %v3869, %v3864
        %v4180 = vpack.c.bf16 %v3870, %v3865
        %v4181 = vpack.c.bf16 %v3876, %v3871
        %v4182 = vpack.c.bf16 %v3877, %v3872
        %v4183 = vpack.c.bf16 %v3878, %v3873
        %v4184 = vpack.c.bf16 %v3879, %v3874
        %v4185 = vpack.c.bf16 %v3880, %v3875
        %v4186 = vpack.c.bf16 %v3886, %v3881
        %v4187 = vpack.c.bf16 %v3887, %v3882
        %v4188 = vpack.c.bf16 %v3888, %v3883
        %v4189 = vpack.c.bf16 %v3889, %v3884
        %v4190 = vpack.c.bf16 %v3890, %v3885
        %v4191 = vpack.c.bf16 %v3896, %v3891
        %v4192 = vpack.c.bf16 %v3897, %v3892
        %v4193 = vpack.c.bf16 %v3898, %v3893
        %v4194 = vpack.c.bf16 %v3899, %v3894
        %v4195 = vpack.c.bf16 %v3900, %v3895
        %v4196 = vpack.c.bf16 %v3906, %v3901
        %v4197 = vpack.c.bf16 %v3907, %v3902
        %v4198 = vpack.c.bf16 %v3908, %v3903
        %v4199 = vpack.c.bf16 %v3909, %v3904
        %v4200 = vpack.c.bf16 %v3910, %v3905
        %v4201 = vpack.c.bf16 %v3916, %v3911
        %v4202 = vpack.c.bf16 %v3917, %v3912
        %v4203 = vpack.c.bf16 %v3918, %v3913
        %v4204 = vpack.c.bf16 %v3919, %v3914
        %v4205 = vpack.c.bf16 %v3920, %v3915
        %v4206 = vpack.c.bf16 %v3926, %v3921
        %v4207 = vpack.c.bf16 %v3927, %v3922
        %v4208 = vpack.c.bf16 %v3928, %v3923
        %v4209 = vpack.c.bf16 %v3929, %v3924
        %v4210 = vpack.c.bf16 %v3930, %v3925
        %v4211 = vpack.c.bf16 %v3936, %v3931
        %v4212 = vpack.c.bf16 %v3937, %v3932
        %v4213 = vpack.c.bf16 %v3938, %v3933
        %v4214 = vpack.c.bf16 %v3939, %v3934
        %v4215 = vpack.c.bf16 %v3940, %v3935
        %v4216 = vpack.c.bf16 %v3946, %v3941
        %v4217 = vpack.c.bf16 %v3947, %v3942
        %v4218 = vpack.c.bf16 %v3948, %v3943
        %v4219 = vpack.c.bf16 %v3949, %v3944
        %v4220 = vpack.c.bf16 %v3950, %v3945
        %v4221 = vpack.c.bf16 %v3956, %v3951
        %v4222 = vpack.c.bf16 %v3957, %v3952
        %v4223 = vpack.c.bf16 %v3958, %v3953
        %v4224 = vpack.c.bf16 %v3959, %v3954
        %v4225 = vpack.c.bf16 %v3960, %v3955
        %v4226 = vpack.c.bf16 %v3966, %v3961
        %v4227 = vpack.c.bf16 %v3967, %v3962
        %v4228 = vpack.c.bf16 %v3968, %v3963
        %v4229 = vpack.c.bf16 %v3969, %v3964
        %v4230 = vpack.c.bf16 %v3970, %v3965
        %v4231 = vpack.c.bf16 %v3976, %v3971
        %v4232 = vpack.c.bf16 %v3977, %v3972
        %v4233 = vpack.c.bf16 %v3978, %v3973
        %v4234 = vpack.c.bf16 %v3979, %v3974
        %v4235 = vpack.c.bf16 %v3980, %v3975
        %v4236 = vpack.c.bf16 %v3986, %v3981
        %v4237 = vpack.c.bf16 %v3987, %v3982
        %v4238 = vpack.c.bf16 %v3988, %v3983
        %v4239 = vpack.c.bf16 %v3989, %v3984
        %v4240 = vpack.c.bf16 %v3990, %v3985
        %v4241 = vpack.c.bf16 %v3996, %v3991
        %v4242 = vpack.c.bf16 %v3997, %v3992
        %v4243 = vpack.c.bf16 %v3998, %v3993
        %v4244 = vpack.c.bf16 %v3999, %v3994
        %v4245 = vpack.c.bf16 %v4000, %v3995
        %v4246 = vpack.c.bf16 %v4006, %v4001
        %v4247 = vpack.c.bf16 %v4007, %v4002
        %v4248 = vpack.c.bf16 %v4008, %v4003
        %v4249 = vpack.c.bf16 %v4009, %v4004
        %v4250 = vpack.c.bf16 %v4010, %v4005
        %v4251 = vpack.c.bf16 %v4016, %v4011
        %v4252 = vpack.c.bf16 %v4017, %v4012
        %v4253 = vpack.c.bf16 %v4018, %v4013
        %v4254 = vpack.c.bf16 %v4019, %v4014
        %v4255 = vpack.c.bf16 %v4020, %v4015
        %v4256 = vpack.c.bf16 %v4026, %v4021
        %v4257 = vpack.c.bf16 %v4027, %v4022
        %v4258 = vpack.c.bf16 %v4028, %v4023
        %v4259 = vpack.c.bf16 %v4029, %v4024
        %v4260 = vpack.c.bf16 %v4030, %v4025
        %v4261 = vpack.c.bf16 %v4036, %v4031
        %v4262 = vpack.c.bf16 %v4037, %v4032
        %v4263 = vpack.c.bf16 %v4038, %v4033
        %v4264 = vpack.c.bf16 %v4039, %v4034
        %v4265 = vpack.c.bf16 %v4040, %v4035
        %v4266 = vpack.c.bf16 %v4046, %v4041
        %v4267 = vpack.c.bf16 %v4047, %v4042
        %v4268 = vpack.c.bf16 %v4048, %v4043
        %v4269 = vpack.c.bf16 %v4049, %v4044
        %v4270 = vpack.c.bf16 %v4050, %v4045
        %v4271 = vpack.c.bf16 %v4056, %v4051
        %v4272 = vpack.c.bf16 %v4057, %v4052
        %v4273 = vpack.c.bf16 %v4058, %v4053
        %v4274 = vpack.c.bf16 %v4059, %v4054
        %v4275 = vpack.c.bf16 %v4060, %v4055
        %v4276 = vpack.c.bf16 %v4066, %v4061
        %v4277 = vpack.c.bf16 %v4067, %v4062
        %v4278 = vpack.c.bf16 %v4068, %v4063
        %v4279 = vpack.c.bf16 %v4069, %v4064
        %v4280 = vpack.c.bf16 %v4070, %v4065
        %v4281 = vpack.c.bf16 %v4076, %v4071
        %v4282 = vpack.c.bf16 %v4077, %v4072
        %v4283 = vpack.c.bf16 %v4078, %v4073
        %v4284 = vpack.c.bf16 %v4079, %v4074
        %v4285 = vpack.c.bf16 %v4080, %v4075
        %v4286 = vpack.c.bf16 %v4086, %v4081
        %v4287 = vpack.c.bf16 %v4087, %v4082
        %v4288 = vpack.c.bf16 %v4088, %v4083
        %v4289 = vpack.c.bf16 %v4089, %v4084
        %v4290 = vpack.c.bf16 %v4090, %v4085
        %v4291 = vpack.c.bf16 %v4096, %v4091
        %v4292 = vpack.c.bf16 %v4097, %v4092
        %v4293 = vpack.c.bf16 %v4098, %v4093
        %v4294 = vpack.c.bf16 %v4099, %v4094
        %v4295 = vpack.c.bf16 %v4100, %v4095
        %v4296 = vpack.c.bf16 %v4106, %v4101
        %v4297 = vpack.c.bf16 %v4107, %v4102
        %v4298 = vpack.c.bf16 %v4108, %v4103
        %v4299 = vpack.c.bf16 %v4109, %v4104
        %v4300 = vpack.c.bf16 %v4110, %v4105
        %v4301 = vpack.c.bf16 %v4116, %v4111
        %v4302 = vpack.c.bf16 %v4117, %v4112
        %v4303 = vpack.c.bf16 %v4118, %v4113
        %v4304 = vpack.c.bf16 %v4119, %v4114
        %v4305 = vpack.c.bf16 %v4120, %v4115
        %v4306 = vpack.c.bf16 %v4126, %v4121
        %v4307 = vpack.c.bf16 %v4127, %v4122
        %v4308 = vpack.c.bf16 %v4128, %v4123
        %v4309 = vpack.c.bf16 %v4129, %v4124
        %v4310 = vpack.c.bf16 %v4130, %v4125
        %v4311 = vpack.c.bf16 %v4136, %v4131
        %v4312 = vpack.c.bf16 %v4137, %v4132
        %v4313 = vpack.c.bf16 %v4138, %v4133
        %v4314 = vpack.c.bf16 %v4139, %v4134
        %v4315 = vpack.c.bf16 %v4140, %v4135
        %v4316 = vpack.c.bf16 %v4146, %v4141
        %v4317 = vpack.c.bf16 %v4147, %v4142
        %v4318 = vpack.c.bf16 %v4148, %v4143
        %v4319 = vpack.c.bf16 %v4149, %v4144
        %v4320 = vpack.c.bf16 %v4150, %v4145
        %v4321 = vpack.c.bf16 %v4156, %v4151
        %v4322 = vpack.c.bf16 %v4157, %v4152
        %v4323 = vpack.c.bf16 %v4158, %v4153
        %v4324 = vpack.c.bf16 %v4159, %v4154
        %v4325 = vpack.c.bf16 %v4160, %v4155
        %v4326 = vpack.c.bf16 %v4166, %v4161
        %v4327 = vpack.c.bf16 %v4167, %v4162
        %v4328 = vpack.c.bf16 %v4168, %v4163
        %v4329 = vpack.c.bf16 %v4169, %v4164
        %v4330 = vpack.c.bf16 %v4170, %v4165
        %v4331 = vld [vmem:[%s3] sm:$0xff]
        %v4332 = vld [vmem:[%s3 + $0x8] sm:$0xf]
        %v4333 = vld [vmem:[%s3 + $0xc] sm:$0xff]
        %v4334 = vld [vmem:[%s3 + $0x14] sm:$0xf]
        %v4335 = vld [vmem:[%s3 + $0x18] sm:$0xff]
        %v4336 = vld [vmem:[%s3 + $0x20] sm:$0xf]
        %v4337 = vld [vmem:[%s3 + $0x24] sm:$0xff]
        %v4338 = vld [vmem:[%s3 + $0x2c] sm:$0xf]
        %v4339 = vld [vmem:[%s3 + $0x30] sm:$0xff]
        %v4340 = vld [vmem:[%s3 + $0x38] sm:$0xf]
        %v4341 = vld [vmem:[%s3 + $0x3c] sm:$0xff]
        %v4342 = vld [vmem:[%s3 + $0x44] sm:$0xf]
        %v4343 = vld [vmem:[%s3 + $0x48] sm:$0xff]
        %v4344 = vld [vmem:[%s3 + $0x50] sm:$0xf]
        %v4345 = vld [vmem:[%s3 + $0x54] sm:$0xff]
        %v4346 = vld [vmem:[%s3 + $0x5c] sm:$0xf]
        %v4347 = vld [vmem:[%s3 + $0x60] sm:$0xff]
        %v4348 = vld [vmem:[%s3 + $0x68] sm:$0xf]
        %v4349 = vld [vmem:[%s3 + $0x6c] sm:$0xff]
        %v4350 = vld [vmem:[%s3 + $0x74] sm:$0xf]
        %v4351 = vld [vmem:[%s3 + $0x78] sm:$0xff]
        %v4352 = vld [vmem:[%s3 + $0x80] sm:$0xf]
        %v4353 = vld [vmem:[%s3 + $0x84] sm:$0xff]
        %v4354 = vld [vmem:[%s3 + $0x8c] sm:$0xf]
        %v4355 = vld [vmem:[%s3 + $0x90] sm:$0xff]
        %v4356 = vld [vmem:[%s3 + $0x98] sm:$0xf]
        %v4357 = vld [vmem:[%s3 + $0x9c] sm:$0xff]
        %v4358 = vld [vmem:[%s3 + $0xa4] sm:$0xf]
        %v4359 = vld [vmem:[%s3 + $0xa8] sm:$0xff]
        %v4360 = vld [vmem:[%s3 + $0xb0] sm:$0xf]
        %v4361 = vld [vmem:[%s3 + $0xb4] sm:$0xff]
        %v4362 = vld [vmem:[%s3 + $0xbc] sm:$0xf]
        %v4363 = vld [vmem:[%s3 + $0xc0] sm:$0xff]
        %v4364 = vld [vmem:[%s3 + $0xc8] sm:$0xf]
        %v4365 = vld [vmem:[%s3 + $0xcc] sm:$0xff]
        %v4366 = vld [vmem:[%s3 + $0xd4] sm:$0xf]
        %v4367 = vld [vmem:[%s3 + $0xd8] sm:$0xff]
        %v4368 = vld [vmem:[%s3 + $0xe0] sm:$0xf]
        %v4369 = vld [vmem:[%s3 + $0xe4] sm:$0xff]
        %v4370 = vld [vmem:[%s3 + $0xec] sm:$0xf]
        %v4371 = vld [vmem:[%s3 + $0xf0] sm:$0xff]
        %v4372 = vld [vmem:[%s3 + $0xf8] sm:$0xf]
        %v4373 = vld [vmem:[%s3 + $0xfc] sm:$0xff]
        %v4374 = vld [vmem:[%s3 + $0x104] sm:$0xf]
        %v4375 = vld [vmem:[%s3 + $0x108] sm:$0xff]
        %v4376 = vld [vmem:[%s3 + $0x110] sm:$0xf]
        %v4377 = vld [vmem:[%s3 + $0x114] sm:$0xff]
        %v4378 = vld [vmem:[%s3 + $0x11c] sm:$0xf]
        %v4379 = vld [vmem:[%s3 + $0x120] sm:$0xff]
        %v4380 = vld [vmem:[%s3 + $0x128] sm:$0xf]
        %v4381 = vld [vmem:[%s3 + $0x12c] sm:$0xff]
        %v4382 = vld [vmem:[%s3 + $0x134] sm:$0xf]
        %v4383 = vld [vmem:[%s3 + $0x138] sm:$0xff]
        %v4384 = vld [vmem:[%s3 + $0x140] sm:$0xf]
        %v4385 = vld [vmem:[%s3 + $0x144] sm:$0xff]
        %v4386 = vld [vmem:[%s3 + $0x14c] sm:$0xf]
        %v4387 = vld [vmem:[%s3 + $0x150] sm:$0xff]
        %v4388 = vld [vmem:[%s3 + $0x158] sm:$0xf]
        %v4389 = vld [vmem:[%s3 + $0x15c] sm:$0xff]
        %v4390 = vld [vmem:[%s3 + $0x164] sm:$0xf]
        %v4391 = vld [vmem:[%s3 + $0x168] sm:$0xff]
        %v4392 = vld [vmem:[%s3 + $0x170] sm:$0xf]
        %v4393 = vld [vmem:[%s3 + $0x174] sm:$0xff]
        %v4394 = vld [vmem:[%s3 + $0x17c] sm:$0xf]
        %v4395 = vld [vmem:[%s3 + $0x180] sm:$0xff]
        %v4396 = vld [vmem:[%s3 + $0x188] sm:$0xf]
        %v4397 = vld [vmem:[%s3 + $0x18c] sm:$0xff]
        %v4398 = vld [vmem:[%s3 + $0x194] sm:$0xf]
        %v4399 = vld [vmem:[%s3 + $0x198] sm:$0xff]
        %v4400 = vld [vmem:[%s3 + $0x1a0] sm:$0xf]
        %v4401 = vld [vmem:[%s3 + $0x1a4] sm:$0xff]
        %v4402 = vld [vmem:[%s3 + $0x1ac] sm:$0xf]
        %v4403 = vld [vmem:[%s3 + $0x1b0] sm:$0xff]
        %v4404 = vld [vmem:[%s3 + $0x1b8] sm:$0xf]
        %v4405 = vld [vmem:[%s3 + $0x1bc] sm:$0xff]
        %v4406 = vld [vmem:[%s3 + $0x1c4] sm:$0xf]
        %v4407 = vld [vmem:[%s3 + $0x1c8] sm:$0xff]
        %v4408 = vld [vmem:[%s3 + $0x1d0] sm:$0xf]
        %v4409 = vld [vmem:[%s3 + $0x1d4] sm:$0xff]
        %v4410 = vld [vmem:[%s3 + $0x1dc] sm:$0xf]
        %v4411 = vld [vmem:[%s3 + $0x1e0] sm:$0xff]
        %v4412 = vld [vmem:[%s3 + $0x1e8] sm:$0xf]
        %v4413 = vld [vmem:[%s3 + $0x1ec] sm:$0xff]
        %v4414 = vld [vmem:[%s3 + $0x1f4] sm:$0xf]
        %v4415 = vld [vmem:[%s3 + $0x1f8] sm:$0xff]
        %v4416 = vld [vmem:[%s3 + $0x200] sm:$0xf]
        %v4417 = vld [vmem:[%s3 + $0x204] sm:$0xff]
        %v4418 = vld [vmem:[%s3 + $0x20c] sm:$0xf]
        %v4419 = vld [vmem:[%s3 + $0x210] sm:$0xff]
        %v4420 = vld [vmem:[%s3 + $0x218] sm:$0xf]
        %v4421 = vld [vmem:[%s3 + $0x21c] sm:$0xff]
        %v4422 = vld [vmem:[%s3 + $0x224] sm:$0xf]
        %v4423 = vld [vmem:[%s3 + $0x228] sm:$0xff]
        %v4424 = vld [vmem:[%s3 + $0x230] sm:$0xf]
        %v4425 = vld [vmem:[%s3 + $0x234] sm:$0xff]
        %v4426 = vld [vmem:[%s3 + $0x23c] sm:$0xf]
        %v4427 = vld [vmem:[%s3 + $0x240] sm:$0xff]
        %v4428 = vld [vmem:[%s3 + $0x248] sm:$0xf]
        %v4429 = vld [vmem:[%s3 + $0x24c] sm:$0xff]
        %v4430 = vld [vmem:[%s3 + $0x254] sm:$0xf]
        %v4431 = vld [vmem:[%s3 + $0x258] sm:$0xff]
        %v4432 = vld [vmem:[%s3 + $0x260] sm:$0xf]
        %v4433 = vld [vmem:[%s3 + $0x264] sm:$0xff]
        %v4434 = vld [vmem:[%s3 + $0x26c] sm:$0xf]
        %v4435 = vld [vmem:[%s3 + $0x270] sm:$0xff]
        %v4436 = vld [vmem:[%s3 + $0x278] sm:$0xf]
        %v4437 = vld [vmem:[%s3 + $0x27c] sm:$0xff]
        %v4438 = vld [vmem:[%s3 + $0x284] sm:$0xf]
        %v4439 = vld [vmem:[%s3 + $0x288] sm:$0xff]
        %v4440 = vld [vmem:[%s3 + $0x290] sm:$0xf]
        %v4441 = vld [vmem:[%s3 + $0x294] sm:$0xff]
        %v4442 = vld [vmem:[%s3 + $0x29c] sm:$0xf]
        %v4443 = vld [vmem:[%s3 + $0x2a0] sm:$0xff]
        %v4444 = vld [vmem:[%s3 + $0x2a8] sm:$0xf]
        %v4445 = vld [vmem:[%s3 + $0x2ac] sm:$0xff]
        %v4446 = vld [vmem:[%s3 + $0x2b4] sm:$0xf]
        %v4447 = vld [vmem:[%s3 + $0x2b8] sm:$0xff]
        %v4448 = vld [vmem:[%s3 + $0x2c0] sm:$0xf]
        %v4449 = vld [vmem:[%s3 + $0x2c4] sm:$0xff]
        %v4450 = vld [vmem:[%s3 + $0x2cc] sm:$0xf]
        %v4451 = vld [vmem:[%s3 + $0x2d0] sm:$0xff]
        %v4452 = vld [vmem:[%s3 + $0x2d8] sm:$0xf]
        %v4453 = vld [vmem:[%s3 + $0x2dc] sm:$0xff]
        %v4454 = vld [vmem:[%s3 + $0x2e4] sm:$0xf]
        %v4455 = vld [vmem:[%s3 + $0x2e8] sm:$0xff]
        %v4456 = vld [vmem:[%s3 + $0x2f0] sm:$0xf]
        %v4457 = vld [vmem:[%s3 + $0x2f4] sm:$0xff]
        %v4458 = vld [vmem:[%s3 + $0x2fc] sm:$0xf]
        %v4459 = vld [vmem:[%s3 + $0x300] sm:$0xff]
        %v4460 = vld [vmem:[%s3 + $0x308] sm:$0xf]
        %v4461 = vld [vmem:[%s3 + $0x30c] sm:$0xff]
        %v4462 = vld [vmem:[%s3 + $0x314] sm:$0xf]
        %v4463 = vld [vmem:[%s3 + $0x318] sm:$0xff]
        %v4464 = vld [vmem:[%s3 + $0x320] sm:$0xf]
        %v4465 = vld [vmem:[%s3 + $0x324] sm:$0xff]
        %v4466 = vld [vmem:[%s3 + $0x32c] sm:$0xf]
        %v4467 = vld [vmem:[%s3 + $0x330] sm:$0xff]
        %v4468 = vld [vmem:[%s3 + $0x338] sm:$0xf]
        %v4469 = vld [vmem:[%s3 + $0x33c] sm:$0xff]
        %v4470 = vld [vmem:[%s3 + $0x344] sm:$0xf]
        %v4471 = vld [vmem:[%s3 + $0x348] sm:$0xff]
        %v4472 = vld [vmem:[%s3 + $0x350] sm:$0xf]
        %v4473 = vld [vmem:[%s3 + $0x354] sm:$0xff]
        %v4474 = vld [vmem:[%s3 + $0x35c] sm:$0xf]
        %v4475 = vld [vmem:[%s3 + $0x360] sm:$0xff]
        %v4476 = vld [vmem:[%s3 + $0x368] sm:$0xf]
        %v4477 = vld [vmem:[%s3 + $0x36c] sm:$0xff]
        %v4478 = vld [vmem:[%s3 + $0x374] sm:$0xf]
        %v4479 = vld [vmem:[%s3 + $0x378] sm:$0xff]
        %v4480 = vld [vmem:[%s3 + $0x380] sm:$0xf]
        %v4481 = vld [vmem:[%s3 + $0x384] sm:$0xff]
        %v4482 = vld [vmem:[%s3 + $0x38c] sm:$0xf]
        %v4483 = vld [vmem:[%s3 + $0x390] sm:$0xff]
        %v4484 = vld [vmem:[%s3 + $0x398] sm:$0xf]
        %v4485 = vld [vmem:[%s3 + $0x39c] sm:$0xff]
        %v4486 = vld [vmem:[%s3 + $0x3a4] sm:$0xf]
        %v4487 = vld [vmem:[%s3 + $0x3a8] sm:$0xff]
        %v4488 = vld [vmem:[%s3 + $0x3b0] sm:$0xf]
        %v4489 = vld [vmem:[%s3 + $0x3b4] sm:$0xff]
        %v4490 = vld [vmem:[%s3 + $0x3bc] sm:$0xf]
        %v4491 = vld [vmem:[%s4] sm:$0x7]
        %v4493 = vperm.slane %v4491, 0
        %v4494 = vperm.slane %v4491, 1
        %v4495 = vperm.slane %v4491, 2
        %v4659 = vunpack.c.l.b16 %v4331
        %v4660 = vunpack.c.h.b16 %v4331
        %v4661 = vunpack.c.l.b16 %v4332
        %v4662 = vunpack.c.l.b16 %v4333
        %v4663 = vunpack.c.h.b16 %v4333
        %v4664 = vunpack.c.l.b16 %v4334
        %v4665 = vunpack.c.l.b16 %v4335
        %v4666 = vunpack.c.h.b16 %v4335
        %v4667 = vunpack.c.l.b16 %v4336
        %v4668 = vunpack.c.l.b16 %v4337
        %v4669 = vunpack.c.h.b16 %v4337
        %v4670 = vunpack.c.l.b16 %v4338
        %v4671 = vunpack.c.l.b16 %v4339
        %v4672 = vunpack.c.h.b16 %v4339
        %v4673 = vunpack.c.l.b16 %v4340
        %v4674 = vunpack.c.l.b16 %v4341
        %v4675 = vunpack.c.h.b16 %v4341
        %v4676 = vunpack.c.l.b16 %v4342
        %v4677 = vunpack.c.l.b16 %v4343
        %v4678 = vunpack.c.h.b16 %v4343
        %v4679 = vunpack.c.l.b16 %v4344
        %v4680 = vunpack.c.l.b16 %v4345
        %v4681 = vunpack.c.h.b16 %v4345
        %v4682 = vunpack.c.l.b16 %v4346
        %v4683 = vunpack.c.l.b16 %v4347
        %v4684 = vunpack.c.h.b16 %v4347
        %v4685 = vunpack.c.l.b16 %v4348
        %v4686 = vunpack.c.l.b16 %v4349
        %v4687 = vunpack.c.h.b16 %v4349
        %v4688 = vunpack.c.l.b16 %v4350
        %v4689 = vunpack.c.l.b16 %v4351
        %v4690 = vunpack.c.h.b16 %v4351
        %v4691 = vunpack.c.l.b16 %v4352
        %v4692 = vunpack.c.l.b16 %v4353
        %v4693 = vunpack.c.h.b16 %v4353
        %v4694 = vunpack.c.l.b16 %v4354
        %v4695 = vunpack.c.l.b16 %v4355
        %v4696 = vunpack.c.h.b16 %v4355
        %v4697 = vunpack.c.l.b16 %v4356
        %v4698 = vunpack.c.l.b16 %v4357
        %v4699 = vunpack.c.h.b16 %v4357
        %v4700 = vunpack.c.l.b16 %v4358
        %v4701 = vunpack.c.l.b16 %v4359
        %v4702 = vunpack.c.h.b16 %v4359
        %v4703 = vunpack.c.l.b16 %v4360
        %v4704 = vunpack.c.l.b16 %v4361
        %v4705 = vunpack.c.h.b16 %v4361
        %v4706 = vunpack.c.l.b16 %v4362
        %v4707 = vunpack.c.l.b16 %v4363
        %v4708 = vunpack.c.h.b16 %v4363
        %v4709 = vunpack.c.l.b16 %v4364
        %v4710 = vunpack.c.l.b16 %v4365
        %v4711 = vunpack.c.h.b16 %v4365
        %v4712 = vunpack.c.l.b16 %v4366
        %v4713 = vunpack.c.l.b16 %v4367
        %v4714 = vunpack.c.h.b16 %v4367
        %v4715 = vunpack.c.l.b16 %v4368
        %v4716 = vunpack.c.l.b16 %v4369
        %v4717 = vunpack.c.h.b16 %v4369
        %v4718 = vunpack.c.l.b16 %v4370
        %v4719 = vunpack.c.l.b16 %v4371
        %v4720 = vunpack.c.h.b16 %v4371
        %v4721 = vunpack.c.l.b16 %v4372
        %v4722 = vunpack.c.l.b16 %v4373
        %v4723 = vunpack.c.h.b16 %v4373
        %v4724 = vunpack.c.l.b16 %v4374
        %v4725 = vunpack.c.l.b16 %v4375
        %v4726 = vunpack.c.h.b16 %v4375
        %v4727 = vunpack.c.l.b16 %v4376
        %v4728 = vunpack.c.l.b16 %v4377
        %v4729 = vunpack.c.h.b16 %v4377
        %v4730 = vunpack.c.l.b16 %v4378
        %v4731 = vunpack.c.l.b16 %v4379
        %v4732 = vunpack.c.h.b16 %v4379
        %v4733 = vunpack.c.l.b16 %v4380
        %v4734 = vunpack.c.l.b16 %v4381
        %v4735 = vunpack.c.h.b16 %v4381
        %v4736 = vunpack.c.l.b16 %v4382
        %v4737 = vunpack.c.l.b16 %v4383
        %v4738 = vunpack.c.h.b16 %v4383
        %v4739 = vunpack.c.l.b16 %v4384
        %v4740 = vunpack.c.l.b16 %v4385
        %v4741 = vunpack.c.h.b16 %v4385
        %v4742 = vunpack.c.l.b16 %v4386
        %v4743 = vunpack.c.l.b16 %v4387
        %v4744 = vunpack.c.h.b16 %v4387
        %v4745 = vunpack.c.l.b16 %v4388
        %v4746 = vunpack.c.l.b16 %v4389
        %v4747 = vunpack.c.h.b16 %v4389
        %v4748 = vunpack.c.l.b16 %v4390
        %v4749 = vunpack.c.l.b16 %v4391
        %v4750 = vunpack.c.h.b16 %v4391
        %v4751 = vunpack.c.l.b16 %v4392
        %v4752 = vunpack.c.l.b16 %v4393
        %v4753 = vunpack.c.h.b16 %v4393
        %v4754 = vunpack.c.l.b16 %v4394
        %v4755 = vunpack.c.l.b16 %v4395
        %v4756 = vunpack.c.h.b16 %v4395
        %v4757 = vunpack.c.l.b16 %v4396
        %v4758 = vunpack.c.l.b16 %v4397
        %v4759 = vunpack.c.h.b16 %v4397
        %v4760 = vunpack.c.l.b16 %v4398
        %v4761 = vunpack.c.l.b16 %v4399
        %v4762 = vunpack.c.h.b16 %v4399
        %v4763 = vunpack.c.l.b16 %v4400
        %v4764 = vunpack.c.l.b16 %v4401
        %v4765 = vunpack.c.h.b16 %v4401
        %v4766 = vunpack.c.l.b16 %v4402
        %v4767 = vunpack.c.l.b16 %v4403
        %v4768 = vunpack.c.h.b16 %v4403
        %v4769 = vunpack.c.l.b16 %v4404
        %v4770 = vunpack.c.l.b16 %v4405
        %v4771 = vunpack.c.h.b16 %v4405
        %v4772 = vunpack.c.l.b16 %v4406
        %v4773 = vunpack.c.l.b16 %v4407
        %v4774 = vunpack.c.h.b16 %v4407
        %v4775 = vunpack.c.l.b16 %v4408
        %v4776 = vunpack.c.l.b16 %v4409
        %v4777 = vunpack.c.h.b16 %v4409
        %v4778 = vunpack.c.l.b16 %v4410
        %v4779 = vunpack.c.l.b16 %v4411
        %v4780 = vunpack.c.h.b16 %v4411
        %v4781 = vunpack.c.l.b16 %v4412
        %v4782 = vunpack.c.l.b16 %v4413
        %v4783 = vunpack.c.h.b16 %v4413
        %v4784 = vunpack.c.l.b16 %v4414
        %v4785 = vunpack.c.l.b16 %v4415
        %v4786 = vunpack.c.h.b16 %v4415
        %v4787 = vunpack.c.l.b16 %v4416
        %v4788 = vunpack.c.l.b16 %v4417
        %v4789 = vunpack.c.h.b16 %v4417
        %v4790 = vunpack.c.l.b16 %v4418
        %v4791 = vunpack.c.l.b16 %v4419
        %v4792 = vunpack.c.h.b16 %v4419
        %v4793 = vunpack.c.l.b16 %v4420
        %v4794 = vunpack.c.l.b16 %v4421
        %v4795 = vunpack.c.h.b16 %v4421
        %v4796 = vunpack.c.l.b16 %v4422
        %v4797 = vunpack.c.l.b16 %v4423
        %v4798 = vunpack.c.h.b16 %v4423
        %v4799 = vunpack.c.l.b16 %v4424
        %v4800 = vunpack.c.l.b16 %v4425
        %v4801 = vunpack.c.h.b16 %v4425
        %v4802 = vunpack.c.l.b16 %v4426
        %v4803 = vunpack.c.l.b16 %v4427
        %v4804 = vunpack.c.h.b16 %v4427
        %v4805 = vunpack.c.l.b16 %v4428
        %v4806 = vunpack.c.l.b16 %v4429
        %v4807 = vunpack.c.h.b16 %v4429
        %v4808 = vunpack.c.l.b16 %v4430
        %v4809 = vunpack.c.l.b16 %v4431
        %v4810 = vunpack.c.h.b16 %v4431
        %v4811 = vunpack.c.l.b16 %v4432
        %v4812 = vunpack.c.l.b16 %v4433
        %v4813 = vunpack.c.h.b16 %v4433
        %v4814 = vunpack.c.l.b16 %v4434
        %v4815 = vunpack.c.l.b16 %v4435
        %v4816 = vunpack.c.h.b16 %v4435
        %v4817 = vunpack.c.l.b16 %v4436
        %v4818 = vunpack.c.l.b16 %v4437
        %v4819 = vunpack.c.h.b16 %v4437
        %v4820 = vunpack.c.l.b16 %v4438
        %v4821 = vunpack.c.l.b16 %v4439
        %v4822 = vunpack.c.h.b16 %v4439
        %v4823 = vunpack.c.l.b16 %v4440
        %v4824 = vunpack.c.l.b16 %v4441
        %v4825 = vunpack.c.h.b16 %v4441
        %v4826 = vunpack.c.l.b16 %v4442
        %v4827 = vunpack.c.l.b16 %v4443
        %v4828 = vunpack.c.h.b16 %v4443
        %v4829 = vunpack.c.l.b16 %v4444
        %v4830 = vunpack.c.l.b16 %v4445
        %v4831 = vunpack.c.h.b16 %v4445
        %v4832 = vunpack.c.l.b16 %v4446
        %v4833 = vunpack.c.l.b16 %v4447
        %v4834 = vunpack.c.h.b16 %v4447
        %v4835 = vunpack.c.l.b16 %v4448
        %v4836 = vunpack.c.l.b16 %v4449
        %v4837 = vunpack.c.h.b16 %v4449
        %v4838 = vunpack.c.l.b16 %v4450
        %v4839 = vunpack.c.l.b16 %v4451
        %v4840 = vunpack.c.h.b16 %v4451
        %v4841 = vunpack.c.l.b16 %v4452
        %v4842 = vunpack.c.l.b16 %v4453
        %v4843 = vunpack.c.h.b16 %v4453
        %v4844 = vunpack.c.l.b16 %v4454
        %v4845 = vunpack.c.l.b16 %v4455
        %v4846 = vunpack.c.h.b16 %v4455
        %v4847 = vunpack.c.l.b16 %v4456
        %v4848 = vunpack.c.l.b16 %v4457
        %v4849 = vunpack.c.h.b16 %v4457
        %v4850 = vunpack.c.l.b16 %v4458
        %v4851 = vunpack.c.l.b16 %v4459
        %v4852 = vunpack.c.h.b16 %v4459
        %v4853 = vunpack.c.l.b16 %v4460
        %v4854 = vunpack.c.l.b16 %v4461
        %v4855 = vunpack.c.h.b16 %v4461
        %v4856 = vunpack.c.l.b16 %v4462
        %v4857 = vunpack.c.l.b16 %v4463
        %v4858 = vunpack.c.h.b16 %v4463
        %v4859 = vunpack.c.l.b16 %v4464
        %v4860 = vunpack.c.l.b16 %v4465
        %v4861 = vunpack.c.h.b16 %v4465
        %v4862 = vunpack.c.l.b16 %v4466
        %v4863 = vunpack.c.l.b16 %v4467
        %v4864 = vunpack.c.h.b16 %v4467
        %v4865 = vunpack.c.l.b16 %v4468
        %v4866 = vunpack.c.l.b16 %v4469
        %v4867 = vunpack.c.h.b16 %v4469
        %v4868 = vunpack.c.l.b16 %v4470
        %v4869 = vunpack.c.l.b16 %v4471
        %v4870 = vunpack.c.h.b16 %v4471
        %v4871 = vunpack.c.l.b16 %v4472
        %v4872 = vunpack.c.l.b16 %v4473
        %v4873 = vunpack.c.h.b16 %v4473
        %v4874 = vunpack.c.l.b16 %v4474
        %v4875 = vunpack.c.l.b16 %v4475
        %v4876 = vunpack.c.h.b16 %v4475
        %v4877 = vunpack.c.l.b16 %v4476
        %v4878 = vunpack.c.l.b16 %v4477
        %v4879 = vunpack.c.h.b16 %v4477
        %v4880 = vunpack.c.l.b16 %v4478
        %v4881 = vunpack.c.l.b16 %v4479
        %v4882 = vunpack.c.h.b16 %v4479
        %v4883 = vunpack.c.l.b16 %v4480
        %v4884 = vunpack.c.l.b16 %v4481
        %v4885 = vunpack.c.h.b16 %v4481
        %v4886 = vunpack.c.l.b16 %v4482
        %v4887 = vunpack.c.l.b16 %v4483
        %v4888 = vunpack.c.h.b16 %v4483
        %v4889 = vunpack.c.l.b16 %v4484
        %v4890 = vunpack.c.l.b16 %v4485
        %v4891 = vunpack.c.h.b16 %v4485
        %v4892 = vunpack.c.l.b16 %v4486
        %v4893 = vunpack.c.l.b16 %v4487
        %v4894 = vunpack.c.h.b16 %v4487
        %v4895 = vunpack.c.l.b16 %v4488
        %v4896 = vunpack.c.l.b16 %v4489
        %v4897 = vunpack.c.h.b16 %v4489
        %v4898 = vunpack.c.l.b16 %v4490
        %v4899 = vpack.c.b16 %v4662, %v4659
        %v4900 = vpack.c.b16 %v4663, %v4660
        %v4901 = vpack.c.b16 %v4664, %v4661
        %v4902 = vpack.c.b16 %v4668, %v4665
        %v4903 = vpack.c.b16 %v4669, %v4666
        %v4904 = vpack.c.b16 %v4670, %v4667
        %v4905 = vpack.c.b16 %v4674, %v4671
        %v4906 = vpack.c.b16 %v4675, %v4672
        %v4907 = vpack.c.b16 %v4676, %v4673
        %v4908 = vpack.c.b16 %v4680, %v4677
        %v4909 = vpack.c.b16 %v4681, %v4678
        %v4910 = vpack.c.b16 %v4682, %v4679
        %v4911 = vpack.c.b16 %v4686, %v4683
        %v4912 = vpack.c.b16 %v4687, %v4684
        %v4913 = vpack.c.b16 %v4688, %v4685
        %v4914 = vpack.c.b16 %v4692, %v4689
        %v4915 = vpack.c.b16 %v4693, %v4690
        %v4916 = vpack.c.b16 %v4694, %v4691
        %v4917 = vpack.c.b16 %v4698, %v4695
        %v4918 = vpack.c.b16 %v4699, %v4696
        %v4919 = vpack.c.b16 %v4700, %v4697
        %v4920 = vpack.c.b16 %v4704, %v4701
        %v4921 = vpack.c.b16 %v4705, %v4702
        %v4922 = vpack.c.b16 %v4706, %v4703
        %v4923 = vpack.c.b16 %v4710, %v4707
        %v4924 = vpack.c.b16 %v4711, %v4708
        %v4925 = vpack.c.b16 %v4712, %v4709
        %v4926 = vpack.c.b16 %v4716, %v4713
        %v4927 = vpack.c.b16 %v4717, %v4714
        %v4928 = vpack.c.b16 %v4718, %v4715
        %v4929 = vpack.c.b16 %v4722, %v4719
        %v4930 = vpack.c.b16 %v4723, %v4720
        %v4931 = vpack.c.b16 %v4724, %v4721
        %v4932 = vpack.c.b16 %v4728, %v4725
        %v4933 = vpack.c.b16 %v4729, %v4726
        %v4934 = vpack.c.b16 %v4730, %v4727
        %v4935 = vpack.c.b16 %v4734, %v4731
        %v4936 = vpack.c.b16 %v4735, %v4732
        %v4937 = vpack.c.b16 %v4736, %v4733
        %v4938 = vpack.c.b16 %v4740, %v4737
        %v4939 = vpack.c.b16 %v4741, %v4738
        %v4940 = vpack.c.b16 %v4742, %v4739
        %v4941 = vpack.c.b16 %v4746, %v4743
        %v4942 = vpack.c.b16 %v4747, %v4744
        %v4943 = vpack.c.b16 %v4748, %v4745
        %v4944 = vpack.c.b16 %v4752, %v4749
        %v4945 = vpack.c.b16 %v4753, %v4750
        %v4946 = vpack.c.b16 %v4754, %v4751
        %v4947 = vpack.c.b16 %v4758, %v4755
        %v4948 = vpack.c.b16 %v4759, %v4756
        %v4949 = vpack.c.b16 %v4760, %v4757
        %v4950 = vpack.c.b16 %v4764, %v4761
        %v4951 = vpack.c.b16 %v4765, %v4762
        %v4952 = vpack.c.b16 %v4766, %v4763
        %v4953 = vpack.c.b16 %v4770, %v4767
        %v4954 = vpack.c.b16 %v4771, %v4768
        %v4955 = vpack.c.b16 %v4772, %v4769
        %v4956 = vpack.c.b16 %v4776, %v4773
        %v4957 = vpack.c.b16 %v4777, %v4774
        %v4958 = vpack.c.b16 %v4778, %v4775
        %v4959 = vpack.c.b16 %v4782, %v4779
        %v4960 = vpack.c.b16 %v4783, %v4780
        %v4961 = vpack.c.b16 %v4784, %v4781
        %v4962 = vpack.c.b16 %v4788, %v4785
        %v4963 = vpack.c.b16 %v4789, %v4786
        %v4964 = vpack.c.b16 %v4790, %v4787
        %v4965 = vpack.c.b16 %v4794, %v4791
        %v4966 = vpack.c.b16 %v4795, %v4792
        %v4967 = vpack.c.b16 %v4796, %v4793
        %v4968 = vpack.c.b16 %v4800, %v4797
        %v4969 = vpack.c.b16 %v4801, %v4798
        %v4970 = vpack.c.b16 %v4802, %v4799
        %v4971 = vpack.c.b16 %v4806, %v4803
        %v4972 = vpack.c.b16 %v4807, %v4804
        %v4973 = vpack.c.b16 %v4808, %v4805
        %v4974 = vpack.c.b16 %v4812, %v4809
        %v4975 = vpack.c.b16 %v4813, %v4810
        %v4976 = vpack.c.b16 %v4814, %v4811
        %v4977 = vpack.c.b16 %v4818, %v4815
        %v4978 = vpack.c.b16 %v4819, %v4816
        %v4979 = vpack.c.b16 %v4820, %v4817
        %v4980 = vpack.c.b16 %v4824, %v4821
        %v4981 = vpack.c.b16 %v4825, %v4822
        %v4982 = vpack.c.b16 %v4826, %v4823
        %v4983 = vpack.c.b16 %v4830, %v4827
        %v4984 = vpack.c.b16 %v4831, %v4828
        %v4985 = vpack.c.b16 %v4832, %v4829
        %v4986 = vpack.c.b16 %v4836, %v4833
        %v4987 = vpack.c.b16 %v4837, %v4834
        %v4988 = vpack.c.b16 %v4838, %v4835
        %v4989 = vpack.c.b16 %v4842, %v4839
        %v4990 = vpack.c.b16 %v4843, %v4840
        %v4991 = vpack.c.b16 %v4844, %v4841
        %v4992 = vpack.c.b16 %v4848, %v4845
        %v4993 = vpack.c.b16 %v4849, %v4846
        %v4994 = vpack.c.b16 %v4850, %v4847
        %v4995 = vpack.c.b16 %v4854, %v4851
        %v4996 = vpack.c.b16 %v4855, %v4852
        %v4997 = vpack.c.b16 %v4856, %v4853
        %v4998 = vpack.c.b16 %v4860, %v4857
        %v4999 = vpack.c.b16 %v4861, %v4858
        %v5000 = vpack.c.b16 %v4862, %v4859
        %v5001 = vpack.c.b16 %v4866, %v4863
        %v5002 = vpack.c.b16 %v4867, %v4864
        %v5003 = vpack.c.b16 %v4868, %v4865
        %v5004 = vpack.c.b16 %v4872, %v4869
        %v5005 = vpack.c.b16 %v4873, %v4870
        %v5006 = vpack.c.b16 %v4874, %v4871
        %v5007 = vpack.c.b16 %v4878, %v4875
        %v5008 = vpack.c.b16 %v4879, %v4876
        %v5009 = vpack.c.b16 %v4880, %v4877
        %v5010 = vpack.c.b16 %v4884, %v4881
        %v5011 = vpack.c.b16 %v4885, %v4882
        %v5012 = vpack.c.b16 %v4886, %v4883
        %v5013 = vpack.c.b16 %v4890, %v4887
        %v5014 = vpack.c.b16 %v4891, %v4888
        %v5015 = vpack.c.b16 %v4892, %v4889
        %v5016 = vpack.c.b16 %v4896, %v4893
        %v5017 = vpack.c.b16 %v4897, %v4894
        %v5018 = vpack.c.b16 %v4898, %v4895
        %5139 = vmatpush.bf16.msra.mxu0 %v4920
        %5140 = vmatpush.bf16.msra.mxu0 %v4917
        %5141 = vmatpush.bf16.msra.mxu0 %v4914
        %5142 = vmatpush.bf16.msra.mxu0 %v4911
        %5143 = vmatpush.bf16.msra.mxu0 %v4908
        %5144 = vmatpush.bf16.msra.mxu0 %v4905
        %5145 = vmatpush.bf16.msra.mxu0 %v4902
        %5146 = vmatpush.bf16.msra.mxu0 %v4899
        %5147 = vmatmul.bf16.gmra.mxu0 %v4171
        %v5148 = vpop.f32.mrf.mxu0
        %v5149 = vadd.f32 %v4493, %v5148
        %v5150 = vpop.f32.mrf.mxu0
        %v5151 = vadd.f32 %v4493, %v5150
        %5152 = vmatmul.bf16.gmra.mxu0 %v4176
        %v5153 = vpop.f32.mrf.mxu0
        %v5154 = vadd.f32 %v4493, %v5153
        %v5155 = vpop.f32.mrf.mxu0
        %v5156 = vadd.f32 %v4493, %v5155
        %5157 = vmatmul.bf16.gmra.mxu0 %v4181
        %v5158 = vpop.f32.mrf.mxu0
        %v5159 = vadd.f32 %v4493, %v5158
        %v5160 = vpop.f32.mrf.mxu0
        %v5161 = vadd.f32 %v4493, %v5160
        %5162 = vmatmul.bf16.gmra.mxu0 %v4186
        %v5163 = vpop.f32.mrf.mxu0
        %v5164 = vadd.f32 %v4493, %v5163
        %v5165 = vpop.f32.mrf.mxu0
        %v5166 = vadd.f32 %v4493, %v5165
        %5167 = vmatmul.bf16.gmra.mxu0 %v4191
        %v5168 = vpop.f32.mrf.mxu0
        %v5169 = vadd.f32 %v4493, %v5168
        %v5170 = vpop.f32.mrf.mxu0
        %v5171 = vadd.f32 %v4493, %v5170
        %5172 = vmatmul.bf16.gmra.mxu0 %v4196
        %v5173 = vpop.f32.mrf.mxu0
        %v5174 = vadd.f32 %v4493, %v5173
        %v5175 = vpop.f32.mrf.mxu0
        %v5176 = vadd.f32 %v4493, %v5175
        %5177 = vmatmul.bf16.gmra.mxu0 %v4201
        %v5178 = vpop.f32.mrf.mxu0
        %v5179 = vadd.f32 %v4493, %v5178
        %v5180 = vpop.f32.mrf.mxu0
        %v5181 = vadd.f32 %v4493, %v5180
        %5182 = vmatmul.bf16.gmra.mxu0 %v4206
        %v5183 = vpop.f32.mrf.mxu0
        %v5184 = vadd.f32 %v4493, %v5183
        %v5185 = vpop.f32.mrf.mxu0
        %v5186 = vadd.f32 %v4493, %v5185
        %5187 = vmatmul.bf16.gmra.mxu0 %v4211
        %v5188 = vpop.f32.mrf.mxu0
        %v5189 = vadd.f32 %v4493, %v5188
        %v5190 = vpop.f32.mrf.mxu0
        %v5191 = vadd.f32 %v4493, %v5190
        %5192 = vmatmul.bf16.gmra.mxu0 %v4216
        %v5193 = vpop.f32.mrf.mxu0
        %v5194 = vadd.f32 %v4493, %v5193
        %v5195 = vpop.f32.mrf.mxu0
        %v5196 = vadd.f32 %v4493, %v5195
        %5197 = vmatmul.bf16.gmra.mxu0 %v4221
        %v5198 = vpop.f32.mrf.mxu0
        %v5199 = vadd.f32 %v4493, %v5198
        %v5200 = vpop.f32.mrf.mxu0
        %v5201 = vadd.f32 %v4493, %v5200
        %5202 = vmatmul.bf16.gmra.mxu0 %v4226
        %v5203 = vpop.f32.mrf.mxu0
        %v5204 = vadd.f32 %v4493, %v5203
        %v5205 = vpop.f32.mrf.mxu0
        %v5206 = vadd.f32 %v4493, %v5205
        %5207 = vmatmul.bf16.gmra.mxu0 %v4231
        %v5208 = vpop.f32.mrf.mxu0
        %v5209 = vadd.f32 %v4493, %v5208
        %v5210 = vpop.f32.mrf.mxu0
        %v5211 = vadd.f32 %v4493, %v5210
        %5212 = vmatmul.bf16.gmra.mxu0 %v4236
        %v5213 = vpop.f32.mrf.mxu0
        %v5214 = vadd.f32 %v4493, %v5213
        %v5215 = vpop.f32.mrf.mxu0
        %v5216 = vadd.f32 %v4493, %v5215
        %5217 = vmatmul.bf16.gmra.mxu0 %v4241
        %v5218 = vpop.f32.mrf.mxu0
        %v5219 = vadd.f32 %v4493, %v5218
        %v5220 = vpop.f32.mrf.mxu0
        %v5221 = vadd.f32 %v4493, %v5220
        %5222 = vmatmul.bf16.gmra.mxu0 %v4246
        %v5223 = vpop.f32.mrf.mxu0
        %v5224 = vadd.f32 %v4493, %v5223
        %v5225 = vpop.f32.mrf.mxu0
        %v5226 = vadd.f32 %v4493, %v5225
        %5227 = vmatmul.bf16.gmra.mxu0 %v4251
        %v5228 = vpop.f32.mrf.mxu0
        %v5229 = vadd.f32 %v4493, %v5228
        %v5230 = vpop.f32.mrf.mxu0
        %v5231 = vadd.f32 %v4493, %v5230
        %5232 = vmatmul.bf16.gmra.mxu0 %v4256
        %v5233 = vpop.f32.mrf.mxu0
        %v5234 = vadd.f32 %v4493, %v5233
        %v5235 = vpop.f32.mrf.mxu0
        %v5236 = vadd.f32 %v4493, %v5235
        %5237 = vmatmul.bf16.gmra.mxu0 %v4261
        %v5238 = vpop.f32.mrf.mxu0
        %v5239 = vadd.f32 %v4493, %v5238
        %v5240 = vpop.f32.mrf.mxu0
        %v5241 = vadd.f32 %v4493, %v5240
        %5242 = vmatmul.bf16.gmra.mxu0 %v4266
        %v5243 = vpop.f32.mrf.mxu0
        %v5244 = vadd.f32 %v4493, %v5243
        %v5245 = vpop.f32.mrf.mxu0
        %v5246 = vadd.f32 %v4493, %v5245
        %5247 = vmatmul.bf16.gmra.mxu0 %v4271
        %v5248 = vpop.f32.mrf.mxu0
        %v5249 = vadd.f32 %v4493, %v5248
        %v5250 = vpop.f32.mrf.mxu0
        %v5251 = vadd.f32 %v4493, %v5250
        %5252 = vmatmul.bf16.gmra.mxu0 %v4276
        %v5253 = vpop.f32.mrf.mxu0
        %v5254 = vadd.f32 %v4493, %v5253
        %v5255 = vpop.f32.mrf.mxu0
        %v5256 = vadd.f32 %v4493, %v5255
        %5257 = vmatmul.bf16.gmra.mxu0 %v4281
        %v5258 = vpop.f32.mrf.mxu0
        %v5259 = vadd.f32 %v4493, %v5258
        %v5260 = vpop.f32.mrf.mxu0
        %v5261 = vadd.f32 %v4493, %v5260
        %5262 = vmatmul.bf16.gmra.mxu0 %v4286
        %v5263 = vpop.f32.mrf.mxu0
        %v5264 = vadd.f32 %v4493, %v5263
        %v5265 = vpop.f32.mrf.mxu0
        %v5266 = vadd.f32 %v4493, %v5265
        %5267 = vmatmul.bf16.gmra.mxu0 %v4291
        %v5268 = vpop.f32.mrf.mxu0
        %v5269 = vadd.f32 %v4493, %v5268
        %v5270 = vpop.f32.mrf.mxu0
        %v5271 = vadd.f32 %v4493, %v5270
        %5272 = vmatmul.bf16.gmra.mxu0 %v4296
        %v5273 = vpop.f32.mrf.mxu0
        %v5274 = vadd.f32 %v4493, %v5273
        %v5275 = vpop.f32.mrf.mxu0
        %v5276 = vadd.f32 %v4493, %v5275
        %5277 = vmatmul.bf16.gmra.mxu0 %v4301
        %v5278 = vpop.f32.mrf.mxu0
        %v5279 = vadd.f32 %v4493, %v5278
        %v5280 = vpop.f32.mrf.mxu0
        %v5281 = vadd.f32 %v4493, %v5280
        %5282 = vmatmul.bf16.gmra.mxu0 %v4306
        %v5283 = vpop.f32.mrf.mxu0
        %v5284 = vadd.f32 %v4493, %v5283
        %v5285 = vpop.f32.mrf.mxu0
        %v5286 = vadd.f32 %v4493, %v5285
        %5287 = vmatmul.bf16.gmra.mxu0 %v4311
        %v5288 = vpop.f32.mrf.mxu0
        %v5289 = vadd.f32 %v4493, %v5288
        %v5290 = vpop.f32.mrf.mxu0
        %v5291 = vadd.f32 %v4493, %v5290
        %5292 = vmatmul.bf16.gmra.mxu0 %v4316
        %v5293 = vpop.f32.mrf.mxu0
        %v5294 = vadd.f32 %v4493, %v5293
        %v5295 = vpop.f32.mrf.mxu0
        %v5296 = vadd.f32 %v4493, %v5295
        %5297 = vmatmul.bf16.gmra.mxu0 %v4321
        %v5298 = vpop.f32.mrf.mxu0
        %v5299 = vadd.f32 %v4493, %v5298
        %v5300 = vpop.f32.mrf.mxu0
        %v5301 = vadd.f32 %v4493, %v5300
        %5302 = vmatmul.bf16.gmra.mxu0 %v4326
        %v5303 = vpop.f32.mrf.mxu0
        %v5304 = vadd.f32 %v4493, %v5303
        %v5305 = vpop.f32.mrf.mxu0
        %v5306 = vadd.f32 %v4493, %v5305
        %5307 = vdwg.mxu0
        %5308 = vmatpush.bf16.msra.mxu0 %v4944
        %5309 = vmatpush.bf16.msra.mxu0 %v4941
        %5310 = vmatpush.bf16.msra.mxu0 %v4938
        %5311 = vmatpush.bf16.msra.mxu0 %v4935
        %5312 = vmatpush.bf16.msra.mxu0 %v4932
        %5313 = vmatpush.bf16.msra.mxu0 %v4929
        %5314 = vmatpush.bf16.msra.mxu0 %v4926
        %5315 = vmatpush.bf16.msra.mxu0 %v4923
        %5316 = vmatmul.bf16.gmra.mxu0 %v4172
        %v5317 = vpop.f32.mrf.mxu0
        %v5318 = vadd.f32 %v5149, %v5317
        %v5319 = vpop.f32.mrf.mxu0
        %v5320 = vadd.f32 %v5151, %v5319
        %5321 = vmatmul.bf16.gmra.mxu0 %v4177
        %v5322 = vpop.f32.mrf.mxu0
        %v5323 = vadd.f32 %v5154, %v5322
        %v5324 = vpop.f32.mrf.mxu0
        %v5325 = vadd.f32 %v5156, %v5324
        %5326 = vmatmul.bf16.gmra.mxu0 %v4182
        %v5327 = vpop.f32.mrf.mxu0
        %v5328 = vadd.f32 %v5159, %v5327
        %v5329 = vpop.f32.mrf.mxu0
        %v5330 = vadd.f32 %v5161, %v5329
        %5331 = vmatmul.bf16.gmra.mxu0 %v4187
        %v5332 = vpop.f32.mrf.mxu0
        %v5333 = vadd.f32 %v5164, %v5332
        %v5334 = vpop.f32.mrf.mxu0
        %v5335 = vadd.f32 %v5166, %v5334
        %5336 = vmatmul.bf16.gmra.mxu0 %v4192
        %v5337 = vpop.f32.mrf.mxu0
        %v5338 = vadd.f32 %v5169, %v5337
        %v5339 = vpop.f32.mrf.mxu0
        %v5340 = vadd.f32 %v5171, %v5339
        %5341 = vmatmul.bf16.gmra.mxu0 %v4197
        %v5342 = vpop.f32.mrf.mxu0
        %v5343 = vadd.f32 %v5174, %v5342
        %v5344 = vpop.f32.mrf.mxu0
        %v5345 = vadd.f32 %v5176, %v5344
        %5346 = vmatmul.bf16.gmra.mxu0 %v4202
        %v5347 = vpop.f32.mrf.mxu0
        %v5348 = vadd.f32 %v5179, %v5347
        %v5349 = vpop.f32.mrf.mxu0
        %v5350 = vadd.f32 %v5181, %v5349
        %5351 = vmatmul.bf16.gmra.mxu0 %v4207
        %v5352 = vpop.f32.mrf.mxu0
        %v5353 = vadd.f32 %v5184, %v5352
        %v5354 = vpop.f32.mrf.mxu0
        %v5355 = vadd.f32 %v5186, %v5354
        %5356 = vmatmul.bf16.gmra.mxu0 %v4212
        %v5357 = vpop.f32.mrf.mxu0
        %v5358 = vadd.f32 %v5189, %v5357
        %v5359 = vpop.f32.mrf.mxu0
        %v5360 = vadd.f32 %v5191, %v5359
        %5361 = vmatmul.bf16.gmra.mxu0 %v4217
        %v5362 = vpop.f32.mrf.mxu0
        %v5363 = vadd.f32 %v5194, %v5362
        %v5364 = vpop.f32.mrf.mxu0
        %v5365 = vadd.f32 %v5196, %v5364
        %5366 = vmatmul.bf16.gmra.mxu0 %v4222
        %v5367 = vpop.f32.mrf.mxu0
        %v5368 = vadd.f32 %v5199, %v5367
        %v5369 = vpop.f32.mrf.mxu0
        %v5370 = vadd.f32 %v5201, %v5369
        %5371 = vmatmul.bf16.gmra.mxu0 %v4227
        %v5372 = vpop.f32.mrf.mxu0
        %v5373 = vadd.f32 %v5204, %v5372
        %v5374 = vpop.f32.mrf.mxu0
        %v5375 = vadd.f32 %v5206, %v5374
        %5376 = vmatmul.bf16.gmra.mxu0 %v4232
        %v5377 = vpop.f32.mrf.mxu0
        %v5378 = vadd.f32 %v5209, %v5377
        %v5379 = vpop.f32.mrf.mxu0
        %v5380 = vadd.f32 %v5211, %v5379
        %5381 = vmatmul.bf16.gmra.mxu0 %v4237
        %v5382 = vpop.f32.mrf.mxu0
        %v5383 = vadd.f32 %v5214, %v5382
        %v5384 = vpop.f32.mrf.mxu0
        %v5385 = vadd.f32 %v5216, %v5384
        %5386 = vmatmul.bf16.gmra.mxu0 %v4242
        %v5387 = vpop.f32.mrf.mxu0
        %v5388 = vadd.f32 %v5219, %v5387
        %v5389 = vpop.f32.mrf.mxu0
        %v5390 = vadd.f32 %v5221, %v5389
        %5391 = vmatmul.bf16.gmra.mxu0 %v4247
        %v5392 = vpop.f32.mrf.mxu0
        %v5393 = vadd.f32 %v5224, %v5392
        %v5394 = vpop.f32.mrf.mxu0
        %v5395 = vadd.f32 %v5226, %v5394
        %5396 = vmatmul.bf16.gmra.mxu0 %v4252
        %v5397 = vpop.f32.mrf.mxu0
        %v5398 = vadd.f32 %v5229, %v5397
        %v5399 = vpop.f32.mrf.mxu0
        %v5400 = vadd.f32 %v5231, %v5399
        %5401 = vmatmul.bf16.gmra.mxu0 %v4257
        %v5402 = vpop.f32.mrf.mxu0
        %v5403 = vadd.f32 %v5234, %v5402
        %v5404 = vpop.f32.mrf.mxu0
        %v5405 = vadd.f32 %v5236, %v5404
        %5406 = vmatmul.bf16.gmra.mxu0 %v4262
        %v5407 = vpop.f32.mrf.mxu0
        %v5408 = vadd.f32 %v5239, %v5407
        %v5409 = vpop.f32.mrf.mxu0
        %v5410 = vadd.f32 %v5241, %v5409
        %5411 = vmatmul.bf16.gmra.mxu0 %v4267
        %v5412 = vpop.f32.mrf.mxu0
        %v5413 = vadd.f32 %v5244, %v5412
        %v5414 = vpop.f32.mrf.mxu0
        %v5415 = vadd.f32 %v5246, %v5414
        %5416 = vmatmul.bf16.gmra.mxu0 %v4272
        %v5417 = vpop.f32.mrf.mxu0
        %v5418 = vadd.f32 %v5249, %v5417
        %v5419 = vpop.f32.mrf.mxu0
        %v5420 = vadd.f32 %v5251, %v5419
        %5421 = vmatmul.bf16.gmra.mxu0 %v4277
        %v5422 = vpop.f32.mrf.mxu0
        %v5423 = vadd.f32 %v5254, %v5422
        %v5424 = vpop.f32.mrf.mxu0
        %v5425 = vadd.f32 %v5256, %v5424
        %5426 = vmatmul.bf16.gmra.mxu0 %v4282
        %v5427 = vpop.f32.mrf.mxu0
        %v5428 = vadd.f32 %v5259, %v5427
        %v5429 = vpop.f32.mrf.mxu0
        %v5430 = vadd.f32 %v5261, %v5429
        %5431 = vmatmul.bf16.gmra.mxu0 %v4287
        %v5432 = vpop.f32.mrf.mxu0
        %v5433 = vadd.f32 %v5264, %v5432
        %v5434 = vpop.f32.mrf.mxu0
        %v5435 = vadd.f32 %v5266, %v5434
        %5436 = vmatmul.bf16.gmra.mxu0 %v4292
        %v5437 = vpop.f32.mrf.mxu0
        %v5438 = vadd.f32 %v5269, %v5437
        %v5439 = vpop.f32.mrf.mxu0
        %v5440 = vadd.f32 %v5271, %v5439
        %5441 = vmatmul.bf16.gmra.mxu0 %v4297
        %v5442 = vpop.f32.mrf.mxu0
        %v5443 = vadd.f32 %v5274, %v5442
        %v5444 = vpop.f32.mrf.mxu0
        %v5445 = vadd.f32 %v5276, %v5444
        %5446 = vmatmul.bf16.gmra.mxu0 %v4302
        %v5447 = vpop.f32.mrf.mxu0
        %v5448 = vadd.f32 %v5279, %v5447
        %v5449 = vpop.f32.mrf.mxu0
        %v5450 = vadd.f32 %v5281, %v5449
        %5451 = vmatmul.bf16.gmra.mxu0 %v4307
        %v5452 = vpop.f32.mrf.mxu0
        %v5453 = vadd.f32 %v5284, %v5452
        %v5454 = vpop.f32.mrf.mxu0
        %v5455 = vadd.f32 %v5286, %v5454
        %5456 = vmatmul.bf16.gmra.mxu0 %v4312
        %v5457 = vpop.f32.mrf.mxu0
        %v5458 = vadd.f32 %v5289, %v5457
        %v5459 = vpop.f32.mrf.mxu0
        %v5460 = vadd.f32 %v5291, %v5459
        %5461 = vmatmul.bf16.gmra.mxu0 %v4317
        %v5462 = vpop.f32.mrf.mxu0
        %v5463 = vadd.f32 %v5294, %v5462
        %v5464 = vpop.f32.mrf.mxu0
        %v5465 = vadd.f32 %v5296, %v5464
        %5466 = vmatmul.bf16.gmra.mxu0 %v4322
        %v5467 = vpop.f32.mrf.mxu0
        %v5468 = vadd.f32 %v5299, %v5467
        %v5469 = vpop.f32.mrf.mxu0
        %v5470 = vadd.f32 %v5301, %v5469
        %5471 = vmatmul.bf16.gmra.mxu0 %v4327
        %v5472 = vpop.f32.mrf.mxu0
        %v5473 = vadd.f32 %v5304, %v5472
        %v5474 = vpop.f32.mrf.mxu0
        %v5475 = vadd.f32 %v5306, %v5474
        %5476 = vdwg.mxu0
        %5477 = vmatpush.bf16.msra.mxu0 %v4968
        %5478 = vmatpush.bf16.msra.mxu0 %v4965
        %5479 = vmatpush.bf16.msra.mxu0 %v4962
        %5480 = vmatpush.bf16.msra.mxu0 %v4959
        %5481 = vmatpush.bf16.msra.mxu0 %v4956
        %5482 = vmatpush.bf16.msra.mxu0 %v4953
        %5483 = vmatpush.bf16.msra.mxu0 %v4950
        %5484 = vmatpush.bf16.msra.mxu0 %v4947
        %5485 = vmatmul.bf16.gmra.mxu0 %v4173
        %v5486 = vpop.f32.mrf.mxu0
        %v5487 = vadd.f32 %v5318, %v5486
        %v5488 = vpop.f32.mrf.mxu0
        %v5489 = vadd.f32 %v5320, %v5488
        %5490 = vmatmul.bf16.gmra.mxu0 %v4178
        %v5491 = vpop.f32.mrf.mxu0
        %v5492 = vadd.f32 %v5323, %v5491
        %v5493 = vpop.f32.mrf.mxu0
        %v5494 = vadd.f32 %v5325, %v5493
        %5495 = vmatmul.bf16.gmra.mxu0 %v4183
        %v5496 = vpop.f32.mrf.mxu0
        %v5497 = vadd.f32 %v5328, %v5496
        %v5498 = vpop.f32.mrf.mxu0
        %v5499 = vadd.f32 %v5330, %v5498
        %5500 = vmatmul.bf16.gmra.mxu0 %v4188
        %v5501 = vpop.f32.mrf.mxu0
        %v5502 = vadd.f32 %v5333, %v5501
        %v5503 = vpop.f32.mrf.mxu0
        %v5504 = vadd.f32 %v5335, %v5503
        %5505 = vmatmul.bf16.gmra.mxu0 %v4193
        %v5506 = vpop.f32.mrf.mxu0
        %v5507 = vadd.f32 %v5338, %v5506
        %v5508 = vpop.f32.mrf.mxu0
        %v5509 = vadd.f32 %v5340, %v5508
        %5510 = vmatmul.bf16.gmra.mxu0 %v4198
        %v5511 = vpop.f32.mrf.mxu0
        %v5512 = vadd.f32 %v5343, %v5511
        %v5513 = vpop.f32.mrf.mxu0
        %v5514 = vadd.f32 %v5345, %v5513
        %5515 = vmatmul.bf16.gmra.mxu0 %v4203
        %v5516 = vpop.f32.mrf.mxu0
        %v5517 = vadd.f32 %v5348, %v5516
        %v5518 = vpop.f32.mrf.mxu0
        %v5519 = vadd.f32 %v5350, %v5518
        %5520 = vmatmul.bf16.gmra.mxu0 %v4208
        %v5521 = vpop.f32.mrf.mxu0
        %v5522 = vadd.f32 %v5353, %v5521
        %v5523 = vpop.f32.mrf.mxu0
        %v5524 = vadd.f32 %v5355, %v5523
        %5525 = vmatmul.bf16.gmra.mxu0 %v4213
        %v5526 = vpop.f32.mrf.mxu0
        %v5527 = vadd.f32 %v5358, %v5526
        %v5528 = vpop.f32.mrf.mxu0
        %v5529 = vadd.f32 %v5360, %v5528
        %5530 = vmatmul.bf16.gmra.mxu0 %v4218
        %v5531 = vpop.f32.mrf.mxu0
        %v5532 = vadd.f32 %v5363, %v5531
        %v5533 = vpop.f32.mrf.mxu0
        %v5534 = vadd.f32 %v5365, %v5533
        %5535 = vmatmul.bf16.gmra.mxu0 %v4223
        %v5536 = vpop.f32.mrf.mxu0
        %v5537 = vadd.f32 %v5368, %v5536
        %v5538 = vpop.f32.mrf.mxu0
        %v5539 = vadd.f32 %v5370, %v5538
        %5540 = vmatmul.bf16.gmra.mxu0 %v4228
        %v5541 = vpop.f32.mrf.mxu0
        %v5542 = vadd.f32 %v5373, %v5541
        %v5543 = vpop.f32.mrf.mxu0
        %v5544 = vadd.f32 %v5375, %v5543
        %5545 = vmatmul.bf16.gmra.mxu0 %v4233
        %v5546 = vpop.f32.mrf.mxu0
        %v5547 = vadd.f32 %v5378, %v5546
        %v5548 = vpop.f32.mrf.mxu0
        %v5549 = vadd.f32 %v5380, %v5548
        %5550 = vmatmul.bf16.gmra.mxu0 %v4238
        %v5551 = vpop.f32.mrf.mxu0
        %v5552 = vadd.f32 %v5383, %v5551
        %v5553 = vpop.f32.mrf.mxu0
        %v5554 = vadd.f32 %v5385, %v5553
        %5555 = vmatmul.bf16.gmra.mxu0 %v4243
        %v5556 = vpop.f32.mrf.mxu0
        %v5557 = vadd.f32 %v5388, %v5556
        %v5558 = vpop.f32.mrf.mxu0
        %v5559 = vadd.f32 %v5390, %v5558
        %5560 = vmatmul.bf16.gmra.mxu0 %v4248
        %v5561 = vpop.f32.mrf.mxu0
        %v5562 = vadd.f32 %v5393, %v5561
        %v5563 = vpop.f32.mrf.mxu0
        %v5564 = vadd.f32 %v5395, %v5563
        %5565 = vmatmul.bf16.gmra.mxu0 %v4253
        %v5566 = vpop.f32.mrf.mxu0
        %v5567 = vadd.f32 %v5398, %v5566
        %v5568 = vpop.f32.mrf.mxu0
        %v5569 = vadd.f32 %v5400, %v5568
        %5570 = vmatmul.bf16.gmra.mxu0 %v4258
        %v5571 = vpop.f32.mrf.mxu0
        %v5572 = vadd.f32 %v5403, %v5571
        %v5573 = vpop.f32.mrf.mxu0
        %v5574 = vadd.f32 %v5405, %v5573
        %5575 = vmatmul.bf16.gmra.mxu0 %v4263
        %v5576 = vpop.f32.mrf.mxu0
        %v5577 = vadd.f32 %v5408, %v5576
        %v5578 = vpop.f32.mrf.mxu0
        %v5579 = vadd.f32 %v5410, %v5578
        %5580 = vmatmul.bf16.gmra.mxu0 %v4268
        %v5581 = vpop.f32.mrf.mxu0
        %v5582 = vadd.f32 %v5413, %v5581
        %v5583 = vpop.f32.mrf.mxu0
        %v5584 = vadd.f32 %v5415, %v5583
        %5585 = vmatmul.bf16.gmra.mxu0 %v4273
        %v5586 = vpop.f32.mrf.mxu0
        %v5587 = vadd.f32 %v5418, %v5586
        %v5588 = vpop.f32.mrf.mxu0
        %v5589 = vadd.f32 %v5420, %v5588
        %5590 = vmatmul.bf16.gmra.mxu0 %v4278
        %v5591 = vpop.f32.mrf.mxu0
        %v5592 = vadd.f32 %v5423, %v5591
        %v5593 = vpop.f32.mrf.mxu0
        %v5594 = vadd.f32 %v5425, %v5593
        %5595 = vmatmul.bf16.gmra.mxu0 %v4283
        %v5596 = vpop.f32.mrf.mxu0
        %v5597 = vadd.f32 %v5428, %v5596
        %v5598 = vpop.f32.mrf.mxu0
        %v5599 = vadd.f32 %v5430, %v5598
        %5600 = vmatmul.bf16.gmra.mxu0 %v4288
        %v5601 = vpop.f32.mrf.mxu0
        %v5602 = vadd.f32 %v5433, %v5601
        %v5603 = vpop.f32.mrf.mxu0
        %v5604 = vadd.f32 %v5435, %v5603
        %5605 = vmatmul.bf16.gmra.mxu0 %v4293
        %v5606 = vpop.f32.mrf.mxu0
        %v5607 = vadd.f32 %v5438, %v5606
        %v5608 = vpop.f32.mrf.mxu0
        %v5609 = vadd.f32 %v5440, %v5608
        %5610 = vmatmul.bf16.gmra.mxu0 %v4298
        %v5611 = vpop.f32.mrf.mxu0
        %v5612 = vadd.f32 %v5443, %v5611
        %v5613 = vpop.f32.mrf.mxu0
        %v5614 = vadd.f32 %v5445, %v5613
        %5615 = vmatmul.bf16.gmra.mxu0 %v4303
        %v5616 = vpop.f32.mrf.mxu0
        %v5617 = vadd.f32 %v5448, %v5616
        %v5618 = vpop.f32.mrf.mxu0
        %v5619 = vadd.f32 %v5450, %v5618
        %5620 = vmatmul.bf16.gmra.mxu0 %v4308
        %v5621 = vpop.f32.mrf.mxu0
        %v5622 = vadd.f32 %v5453, %v5621
        %v5623 = vpop.f32.mrf.mxu0
        %v5624 = vadd.f32 %v5455, %v5623
        %5625 = vmatmul.bf16.gmra.mxu0 %v4313
        %v5626 = vpop.f32.mrf.mxu0
        %v5627 = vadd.f32 %v5458, %v5626
        %v5628 = vpop.f32.mrf.mxu0
        %v5629 = vadd.f32 %v5460, %v5628
        %5630 = vmatmul.bf16.gmra.mxu0 %v4318
        %v5631 = vpop.f32.mrf.mxu0
        %v5632 = vadd.f32 %v5463, %v5631
        %v5633 = vpop.f32.mrf.mxu0
        %v5634 = vadd.f32 %v5465, %v5633
        %5635 = vmatmul.bf16.gmra.mxu0 %v4323
        %v5636 = vpop.f32.mrf.mxu0
        %v5637 = vadd.f32 %v5468, %v5636
        %v5638 = vpop.f32.mrf.mxu0
        %v5639 = vadd.f32 %v5470, %v5638
        %5640 = vmatmul.bf16.gmra.mxu0 %v4328
        %v5641 = vpop.f32.mrf.mxu0
        %v5642 = vadd.f32 %v5473, %v5641
        %v5643 = vpop.f32.mrf.mxu0
        %v5644 = vadd.f32 %v5475, %v5643
        %5645 = vdwg.mxu0
        %5646 = vmatpush.bf16.msra.mxu0 %v4992
        %5647 = vmatpush.bf16.msra.mxu0 %v4989
        %5648 = vmatpush.bf16.msra.mxu0 %v4986
        %5649 = vmatpush.bf16.msra.mxu0 %v4983
        %5650 = vmatpush.bf16.msra.mxu0 %v4980
        %5651 = vmatpush.bf16.msra.mxu0 %v4977
        %5652 = vmatpush.bf16.msra.mxu0 %v4974
        %5653 = vmatpush.bf16.msra.mxu0 %v4971
        %5654 = vmatmul.bf16.gmra.mxu0 %v4174
        %v5655 = vpop.f32.mrf.mxu0
        %v5656 = vadd.f32 %v5487, %v5655
        %v5657 = vpop.f32.mrf.mxu0
        %v5658 = vadd.f32 %v5489, %v5657
        %5659 = vmatmul.bf16.gmra.mxu0 %v4179
        %v5660 = vpop.f32.mrf.mxu0
        %v5661 = vadd.f32 %v5492, %v5660
        %v5662 = vpop.f32.mrf.mxu0
        %v5663 = vadd.f32 %v5494, %v5662
        %5664 = vmatmul.bf16.gmra.mxu0 %v4184
        %v5665 = vpop.f32.mrf.mxu0
        %v5666 = vadd.f32 %v5497, %v5665
        %v5667 = vpop.f32.mrf.mxu0
        %v5668 = vadd.f32 %v5499, %v5667
        %5669 = vmatmul.bf16.gmra.mxu0 %v4189
        %v5670 = vpop.f32.mrf.mxu0
        %v5671 = vadd.f32 %v5502, %v5670
        %v5672 = vpop.f32.mrf.mxu0
        %v5673 = vadd.f32 %v5504, %v5672
        %5674 = vmatmul.bf16.gmra.mxu0 %v4194
        %v5675 = vpop.f32.mrf.mxu0
        %v5676 = vadd.f32 %v5507, %v5675
        %v5677 = vpop.f32.mrf.mxu0
        %v5678 = vadd.f32 %v5509, %v5677
        %5679 = vmatmul.bf16.gmra.mxu0 %v4199
        %v5680 = vpop.f32.mrf.mxu0
        %v5681 = vadd.f32 %v5512, %v5680
        %v5682 = vpop.f32.mrf.mxu0
        %v5683 = vadd.f32 %v5514, %v5682
        %5684 = vmatmul.bf16.gmra.mxu0 %v4204
        %v5685 = vpop.f32.mrf.mxu0
        %v5686 = vadd.f32 %v5517, %v5685
        %v5687 = vpop.f32.mrf.mxu0
        %v5688 = vadd.f32 %v5519, %v5687
        %5689 = vmatmul.bf16.gmra.mxu0 %v4209
        %v5690 = vpop.f32.mrf.mxu0
        %v5691 = vadd.f32 %v5522, %v5690
        %v5692 = vpop.f32.mrf.mxu0
        %v5693 = vadd.f32 %v5524, %v5692
        %5694 = vmatmul.bf16.gmra.mxu0 %v4214
        %v5695 = vpop.f32.mrf.mxu0
        %v5696 = vadd.f32 %v5527, %v5695
        %v5697 = vpop.f32.mrf.mxu0
        %v5698 = vadd.f32 %v5529, %v5697
        %5699 = vmatmul.bf16.gmra.mxu0 %v4219
        %v5700 = vpop.f32.mrf.mxu0
        %v5701 = vadd.f32 %v5532, %v5700
        %v5702 = vpop.f32.mrf.mxu0
        %v5703 = vadd.f32 %v5534, %v5702
        %5704 = vmatmul.bf16.gmra.mxu0 %v4224
        %v5705 = vpop.f32.mrf.mxu0
        %v5706 = vadd.f32 %v5537, %v5705
        %v5707 = vpop.f32.mrf.mxu0
        %v5708 = vadd.f32 %v5539, %v5707
        %5709 = vmatmul.bf16.gmra.mxu0 %v4229
        %v5710 = vpop.f32.mrf.mxu0
        %v5711 = vadd.f32 %v5542, %v5710
        %v5712 = vpop.f32.mrf.mxu0
        %v5713 = vadd.f32 %v5544, %v5712
        %5714 = vmatmul.bf16.gmra.mxu0 %v4234
        %v5715 = vpop.f32.mrf.mxu0
        %v5716 = vadd.f32 %v5547, %v5715
        %v5717 = vpop.f32.mrf.mxu0
        %v5718 = vadd.f32 %v5549, %v5717
        %5719 = vmatmul.bf16.gmra.mxu0 %v4239
        %v5720 = vpop.f32.mrf.mxu0
        %v5721 = vadd.f32 %v5552, %v5720
        %v5722 = vpop.f32.mrf.mxu0
        %v5723 = vadd.f32 %v5554, %v5722
        %5724 = vmatmul.bf16.gmra.mxu0 %v4244
        %v5725 = vpop.f32.mrf.mxu0
        %v5726 = vadd.f32 %v5557, %v5725
        %v5727 = vpop.f32.mrf.mxu0
        %v5728 = vadd.f32 %v5559, %v5727
        %5729 = vmatmul.bf16.gmra.mxu0 %v4249
        %v5730 = vpop.f32.mrf.mxu0
        %v5731 = vadd.f32 %v5562, %v5730
        %v5732 = vpop.f32.mrf.mxu0
        %v5733 = vadd.f32 %v5564, %v5732
        %5734 = vmatmul.bf16.gmra.mxu0 %v4254
        %v5735 = vpop.f32.mrf.mxu0
        %v5736 = vadd.f32 %v5567, %v5735
        %v5737 = vpop.f32.mrf.mxu0
        %v5738 = vadd.f32 %v5569, %v5737
        %5739 = vmatmul.bf16.gmra.mxu0 %v4259
        %v5740 = vpop.f32.mrf.mxu0
        %v5741 = vadd.f32 %v5572, %v5740
        %v5742 = vpop.f32.mrf.mxu0
        %v5743 = vadd.f32 %v5574, %v5742
        %5744 = vmatmul.bf16.gmra.mxu0 %v4264
        %v5745 = vpop.f32.mrf.mxu0
        %v5746 = vadd.f32 %v5577, %v5745
        %v5747 = vpop.f32.mrf.mxu0
        %v5748 = vadd.f32 %v5579, %v5747
        %5749 = vmatmul.bf16.gmra.mxu0 %v4269
        %v5750 = vpop.f32.mrf.mxu0
        %v5751 = vadd.f32 %v5582, %v5750
        %v5752 = vpop.f32.mrf.mxu0
        %v5753 = vadd.f32 %v5584, %v5752
        %5754 = vmatmul.bf16.gmra.mxu0 %v4274
        %v5755 = vpop.f32.mrf.mxu0
        %v5756 = vadd.f32 %v5587, %v5755
        %v5757 = vpop.f32.mrf.mxu0
        %v5758 = vadd.f32 %v5589, %v5757
        %5759 = vmatmul.bf16.gmra.mxu0 %v4279
        %v5760 = vpop.f32.mrf.mxu0
        %v5761 = vadd.f32 %v5592, %v5760
        %v5762 = vpop.f32.mrf.mxu0
        %v5763 = vadd.f32 %v5594, %v5762
        %5764 = vmatmul.bf16.gmra.mxu0 %v4284
        %v5765 = vpop.f32.mrf.mxu0
        %v5766 = vadd.f32 %v5597, %v5765
        %v5767 = vpop.f32.mrf.mxu0
        %v5768 = vadd.f32 %v5599, %v5767
        %5769 = vmatmul.bf16.gmra.mxu0 %v4289
        %v5770 = vpop.f32.mrf.mxu0
        %v5771 = vadd.f32 %v5602, %v5770
        %v5772 = vpop.f32.mrf.mxu0
        %v5773 = vadd.f32 %v5604, %v5772
        %5774 = vmatmul.bf16.gmra.mxu0 %v4294
        %v5775 = vpop.f32.mrf.mxu0
        %v5776 = vadd.f32 %v5607, %v5775
        %v5777 = vpop.f32.mrf.mxu0
        %v5778 = vadd.f32 %v5609, %v5777
        %5779 = vmatmul.bf16.gmra.mxu0 %v4299
        %v5780 = vpop.f32.mrf.mxu0
        %v5781 = vadd.f32 %v5612, %v5780
        %v5782 = vpop.f32.mrf.mxu0
        %v5783 = vadd.f32 %v5614, %v5782
        %5784 = vmatmul.bf16.gmra.mxu0 %v4304
        %v5785 = vpop.f32.mrf.mxu0
        %v5786 = vadd.f32 %v5617, %v5785
        %v5787 = vpop.f32.mrf.mxu0
        %v5788 = vadd.f32 %v5619, %v5787
        %5789 = vmatmul.bf16.gmra.mxu0 %v4309
        %v5790 = vpop.f32.mrf.mxu0
        %v5791 = vadd.f32 %v5622, %v5790
        %v5792 = vpop.f32.mrf.mxu0
        %v5793 = vadd.f32 %v5624, %v5792
        %5794 = vmatmul.bf16.gmra.mxu0 %v4314
        %v5795 = vpop.f32.mrf.mxu0
        %v5796 = vadd.f32 %v5627, %v5795
        %v5797 = vpop.f32.mrf.mxu0
        %v5798 = vadd.f32 %v5629, %v5797
        %5799 = vmatmul.bf16.gmra.mxu0 %v4319
        %v5800 = vpop.f32.mrf.mxu0
        %v5801 = vadd.f32 %v5632, %v5800
        %v5802 = vpop.f32.mrf.mxu0
        %v5803 = vadd.f32 %v5634, %v5802
        %5804 = vmatmul.bf16.gmra.mxu0 %v4324
        %v5805 = vpop.f32.mrf.mxu0
        %v5806 = vadd.f32 %v5637, %v5805
        %v5807 = vpop.f32.mrf.mxu0
        %v5808 = vadd.f32 %v5639, %v5807
        %5809 = vmatmul.bf16.gmra.mxu0 %v4329
        %v5810 = vpop.f32.mrf.mxu0
        %v5811 = vadd.f32 %v5642, %v5810
        %v5812 = vpop.f32.mrf.mxu0
        %v5813 = vadd.f32 %v5644, %v5812
        %5814 = vdwg.mxu0
        %5815 = vmatpush.bf16.msra.mxu0 %v5016
        %5816 = vmatpush.bf16.msra.mxu0 %v5013
        %5817 = vmatpush.bf16.msra.mxu0 %v5010
        %5818 = vmatpush.bf16.msra.mxu0 %v5007
        %5819 = vmatpush.bf16.msra.mxu0 %v5004
        %5820 = vmatpush.bf16.msra.mxu0 %v5001
        %5821 = vmatpush.bf16.msra.mxu0 %v4998
        %5822 = vmatpush.bf16.msra.mxu0 %v4995
        %5823 = vmatmul.bf16.gmra.mxu0 %v4175
        %v5824 = vpop.f32.mrf.mxu0
        %v5825 = vadd.f32 %v5656, %v5824
        %v5826 = vpop.f32.mrf.mxu0
        %v5827 = vadd.f32 %v5658, %v5826
        %5828 = vmatmul.bf16.gmra.mxu0 %v4180
        %v5829 = vpop.f32.mrf.mxu0
        %v5830 = vadd.f32 %v5661, %v5829
        %v5831 = vpop.f32.mrf.mxu0
        %v5832 = vadd.f32 %v5663, %v5831
        %5833 = vmatmul.bf16.gmra.mxu0 %v4185
        %v5834 = vpop.f32.mrf.mxu0
        %v5835 = vadd.f32 %v5666, %v5834
        %v5836 = vpop.f32.mrf.mxu0
        %v5837 = vadd.f32 %v5668, %v5836
        %5838 = vmatmul.bf16.gmra.mxu0 %v4190
        %v5839 = vpop.f32.mrf.mxu0
        %v5840 = vadd.f32 %v5671, %v5839
        %v5841 = vpop.f32.mrf.mxu0
        %v5842 = vadd.f32 %v5673, %v5841
        %5843 = vmatmul.bf16.gmra.mxu0 %v4195
        %v5844 = vpop.f32.mrf.mxu0
        %v5845 = vadd.f32 %v5676, %v5844
        %v5846 = vpop.f32.mrf.mxu0
        %v5847 = vadd.f32 %v5678, %v5846
        %5848 = vmatmul.bf16.gmra.mxu0 %v4200
        %v5849 = vpop.f32.mrf.mxu0
        %v5850 = vadd.f32 %v5681, %v5849
        %v5851 = vpop.f32.mrf.mxu0
        %v5852 = vadd.f32 %v5683, %v5851
        %5853 = vmatmul.bf16.gmra.mxu0 %v4205
        %v5854 = vpop.f32.mrf.mxu0
        %v5855 = vadd.f32 %v5686, %v5854
        %v5856 = vpop.f32.mrf.mxu0
        %v5857 = vadd.f32 %v5688, %v5856
        %5858 = vmatmul.bf16.gmra.mxu0 %v4210
        %v5859 = vpop.f32.mrf.mxu0
        %v5860 = vadd.f32 %v5691, %v5859
        %v5861 = vpop.f32.mrf.mxu0
        %v5862 = vadd.f32 %v5693, %v5861
        %5863 = vmatmul.bf16.gmra.mxu0 %v4215
        %v5864 = vpop.f32.mrf.mxu0
        %v5865 = vadd.f32 %v5696, %v5864
        %v5866 = vpop.f32.mrf.mxu0
        %v5867 = vadd.f32 %v5698, %v5866
        %5868 = vmatmul.bf16.gmra.mxu0 %v4220
        %v5869 = vpop.f32.mrf.mxu0
        %v5870 = vadd.f32 %v5701, %v5869
        %v5871 = vpop.f32.mrf.mxu0
        %v5872 = vadd.f32 %v5703, %v5871
        %5873 = vmatmul.bf16.gmra.mxu0 %v4225
        %v5874 = vpop.f32.mrf.mxu0
        %v5875 = vadd.f32 %v5706, %v5874
        %v5876 = vpop.f32.mrf.mxu0
        %v5877 = vadd.f32 %v5708, %v5876
        %5878 = vmatmul.bf16.gmra.mxu0 %v4230
        %v5879 = vpop.f32.mrf.mxu0
        %v5880 = vadd.f32 %v5711, %v5879
        %v5881 = vpop.f32.mrf.mxu0
        %v5882 = vadd.f32 %v5713, %v5881
        %5883 = vmatmul.bf16.gmra.mxu0 %v4235
        %v5884 = vpop.f32.mrf.mxu0
        %v5885 = vadd.f32 %v5716, %v5884
        %v5886 = vpop.f32.mrf.mxu0
        %v5887 = vadd.f32 %v5718, %v5886
        %5888 = vmatmul.bf16.gmra.mxu0 %v4240
        %v5889 = vpop.f32.mrf.mxu0
        %v5890 = vadd.f32 %v5721, %v5889
        %v5891 = vpop.f32.mrf.mxu0
        %v5892 = vadd.f32 %v5723, %v5891
        %5893 = vmatmul.bf16.gmra.mxu0 %v4245
        %v5894 = vpop.f32.mrf.mxu0
        %v5895 = vadd.f32 %v5726, %v5894
        %v5896 = vpop.f32.mrf.mxu0
        %v5897 = vadd.f32 %v5728, %v5896
        %5898 = vmatmul.bf16.gmra.mxu0 %v4250
        %v5899 = vpop.f32.mrf.mxu0
        %v5900 = vadd.f32 %v5731, %v5899
        %v5901 = vpop.f32.mrf.mxu0
        %v5902 = vadd.f32 %v5733, %v5901
        %5903 = vmatmul.bf16.gmra.mxu0 %v4255
        %v5904 = vpop.f32.mrf.mxu0
        %v5905 = vadd.f32 %v5736, %v5904
        %v5906 = vpop.f32.mrf.mxu0
        %v5907 = vadd.f32 %v5738, %v5906
        %5908 = vmatmul.bf16.gmra.mxu0 %v4260
        %v5909 = vpop.f32.mrf.mxu0
        %v5910 = vadd.f32 %v5741, %v5909
        %v5911 = vpop.f32.mrf.mxu0
        %v5912 = vadd.f32 %v5743, %v5911
        %5913 = vmatmul.bf16.gmra.mxu0 %v4265
        %v5914 = vpop.f32.mrf.mxu0
        %v5915 = vadd.f32 %v5746, %v5914
        %v5916 = vpop.f32.mrf.mxu0
        %v5917 = vadd.f32 %v5748, %v5916
        %5918 = vmatmul.bf16.gmra.mxu0 %v4270
        %v5919 = vpop.f32.mrf.mxu0
        %v5920 = vadd.f32 %v5751, %v5919
        %v5921 = vpop.f32.mrf.mxu0
        %v5922 = vadd.f32 %v5753, %v5921
        %5923 = vmatmul.bf16.gmra.mxu0 %v4275
        %v5924 = vpop.f32.mrf.mxu0
        %v5925 = vadd.f32 %v5756, %v5924
        %v5926 = vpop.f32.mrf.mxu0
        %v5927 = vadd.f32 %v5758, %v5926
        %5928 = vmatmul.bf16.gmra.mxu0 %v4280
        %v5929 = vpop.f32.mrf.mxu0
        %v5930 = vadd.f32 %v5761, %v5929
        %v5931 = vpop.f32.mrf.mxu0
        %v5932 = vadd.f32 %v5763, %v5931
        %5933 = vmatmul.bf16.gmra.mxu0 %v4285
        %v5934 = vpop.f32.mrf.mxu0
        %v5935 = vadd.f32 %v5766, %v5934
        %v5936 = vpop.f32.mrf.mxu0
        %v5937 = vadd.f32 %v5768, %v5936
        %5938 = vmatmul.bf16.gmra.mxu0 %v4290
        %v5939 = vpop.f32.mrf.mxu0
        %v5940 = vadd.f32 %v5771, %v5939
        %v5941 = vpop.f32.mrf.mxu0
        %v5942 = vadd.f32 %v5773, %v5941
        %5943 = vmatmul.bf16.gmra.mxu0 %v4295
        %v5944 = vpop.f32.mrf.mxu0
        %v5945 = vadd.f32 %v5776, %v5944
        %v5946 = vpop.f32.mrf.mxu0
        %v5947 = vadd.f32 %v5778, %v5946
        %5948 = vmatmul.bf16.gmra.mxu0 %v4300
        %v5949 = vpop.f32.mrf.mxu0
        %v5950 = vadd.f32 %v5781, %v5949
        %v5951 = vpop.f32.mrf.mxu0
        %v5952 = vadd.f32 %v5783, %v5951
        %5953 = vmatmul.bf16.gmra.mxu0 %v4305
        %v5954 = vpop.f32.mrf.mxu0
        %v5955 = vadd.f32 %v5786, %v5954
        %v5956 = vpop.f32.mrf.mxu0
        %v5957 = vadd.f32 %v5788, %v5956
        %5958 = vmatmul.bf16.gmra.mxu0 %v4310
        %v5959 = vpop.f32.mrf.mxu0
        %v5960 = vadd.f32 %v5791, %v5959
        %v5961 = vpop.f32.mrf.mxu0
        %v5962 = vadd.f32 %v5793, %v5961
        %5963 = vmatmul.bf16.gmra.mxu0 %v4315
        %v5964 = vpop.f32.mrf.mxu0
        %v5965 = vadd.f32 %v5796, %v5964
        %v5966 = vpop.f32.mrf.mxu0
        %v5967 = vadd.f32 %v5798, %v5966
        %5968 = vmatmul.bf16.gmra.mxu0 %v4320
        %v5969 = vpop.f32.mrf.mxu0
        %v5970 = vadd.f32 %v5801, %v5969
        %v5971 = vpop.f32.mrf.mxu0
        %v5972 = vadd.f32 %v5803, %v5971
        %5973 = vmatmul.bf16.gmra.mxu0 %v4325
        %v5974 = vpop.f32.mrf.mxu0
        %v5975 = vadd.f32 %v5806, %v5974
        %v5976 = vpop.f32.mrf.mxu0
        %v5977 = vadd.f32 %v5808, %v5976
        %5978 = vmatmul.bf16.gmra.mxu0 %v4330
        %v5979 = vpop.f32.mrf.mxu0
        %v5980 = vadd.f32 %v5811, %v5979
        %v5981 = vpop.f32.mrf.mxu0
        %v5982 = vadd.f32 %v5813, %v5981
        %5983 = vdwg.mxu0
        %5984 = vmatpush.bf16.msra.mxu0 %v4921
        %5985 = vmatpush.bf16.msra.mxu0 %v4918
        %5986 = vmatpush.bf16.msra.mxu0 %v4915
        %5987 = vmatpush.bf16.msra.mxu0 %v4912
        %5988 = vmatpush.bf16.msra.mxu0 %v4909
        %5989 = vmatpush.bf16.msra.mxu0 %v4906
        %5990 = vmatpush.bf16.msra.mxu0 %v4903
        %5991 = vmatpush.bf16.msra.mxu0 %v4900
        %5992 = vmatmul.bf16.gmra.mxu0 %v4171
        %v5993 = vpop.f32.mrf.mxu0
        %v5994 = vadd.f32 %v4494, %v5993
        %v5995 = vpop.f32.mrf.mxu0
        %v5996 = vadd.f32 %v4494, %v5995
        %5997 = vmatmul.bf16.gmra.mxu0 %v4176
        %v5998 = vpop.f32.mrf.mxu0
        %v5999 = vadd.f32 %v4494, %v5998
        %v6000 = vpop.f32.mrf.mxu0
        %v6001 = vadd.f32 %v4494, %v6000
        %6002 = vmatmul.bf16.gmra.mxu0 %v4181
        %v6003 = vpop.f32.mrf.mxu0
        %v6004 = vadd.f32 %v4494, %v6003
        %v6005 = vpop.f32.mrf.mxu0
        %v6006 = vadd.f32 %v4494, %v6005
        %6007 = vmatmul.bf16.gmra.mxu0 %v4186
        %v6008 = vpop.f32.mrf.mxu0
        %v6009 = vadd.f32 %v4494, %v6008
        %v6010 = vpop.f32.mrf.mxu0
        %v6011 = vadd.f32 %v4494, %v6010
        %6012 = vmatmul.bf16.gmra.mxu0 %v4191
        %v6013 = vpop.f32.mrf.mxu0
        %v6014 = vadd.f32 %v4494, %v6013
        %v6015 = vpop.f32.mrf.mxu0
        %v6016 = vadd.f32 %v4494, %v6015
        %6017 = vmatmul.bf16.gmra.mxu0 %v4196
        %v6018 = vpop.f32.mrf.mxu0
        %v6019 = vadd.f32 %v4494, %v6018
        %v6020 = vpop.f32.mrf.mxu0
        %v6021 = vadd.f32 %v4494, %v6020
        %6022 = vmatmul.bf16.gmra.mxu0 %v4201
        %v6023 = vpop.f32.mrf.mxu0
        %v6024 = vadd.f32 %v4494, %v6023
        %v6025 = vpop.f32.mrf.mxu0
        %v6026 = vadd.f32 %v4494, %v6025
        %6027 = vmatmul.bf16.gmra.mxu0 %v4206
        %v6028 = vpop.f32.mrf.mxu0
        %v6029 = vadd.f32 %v4494, %v6028
        %v6030 = vpop.f32.mrf.mxu0
        %v6031 = vadd.f32 %v4494, %v6030
        %6032 = vmatmul.bf16.gmra.mxu0 %v4211
        %v6033 = vpop.f32.mrf.mxu0
        %v6034 = vadd.f32 %v4494, %v6033
        %v6035 = vpop.f32.mrf.mxu0
        %v6036 = vadd.f32 %v4494, %v6035
        %6037 = vmatmul.bf16.gmra.mxu0 %v4216
        %v6038 = vpop.f32.mrf.mxu0
        %v6039 = vadd.f32 %v4494, %v6038
        %v6040 = vpop.f32.mrf.mxu0
        %v6041 = vadd.f32 %v4494, %v6040
        %6042 = vmatmul.bf16.gmra.mxu0 %v4221
        %v6043 = vpop.f32.mrf.mxu0
        %v6044 = vadd.f32 %v4494, %v6043
        %v6045 = vpop.f32.mrf.mxu0
        %v6046 = vadd.f32 %v4494, %v6045
        %6047 = vmatmul.bf16.gmra.mxu0 %v4226
        %v6048 = vpop.f32.mrf.mxu0
        %v6049 = vadd.f32 %v4494, %v6048
        %v6050 = vpop.f32.mrf.mxu0
        %v6051 = vadd.f32 %v4494, %v6050
        %6052 = vmatmul.bf16.gmra.mxu0 %v4231
        %v6053 = vpop.f32.mrf.mxu0
        %v6054 = vadd.f32 %v4494, %v6053
        %v6055 = vpop.f32.mrf.mxu0
        %v6056 = vadd.f32 %v4494, %v6055
        %6057 = vmatmul.bf16.gmra.mxu0 %v4236
        %v6058 = vpop.f32.mrf.mxu0
        %v6059 = vadd.f32 %v4494, %v6058
        %v6060 = vpop.f32.mrf.mxu0
        %v6061 = vadd.f32 %v4494, %v6060
        %6062 = vmatmul.bf16.gmra.mxu0 %v4241
        %v6063 = vpop.f32.mrf.mxu0
        %v6064 = vadd.f32 %v4494, %v6063
        %v6065 = vpop.f32.mrf.mxu0
        %v6066 = vadd.f32 %v4494, %v6065
        %6067 = vmatmul.bf16.gmra.mxu0 %v4246
        %v6068 = vpop.f32.mrf.mxu0
        %v6069 = vadd.f32 %v4494, %v6068
        %v6070 = vpop.f32.mrf.mxu0
        %v6071 = vadd.f32 %v4494, %v6070
        %6072 = vmatmul.bf16.gmra.mxu0 %v4251
        %v6073 = vpop.f32.mrf.mxu0
        %v6074 = vadd.f32 %v4494, %v6073
        %v6075 = vpop.f32.mrf.mxu0
        %v6076 = vadd.f32 %v4494, %v6075
        %6077 = vmatmul.bf16.gmra.mxu0 %v4256
        %v6078 = vpop.f32.mrf.mxu0
        %v6079 = vadd.f32 %v4494, %v6078
        %v6080 = vpop.f32.mrf.mxu0
        %v6081 = vadd.f32 %v4494, %v6080
        %6082 = vmatmul.bf16.gmra.mxu0 %v4261
        %v6083 = vpop.f32.mrf.mxu0
        %v6084 = vadd.f32 %v4494, %v6083
        %v6085 = vpop.f32.mrf.mxu0
        %v6086 = vadd.f32 %v4494, %v6085
        %6087 = vmatmul.bf16.gmra.mxu0 %v4266
        %v6088 = vpop.f32.mrf.mxu0
        %v6089 = vadd.f32 %v4494, %v6088
        %v6090 = vpop.f32.mrf.mxu0
        %v6091 = vadd.f32 %v4494, %v6090
        %6092 = vmatmul.bf16.gmra.mxu0 %v4271
        %v6093 = vpop.f32.mrf.mxu0
        %v6094 = vadd.f32 %v4494, %v6093
        %v6095 = vpop.f32.mrf.mxu0
        %v6096 = vadd.f32 %v4494, %v6095
        %6097 = vmatmul.bf16.gmra.mxu0 %v4276
        %v6098 = vpop.f32.mrf.mxu0
        %v6099 = vadd.f32 %v4494, %v6098
        %v6100 = vpop.f32.mrf.mxu0
        %v6101 = vadd.f32 %v4494, %v6100
        %6102 = vmatmul.bf16.gmra.mxu0 %v4281
        %v6103 = vpop.f32.mrf.mxu0
        %v6104 = vadd.f32 %v4494, %v6103
        %v6105 = vpop.f32.mrf.mxu0
        %v6106 = vadd.f32 %v4494, %v6105
        %6107 = vmatmul.bf16.gmra.mxu0 %v4286
        %v6108 = vpop.f32.mrf.mxu0
        %v6109 = vadd.f32 %v4494, %v6108
        %v6110 = vpop.f32.mrf.mxu0
        %v6111 = vadd.f32 %v4494, %v6110
        %6112 = vmatmul.bf16.gmra.mxu0 %v4291
        %v6113 = vpop.f32.mrf.mxu0
        %v6114 = vadd.f32 %v4494, %v6113
        %v6115 = vpop.f32.mrf.mxu0
        %v6116 = vadd.f32 %v4494, %v6115
        %6117 = vmatmul.bf16.gmra.mxu0 %v4296
        %v6118 = vpop.f32.mrf.mxu0
        %v6119 = vadd.f32 %v4494, %v6118
        %v6120 = vpop.f32.mrf.mxu0
        %v6121 = vadd.f32 %v4494, %v6120
        %6122 = vmatmul.bf16.gmra.mxu0 %v4301
        %v6123 = vpop.f32.mrf.mxu0
        %v6124 = vadd.f32 %v4494, %v6123
        %v6125 = vpop.f32.mrf.mxu0
        %v6126 = vadd.f32 %v4494, %v6125
        %6127 = vmatmul.bf16.gmra.mxu0 %v4306
        %v6128 = vpop.f32.mrf.mxu0
        %v6129 = vadd.f32 %v4494, %v6128
        %v6130 = vpop.f32.mrf.mxu0
        %v6131 = vadd.f32 %v4494, %v6130
        %6132 = vmatmul.bf16.gmra.mxu0 %v4311
        %v6133 = vpop.f32.mrf.mxu0
        %v6134 = vadd.f32 %v4494, %v6133
        %v6135 = vpop.f32.mrf.mxu0
        %v6136 = vadd.f32 %v4494, %v6135
        %6137 = vmatmul.bf16.gmra.mxu0 %v4316
        %v6138 = vpop.f32.mrf.mxu0
        %v6139 = vadd.f32 %v4494, %v6138
        %v6140 = vpop.f32.mrf.mxu0
        %v6141 = vadd.f32 %v4494, %v6140
        %6142 = vmatmul.bf16.gmra.mxu0 %v4321
        %v6143 = vpop.f32.mrf.mxu0
        %v6144 = vadd.f32 %v4494, %v6143
        %v6145 = vpop.f32.mrf.mxu0
        %v6146 = vadd.f32 %v4494, %v6145
        %6147 = vmatmul.bf16.gmra.mxu0 %v4326
        %v6148 = vpop.f32.mrf.mxu0
        %v6149 = vadd.f32 %v4494, %v6148
        %v6150 = vpop.f32.mrf.mxu0
        %v6151 = vadd.f32 %v4494, %v6150
        %6152 = vdwg.mxu0
        %6153 = vmatpush.bf16.msra.mxu0 %v4945
        %6154 = vmatpush.bf16.msra.mxu0 %v4942
        %6155 = vmatpush.bf16.msra.mxu0 %v4939
        %6156 = vmatpush.bf16.msra.mxu0 %v4936
        %6157 = vmatpush.bf16.msra.mxu0 %v4933
        %6158 = vmatpush.bf16.msra.mxu0 %v4930
        %6159 = vmatpush.bf16.msra.mxu0 %v4927
        %6160 = vmatpush.bf16.msra.mxu0 %v4924
        %6161 = vmatmul.bf16.gmra.mxu0 %v4172
        %v6162 = vpop.f32.mrf.mxu0
        %v6163 = vadd.f32 %v5994, %v6162
        %v6164 = vpop.f32.mrf.mxu0
        %v6165 = vadd.f32 %v5996, %v6164
        %6166 = vmatmul.bf16.gmra.mxu0 %v4177
        %v6167 = vpop.f32.mrf.mxu0
        %v6168 = vadd.f32 %v5999, %v6167
        %v6169 = vpop.f32.mrf.mxu0
        %v6170 = vadd.f32 %v6001, %v6169
        %6171 = vmatmul.bf16.gmra.mxu0 %v4182
        %v6172 = vpop.f32.mrf.mxu0
        %v6173 = vadd.f32 %v6004, %v6172
        %v6174 = vpop.f32.mrf.mxu0
        %v6175 = vadd.f32 %v6006, %v6174
        %6176 = vmatmul.bf16.gmra.mxu0 %v4187
        %v6177 = vpop.f32.mrf.mxu0
        %v6178 = vadd.f32 %v6009, %v6177
        %v6179 = vpop.f32.mrf.mxu0
        %v6180 = vadd.f32 %v6011, %v6179
        %6181 = vmatmul.bf16.gmra.mxu0 %v4192
        %v6182 = vpop.f32.mrf.mxu0
        %v6183 = vadd.f32 %v6014, %v6182
        %v6184 = vpop.f32.mrf.mxu0
        %v6185 = vadd.f32 %v6016, %v6184
        %6186 = vmatmul.bf16.gmra.mxu0 %v4197
        %v6187 = vpop.f32.mrf.mxu0
        %v6188 = vadd.f32 %v6019, %v6187
        %v6189 = vpop.f32.mrf.mxu0
        %v6190 = vadd.f32 %v6021, %v6189
        %6191 = vmatmul.bf16.gmra.mxu0 %v4202
        %v6192 = vpop.f32.mrf.mxu0
        %v6193 = vadd.f32 %v6024, %v6192
        %v6194 = vpop.f32.mrf.mxu0
        %v6195 = vadd.f32 %v6026, %v6194
        %6196 = vmatmul.bf16.gmra.mxu0 %v4207
        %v6197 = vpop.f32.mrf.mxu0
        %v6198 = vadd.f32 %v6029, %v6197
        %v6199 = vpop.f32.mrf.mxu0
        %v6200 = vadd.f32 %v6031, %v6199
        %6201 = vmatmul.bf16.gmra.mxu0 %v4212
        %v6202 = vpop.f32.mrf.mxu0
        %v6203 = vadd.f32 %v6034, %v6202
        %v6204 = vpop.f32.mrf.mxu0
        %v6205 = vadd.f32 %v6036, %v6204
        %6206 = vmatmul.bf16.gmra.mxu0 %v4217
        %v6207 = vpop.f32.mrf.mxu0
        %v6208 = vadd.f32 %v6039, %v6207
        %v6209 = vpop.f32.mrf.mxu0
        %v6210 = vadd.f32 %v6041, %v6209
        %6211 = vmatmul.bf16.gmra.mxu0 %v4222
        %v6212 = vpop.f32.mrf.mxu0
        %v6213 = vadd.f32 %v6044, %v6212
        %v6214 = vpop.f32.mrf.mxu0
        %v6215 = vadd.f32 %v6046, %v6214
        %6216 = vmatmul.bf16.gmra.mxu0 %v4227
        %v6217 = vpop.f32.mrf.mxu0
        %v6218 = vadd.f32 %v6049, %v6217
        %v6219 = vpop.f32.mrf.mxu0
        %v6220 = vadd.f32 %v6051, %v6219
        %6221 = vmatmul.bf16.gmra.mxu0 %v4232
        %v6222 = vpop.f32.mrf.mxu0
        %v6223 = vadd.f32 %v6054, %v6222
        %v6224 = vpop.f32.mrf.mxu0
        %v6225 = vadd.f32 %v6056, %v6224
        %6226 = vmatmul.bf16.gmra.mxu0 %v4237
        %v6227 = vpop.f32.mrf.mxu0
        %v6228 = vadd.f32 %v6059, %v6227
        %v6229 = vpop.f32.mrf.mxu0
        %v6230 = vadd.f32 %v6061, %v6229
        %6231 = vmatmul.bf16.gmra.mxu0 %v4242
        %v6232 = vpop.f32.mrf.mxu0
        %v6233 = vadd.f32 %v6064, %v6232
        %v6234 = vpop.f32.mrf.mxu0
        %v6235 = vadd.f32 %v6066, %v6234
        %6236 = vmatmul.bf16.gmra.mxu0 %v4247
        %v6237 = vpop.f32.mrf.mxu0
        %v6238 = vadd.f32 %v6069, %v6237
        %v6239 = vpop.f32.mrf.mxu0
        %v6240 = vadd.f32 %v6071, %v6239
        %6241 = vmatmul.bf16.gmra.mxu0 %v4252
        %v6242 = vpop.f32.mrf.mxu0
        %v6243 = vadd.f32 %v6074, %v6242
        %v6244 = vpop.f32.mrf.mxu0
        %v6245 = vadd.f32 %v6076, %v6244
        %6246 = vmatmul.bf16.gmra.mxu0 %v4257
        %v6247 = vpop.f32.mrf.mxu0
        %v6248 = vadd.f32 %v6079, %v6247
        %v6249 = vpop.f32.mrf.mxu0
        %v6250 = vadd.f32 %v6081, %v6249
        %6251 = vmatmul.bf16.gmra.mxu0 %v4262
        %v6252 = vpop.f32.mrf.mxu0
        %v6253 = vadd.f32 %v6084, %v6252
        %v6254 = vpop.f32.mrf.mxu0
        %v6255 = vadd.f32 %v6086, %v6254
        %6256 = vmatmul.bf16.gmra.mxu0 %v4267
        %v6257 = vpop.f32.mrf.mxu0
        %v6258 = vadd.f32 %v6089, %v6257
        %v6259 = vpop.f32.mrf.mxu0
        %v6260 = vadd.f32 %v6091, %v6259
        %6261 = vmatmul.bf16.gmra.mxu0 %v4272
        %v6262 = vpop.f32.mrf.mxu0
        %v6263 = vadd.f32 %v6094, %v6262
        %v6264 = vpop.f32.mrf.mxu0
        %v6265 = vadd.f32 %v6096, %v6264
        %6266 = vmatmul.bf16.gmra.mxu0 %v4277
        %v6267 = vpop.f32.mrf.mxu0
        %v6268 = vadd.f32 %v6099, %v6267
        %v6269 = vpop.f32.mrf.mxu0
        %v6270 = vadd.f32 %v6101, %v6269
        %6271 = vmatmul.bf16.gmra.mxu0 %v4282
        %v6272 = vpop.f32.mrf.mxu0
        %v6273 = vadd.f32 %v6104, %v6272
        %v6274 = vpop.f32.mrf.mxu0
        %v6275 = vadd.f32 %v6106, %v6274
        %6276 = vmatmul.bf16.gmra.mxu0 %v4287
        %v6277 = vpop.f32.mrf.mxu0
        %v6278 = vadd.f32 %v6109, %v6277
        %v6279 = vpop.f32.mrf.mxu0
        %v6280 = vadd.f32 %v6111, %v6279
        %6281 = vmatmul.bf16.gmra.mxu0 %v4292
        %v6282 = vpop.f32.mrf.mxu0
        %v6283 = vadd.f32 %v6114, %v6282
        %v6284 = vpop.f32.mrf.mxu0
        %v6285 = vadd.f32 %v6116, %v6284
        %6286 = vmatmul.bf16.gmra.mxu0 %v4297
        %v6287 = vpop.f32.mrf.mxu0
        %v6288 = vadd.f32 %v6119, %v6287
        %v6289 = vpop.f32.mrf.mxu0
        %v6290 = vadd.f32 %v6121, %v6289
        %6291 = vmatmul.bf16.gmra.mxu0 %v4302
        %v6292 = vpop.f32.mrf.mxu0
        %v6293 = vadd.f32 %v6124, %v6292
        %v6294 = vpop.f32.mrf.mxu0
        %v6295 = vadd.f32 %v6126, %v6294
        %6296 = vmatmul.bf16.gmra.mxu0 %v4307
        %v6297 = vpop.f32.mrf.mxu0
        %v6298 = vadd.f32 %v6129, %v6297
        %v6299 = vpop.f32.mrf.mxu0
        %v6300 = vadd.f32 %v6131, %v6299
        %6301 = vmatmul.bf16.gmra.mxu0 %v4312
        %v6302 = vpop.f32.mrf.mxu0
        %v6303 = vadd.f32 %v6134, %v6302
        %v6304 = vpop.f32.mrf.mxu0
        %v6305 = vadd.f32 %v6136, %v6304
        %6306 = vmatmul.bf16.gmra.mxu0 %v4317
        %v6307 = vpop.f32.mrf.mxu0
        %v6308 = vadd.f32 %v6139, %v6307
        %v6309 = vpop.f32.mrf.mxu0
        %v6310 = vadd.f32 %v6141, %v6309
        %6311 = vmatmul.bf16.gmra.mxu0 %v4322
        %v6312 = vpop.f32.mrf.mxu0
        %v6313 = vadd.f32 %v6144, %v6312
        %v6314 = vpop.f32.mrf.mxu0
        %v6315 = vadd.f32 %v6146, %v6314
        %6316 = vmatmul.bf16.gmra.mxu0 %v4327
        %v6317 = vpop.f32.mrf.mxu0
        %v6318 = vadd.f32 %v6149, %v6317
        %v6319 = vpop.f32.mrf.mxu0
        %v6320 = vadd.f32 %v6151, %v6319
        %6321 = vdwg.mxu0
        %6322 = vmatpush.bf16.msra.mxu0 %v4969
        %6323 = vmatpush.bf16.msra.mxu0 %v4966
        %6324 = vmatpush.bf16.msra.mxu0 %v4963
        %6325 = vmatpush.bf16.msra.mxu0 %v4960
        %6326 = vmatpush.bf16.msra.mxu0 %v4957
        %6327 = vmatpush.bf16.msra.mxu0 %v4954
        %6328 = vmatpush.bf16.msra.mxu0 %v4951
        %6329 = vmatpush.bf16.msra.mxu0 %v4948
        %6330 = vmatmul.bf16.gmra.mxu0 %v4173
        %v6331 = vpop.f32.mrf.mxu0
        %v6332 = vadd.f32 %v6163, %v6331
        %v6333 = vpop.f32.mrf.mxu0
        %v6334 = vadd.f32 %v6165, %v6333
        %6335 = vmatmul.bf16.gmra.mxu0 %v4178
        %v6336 = vpop.f32.mrf.mxu0
        %v6337 = vadd.f32 %v6168, %v6336
        %v6338 = vpop.f32.mrf.mxu0
        %v6339 = vadd.f32 %v6170, %v6338
        %6340 = vmatmul.bf16.gmra.mxu0 %v4183
        %v6341 = vpop.f32.mrf.mxu0
        %v6342 = vadd.f32 %v6173, %v6341
        %v6343 = vpop.f32.mrf.mxu0
        %v6344 = vadd.f32 %v6175, %v6343
        %6345 = vmatmul.bf16.gmra.mxu0 %v4188
        %v6346 = vpop.f32.mrf.mxu0
        %v6347 = vadd.f32 %v6178, %v6346
        %v6348 = vpop.f32.mrf.mxu0
        %v6349 = vadd.f32 %v6180, %v6348
        %6350 = vmatmul.bf16.gmra.mxu0 %v4193
        %v6351 = vpop.f32.mrf.mxu0
        %v6352 = vadd.f32 %v6183, %v6351
        %v6353 = vpop.f32.mrf.mxu0
        %v6354 = vadd.f32 %v6185, %v6353
        %6355 = vmatmul.bf16.gmra.mxu0 %v4198
        %v6356 = vpop.f32.mrf.mxu0
        %v6357 = vadd.f32 %v6188, %v6356
        %v6358 = vpop.f32.mrf.mxu0
        %v6359 = vadd.f32 %v6190, %v6358
        %6360 = vmatmul.bf16.gmra.mxu0 %v4203
        %v6361 = vpop.f32.mrf.mxu0
        %v6362 = vadd.f32 %v6193, %v6361
        %v6363 = vpop.f32.mrf.mxu0
        %v6364 = vadd.f32 %v6195, %v6363
        %6365 = vmatmul.bf16.gmra.mxu0 %v4208
        %v6366 = vpop.f32.mrf.mxu0
        %v6367 = vadd.f32 %v6198, %v6366
        %v6368 = vpop.f32.mrf.mxu0
        %v6369 = vadd.f32 %v6200, %v6368
        %6370 = vmatmul.bf16.gmra.mxu0 %v4213
        %v6371 = vpop.f32.mrf.mxu0
        %v6372 = vadd.f32 %v6203, %v6371
        %v6373 = vpop.f32.mrf.mxu0
        %v6374 = vadd.f32 %v6205, %v6373
        %6375 = vmatmul.bf16.gmra.mxu0 %v4218
        %v6376 = vpop.f32.mrf.mxu0
        %v6377 = vadd.f32 %v6208, %v6376
        %v6378 = vpop.f32.mrf.mxu0
        %v6379 = vadd.f32 %v6210, %v6378
        %6380 = vmatmul.bf16.gmra.mxu0 %v4223
        %v6381 = vpop.f32.mrf.mxu0
        %v6382 = vadd.f32 %v6213, %v6381
        %v6383 = vpop.f32.mrf.mxu0
        %v6384 = vadd.f32 %v6215, %v6383
        %6385 = vmatmul.bf16.gmra.mxu0 %v4228
        %v6386 = vpop.f32.mrf.mxu0
        %v6387 = vadd.f32 %v6218, %v6386
        %v6388 = vpop.f32.mrf.mxu0
        %v6389 = vadd.f32 %v6220, %v6388
        %6390 = vmatmul.bf16.gmra.mxu0 %v4233
        %v6391 = vpop.f32.mrf.mxu0
        %v6392 = vadd.f32 %v6223, %v6391
        %v6393 = vpop.f32.mrf.mxu0
        %v6394 = vadd.f32 %v6225, %v6393
        %6395 = vmatmul.bf16.gmra.mxu0 %v4238
        %v6396 = vpop.f32.mrf.mxu0
        %v6397 = vadd.f32 %v6228, %v6396
        %v6398 = vpop.f32.mrf.mxu0
        %v6399 = vadd.f32 %v6230, %v6398
        %6400 = vmatmul.bf16.gmra.mxu0 %v4243
        %v6401 = vpop.f32.mrf.mxu0
        %v6402 = vadd.f32 %v6233, %v6401
        %v6403 = vpop.f32.mrf.mxu0
        %v6404 = vadd.f32 %v6235, %v6403
        %6405 = vmatmul.bf16.gmra.mxu0 %v4248
        %v6406 = vpop.f32.mrf.mxu0
        %v6407 = vadd.f32 %v6238, %v6406
        %v6408 = vpop.f32.mrf.mxu0
        %v6409 = vadd.f32 %v6240, %v6408
        %6410 = vmatmul.bf16.gmra.mxu0 %v4253
        %v6411 = vpop.f32.mrf.mxu0
        %v6412 = vadd.f32 %v6243, %v6411
        %v6413 = vpop.f32.mrf.mxu0
        %v6414 = vadd.f32 %v6245, %v6413
        %6415 = vmatmul.bf16.gmra.mxu0 %v4258
        %v6416 = vpop.f32.mrf.mxu0
        %v6417 = vadd.f32 %v6248, %v6416
        %v6418 = vpop.f32.mrf.mxu0
        %v6419 = vadd.f32 %v6250, %v6418
        %6420 = vmatmul.bf16.gmra.mxu0 %v4263
        %v6421 = vpop.f32.mrf.mxu0
        %v6422 = vadd.f32 %v6253, %v6421
        %v6423 = vpop.f32.mrf.mxu0
        %v6424 = vadd.f32 %v6255, %v6423
        %6425 = vmatmul.bf16.gmra.mxu0 %v4268
        %v6426 = vpop.f32.mrf.mxu0
        %v6427 = vadd.f32 %v6258, %v6426
        %v6428 = vpop.f32.mrf.mxu0
        %v6429 = vadd.f32 %v6260, %v6428
        %6430 = vmatmul.bf16.gmra.mxu0 %v4273
        %v6431 = vpop.f32.mrf.mxu0
        %v6432 = vadd.f32 %v6263, %v6431
        %v6433 = vpop.f32.mrf.mxu0
        %v6434 = vadd.f32 %v6265, %v6433
        %6435 = vmatmul.bf16.gmra.mxu0 %v4278
        %v6436 = vpop.f32.mrf.mxu0
        %v6437 = vadd.f32 %v6268, %v6436
        %v6438 = vpop.f32.mrf.mxu0
        %v6439 = vadd.f32 %v6270, %v6438
        %6440 = vmatmul.bf16.gmra.mxu0 %v4283
        %v6441 = vpop.f32.mrf.mxu0
        %v6442 = vadd.f32 %v6273, %v6441
        %v6443 = vpop.f32.mrf.mxu0
        %v6444 = vadd.f32 %v6275, %v6443
        %6445 = vmatmul.bf16.gmra.mxu0 %v4288
        %v6446 = vpop.f32.mrf.mxu0
        %v6447 = vadd.f32 %v6278, %v6446
        %v6448 = vpop.f32.mrf.mxu0
        %v6449 = vadd.f32 %v6280, %v6448
        %6450 = vmatmul.bf16.gmra.mxu0 %v4293
        %v6451 = vpop.f32.mrf.mxu0
        %v6452 = vadd.f32 %v6283, %v6451
        %v6453 = vpop.f32.mrf.mxu0
        %v6454 = vadd.f32 %v6285, %v6453
        %6455 = vmatmul.bf16.gmra.mxu0 %v4298
        %v6456 = vpop.f32.mrf.mxu0
        %v6457 = vadd.f32 %v6288, %v6456
        %v6458 = vpop.f32.mrf.mxu0
        %v6459 = vadd.f32 %v6290, %v6458
        %6460 = vmatmul.bf16.gmra.mxu0 %v4303
        %v6461 = vpop.f32.mrf.mxu0
        %v6462 = vadd.f32 %v6293, %v6461
        %v6463 = vpop.f32.mrf.mxu0
        %v6464 = vadd.f32 %v6295, %v6463
        %6465 = vmatmul.bf16.gmra.mxu0 %v4308
        %v6466 = vpop.f32.mrf.mxu0
        %v6467 = vadd.f32 %v6298, %v6466
        %v6468 = vpop.f32.mrf.mxu0
        %v6469 = vadd.f32 %v6300, %v6468
        %6470 = vmatmul.bf16.gmra.mxu0 %v4313
        %v6471 = vpop.f32.mrf.mxu0
        %v6472 = vadd.f32 %v6303, %v6471
        %v6473 = vpop.f32.mrf.mxu0
        %v6474 = vadd.f32 %v6305, %v6473
        %6475 = vmatmul.bf16.gmra.mxu0 %v4318
        %v6476 = vpop.f32.mrf.mxu0
        %v6477 = vadd.f32 %v6308, %v6476
        %v6478 = vpop.f32.mrf.mxu0
        %v6479 = vadd.f32 %v6310, %v6478
        %6480 = vmatmul.bf16.gmra.mxu0 %v4323
        %v6481 = vpop.f32.mrf.mxu0
        %v6482 = vadd.f32 %v6313, %v6481
        %v6483 = vpop.f32.mrf.mxu0
        %v6484 = vadd.f32 %v6315, %v6483
        %6485 = vmatmul.bf16.gmra.mxu0 %v4328
        %v6486 = vpop.f32.mrf.mxu0
        %v6487 = vadd.f32 %v6318, %v6486
        %v6488 = vpop.f32.mrf.mxu0
        %v6489 = vadd.f32 %v6320, %v6488
        %6490 = vdwg.mxu0
        %6491 = vmatpush.bf16.msra.mxu0 %v4993
        %6492 = vmatpush.bf16.msra.mxu0 %v4990
        %6493 = vmatpush.bf16.msra.mxu0 %v4987
        %6494 = vmatpush.bf16.msra.mxu0 %v4984
        %6495 = vmatpush.bf16.msra.mxu0 %v4981
        %6496 = vmatpush.bf16.msra.mxu0 %v4978
        %6497 = vmatpush.bf16.msra.mxu0 %v4975
        %6498 = vmatpush.bf16.msra.mxu0 %v4972
        %6499 = vmatmul.bf16.gmra.mxu0 %v4174
        %v6500 = vpop.f32.mrf.mxu0
        %v6501 = vadd.f32 %v6332, %v6500
        %v6502 = vpop.f32.mrf.mxu0
        %v6503 = vadd.f32 %v6334, %v6502
        %6504 = vmatmul.bf16.gmra.mxu0 %v4179
        %v6505 = vpop.f32.mrf.mxu0
        %v6506 = vadd.f32 %v6337, %v6505
        %v6507 = vpop.f32.mrf.mxu0
        %v6508 = vadd.f32 %v6339, %v6507
        %6509 = vmatmul.bf16.gmra.mxu0 %v4184
        %v6510 = vpop.f32.mrf.mxu0
        %v6511 = vadd.f32 %v6342, %v6510
        %v6512 = vpop.f32.mrf.mxu0
        %v6513 = vadd.f32 %v6344, %v6512
        %6514 = vmatmul.bf16.gmra.mxu0 %v4189
        %v6515 = vpop.f32.mrf.mxu0
        %v6516 = vadd.f32 %v6347, %v6515
        %v6517 = vpop.f32.mrf.mxu0
        %v6518 = vadd.f32 %v6349, %v6517
        %6519 = vmatmul.bf16.gmra.mxu0 %v4194
        %v6520 = vpop.f32.mrf.mxu0
        %v6521 = vadd.f32 %v6352, %v6520
        %v6522 = vpop.f32.mrf.mxu0
        %v6523 = vadd.f32 %v6354, %v6522
        %6524 = vmatmul.bf16.gmra.mxu0 %v4199
        %v6525 = vpop.f32.mrf.mxu0
        %v6526 = vadd.f32 %v6357, %v6525
        %v6527 = vpop.f32.mrf.mxu0
        %v6528 = vadd.f32 %v6359, %v6527
        %6529 = vmatmul.bf16.gmra.mxu0 %v4204
        %v6530 = vpop.f32.mrf.mxu0
        %v6531 = vadd.f32 %v6362, %v6530
        %v6532 = vpop.f32.mrf.mxu0
        %v6533 = vadd.f32 %v6364, %v6532
        %6534 = vmatmul.bf16.gmra.mxu0 %v4209
        %v6535 = vpop.f32.mrf.mxu0
        %v6536 = vadd.f32 %v6367, %v6535
        %v6537 = vpop.f32.mrf.mxu0
        %v6538 = vadd.f32 %v6369, %v6537
        %6539 = vmatmul.bf16.gmra.mxu0 %v4214
        %v6540 = vpop.f32.mrf.mxu0
        %v6541 = vadd.f32 %v6372, %v6540
        %v6542 = vpop.f32.mrf.mxu0
        %v6543 = vadd.f32 %v6374, %v6542
        %6544 = vmatmul.bf16.gmra.mxu0 %v4219
        %v6545 = vpop.f32.mrf.mxu0
        %v6546 = vadd.f32 %v6377, %v6545
        %v6547 = vpop.f32.mrf.mxu0
        %v6548 = vadd.f32 %v6379, %v6547
        %6549 = vmatmul.bf16.gmra.mxu0 %v4224
        %v6550 = vpop.f32.mrf.mxu0
        %v6551 = vadd.f32 %v6382, %v6550
        %v6552 = vpop.f32.mrf.mxu0
        %v6553 = vadd.f32 %v6384, %v6552
        %6554 = vmatmul.bf16.gmra.mxu0 %v4229
        %v6555 = vpop.f32.mrf.mxu0
        %v6556 = vadd.f32 %v6387, %v6555
        %v6557 = vpop.f32.mrf.mxu0
        %v6558 = vadd.f32 %v6389, %v6557
        %6559 = vmatmul.bf16.gmra.mxu0 %v4234
        %v6560 = vpop.f32.mrf.mxu0
        %v6561 = vadd.f32 %v6392, %v6560
        %v6562 = vpop.f32.mrf.mxu0
        %v6563 = vadd.f32 %v6394, %v6562
        %6564 = vmatmul.bf16.gmra.mxu0 %v4239
        %v6565 = vpop.f32.mrf.mxu0
        %v6566 = vadd.f32 %v6397, %v6565
        %v6567 = vpop.f32.mrf.mxu0
        %v6568 = vadd.f32 %v6399, %v6567
        %6569 = vmatmul.bf16.gmra.mxu0 %v4244
        %v6570 = vpop.f32.mrf.mxu0
        %v6571 = vadd.f32 %v6402, %v6570
        %v6572 = vpop.f32.mrf.mxu0
        %v6573 = vadd.f32 %v6404, %v6572
        %6574 = vmatmul.bf16.gmra.mxu0 %v4249
        %v6575 = vpop.f32.mrf.mxu0
        %v6576 = vadd.f32 %v6407, %v6575
        %v6577 = vpop.f32.mrf.mxu0
        %v6578 = vadd.f32 %v6409, %v6577
        %6579 = vmatmul.bf16.gmra.mxu0 %v4254
        %v6580 = vpop.f32.mrf.mxu0
        %v6581 = vadd.f32 %v6412, %v6580
        %v6582 = vpop.f32.mrf.mxu0
        %v6583 = vadd.f32 %v6414, %v6582
        %6584 = vmatmul.bf16.gmra.mxu0 %v4259
        %v6585 = vpop.f32.mrf.mxu0
        %v6586 = vadd.f32 %v6417, %v6585
        %v6587 = vpop.f32.mrf.mxu0
        %v6588 = vadd.f32 %v6419, %v6587
        %6589 = vmatmul.bf16.gmra.mxu0 %v4264
        %v6590 = vpop.f32.mrf.mxu0
        %v6591 = vadd.f32 %v6422, %v6590
        %v6592 = vpop.f32.mrf.mxu0
        %v6593 = vadd.f32 %v6424, %v6592
        %6594 = vmatmul.bf16.gmra.mxu0 %v4269
        %v6595 = vpop.f32.mrf.mxu0
        %v6596 = vadd.f32 %v6427, %v6595
        %v6597 = vpop.f32.mrf.mxu0
        %v6598 = vadd.f32 %v6429, %v6597
        %6599 = vmatmul.bf16.gmra.mxu0 %v4274
        %v6600 = vpop.f32.mrf.mxu0
        %v6601 = vadd.f32 %v6432, %v6600
        %v6602 = vpop.f32.mrf.mxu0
        %v6603 = vadd.f32 %v6434, %v6602
        %6604 = vmatmul.bf16.gmra.mxu0 %v4279
        %v6605 = vpop.f32.mrf.mxu0
        %v6606 = vadd.f32 %v6437, %v6605
        %v6607 = vpop.f32.mrf.mxu0
        %v6608 = vadd.f32 %v6439, %v6607
        %6609 = vmatmul.bf16.gmra.mxu0 %v4284
        %v6610 = vpop.f32.mrf.mxu0
        %v6611 = vadd.f32 %v6442, %v6610
        %v6612 = vpop.f32.mrf.mxu0
        %v6613 = vadd.f32 %v6444, %v6612
        %6614 = vmatmul.bf16.gmra.mxu0 %v4289
        %v6615 = vpop.f32.mrf.mxu0
        %v6616 = vadd.f32 %v6447, %v6615
        %v6617 = vpop.f32.mrf.mxu0
        %v6618 = vadd.f32 %v6449, %v6617
        %6619 = vmatmul.bf16.gmra.mxu0 %v4294
        %v6620 = vpop.f32.mrf.mxu0
        %v6621 = vadd.f32 %v6452, %v6620
        %v6622 = vpop.f32.mrf.mxu0
        %v6623 = vadd.f32 %v6454, %v6622
        %6624 = vmatmul.bf16.gmra.mxu0 %v4299
        %v6625 = vpop.f32.mrf.mxu0
        %v6626 = vadd.f32 %v6457, %v6625
        %v6627 = vpop.f32.mrf.mxu0
        %v6628 = vadd.f32 %v6459, %v6627
        %6629 = vmatmul.bf16.gmra.mxu0 %v4304
        %v6630 = vpop.f32.mrf.mxu0
        %v6631 = vadd.f32 %v6462, %v6630
        %v6632 = vpop.f32.mrf.mxu0
        %v6633 = vadd.f32 %v6464, %v6632
        %6634 = vmatmul.bf16.gmra.mxu0 %v4309
        %v6635 = vpop.f32.mrf.mxu0
        %v6636 = vadd.f32 %v6467, %v6635
        %v6637 = vpop.f32.mrf.mxu0
        %v6638 = vadd.f32 %v6469, %v6637
        %6639 = vmatmul.bf16.gmra.mxu0 %v4314
        %v6640 = vpop.f32.mrf.mxu0
        %v6641 = vadd.f32 %v6472, %v6640
        %v6642 = vpop.f32.mrf.mxu0
        %v6643 = vadd.f32 %v6474, %v6642
        %6644 = vmatmul.bf16.gmra.mxu0 %v4319
        %v6645 = vpop.f32.mrf.mxu0
        %v6646 = vadd.f32 %v6477, %v6645
        %v6647 = vpop.f32.mrf.mxu0
        %v6648 = vadd.f32 %v6479, %v6647
        %6649 = vmatmul.bf16.gmra.mxu0 %v4324
        %v6650 = vpop.f32.mrf.mxu0
        %v6651 = vadd.f32 %v6482, %v6650
        %v6652 = vpop.f32.mrf.mxu0
        %v6653 = vadd.f32 %v6484, %v6652
        %6654 = vmatmul.bf16.gmra.mxu0 %v4329
        %v6655 = vpop.f32.mrf.mxu0
        %v6656 = vadd.f32 %v6487, %v6655
        %v6657 = vpop.f32.mrf.mxu0
        %v6658 = vadd.f32 %v6489, %v6657
        %6659 = vdwg.mxu0
        %6660 = vmatpush.bf16.msra.mxu0 %v5017
        %6661 = vmatpush.bf16.msra.mxu0 %v5014
        %6662 = vmatpush.bf16.msra.mxu0 %v5011
        %6663 = vmatpush.bf16.msra.mxu0 %v5008
        %6664 = vmatpush.bf16.msra.mxu0 %v5005
        %6665 = vmatpush.bf16.msra.mxu0 %v5002
        %6666 = vmatpush.bf16.msra.mxu0 %v4999
        %6667 = vmatpush.bf16.msra.mxu0 %v4996
        %6668 = vmatmul.bf16.gmra.mxu0 %v4175
        %v6669 = vpop.f32.mrf.mxu0
        %v6670 = vadd.f32 %v6501, %v6669
        %v6671 = vpop.f32.mrf.mxu0
        %v6672 = vadd.f32 %v6503, %v6671
        %6673 = vmatmul.bf16.gmra.mxu0 %v4180
        %v6674 = vpop.f32.mrf.mxu0
        %v6675 = vadd.f32 %v6506, %v6674
        %v6676 = vpop.f32.mrf.mxu0
        %v6677 = vadd.f32 %v6508, %v6676
        %6678 = vmatmul.bf16.gmra.mxu0 %v4185
        %v6679 = vpop.f32.mrf.mxu0
        %v6680 = vadd.f32 %v6511, %v6679
        %v6681 = vpop.f32.mrf.mxu0
        %v6682 = vadd.f32 %v6513, %v6681
        %6683 = vmatmul.bf16.gmra.mxu0 %v4190
        %v6684 = vpop.f32.mrf.mxu0
        %v6685 = vadd.f32 %v6516, %v6684
        %v6686 = vpop.f32.mrf.mxu0
        %v6687 = vadd.f32 %v6518, %v6686
        %6688 = vmatmul.bf16.gmra.mxu0 %v4195
        %v6689 = vpop.f32.mrf.mxu0
        %v6690 = vadd.f32 %v6521, %v6689
        %v6691 = vpop.f32.mrf.mxu0
        %v6692 = vadd.f32 %v6523, %v6691
        %6693 = vmatmul.bf16.gmra.mxu0 %v4200
        %v6694 = vpop.f32.mrf.mxu0
        %v6695 = vadd.f32 %v6526, %v6694
        %v6696 = vpop.f32.mrf.mxu0
        %v6697 = vadd.f32 %v6528, %v6696
        %6698 = vmatmul.bf16.gmra.mxu0 %v4205
        %v6699 = vpop.f32.mrf.mxu0
        %v6700 = vadd.f32 %v6531, %v6699
        %v6701 = vpop.f32.mrf.mxu0
        %v6702 = vadd.f32 %v6533, %v6701
        %6703 = vmatmul.bf16.gmra.mxu0 %v4210
        %v6704 = vpop.f32.mrf.mxu0
        %v6705 = vadd.f32 %v6536, %v6704
        %v6706 = vpop.f32.mrf.mxu0
        %v6707 = vadd.f32 %v6538, %v6706
        %6708 = vmatmul.bf16.gmra.mxu0 %v4215
        %v6709 = vpop.f32.mrf.mxu0
        %v6710 = vadd.f32 %v6541, %v6709
        %v6711 = vpop.f32.mrf.mxu0
        %v6712 = vadd.f32 %v6543, %v6711
        %6713 = vmatmul.bf16.gmra.mxu0 %v4220
        %v6714 = vpop.f32.mrf.mxu0
        %v6715 = vadd.f32 %v6546, %v6714
        %v6716 = vpop.f32.mrf.mxu0
        %v6717 = vadd.f32 %v6548, %v6716
        %6718 = vmatmul.bf16.gmra.mxu0 %v4225
        %v6719 = vpop.f32.mrf.mxu0
        %v6720 = vadd.f32 %v6551, %v6719
        %v6721 = vpop.f32.mrf.mxu0
        %v6722 = vadd.f32 %v6553, %v6721
        %6723 = vmatmul.bf16.gmra.mxu0 %v4230
        %v6724 = vpop.f32.mrf.mxu0
        %v6725 = vadd.f32 %v6556, %v6724
        %v6726 = vpop.f32.mrf.mxu0
        %v6727 = vadd.f32 %v6558, %v6726
        %6728 = vmatmul.bf16.gmra.mxu0 %v4235
        %v6729 = vpop.f32.mrf.mxu0
        %v6730 = vadd.f32 %v6561, %v6729
        %v6731 = vpop.f32.mrf.mxu0
        %v6732 = vadd.f32 %v6563, %v6731
        %6733 = vmatmul.bf16.gmra.mxu0 %v4240
        %v6734 = vpop.f32.mrf.mxu0
        %v6735 = vadd.f32 %v6566, %v6734
        %v6736 = vpop.f32.mrf.mxu0
        %v6737 = vadd.f32 %v6568, %v6736
        %6738 = vmatmul.bf16.gmra.mxu0 %v4245
        %v6739 = vpop.f32.mrf.mxu0
        %v6740 = vadd.f32 %v6571, %v6739
        %v6741 = vpop.f32.mrf.mxu0
        %v6742 = vadd.f32 %v6573, %v6741
        %6743 = vmatmul.bf16.gmra.mxu0 %v4250
        %v6744 = vpop.f32.mrf.mxu0
        %v6745 = vadd.f32 %v6576, %v6744
        %v6746 = vpop.f32.mrf.mxu0
        %v6747 = vadd.f32 %v6578, %v6746
        %6748 = vmatmul.bf16.gmra.mxu0 %v4255
        %v6749 = vpop.f32.mrf.mxu0
        %v6750 = vadd.f32 %v6581, %v6749
        %v6751 = vpop.f32.mrf.mxu0
        %v6752 = vadd.f32 %v6583, %v6751
        %6753 = vmatmul.bf16.gmra.mxu0 %v4260
        %v6754 = vpop.f32.mrf.mxu0
        %v6755 = vadd.f32 %v6586, %v6754
        %v6756 = vpop.f32.mrf.mxu0
        %v6757 = vadd.f32 %v6588, %v6756
        %6758 = vmatmul.bf16.gmra.mxu0 %v4265
        %v6759 = vpop.f32.mrf.mxu0
        %v6760 = vadd.f32 %v6591, %v6759
        %v6761 = vpop.f32.mrf.mxu0
        %v6762 = vadd.f32 %v6593, %v6761
        %6763 = vmatmul.bf16.gmra.mxu0 %v4270
        %v6764 = vpop.f32.mrf.mxu0
        %v6765 = vadd.f32 %v6596, %v6764
        %v6766 = vpop.f32.mrf.mxu0
        %v6767 = vadd.f32 %v6598, %v6766
        %6768 = vmatmul.bf16.gmra.mxu0 %v4275
        %v6769 = vpop.f32.mrf.mxu0
        %v6770 = vadd.f32 %v6601, %v6769
        %v6771 = vpop.f32.mrf.mxu0
        %v6772 = vadd.f32 %v6603, %v6771
        %6773 = vmatmul.bf16.gmra.mxu0 %v4280
        %v6774 = vpop.f32.mrf.mxu0
        %v6775 = vadd.f32 %v6606, %v6774
        %v6776 = vpop.f32.mrf.mxu0
        %v6777 = vadd.f32 %v6608, %v6776
        %6778 = vmatmul.bf16.gmra.mxu0 %v4285
        %v6779 = vpop.f32.mrf.mxu0
        %v6780 = vadd.f32 %v6611, %v6779
        %v6781 = vpop.f32.mrf.mxu0
        %v6782 = vadd.f32 %v6613, %v6781
        %6783 = vmatmul.bf16.gmra.mxu0 %v4290
        %v6784 = vpop.f32.mrf.mxu0
        %v6785 = vadd.f32 %v6616, %v6784
        %v6786 = vpop.f32.mrf.mxu0
        %v6787 = vadd.f32 %v6618, %v6786
        %6788 = vmatmul.bf16.gmra.mxu0 %v4295
        %v6789 = vpop.f32.mrf.mxu0
        %v6790 = vadd.f32 %v6621, %v6789
        %v6791 = vpop.f32.mrf.mxu0
        %v6792 = vadd.f32 %v6623, %v6791
        %6793 = vmatmul.bf16.gmra.mxu0 %v4300
        %v6794 = vpop.f32.mrf.mxu0
        %v6795 = vadd.f32 %v6626, %v6794
        %v6796 = vpop.f32.mrf.mxu0
        %v6797 = vadd.f32 %v6628, %v6796
        %6798 = vmatmul.bf16.gmra.mxu0 %v4305
        %v6799 = vpop.f32.mrf.mxu0
        %v6800 = vadd.f32 %v6631, %v6799
        %v6801 = vpop.f32.mrf.mxu0
        %v6802 = vadd.f32 %v6633, %v6801
        %6803 = vmatmul.bf16.gmra.mxu0 %v4310
        %v6804 = vpop.f32.mrf.mxu0
        %v6805 = vadd.f32 %v6636, %v6804
        %v6806 = vpop.f32.mrf.mxu0
        %v6807 = vadd.f32 %v6638, %v6806
        %6808 = vmatmul.bf16.gmra.mxu0 %v4315
        %v6809 = vpop.f32.mrf.mxu0
        %v6810 = vadd.f32 %v6641, %v6809
        %v6811 = vpop.f32.mrf.mxu0
        %v6812 = vadd.f32 %v6643, %v6811
        %6813 = vmatmul.bf16.gmra.mxu0 %v4320
        %v6814 = vpop.f32.mrf.mxu0
        %v6815 = vadd.f32 %v6646, %v6814
        %v6816 = vpop.f32.mrf.mxu0
        %v6817 = vadd.f32 %v6648, %v6816
        %6818 = vmatmul.bf16.gmra.mxu0 %v4325
        %v6819 = vpop.f32.mrf.mxu0
        %v6820 = vadd.f32 %v6651, %v6819
        %v6821 = vpop.f32.mrf.mxu0
        %v6822 = vadd.f32 %v6653, %v6821
        %6823 = vmatmul.bf16.gmra.mxu0 %v4330
        %v6824 = vpop.f32.mrf.mxu0
        %v6825 = vadd.f32 %v6656, %v6824
        %v6826 = vpop.f32.mrf.mxu0
        %v6827 = vadd.f32 %v6658, %v6826
        %6828 = vdwg.mxu0
        %6829 = vmatpush.bf16.msra.mxu0 %v4922
        %6830 = vmatpush.bf16.msra.mxu0 %v4919
        %6831 = vmatpush.bf16.msra.mxu0 %v4916
        %6832 = vmatpush.bf16.msra.mxu0 %v4913
        %6833 = vmatpush.bf16.msra.mxu0 %v4910
        %6834 = vmatpush.bf16.msra.mxu0 %v4907
        %6835 = vmatpush.bf16.msra.mxu0 %v4904
        %6836 = vmatpush.bf16.msra.mxu0 %v4901
        %6837 = vmatmul.bf16.gmra.mxu0 %v4171
        %v6838 = vpop.f32.mrf.mxu0
        %v6839 = vadd.f32 %v4495, %v6838
        %v6840 = vpop.f32.mrf.mxu0
        %v6841 = vadd.f32 %v4495, %v6840
        %6842 = vmatmul.bf16.gmra.mxu0 %v4176
        %v6843 = vpop.f32.mrf.mxu0
        %v6844 = vadd.f32 %v4495, %v6843
        %v6845 = vpop.f32.mrf.mxu0
        %v6846 = vadd.f32 %v4495, %v6845
        %6847 = vmatmul.bf16.gmra.mxu0 %v4181
        %v6848 = vpop.f32.mrf.mxu0
        %v6849 = vadd.f32 %v4495, %v6848
        %v6850 = vpop.f32.mrf.mxu0
        %v6851 = vadd.f32 %v4495, %v6850
        %6852 = vmatmul.bf16.gmra.mxu0 %v4186
        %v6853 = vpop.f32.mrf.mxu0
        %v6854 = vadd.f32 %v4495, %v6853
        %v6855 = vpop.f32.mrf.mxu0
        %v6856 = vadd.f32 %v4495, %v6855
        %6857 = vmatmul.bf16.gmra.mxu0 %v4191
        %v6858 = vpop.f32.mrf.mxu0
        %v6859 = vadd.f32 %v4495, %v6858
        %v6860 = vpop.f32.mrf.mxu0
        %v6861 = vadd.f32 %v4495, %v6860
        %6862 = vmatmul.bf16.gmra.mxu0 %v4196
        %v6863 = vpop.f32.mrf.mxu0
        %v6864 = vadd.f32 %v4495, %v6863
        %v6865 = vpop.f32.mrf.mxu0
        %v6866 = vadd.f32 %v4495, %v6865
        %6867 = vmatmul.bf16.gmra.mxu0 %v4201
        %v6868 = vpop.f32.mrf.mxu0
        %v6869 = vadd.f32 %v4495, %v6868
        %v6870 = vpop.f32.mrf.mxu0
        %v6871 = vadd.f32 %v4495, %v6870
        %6872 = vmatmul.bf16.gmra.mxu0 %v4206
        %v6873 = vpop.f32.mrf.mxu0
        %v6874 = vadd.f32 %v4495, %v6873
        %v6875 = vpop.f32.mrf.mxu0
        %v6876 = vadd.f32 %v4495, %v6875
        %6877 = vmatmul.bf16.gmra.mxu0 %v4211
        %v6878 = vpop.f32.mrf.mxu0
        %v6879 = vadd.f32 %v4495, %v6878
        %v6880 = vpop.f32.mrf.mxu0
        %v6881 = vadd.f32 %v4495, %v6880
        %6882 = vmatmul.bf16.gmra.mxu0 %v4216
        %v6883 = vpop.f32.mrf.mxu0
        %v6884 = vadd.f32 %v4495, %v6883
        %v6885 = vpop.f32.mrf.mxu0
        %v6886 = vadd.f32 %v4495, %v6885
        %6887 = vmatmul.bf16.gmra.mxu0 %v4221
        %v6888 = vpop.f32.mrf.mxu0
        %v6889 = vadd.f32 %v4495, %v6888
        %v6890 = vpop.f32.mrf.mxu0
        %v6891 = vadd.f32 %v4495, %v6890
        %6892 = vmatmul.bf16.gmra.mxu0 %v4226
        %v6893 = vpop.f32.mrf.mxu0
        %v6894 = vadd.f32 %v4495, %v6893
        %v6895 = vpop.f32.mrf.mxu0
        %v6896 = vadd.f32 %v4495, %v6895
        %6897 = vmatmul.bf16.gmra.mxu0 %v4231
        %v6898 = vpop.f32.mrf.mxu0
        %v6899 = vadd.f32 %v4495, %v6898
        %v6900 = vpop.f32.mrf.mxu0
        %v6901 = vadd.f32 %v4495, %v6900
        %6902 = vmatmul.bf16.gmra.mxu0 %v4236
        %v6903 = vpop.f32.mrf.mxu0
        %v6904 = vadd.f32 %v4495, %v6903
        %v6905 = vpop.f32.mrf.mxu0
        %v6906 = vadd.f32 %v4495, %v6905
        %6907 = vmatmul.bf16.gmra.mxu0 %v4241
        %v6908 = vpop.f32.mrf.mxu0
        %v6909 = vadd.f32 %v4495, %v6908
        %v6910 = vpop.f32.mrf.mxu0
        %v6911 = vadd.f32 %v4495, %v6910
        %6912 = vmatmul.bf16.gmra.mxu0 %v4246
        %v6913 = vpop.f32.mrf.mxu0
        %v6914 = vadd.f32 %v4495, %v6913
        %v6915 = vpop.f32.mrf.mxu0
        %v6916 = vadd.f32 %v4495, %v6915
        %6917 = vmatmul.bf16.gmra.mxu0 %v4251
        %v6918 = vpop.f32.mrf.mxu0
        %v6919 = vadd.f32 %v4495, %v6918
        %v6920 = vpop.f32.mrf.mxu0
        %v6921 = vadd.f32 %v4495, %v6920
        %6922 = vmatmul.bf16.gmra.mxu0 %v4256
        %v6923 = vpop.f32.mrf.mxu0
        %v6924 = vadd.f32 %v4495, %v6923
        %v6925 = vpop.f32.mrf.mxu0
        %v6926 = vadd.f32 %v4495, %v6925
        %6927 = vmatmul.bf16.gmra.mxu0 %v4261
        %v6928 = vpop.f32.mrf.mxu0
        %v6929 = vadd.f32 %v4495, %v6928
        %v6930 = vpop.f32.mrf.mxu0
        %v6931 = vadd.f32 %v4495, %v6930
        %6932 = vmatmul.bf16.gmra.mxu0 %v4266
        %v6933 = vpop.f32.mrf.mxu0
        %v6934 = vadd.f32 %v4495, %v6933
        %v6935 = vpop.f32.mrf.mxu0
        %v6936 = vadd.f32 %v4495, %v6935
        %6937 = vmatmul.bf16.gmra.mxu0 %v4271
        %v6938 = vpop.f32.mrf.mxu0
        %v6939 = vadd.f32 %v4495, %v6938
        %v6940 = vpop.f32.mrf.mxu0
        %v6941 = vadd.f32 %v4495, %v6940
        %6942 = vmatmul.bf16.gmra.mxu0 %v4276
        %v6943 = vpop.f32.mrf.mxu0
        %v6944 = vadd.f32 %v4495, %v6943
        %v6945 = vpop.f32.mrf.mxu0
        %v6946 = vadd.f32 %v4495, %v6945
        %6947 = vmatmul.bf16.gmra.mxu0 %v4281
        %v6948 = vpop.f32.mrf.mxu0
        %v6949 = vadd.f32 %v4495, %v6948
        %v6950 = vpop.f32.mrf.mxu0
        %v6951 = vadd.f32 %v4495, %v6950
        %6952 = vmatmul.bf16.gmra.mxu0 %v4286
        %v6953 = vpop.f32.mrf.mxu0
        %v6954 = vadd.f32 %v4495, %v6953
        %v6955 = vpop.f32.mrf.mxu0
        %v6956 = vadd.f32 %v4495, %v6955
        %6957 = vmatmul.bf16.gmra.mxu0 %v4291
        %v6958 = vpop.f32.mrf.mxu0
        %v6959 = vadd.f32 %v4495, %v6958
        %v6960 = vpop.f32.mrf.mxu0
        %v6961 = vadd.f32 %v4495, %v6960
        %6962 = vmatmul.bf16.gmra.mxu0 %v4296
        %v6963 = vpop.f32.mrf.mxu0
        %v6964 = vadd.f32 %v4495, %v6963
        %v6965 = vpop.f32.mrf.mxu0
        %v6966 = vadd.f32 %v4495, %v6965
        %6967 = vmatmul.bf16.gmra.mxu0 %v4301
        %v6968 = vpop.f32.mrf.mxu0
        %v6969 = vadd.f32 %v4495, %v6968
        %v6970 = vpop.f32.mrf.mxu0
        %v6971 = vadd.f32 %v4495, %v6970
        %6972 = vmatmul.bf16.gmra.mxu0 %v4306
        %v6973 = vpop.f32.mrf.mxu0
        %v6974 = vadd.f32 %v4495, %v6973
        %v6975 = vpop.f32.mrf.mxu0
        %v6976 = vadd.f32 %v4495, %v6975
        %6977 = vmatmul.bf16.gmra.mxu0 %v4311
        %v6978 = vpop.f32.mrf.mxu0
        %v6979 = vadd.f32 %v4495, %v6978
        %v6980 = vpop.f32.mrf.mxu0
        %v6981 = vadd.f32 %v4495, %v6980
        %6982 = vmatmul.bf16.gmra.mxu0 %v4316
        %v6983 = vpop.f32.mrf.mxu0
        %v6984 = vadd.f32 %v4495, %v6983
        %v6985 = vpop.f32.mrf.mxu0
        %v6986 = vadd.f32 %v4495, %v6985
        %6987 = vmatmul.bf16.gmra.mxu0 %v4321
        %v6988 = vpop.f32.mrf.mxu0
        %v6989 = vadd.f32 %v4495, %v6988
        %v6990 = vpop.f32.mrf.mxu0
        %v6991 = vadd.f32 %v4495, %v6990
        %6992 = vmatmul.bf16.gmra.mxu0 %v4326
        %v6993 = vpop.f32.mrf.mxu0
        %v6994 = vadd.f32 %v4495, %v6993
        %v6995 = vpop.f32.mrf.mxu0
        %v6996 = vadd.f32 %v4495, %v6995
        %6997 = vdwg.mxu0
        %6998 = vmatpush.bf16.msra.mxu0 %v4946
        %6999 = vmatpush.bf16.msra.mxu0 %v4943
        %7000 = vmatpush.bf16.msra.mxu0 %v4940
        %7001 = vmatpush.bf16.msra.mxu0 %v4937
        %7002 = vmatpush.bf16.msra.mxu0 %v4934
        %7003 = vmatpush.bf16.msra.mxu0 %v4931
        %7004 = vmatpush.bf16.msra.mxu0 %v4928
        %7005 = vmatpush.bf16.msra.mxu0 %v4925
        %7006 = vmatmul.bf16.gmra.mxu0 %v4172
        %v7007 = vpop.f32.mrf.mxu0
        %v7008 = vadd.f32 %v6839, %v7007
        %v7009 = vpop.f32.mrf.mxu0
        %v7010 = vadd.f32 %v6841, %v7009
        %7011 = vmatmul.bf16.gmra.mxu0 %v4177
        %v7012 = vpop.f32.mrf.mxu0
        %v7013 = vadd.f32 %v6844, %v7012
        %v7014 = vpop.f32.mrf.mxu0
        %v7015 = vadd.f32 %v6846, %v7014
        %7016 = vmatmul.bf16.gmra.mxu0 %v4182
        %v7017 = vpop.f32.mrf.mxu0
        %v7018 = vadd.f32 %v6849, %v7017
        %v7019 = vpop.f32.mrf.mxu0
        %v7020 = vadd.f32 %v6851, %v7019
        %7021 = vmatmul.bf16.gmra.mxu0 %v4187
        %v7022 = vpop.f32.mrf.mxu0
        %v7023 = vadd.f32 %v6854, %v7022
        %v7024 = vpop.f32.mrf.mxu0
        %v7025 = vadd.f32 %v6856, %v7024
        %7026 = vmatmul.bf16.gmra.mxu0 %v4192
        %v7027 = vpop.f32.mrf.mxu0
        %v7028 = vadd.f32 %v6859, %v7027
        %v7029 = vpop.f32.mrf.mxu0
        %v7030 = vadd.f32 %v6861, %v7029
        %7031 = vmatmul.bf16.gmra.mxu0 %v4197
        %v7032 = vpop.f32.mrf.mxu0
        %v7033 = vadd.f32 %v6864, %v7032
        %v7034 = vpop.f32.mrf.mxu0
        %v7035 = vadd.f32 %v6866, %v7034
        %7036 = vmatmul.bf16.gmra.mxu0 %v4202
        %v7037 = vpop.f32.mrf.mxu0
        %v7038 = vadd.f32 %v6869, %v7037
        %v7039 = vpop.f32.mrf.mxu0
        %v7040 = vadd.f32 %v6871, %v7039
        %7041 = vmatmul.bf16.gmra.mxu0 %v4207
        %v7042 = vpop.f32.mrf.mxu0
        %v7043 = vadd.f32 %v6874, %v7042
        %v7044 = vpop.f32.mrf.mxu0
        %v7045 = vadd.f32 %v6876, %v7044
        %7046 = vmatmul.bf16.gmra.mxu0 %v4212
        %v7047 = vpop.f32.mrf.mxu0
        %v7048 = vadd.f32 %v6879, %v7047
        %v7049 = vpop.f32.mrf.mxu0
        %v7050 = vadd.f32 %v6881, %v7049
        %7051 = vmatmul.bf16.gmra.mxu0 %v4217
        %v7052 = vpop.f32.mrf.mxu0
        %v7053 = vadd.f32 %v6884, %v7052
        %v7054 = vpop.f32.mrf.mxu0
        %v7055 = vadd.f32 %v6886, %v7054
        %7056 = vmatmul.bf16.gmra.mxu0 %v4222
        %v7057 = vpop.f32.mrf.mxu0
        %v7058 = vadd.f32 %v6889, %v7057
        %v7059 = vpop.f32.mrf.mxu0
        %v7060 = vadd.f32 %v6891, %v7059
        %7061 = vmatmul.bf16.gmra.mxu0 %v4227
        %v7062 = vpop.f32.mrf.mxu0
        %v7063 = vadd.f32 %v6894, %v7062
        %v7064 = vpop.f32.mrf.mxu0
        %v7065 = vadd.f32 %v6896, %v7064
        %7066 = vmatmul.bf16.gmra.mxu0 %v4232
        %v7067 = vpop.f32.mrf.mxu0
        %v7068 = vadd.f32 %v6899, %v7067
        %v7069 = vpop.f32.mrf.mxu0
        %v7070 = vadd.f32 %v6901, %v7069
        %7071 = vmatmul.bf16.gmra.mxu0 %v4237
        %v7072 = vpop.f32.mrf.mxu0
        %v7073 = vadd.f32 %v6904, %v7072
        %v7074 = vpop.f32.mrf.mxu0
        %v7075 = vadd.f32 %v6906, %v7074
        %7076 = vmatmul.bf16.gmra.mxu0 %v4242
        %v7077 = vpop.f32.mrf.mxu0
        %v7078 = vadd.f32 %v6909, %v7077
        %v7079 = vpop.f32.mrf.mxu0
        %v7080 = vadd.f32 %v6911, %v7079
        %7081 = vmatmul.bf16.gmra.mxu0 %v4247
        %v7082 = vpop.f32.mrf.mxu0
        %v7083 = vadd.f32 %v6914, %v7082
        %v7084 = vpop.f32.mrf.mxu0
        %v7085 = vadd.f32 %v6916, %v7084
        %7086 = vmatmul.bf16.gmra.mxu0 %v4252
        %v7087 = vpop.f32.mrf.mxu0
        %v7088 = vadd.f32 %v6919, %v7087
        %v7089 = vpop.f32.mrf.mxu0
        %v7090 = vadd.f32 %v6921, %v7089
        %7091 = vmatmul.bf16.gmra.mxu0 %v4257
        %v7092 = vpop.f32.mrf.mxu0
        %v7093 = vadd.f32 %v6924, %v7092
        %v7094 = vpop.f32.mrf.mxu0
        %v7095 = vadd.f32 %v6926, %v7094
        %7096 = vmatmul.bf16.gmra.mxu0 %v4262
        %v7097 = vpop.f32.mrf.mxu0
        %v7098 = vadd.f32 %v6929, %v7097
        %v7099 = vpop.f32.mrf.mxu0
        %v7100 = vadd.f32 %v6931, %v7099
        %7101 = vmatmul.bf16.gmra.mxu0 %v4267
        %v7102 = vpop.f32.mrf.mxu0
        %v7103 = vadd.f32 %v6934, %v7102
        %v7104 = vpop.f32.mrf.mxu0
        %v7105 = vadd.f32 %v6936, %v7104
        %7106 = vmatmul.bf16.gmra.mxu0 %v4272
        %v7107 = vpop.f32.mrf.mxu0
        %v7108 = vadd.f32 %v6939, %v7107
        %v7109 = vpop.f32.mrf.mxu0
        %v7110 = vadd.f32 %v6941, %v7109
        %7111 = vmatmul.bf16.gmra.mxu0 %v4277
        %v7112 = vpop.f32.mrf.mxu0
        %v7113 = vadd.f32 %v6944, %v7112
        %v7114 = vpop.f32.mrf.mxu0
        %v7115 = vadd.f32 %v6946, %v7114
        %7116 = vmatmul.bf16.gmra.mxu0 %v4282
        %v7117 = vpop.f32.mrf.mxu0
        %v7118 = vadd.f32 %v6949, %v7117
        %v7119 = vpop.f32.mrf.mxu0
        %v7120 = vadd.f32 %v6951, %v7119
        %7121 = vmatmul.bf16.gmra.mxu0 %v4287
        %v7122 = vpop.f32.mrf.mxu0
        %v7123 = vadd.f32 %v6954, %v7122
        %v7124 = vpop.f32.mrf.mxu0
        %v7125 = vadd.f32 %v6956, %v7124
        %7126 = vmatmul.bf16.gmra.mxu0 %v4292
        %v7127 = vpop.f32.mrf.mxu0
        %v7128 = vadd.f32 %v6959, %v7127
        %v7129 = vpop.f32.mrf.mxu0
        %v7130 = vadd.f32 %v6961, %v7129
        %7131 = vmatmul.bf16.gmra.mxu0 %v4297
        %v7132 = vpop.f32.mrf.mxu0
        %v7133 = vadd.f32 %v6964, %v7132
        %v7134 = vpop.f32.mrf.mxu0
        %v7135 = vadd.f32 %v6966, %v7134
        %7136 = vmatmul.bf16.gmra.mxu0 %v4302
        %v7137 = vpop.f32.mrf.mxu0
        %v7138 = vadd.f32 %v6969, %v7137
        %v7139 = vpop.f32.mrf.mxu0
        %v7140 = vadd.f32 %v6971, %v7139
        %7141 = vmatmul.bf16.gmra.mxu0 %v4307
        %v7142 = vpop.f32.mrf.mxu0
        %v7143 = vadd.f32 %v6974, %v7142
        %v7144 = vpop.f32.mrf.mxu0
        %v7145 = vadd.f32 %v6976, %v7144
        %7146 = vmatmul.bf16.gmra.mxu0 %v4312
        %v7147 = vpop.f32.mrf.mxu0
        %v7148 = vadd.f32 %v6979, %v7147
        %v7149 = vpop.f32.mrf.mxu0
        %v7150 = vadd.f32 %v6981, %v7149
        %7151 = vmatmul.bf16.gmra.mxu0 %v4317
        %v7152 = vpop.f32.mrf.mxu0
        %v7153 = vadd.f32 %v6984, %v7152
        %v7154 = vpop.f32.mrf.mxu0
        %v7155 = vadd.f32 %v6986, %v7154
        %7156 = vmatmul.bf16.gmra.mxu0 %v4322
        %v7157 = vpop.f32.mrf.mxu0
        %v7158 = vadd.f32 %v6989, %v7157
        %v7159 = vpop.f32.mrf.mxu0
        %v7160 = vadd.f32 %v6991, %v7159
        %7161 = vmatmul.bf16.gmra.mxu0 %v4327
        %v7162 = vpop.f32.mrf.mxu0
        %v7163 = vadd.f32 %v6994, %v7162
        %v7164 = vpop.f32.mrf.mxu0
        %v7165 = vadd.f32 %v6996, %v7164
        %7166 = vdwg.mxu0
        %7167 = vmatpush.bf16.msra.mxu0 %v4970
        %7168 = vmatpush.bf16.msra.mxu0 %v4967
        %7169 = vmatpush.bf16.msra.mxu0 %v4964
        %7170 = vmatpush.bf16.msra.mxu0 %v4961
        %7171 = vmatpush.bf16.msra.mxu0 %v4958
        %7172 = vmatpush.bf16.msra.mxu0 %v4955
        %7173 = vmatpush.bf16.msra.mxu0 %v4952
        %7174 = vmatpush.bf16.msra.mxu0 %v4949
        %7175 = vmatmul.bf16.gmra.mxu0 %v4173
        %v7176 = vpop.f32.mrf.mxu0
        %v7177 = vadd.f32 %v7008, %v7176
        %v7178 = vpop.f32.mrf.mxu0
        %v7179 = vadd.f32 %v7010, %v7178
        %7180 = vmatmul.bf16.gmra.mxu0 %v4178
        %v7181 = vpop.f32.mrf.mxu0
        %v7182 = vadd.f32 %v7013, %v7181
        %v7183 = vpop.f32.mrf.mxu0
        %v7184 = vadd.f32 %v7015, %v7183
        %7185 = vmatmul.bf16.gmra.mxu0 %v4183
        %v7186 = vpop.f32.mrf.mxu0
        %v7187 = vadd.f32 %v7018, %v7186
        %v7188 = vpop.f32.mrf.mxu0
        %v7189 = vadd.f32 %v7020, %v7188
        %7190 = vmatmul.bf16.gmra.mxu0 %v4188
        %v7191 = vpop.f32.mrf.mxu0
        %v7192 = vadd.f32 %v7023, %v7191
        %v7193 = vpop.f32.mrf.mxu0
        %v7194 = vadd.f32 %v7025, %v7193
        %7195 = vmatmul.bf16.gmra.mxu0 %v4193
        %v7196 = vpop.f32.mrf.mxu0
        %v7197 = vadd.f32 %v7028, %v7196
        %v7198 = vpop.f32.mrf.mxu0
        %v7199 = vadd.f32 %v7030, %v7198
        %7200 = vmatmul.bf16.gmra.mxu0 %v4198
        %v7201 = vpop.f32.mrf.mxu0
        %v7202 = vadd.f32 %v7033, %v7201
        %v7203 = vpop.f32.mrf.mxu0
        %v7204 = vadd.f32 %v7035, %v7203
        %7205 = vmatmul.bf16.gmra.mxu0 %v4203
        %v7206 = vpop.f32.mrf.mxu0
        %v7207 = vadd.f32 %v7038, %v7206
        %v7208 = vpop.f32.mrf.mxu0
        %v7209 = vadd.f32 %v7040, %v7208
        %7210 = vmatmul.bf16.gmra.mxu0 %v4208
        %v7211 = vpop.f32.mrf.mxu0
        %v7212 = vadd.f32 %v7043, %v7211
        %v7213 = vpop.f32.mrf.mxu0
        %v7214 = vadd.f32 %v7045, %v7213
        %7215 = vmatmul.bf16.gmra.mxu0 %v4213
        %v7216 = vpop.f32.mrf.mxu0
        %v7217 = vadd.f32 %v7048, %v7216
        %v7218 = vpop.f32.mrf.mxu0
        %v7219 = vadd.f32 %v7050, %v7218
        %7220 = vmatmul.bf16.gmra.mxu0 %v4218
        %v7221 = vpop.f32.mrf.mxu0
        %v7222 = vadd.f32 %v7053, %v7221
        %v7223 = vpop.f32.mrf.mxu0
        %v7224 = vadd.f32 %v7055, %v7223
        %7225 = vmatmul.bf16.gmra.mxu0 %v4223
        %v7226 = vpop.f32.mrf.mxu0
        %v7227 = vadd.f32 %v7058, %v7226
        %v7228 = vpop.f32.mrf.mxu0
        %v7229 = vadd.f32 %v7060, %v7228
        %7230 = vmatmul.bf16.gmra.mxu0 %v4228
        %v7231 = vpop.f32.mrf.mxu0
        %v7232 = vadd.f32 %v7063, %v7231
        %v7233 = vpop.f32.mrf.mxu0
        %v7234 = vadd.f32 %v7065, %v7233
        %7235 = vmatmul.bf16.gmra.mxu0 %v4233
        %v7236 = vpop.f32.mrf.mxu0
        %v7237 = vadd.f32 %v7068, %v7236
        %v7238 = vpop.f32.mrf.mxu0
        %v7239 = vadd.f32 %v7070, %v7238
        %7240 = vmatmul.bf16.gmra.mxu0 %v4238
        %v7241 = vpop.f32.mrf.mxu0
        %v7242 = vadd.f32 %v7073, %v7241
        %v7243 = vpop.f32.mrf.mxu0
        %v7244 = vadd.f32 %v7075, %v7243
        %7245 = vmatmul.bf16.gmra.mxu0 %v4243
        %v7246 = vpop.f32.mrf.mxu0
        %v7247 = vadd.f32 %v7078, %v7246
        %v7248 = vpop.f32.mrf.mxu0
        %v7249 = vadd.f32 %v7080, %v7248
        %7250 = vmatmul.bf16.gmra.mxu0 %v4248
        %v7251 = vpop.f32.mrf.mxu0
        %v7252 = vadd.f32 %v7083, %v7251
        %v7253 = vpop.f32.mrf.mxu0
        %v7254 = vadd.f32 %v7085, %v7253
        %7255 = vmatmul.bf16.gmra.mxu0 %v4253
        %v7256 = vpop.f32.mrf.mxu0
        %v7257 = vadd.f32 %v7088, %v7256
        %v7258 = vpop.f32.mrf.mxu0
        %v7259 = vadd.f32 %v7090, %v7258
        %7260 = vmatmul.bf16.gmra.mxu0 %v4258
        %v7261 = vpop.f32.mrf.mxu0
        %v7262 = vadd.f32 %v7093, %v7261
        %v7263 = vpop.f32.mrf.mxu0
        %v7264 = vadd.f32 %v7095, %v7263
        %7265 = vmatmul.bf16.gmra.mxu0 %v4263
        %v7266 = vpop.f32.mrf.mxu0
        %v7267 = vadd.f32 %v7098, %v7266
        %v7268 = vpop.f32.mrf.mxu0
        %v7269 = vadd.f32 %v7100, %v7268
        %7270 = vmatmul.bf16.gmra.mxu0 %v4268
        %v7271 = vpop.f32.mrf.mxu0
        %v7272 = vadd.f32 %v7103, %v7271
        %v7273 = vpop.f32.mrf.mxu0
        %v7274 = vadd.f32 %v7105, %v7273
        %7275 = vmatmul.bf16.gmra.mxu0 %v4273
        %v7276 = vpop.f32.mrf.mxu0
        %v7277 = vadd.f32 %v7108, %v7276
        %v7278 = vpop.f32.mrf.mxu0
        %v7279 = vadd.f32 %v7110, %v7278
        %7280 = vmatmul.bf16.gmra.mxu0 %v4278
        %v7281 = vpop.f32.mrf.mxu0
        %v7282 = vadd.f32 %v7113, %v7281
        %v7283 = vpop.f32.mrf.mxu0
        %v7284 = vadd.f32 %v7115, %v7283
        %7285 = vmatmul.bf16.gmra.mxu0 %v4283
        %v7286 = vpop.f32.mrf.mxu0
        %v7287 = vadd.f32 %v7118, %v7286
        %v7288 = vpop.f32.mrf.mxu0
        %v7289 = vadd.f32 %v7120, %v7288
        %7290 = vmatmul.bf16.gmra.mxu0 %v4288
        %v7291 = vpop.f32.mrf.mxu0
        %v7292 = vadd.f32 %v7123, %v7291
        %v7293 = vpop.f32.mrf.mxu0
        %v7294 = vadd.f32 %v7125, %v7293
        %7295 = vmatmul.bf16.gmra.mxu0 %v4293
        %v7296 = vpop.f32.mrf.mxu0
        %v7297 = vadd.f32 %v7128, %v7296
        %v7298 = vpop.f32.mrf.mxu0
        %v7299 = vadd.f32 %v7130, %v7298
        %7300 = vmatmul.bf16.gmra.mxu0 %v4298
        %v7301 = vpop.f32.mrf.mxu0
        %v7302 = vadd.f32 %v7133, %v7301
        %v7303 = vpop.f32.mrf.mxu0
        %v7304 = vadd.f32 %v7135, %v7303
        %7305 = vmatmul.bf16.gmra.mxu0 %v4303
        %v7306 = vpop.f32.mrf.mxu0
        %v7307 = vadd.f32 %v7138, %v7306
        %v7308 = vpop.f32.mrf.mxu0
        %v7309 = vadd.f32 %v7140, %v7308
        %7310 = vmatmul.bf16.gmra.mxu0 %v4308
        %v7311 = vpop.f32.mrf.mxu0
        %v7312 = vadd.f32 %v7143, %v7311
        %v7313 = vpop.f32.mrf.mxu0
        %v7314 = vadd.f32 %v7145, %v7313
        %7315 = vmatmul.bf16.gmra.mxu0 %v4313
        %v7316 = vpop.f32.mrf.mxu0
        %v7317 = vadd.f32 %v7148, %v7316
        %v7318 = vpop.f32.mrf.mxu0
        %v7319 = vadd.f32 %v7150, %v7318
        %7320 = vmatmul.bf16.gmra.mxu0 %v4318
        %v7321 = vpop.f32.mrf.mxu0
        %v7322 = vadd.f32 %v7153, %v7321
        %v7323 = vpop.f32.mrf.mxu0
        %v7324 = vadd.f32 %v7155, %v7323
        %7325 = vmatmul.bf16.gmra.mxu0 %v4323
        %v7326 = vpop.f32.mrf.mxu0
        %v7327 = vadd.f32 %v7158, %v7326
        %v7328 = vpop.f32.mrf.mxu0
        %v7329 = vadd.f32 %v7160, %v7328
        %7330 = vmatmul.bf16.gmra.mxu0 %v4328
        %v7331 = vpop.f32.mrf.mxu0
        %v7332 = vadd.f32 %v7163, %v7331
        %v7333 = vpop.f32.mrf.mxu0
        %v7334 = vadd.f32 %v7165, %v7333
        %7335 = vdwg.mxu0
        %7336 = vmatpush.bf16.msra.mxu0 %v4994
        %7337 = vmatpush.bf16.msra.mxu0 %v4991
        %7338 = vmatpush.bf16.msra.mxu0 %v4988
        %7339 = vmatpush.bf16.msra.mxu0 %v4985
        %7340 = vmatpush.bf16.msra.mxu0 %v4982
        %7341 = vmatpush.bf16.msra.mxu0 %v4979
        %7342 = vmatpush.bf16.msra.mxu0 %v4976
        %7343 = vmatpush.bf16.msra.mxu0 %v4973
        %7344 = vmatmul.bf16.gmra.mxu0 %v4174
        %v7345 = vpop.f32.mrf.mxu0
        %v7346 = vadd.f32 %v7177, %v7345
        %v7347 = vpop.f32.mrf.mxu0
        %v7348 = vadd.f32 %v7179, %v7347
        %7349 = vmatmul.bf16.gmra.mxu0 %v4179
        %v7350 = vpop.f32.mrf.mxu0
        %v7351 = vadd.f32 %v7182, %v7350
        %v7352 = vpop.f32.mrf.mxu0
        %v7353 = vadd.f32 %v7184, %v7352
        %7354 = vmatmul.bf16.gmra.mxu0 %v4184
        %v7355 = vpop.f32.mrf.mxu0
        %v7356 = vadd.f32 %v7187, %v7355
        %v7357 = vpop.f32.mrf.mxu0
        %v7358 = vadd.f32 %v7189, %v7357
        %7359 = vmatmul.bf16.gmra.mxu0 %v4189
        %v7360 = vpop.f32.mrf.mxu0
        %v7361 = vadd.f32 %v7192, %v7360
        %v7362 = vpop.f32.mrf.mxu0
        %v7363 = vadd.f32 %v7194, %v7362
        %7364 = vmatmul.bf16.gmra.mxu0 %v4194
        %v7365 = vpop.f32.mrf.mxu0
        %v7366 = vadd.f32 %v7197, %v7365
        %v7367 = vpop.f32.mrf.mxu0
        %v7368 = vadd.f32 %v7199, %v7367
        %7369 = vmatmul.bf16.gmra.mxu0 %v4199
        %v7370 = vpop.f32.mrf.mxu0
        %v7371 = vadd.f32 %v7202, %v7370
        %v7372 = vpop.f32.mrf.mxu0
        %v7373 = vadd.f32 %v7204, %v7372
        %7374 = vmatmul.bf16.gmra.mxu0 %v4204
        %v7375 = vpop.f32.mrf.mxu0
        %v7376 = vadd.f32 %v7207, %v7375
        %v7377 = vpop.f32.mrf.mxu0
        %v7378 = vadd.f32 %v7209, %v7377
        %7379 = vmatmul.bf16.gmra.mxu0 %v4209
        %v7380 = vpop.f32.mrf.mxu0
        %v7381 = vadd.f32 %v7212, %v7380
        %v7382 = vpop.f32.mrf.mxu0
        %v7383 = vadd.f32 %v7214, %v7382
        %7384 = vmatmul.bf16.gmra.mxu0 %v4214
        %v7385 = vpop.f32.mrf.mxu0
        %v7386 = vadd.f32 %v7217, %v7385
        %v7387 = vpop.f32.mrf.mxu0
        %v7388 = vadd.f32 %v7219, %v7387
        %7389 = vmatmul.bf16.gmra.mxu0 %v4219
        %v7390 = vpop.f32.mrf.mxu0
        %v7391 = vadd.f32 %v7222, %v7390
        %v7392 = vpop.f32.mrf.mxu0
        %v7393 = vadd.f32 %v7224, %v7392
        %7394 = vmatmul.bf16.gmra.mxu0 %v4224
        %v7395 = vpop.f32.mrf.mxu0
        %v7396 = vadd.f32 %v7227, %v7395
        %v7397 = vpop.f32.mrf.mxu0
        %v7398 = vadd.f32 %v7229, %v7397
        %7399 = vmatmul.bf16.gmra.mxu0 %v4229
        %v7400 = vpop.f32.mrf.mxu0
        %v7401 = vadd.f32 %v7232, %v7400
        %v7402 = vpop.f32.mrf.mxu0
        %v7403 = vadd.f32 %v7234, %v7402
        %7404 = vmatmul.bf16.gmra.mxu0 %v4234
        %v7405 = vpop.f32.mrf.mxu0
        %v7406 = vadd.f32 %v7237, %v7405
        %v7407 = vpop.f32.mrf.mxu0
        %v7408 = vadd.f32 %v7239, %v7407
        %7409 = vmatmul.bf16.gmra.mxu0 %v4239
        %v7410 = vpop.f32.mrf.mxu0
        %v7411 = vadd.f32 %v7242, %v7410
        %v7412 = vpop.f32.mrf.mxu0
        %v7413 = vadd.f32 %v7244, %v7412
        %7414 = vmatmul.bf16.gmra.mxu0 %v4244
        %v7415 = vpop.f32.mrf.mxu0
        %v7416 = vadd.f32 %v7247, %v7415
        %v7417 = vpop.f32.mrf.mxu0
        %v7418 = vadd.f32 %v7249, %v7417
        %7419 = vmatmul.bf16.gmra.mxu0 %v4249
        %v7420 = vpop.f32.mrf.mxu0
        %v7421 = vadd.f32 %v7252, %v7420
        %v7422 = vpop.f32.mrf.mxu0
        %v7423 = vadd.f32 %v7254, %v7422
        %7424 = vmatmul.bf16.gmra.mxu0 %v4254
        %v7425 = vpop.f32.mrf.mxu0
        %v7426 = vadd.f32 %v7257, %v7425
        %v7427 = vpop.f32.mrf.mxu0
        %v7428 = vadd.f32 %v7259, %v7427
        %7429 = vmatmul.bf16.gmra.mxu0 %v4259
        %v7430 = vpop.f32.mrf.mxu0
        %v7431 = vadd.f32 %v7262, %v7430
        %v7432 = vpop.f32.mrf.mxu0
        %v7433 = vadd.f32 %v7264, %v7432
        %7434 = vmatmul.bf16.gmra.mxu0 %v4264
        %v7435 = vpop.f32.mrf.mxu0
        %v7436 = vadd.f32 %v7267, %v7435
        %v7437 = vpop.f32.mrf.mxu0
        %v7438 = vadd.f32 %v7269, %v7437
        %7439 = vmatmul.bf16.gmra.mxu0 %v4269
        %v7440 = vpop.f32.mrf.mxu0
        %v7441 = vadd.f32 %v7272, %v7440
        %v7442 = vpop.f32.mrf.mxu0
        %v7443 = vadd.f32 %v7274, %v7442
        %7444 = vmatmul.bf16.gmra.mxu0 %v4274
        %v7445 = vpop.f32.mrf.mxu0
        %v7446 = vadd.f32 %v7277, %v7445
        %v7447 = vpop.f32.mrf.mxu0
        %v7448 = vadd.f32 %v7279, %v7447
        %7449 = vmatmul.bf16.gmra.mxu0 %v4279
        %v7450 = vpop.f32.mrf.mxu0
        %v7451 = vadd.f32 %v7282, %v7450
        %v7452 = vpop.f32.mrf.mxu0
        %v7453 = vadd.f32 %v7284, %v7452
        %7454 = vmatmul.bf16.gmra.mxu0 %v4284
        %v7455 = vpop.f32.mrf.mxu0
        %v7456 = vadd.f32 %v7287, %v7455
        %v7457 = vpop.f32.mrf.mxu0
        %v7458 = vadd.f32 %v7289, %v7457
        %7459 = vmatmul.bf16.gmra.mxu0 %v4289
        %v7460 = vpop.f32.mrf.mxu0
        %v7461 = vadd.f32 %v7292, %v7460
        %v7462 = vpop.f32.mrf.mxu0
        %v7463 = vadd.f32 %v7294, %v7462
        %7464 = vmatmul.bf16.gmra.mxu0 %v4294
        %v7465 = vpop.f32.mrf.mxu0
        %v7466 = vadd.f32 %v7297, %v7465
        %v7467 = vpop.f32.mrf.mxu0
        %v7468 = vadd.f32 %v7299, %v7467
        %7469 = vmatmul.bf16.gmra.mxu0 %v4299
        %v7470 = vpop.f32.mrf.mxu0
        %v7471 = vadd.f32 %v7302, %v7470
        %v7472 = vpop.f32.mrf.mxu0
        %v7473 = vadd.f32 %v7304, %v7472
        %7474 = vmatmul.bf16.gmra.mxu0 %v4304
        %v7475 = vpop.f32.mrf.mxu0
        %v7476 = vadd.f32 %v7307, %v7475
        %v7477 = vpop.f32.mrf.mxu0
        %v7478 = vadd.f32 %v7309, %v7477
        %7479 = vmatmul.bf16.gmra.mxu0 %v4309
        %v7480 = vpop.f32.mrf.mxu0
        %v7481 = vadd.f32 %v7312, %v7480
        %v7482 = vpop.f32.mrf.mxu0
        %v7483 = vadd.f32 %v7314, %v7482
        %7484 = vmatmul.bf16.gmra.mxu0 %v4314
        %v7485 = vpop.f32.mrf.mxu0
        %v7486 = vadd.f32 %v7317, %v7485
        %v7487 = vpop.f32.mrf.mxu0
        %v7488 = vadd.f32 %v7319, %v7487
        %7489 = vmatmul.bf16.gmra.mxu0 %v4319
        %v7490 = vpop.f32.mrf.mxu0
        %v7491 = vadd.f32 %v7322, %v7490
        %v7492 = vpop.f32.mrf.mxu0
        %v7493 = vadd.f32 %v7324, %v7492
        %7494 = vmatmul.bf16.gmra.mxu0 %v4324
        %v7495 = vpop.f32.mrf.mxu0
        %v7496 = vadd.f32 %v7327, %v7495
        %v7497 = vpop.f32.mrf.mxu0
        %v7498 = vadd.f32 %v7329, %v7497
        %7499 = vmatmul.bf16.gmra.mxu0 %v4329
        %v7500 = vpop.f32.mrf.mxu0
        %v7501 = vadd.f32 %v7332, %v7500
        %v7502 = vpop.f32.mrf.mxu0
        %v7503 = vadd.f32 %v7334, %v7502
        %7504 = vdwg.mxu0
        %7505 = vmatpush.bf16.msra.mxu0 %v5018
        %7506 = vmatpush.bf16.msra.mxu0 %v5015
        %7507 = vmatpush.bf16.msra.mxu0 %v5012
        %7508 = vmatpush.bf16.msra.mxu0 %v5009
        %7509 = vmatpush.bf16.msra.mxu0 %v5006
        %7510 = vmatpush.bf16.msra.mxu0 %v5003
        %7511 = vmatpush.bf16.msra.mxu0 %v5000
        %7512 = vmatpush.bf16.msra.mxu0 %v4997
        %7513 = vmatmul.bf16.gmra.mxu0 %v4175
        %v7514 = vpop.f32.mrf.mxu0
        %v7515 = vadd.f32 %v7346, %v7514
        %v7516 = vpop.f32.mrf.mxu0
        %v7517 = vadd.f32 %v7348, %v7516
        %7518 = vmatmul.bf16.gmra.mxu0 %v4180
        %v7519 = vpop.f32.mrf.mxu0
        %v7520 = vadd.f32 %v7351, %v7519
        %v7521 = vpop.f32.mrf.mxu0
        %v7522 = vadd.f32 %v7353, %v7521
        %7523 = vmatmul.bf16.gmra.mxu0 %v4185
        %v7524 = vpop.f32.mrf.mxu0
        %v7525 = vadd.f32 %v7356, %v7524
        %v7526 = vpop.f32.mrf.mxu0
        %v7527 = vadd.f32 %v7358, %v7526
        %7528 = vmatmul.bf16.gmra.mxu0 %v4190
        %v7529 = vpop.f32.mrf.mxu0
        %v7530 = vadd.f32 %v7361, %v7529
        %v7531 = vpop.f32.mrf.mxu0
        %v7532 = vadd.f32 %v7363, %v7531
        %7533 = vmatmul.bf16.gmra.mxu0 %v4195
        %v7534 = vpop.f32.mrf.mxu0
        %v7535 = vadd.f32 %v7366, %v7534
        %v7536 = vpop.f32.mrf.mxu0
        %v7537 = vadd.f32 %v7368, %v7536
        %7538 = vmatmul.bf16.gmra.mxu0 %v4200
        %v7539 = vpop.f32.mrf.mxu0
        %v7540 = vadd.f32 %v7371, %v7539
        %v7541 = vpop.f32.mrf.mxu0
        %v7542 = vadd.f32 %v7373, %v7541
        %7543 = vmatmul.bf16.gmra.mxu0 %v4205
        %v7544 = vpop.f32.mrf.mxu0
        %v7545 = vadd.f32 %v7376, %v7544
        %v7546 = vpop.f32.mrf.mxu0
        %v7547 = vadd.f32 %v7378, %v7546
        %7548 = vmatmul.bf16.gmra.mxu0 %v4210
        %v7549 = vpop.f32.mrf.mxu0
        %v7550 = vadd.f32 %v7381, %v7549
        %v7551 = vpop.f32.mrf.mxu0
        %v7552 = vadd.f32 %v7383, %v7551
        %7553 = vmatmul.bf16.gmra.mxu0 %v4215
        %v7554 = vpop.f32.mrf.mxu0
        %v7555 = vadd.f32 %v7386, %v7554
        %v7556 = vpop.f32.mrf.mxu0
        %v7557 = vadd.f32 %v7388, %v7556
        %7558 = vmatmul.bf16.gmra.mxu0 %v4220
        %v7559 = vpop.f32.mrf.mxu0
        %v7560 = vadd.f32 %v7391, %v7559
        %v7561 = vpop.f32.mrf.mxu0
        %v7562 = vadd.f32 %v7393, %v7561
        %7563 = vmatmul.bf16.gmra.mxu0 %v4225
        %v7564 = vpop.f32.mrf.mxu0
        %v7565 = vadd.f32 %v7396, %v7564
        %v7566 = vpop.f32.mrf.mxu0
        %v7567 = vadd.f32 %v7398, %v7566
        %7568 = vmatmul.bf16.gmra.mxu0 %v4230
        %v7569 = vpop.f32.mrf.mxu0
        %v7570 = vadd.f32 %v7401, %v7569
        %v7571 = vpop.f32.mrf.mxu0
        %v7572 = vadd.f32 %v7403, %v7571
        %7573 = vmatmul.bf16.gmra.mxu0 %v4235
        %v7574 = vpop.f32.mrf.mxu0
        %v7575 = vadd.f32 %v7406, %v7574
        %v7576 = vpop.f32.mrf.mxu0
        %v7577 = vadd.f32 %v7408, %v7576
        %7578 = vmatmul.bf16.gmra.mxu0 %v4240
        %v7579 = vpop.f32.mrf.mxu0
        %v7580 = vadd.f32 %v7411, %v7579
        %v7581 = vpop.f32.mrf.mxu0
        %v7582 = vadd.f32 %v7413, %v7581
        %7583 = vmatmul.bf16.gmra.mxu0 %v4245
        %v7584 = vpop.f32.mrf.mxu0
        %v7585 = vadd.f32 %v7416, %v7584
        %v7586 = vpop.f32.mrf.mxu0
        %v7587 = vadd.f32 %v7418, %v7586
        %7588 = vmatmul.bf16.gmra.mxu0 %v4250
        %v7589 = vpop.f32.mrf.mxu0
        %v7590 = vadd.f32 %v7421, %v7589
        %v7591 = vpop.f32.mrf.mxu0
        %v7592 = vadd.f32 %v7423, %v7591
        %7593 = vmatmul.bf16.gmra.mxu0 %v4255
        %v7594 = vpop.f32.mrf.mxu0
        %v7595 = vadd.f32 %v7426, %v7594
        %v7596 = vpop.f32.mrf.mxu0
        %v7597 = vadd.f32 %v7428, %v7596
        %7598 = vmatmul.bf16.gmra.mxu0 %v4260
        %v7599 = vpop.f32.mrf.mxu0
        %v7600 = vadd.f32 %v7431, %v7599
        %v7601 = vpop.f32.mrf.mxu0
        %v7602 = vadd.f32 %v7433, %v7601
        %7603 = vmatmul.bf16.gmra.mxu0 %v4265
        %v7604 = vpop.f32.mrf.mxu0
        %v7605 = vadd.f32 %v7436, %v7604
        %v7606 = vpop.f32.mrf.mxu0
        %v7607 = vadd.f32 %v7438, %v7606
        %7608 = vmatmul.bf16.gmra.mxu0 %v4270
        %v7609 = vpop.f32.mrf.mxu0
        %v7610 = vadd.f32 %v7441, %v7609
        %v7611 = vpop.f32.mrf.mxu0
        %v7612 = vadd.f32 %v7443, %v7611
        %7613 = vmatmul.bf16.gmra.mxu0 %v4275
        %v7614 = vpop.f32.mrf.mxu0
        %v7615 = vadd.f32 %v7446, %v7614
        %v7616 = vpop.f32.mrf.mxu0
        %v7617 = vadd.f32 %v7448, %v7616
        %7618 = vmatmul.bf16.gmra.mxu0 %v4280
        %v7619 = vpop.f32.mrf.mxu0
        %v7620 = vadd.f32 %v7451, %v7619
        %v7621 = vpop.f32.mrf.mxu0
        %v7622 = vadd.f32 %v7453, %v7621
        %7623 = vmatmul.bf16.gmra.mxu0 %v4285
        %v7624 = vpop.f32.mrf.mxu0
        %v7625 = vadd.f32 %v7456, %v7624
        %v7626 = vpop.f32.mrf.mxu0
        %v7627 = vadd.f32 %v7458, %v7626
        %7628 = vmatmul.bf16.gmra.mxu0 %v4290
        %v7629 = vpop.f32.mrf.mxu0
        %v7630 = vadd.f32 %v7461, %v7629
        %v7631 = vpop.f32.mrf.mxu0
        %v7632 = vadd.f32 %v7463, %v7631
        %7633 = vmatmul.bf16.gmra.mxu0 %v4295
        %v7634 = vpop.f32.mrf.mxu0
        %v7635 = vadd.f32 %v7466, %v7634
        %v7636 = vpop.f32.mrf.mxu0
        %v7637 = vadd.f32 %v7468, %v7636
        %7638 = vmatmul.bf16.gmra.mxu0 %v4300
        %v7639 = vpop.f32.mrf.mxu0
        %v7640 = vadd.f32 %v7471, %v7639
        %v7641 = vpop.f32.mrf.mxu0
        %v7642 = vadd.f32 %v7473, %v7641
        %7643 = vmatmul.bf16.gmra.mxu0 %v4305
        %v7644 = vpop.f32.mrf.mxu0
        %v7645 = vadd.f32 %v7476, %v7644
        %v7646 = vpop.f32.mrf.mxu0
        %v7647 = vadd.f32 %v7478, %v7646
        %7648 = vmatmul.bf16.gmra.mxu0 %v4310
        %v7649 = vpop.f32.mrf.mxu0
        %v7650 = vadd.f32 %v7481, %v7649
        %v7651 = vpop.f32.mrf.mxu0
        %v7652 = vadd.f32 %v7483, %v7651
        %7653 = vmatmul.bf16.gmra.mxu0 %v4315
        %v7654 = vpop.f32.mrf.mxu0
        %v7655 = vadd.f32 %v7486, %v7654
        %v7656 = vpop.f32.mrf.mxu0
        %v7657 = vadd.f32 %v7488, %v7656
        %7658 = vmatmul.bf16.gmra.mxu0 %v4320
        %v7659 = vpop.f32.mrf.mxu0
        %v7660 = vadd.f32 %v7491, %v7659
        %v7661 = vpop.f32.mrf.mxu0
        %v7662 = vadd.f32 %v7493, %v7661
        %7663 = vmatmul.bf16.gmra.mxu0 %v4325
        %v7664 = vpop.f32.mrf.mxu0
        %v7665 = vadd.f32 %v7496, %v7664
        %v7666 = vpop.f32.mrf.mxu0
        %v7667 = vadd.f32 %v7498, %v7666
        %7668 = vmatmul.bf16.gmra.mxu0 %v4330
        %v7669 = vpop.f32.mrf.mxu0
        %v7670 = vadd.f32 %v7501, %v7669
        %v7671 = vpop.f32.mrf.mxu0
        %v7672 = vadd.f32 %v7503, %v7671
        %7673 = vdwg.mxu0
        %v7674 = vadd.f32 %v248, %v5825
        %v7675 = vadd.f32 %v249, %v6670
        %v7676 = vadd.f32 %v250, %v7515
        %v7677 = vadd.f32 %v251, %v5827
        %v7678 = vadd.f32 %v252, %v6672
        %v7679 = vadd.f32 %v253, %v7517
        %v7680 = vadd.f32 %v254, %v5830
        %v7681 = vadd.f32 %v255, %v6675
        %v7682 = vadd.f32 %v256, %v7520
        %v7683 = vadd.f32 %v257, %v5832
        %v7684 = vadd.f32 %v258, %v6677
        %v7685 = vadd.f32 %v259, %v7522
        %v7686 = vadd.f32 %v260, %v5835
        %v7687 = vadd.f32 %v261, %v6680
        %v7688 = vadd.f32 %v262, %v7525
        %v7689 = vadd.f32 %v263, %v5837
        %v7690 = vadd.f32 %v264, %v6682
        %v7691 = vadd.f32 %v265, %v7527
        %v7692 = vadd.f32 %v266, %v5840
        %v7693 = vadd.f32 %v267, %v6685
        %v7694 = vadd.f32 %v268, %v7530
        %v7695 = vadd.f32 %v269, %v5842
        %v7696 = vadd.f32 %v270, %v6687
        %v7697 = vadd.f32 %v271, %v7532
        %v7698 = vadd.f32 %v272, %v5845
        %v7699 = vadd.f32 %v273, %v6690
        %v7700 = vadd.f32 %v274, %v7535
        %v7701 = vadd.f32 %v275, %v5847
        %v7702 = vadd.f32 %v276, %v6692
        %v7703 = vadd.f32 %v277, %v7537
        %v7704 = vadd.f32 %v278, %v5850
        %v7705 = vadd.f32 %v279, %v6695
        %v7706 = vadd.f32 %v280, %v7540
        %v7707 = vadd.f32 %v281, %v5852
        %v7708 = vadd.f32 %v282, %v6697
        %v7709 = vadd.f32 %v283, %v7542
        %v7710 = vadd.f32 %v284, %v5855
        %v7711 = vadd.f32 %v285, %v6700
        %v7712 = vadd.f32 %v286, %v7545
        %v7713 = vadd.f32 %v287, %v5857
        %v7714 = vadd.f32 %v288, %v6702
        %v7715 = vadd.f32 %v289, %v7547
        %v7716 = vadd.f32 %v290, %v5860
        %v7717 = vadd.f32 %v291, %v6705
        %v7718 = vadd.f32 %v292, %v7550
        %v7719 = vadd.f32 %v293, %v5862
        %v7720 = vadd.f32 %v294, %v6707
        %v7721 = vadd.f32 %v295, %v7552
        %v7722 = vadd.f32 %v296, %v5865
        %v7723 = vadd.f32 %v297, %v6710
        %v7724 = vadd.f32 %v298, %v7555
        %v7725 = vadd.f32 %v299, %v5867
        %v7726 = vadd.f32 %v300, %v6712
        %v7727 = vadd.f32 %v301, %v7557
        %v7728 = vadd.f32 %v302, %v5870
        %v7729 = vadd.f32 %v303, %v6715
        %v7730 = vadd.f32 %v304, %v7560
        %v7731 = vadd.f32 %v305, %v5872
        %v7732 = vadd.f32 %v306, %v6717
        %v7733 = vadd.f32 %v307, %v7562
        %v7734 = vadd.f32 %v308, %v5875
        %v7735 = vadd.f32 %v309, %v6720
        %v7736 = vadd.f32 %v310, %v7565
        %v7737 = vadd.f32 %v311, %v5877
        %v7738 = vadd.f32 %v312, %v6722
        %v7739 = vadd.f32 %v313, %v7567
        %v7740 = vadd.f32 %v314, %v5880
        %v7741 = vadd.f32 %v315, %v6725
        %v7742 = vadd.f32 %v316, %v7570
        %v7743 = vadd.f32 %v317, %v5882
        %v7744 = vadd.f32 %v318, %v6727
        %v7745 = vadd.f32 %v319, %v7572
        %v7746 = vadd.f32 %v320, %v5885
        %v7747 = vadd.f32 %v321, %v6730
        %v7748 = vadd.f32 %v322, %v7575
        %v7749 = vadd.f32 %v323, %v5887
        %v7750 = vadd.f32 %v324, %v6732
        %v7751 = vadd.f32 %v325, %v7577
        %v7752 = vadd.f32 %v326, %v5890
        %v7753 = vadd.f32 %v327, %v6735
        %v7754 = vadd.f32 %v328, %v7580
        %v7755 = vadd.f32 %v329, %v5892
        %v7756 = vadd.f32 %v330, %v6737
        %v7757 = vadd.f32 %v331, %v7582
        %v7758 = vadd.f32 %v332, %v5895
        %v7759 = vadd.f32 %v333, %v6740
        %v7760 = vadd.f32 %v334, %v7585
        %v7761 = vadd.f32 %v335, %v5897
        %v7762 = vadd.f32 %v336, %v6742
        %v7763 = vadd.f32 %v337, %v7587
        %v7764 = vadd.f32 %v338, %v5900
        %v7765 = vadd.f32 %v339, %v6745
        %v7766 = vadd.f32 %v340, %v7590
        %v7767 = vadd.f32 %v341, %v5902
        %v7768 = vadd.f32 %v342, %v6747
        %v7769 = vadd.f32 %v343, %v7592
        %v7770 = vadd.f32 %v344, %v5905
        %v7771 = vadd.f32 %v345, %v6750
        %v7772 = vadd.f32 %v346, %v7595
        %v7773 = vadd.f32 %v347, %v5907
        %v7774 = vadd.f32 %v348, %v6752
        %v7775 = vadd.f32 %v349, %v7597
        %v7776 = vadd.f32 %v350, %v5910
        %v7777 = vadd.f32 %v351, %v6755
        %v7778 = vadd.f32 %v352, %v7600
        %v7779 = vadd.f32 %v353, %v5912
        %v7780 = vadd.f32 %v354, %v6757
        %v7781 = vadd.f32 %v355, %v7602
        %v7782 = vadd.f32 %v356, %v5915
        %v7783 = vadd.f32 %v357, %v6760
        %v7784 = vadd.f32 %v358, %v7605
        %v7785 = vadd.f32 %v359, %v5917
        %v7786 = vadd.f32 %v360, %v6762
        %v7787 = vadd.f32 %v361, %v7607
        %v7788 = vadd.f32 %v362, %v5920
        %v7789 = vadd.f32 %v363, %v6765
        %v7790 = vadd.f32 %v364, %v7610
        %v7791 = vadd.f32 %v365, %v5922
        %v7792 = vadd.f32 %v366, %v6767
        %v7793 = vadd.f32 %v367, %v7612
        %v7794 = vadd.f32 %v368, %v5925
        %v7795 = vadd.f32 %v369, %v6770
        %v7796 = vadd.f32 %v370, %v7615
        %v7797 = vadd.f32 %v371, %v5927
        %v7798 = vadd.f32 %v372, %v6772
        %v7799 = vadd.f32 %v373, %v7617
        %v7800 = vadd.f32 %v374, %v5930
        %v7801 = vadd.f32 %v375, %v6775
        %v7802 = vadd.f32 %v376, %v7620
        %v7803 = vadd.f32 %v377, %v5932
        %v7804 = vadd.f32 %v378, %v6777
        %v7805 = vadd.f32 %v379, %v7622
        %v7806 = vadd.f32 %v380, %v5935
        %v7807 = vadd.f32 %v381, %v6780
        %v7808 = vadd.f32 %v382, %v7625
        %v7809 = vadd.f32 %v383, %v5937
        %v7810 = vadd.f32 %v384, %v6782
        %v7811 = vadd.f32 %v385, %v7627
        %v7812 = vadd.f32 %v386, %v5940
        %v7813 = vadd.f32 %v387, %v6785
        %v7814 = vadd.f32 %v388, %v7630
        %v7815 = vadd.f32 %v389, %v5942
        %v7816 = vadd.f32 %v390, %v6787
        %v7817 = vadd.f32 %v391, %v7632
        %v7818 = vadd.f32 %v392, %v5945
        %v7819 = vadd.f32 %v393, %v6790
        %v7820 = vadd.f32 %v394, %v7635
        %v7821 = vadd.f32 %v395, %v5947
        %v7822 = vadd.f32 %v396, %v6792
        %v7823 = vadd.f32 %v397, %v7637
        %v7824 = vadd.f32 %v398, %v5950
        %v7825 = vadd.f32 %v399, %v6795
        %v7826 = vadd.f32 %v400, %v7640
        %v7827 = vadd.f32 %v401, %v5952
        %v7828 = vadd.f32 %v402, %v6797
        %v7829 = vadd.f32 %v403, %v7642
        %v7830 = vadd.f32 %v404, %v5955
        %v7831 = vadd.f32 %v405, %v6800
        %v7832 = vadd.f32 %v406, %v7645
        %v7833 = vadd.f32 %v407, %v5957
        %v7834 = vadd.f32 %v408, %v6802
        %v7835 = vadd.f32 %v409, %v7647
        %v7836 = vadd.f32 %v410, %v5960
        %v7837 = vadd.f32 %v411, %v6805
        %v7838 = vadd.f32 %v412, %v7650
        %v7839 = vadd.f32 %v413, %v5962
        %v7840 = vadd.f32 %v414, %v6807
        %v7841 = vadd.f32 %v415, %v7652
        %v7842 = vadd.f32 %v416, %v5965
        %v7843 = vadd.f32 %v417, %v6810
        %v7844 = vadd.f32 %v418, %v7655
        %v7845 = vadd.f32 %v419, %v5967
        %v7846 = vadd.f32 %v420, %v6812
        %v7847 = vadd.f32 %v421, %v7657
        %v7848 = vadd.f32 %v422, %v5970
        %v7849 = vadd.f32 %v423, %v6815
        %v7850 = vadd.f32 %v424, %v7660
        %v7851 = vadd.f32 %v425, %v5972
        %v7852 = vadd.f32 %v426, %v6817
        %v7853 = vadd.f32 %v427, %v7662
        %v7854 = vadd.f32 %v428, %v5975
        %v7855 = vadd.f32 %v429, %v6820
        %v7856 = vadd.f32 %v430, %v7665
        %v7857 = vadd.f32 %v431, %v5977
        %v7858 = vadd.f32 %v432, %v6822
        %v7859 = vadd.f32 %v433, %v7667
        %v7860 = vadd.f32 %v434, %v5980
        %v7861 = vadd.f32 %v435, %v6825
        %v7862 = vadd.f32 %v436, %v7670
        %v7863 = vadd.f32 %v437, %v5982
        %v7864 = vadd.f32 %v438, %v6827
        %v7865 = vadd.f32 %v439, %v7672
        %7866 = vst [vmem:[%s245] sm:$0xff] %v7674
        %7867 = vst [vmem:[%s245 + $0x8] sm:$0xff] %v7675
        %7868 = vst [vmem:[%s245 + $0x10] sm:$0xff] %v7676
        %7869 = vst [vmem:[%s245 + $0x18] sm:$0xff] %v7677
        %7870 = vst [vmem:[%s245 + $0x20] sm:$0xff] %v7678
        %7871 = vst [vmem:[%s245 + $0x28] sm:$0xff] %v7679
        %7872 = vst [vmem:[%s245 + $0x30] sm:$0xff] %v7680
        %7873 = vst [vmem:[%s245 + $0x38] sm:$0xff] %v7681
        %7874 = vst [vmem:[%s245 + $0x40] sm:$0xff] %v7682
        %7875 = vst [vmem:[%s245 + $0x48] sm:$0xff] %v7683
        %7876 = vst [vmem:[%s245 + $0x50] sm:$0xff] %v7684
        %7877 = vst [vmem:[%s245 + $0x58] sm:$0xff] %v7685
        %7878 = vst [vmem:[%s245 + $0x60] sm:$0xff] %v7686
        %7879 = vst [vmem:[%s245 + $0x68] sm:$0xff] %v7687
        %7880 = vst [vmem:[%s245 + $0x70] sm:$0xff] %v7688
        %7881 = vst [vmem:[%s245 + $0x78] sm:$0xff] %v7689
        %7882 = vst [vmem:[%s245 + $0x80] sm:$0xff] %v7690
        %7883 = vst [vmem:[%s245 + $0x88] sm:$0xff] %v7691
        %7884 = vst [vmem:[%s245 + $0x90] sm:$0xff] %v7692
        %7885 = vst [vmem:[%s245 + $0x98] sm:$0xff] %v7693
        %7886 = vst [vmem:[%s245 + $0xa0] sm:$0xff] %v7694
        %7887 = vst [vmem:[%s245 + $0xa8] sm:$0xff] %v7695
        %7888 = vst [vmem:[%s245 + $0xb0] sm:$0xff] %v7696
        %7889 = vst [vmem:[%s245 + $0xb8] sm:$0xff] %v7697
        %7890 = vst [vmem:[%s245 + $0xc0] sm:$0xff] %v7698
        %7891 = vst [vmem:[%s245 + $0xc8] sm:$0xff] %v7699
        %7892 = vst [vmem:[%s245 + $0xd0] sm:$0xff] %v7700
        %7893 = vst [vmem:[%s245 + $0xd8] sm:$0xff] %v7701
        %7894 = vst [vmem:[%s245 + $0xe0] sm:$0xff] %v7702
        %7895 = vst [vmem:[%s245 + $0xe8] sm:$0xff] %v7703
        %7896 = vst [vmem:[%s245 + $0xf0] sm:$0xff] %v7704
        %7897 = vst [vmem:[%s245 + $0xf8] sm:$0xff] %v7705
        %7898 = vst [vmem:[%s245 + $0x100] sm:$0xff] %v7706
        %7899 = vst [vmem:[%s245 + $0x108] sm:$0xff] %v7707
        %7900 = vst [vmem:[%s245 + $0x110] sm:$0xff] %v7708
        %7901 = vst [vmem:[%s245 + $0x118] sm:$0xff] %v7709
        %7902 = vst [vmem:[%s245 + $0x120] sm:$0xff] %v7710
        %7903 = vst [vmem:[%s245 + $0x128] sm:$0xff] %v7711
        %7904 = vst [vmem:[%s245 + $0x130] sm:$0xff] %v7712
        %7905 = vst [vmem:[%s245 + $0x138] sm:$0xff] %v7713
        %7906 = vst [vmem:[%s245 + $0x140] sm:$0xff] %v7714
        %7907 = vst [vmem:[%s245 + $0x148] sm:$0xff] %v7715
        %7908 = vst [vmem:[%s245 + $0x150] sm:$0xff] %v7716
        %7909 = vst [vmem:[%s245 + $0x158] sm:$0xff] %v7717
        %7910 = vst [vmem:[%s245 + $0x160] sm:$0xff] %v7718
        %7911 = vst [vmem:[%s245 + $0x168] sm:$0xff] %v7719
        %7912 = vst [vmem:[%s245 + $0x170] sm:$0xff] %v7720
        %7913 = vst [vmem:[%s245 + $0x178] sm:$0xff] %v7721
        %7914 = vst [vmem:[%s245 + $0x180] sm:$0xff] %v7722
        %7915 = vst [vmem:[%s245 + $0x188] sm:$0xff] %v7723
        %7916 = vst [vmem:[%s245 + $0x190] sm:$0xff] %v7724
        %7917 = vst [vmem:[%s245 + $0x198] sm:$0xff] %v7725
        %7918 = vst [vmem:[%s245 + $0x1a0] sm:$0xff] %v7726
        %7919 = vst [vmem:[%s245 + $0x1a8] sm:$0xff] %v7727
        %7920 = vst [vmem:[%s245 + $0x1b0] sm:$0xff] %v7728
        %7921 = vst [vmem:[%s245 + $0x1b8] sm:$0xff] %v7729
        %7922 = vst [vmem:[%s245 + $0x1c0] sm:$0xff] %v7730
        %7923 = vst [vmem:[%s245 + $0x1c8] sm:$0xff] %v7731
        %7924 = vst [vmem:[%s245 + $0x1d0] sm:$0xff] %v7732
        %7925 = vst [vmem:[%s245 + $0x1d8] sm:$0xff] %v7733
        %7926 = vst [vmem:[%s245 + $0x1e0] sm:$0xff] %v7734
        %7927 = vst [vmem:[%s245 + $0x1e8] sm:$0xff] %v7735
        %7928 = vst [vmem:[%s245 + $0x1f0] sm:$0xff] %v7736
        %7929 = vst [vmem:[%s245 + $0x1f8] sm:$0xff] %v7737
        %7930 = vst [vmem:[%s245 + $0x200] sm:$0xff] %v7738
        %7931 = vst [vmem:[%s245 + $0x208] sm:$0xff] %v7739
        %7932 = vst [vmem:[%s245 + $0x210] sm:$0xff] %v7740
        %7933 = vst [vmem:[%s245 + $0x218] sm:$0xff] %v7741
        %7934 = vst [vmem:[%s245 + $0x220] sm:$0xff] %v7742
        %7935 = vst [vmem:[%s245 + $0x228] sm:$0xff] %v7743
        %7936 = vst [vmem:[%s245 + $0x230] sm:$0xff] %v7744
        %7937 = vst [vmem:[%s245 + $0x238] sm:$0xff] %v7745
        %7938 = vst [vmem:[%s245 + $0x240] sm:$0xff] %v7746
        %7939 = vst [vmem:[%s245 + $0x248] sm:$0xff] %v7747
        %7940 = vst [vmem:[%s245 + $0x250] sm:$0xff] %v7748
        %7941 = vst [vmem:[%s245 + $0x258] sm:$0xff] %v7749
        %7942 = vst [vmem:[%s245 + $0x260] sm:$0xff] %v7750
        %7943 = vst [vmem:[%s245 + $0x268] sm:$0xff] %v7751
        %7944 = vst [vmem:[%s245 + $0x270] sm:$0xff] %v7752
        %7945 = vst [vmem:[%s245 + $0x278] sm:$0xff] %v7753
        %7946 = vst [vmem:[%s245 + $0x280] sm:$0xff] %v7754
        %7947 = vst [vmem:[%s245 + $0x288] sm:$0xff] %v7755
        %7948 = vst [vmem:[%s245 + $0x290] sm:$0xff] %v7756
        %7949 = vst [vmem:[%s245 + $0x298] sm:$0xff] %v7757
        %7950 = vst [vmem:[%s245 + $0x2a0] sm:$0xff] %v7758
        %7951 = vst [vmem:[%s245 + $0x2a8] sm:$0xff] %v7759
        %7952 = vst [vmem:[%s245 + $0x2b0] sm:$0xff] %v7760
        %7953 = vst [vmem:[%s245 + $0x2b8] sm:$0xff] %v7761
        %7954 = vst [vmem:[%s245 + $0x2c0] sm:$0xff] %v7762
        %7955 = vst [vmem:[%s245 + $0x2c8] sm:$0xff] %v7763
        %7956 = vst [vmem:[%s245 + $0x2d0] sm:$0xff] %v7764
        %7957 = vst [vmem:[%s245 + $0x2d8] sm:$0xff] %v7765
        %7958 = vst [vmem:[%s245 + $0x2e0] sm:$0xff] %v7766
        %7959 = vst [vmem:[%s245 + $0x2e8] sm:$0xff] %v7767
        %7960 = vst [vmem:[%s245 + $0x2f0] sm:$0xff] %v7768
        %7961 = vst [vmem:[%s245 + $0x2f8] sm:$0xff] %v7769
        %7962 = vst [vmem:[%s245 + $0x300] sm:$0xff] %v7770
        %7963 = vst [vmem:[%s245 + $0x308] sm:$0xff] %v7771
        %7964 = vst [vmem:[%s245 + $0x310] sm:$0xff] %v7772
        %7965 = vst [vmem:[%s245 + $0x318] sm:$0xff] %v7773
        %7966 = vst [vmem:[%s245 + $0x320] sm:$0xff] %v7774
        %7967 = vst [vmem:[%s245 + $0x328] sm:$0xff] %v7775
        %7968 = vst [vmem:[%s245 + $0x330] sm:$0xff] %v7776
        %7969 = vst [vmem:[%s245 + $0x338] sm:$0xff] %v7777
        %7970 = vst [vmem:[%s245 + $0x340] sm:$0xff] %v7778
        %7971 = vst [vmem:[%s245 + $0x348] sm:$0xff] %v7779
        %7972 = vst [vmem:[%s245 + $0x350] sm:$0xff] %v7780
        %7973 = vst [vmem:[%s245 + $0x358] sm:$0xff] %v7781
        %7974 = vst [vmem:[%s245 + $0x360] sm:$0xff] %v7782
        %7975 = vst [vmem:[%s245 + $0x368] sm:$0xff] %v7783
        %7976 = vst [vmem:[%s245 + $0x370] sm:$0xff] %v7784
        %7977 = vst [vmem:[%s245 + $0x378] sm:$0xff] %v7785
        %7978 = vst [vmem:[%s245 + $0x380] sm:$0xff] %v7786
        %7979 = vst [vmem:[%s245 + $0x388] sm:$0xff] %v7787
        %7980 = vst [vmem:[%s245 + $0x390] sm:$0xff] %v7788
        %7981 = vst [vmem:[%s245 + $0x398] sm:$0xff] %v7789
        %7982 = vst [vmem:[%s245 + $0x3a0] sm:$0xff] %v7790
        %7983 = vst [vmem:[%s245 + $0x3a8] sm:$0xff] %v7791
        %7984 = vst [vmem:[%s245 + $0x3b0] sm:$0xff] %v7792
        %7985 = vst [vmem:[%s245 + $0x3b8] sm:$0xff] %v7793
        %7986 = vst [vmem:[%s245 + $0x3c0] sm:$0xff] %v7794
        %7987 = vst [vmem:[%s245 + $0x3c8] sm:$0xff] %v7795
        %7988 = vst [vmem:[%s245 + $0x3d0] sm:$0xff] %v7796
        %7989 = vst [vmem:[%s245 + $0x3d8] sm:$0xff] %v7797
        %7990 = vst [vmem:[%s245 + $0x3e0] sm:$0xff] %v7798
        %7991 = vst [vmem:[%s245 + $0x3e8] sm:$0xff] %v7799
        %7992 = vst [vmem:[%s245 + $0x3f0] sm:$0xff] %v7800
        %7993 = vst [vmem:[%s245 + $0x3f8] sm:$0xff] %v7801
        %7994 = vst [vmem:[%s245 + $0x400] sm:$0xff] %v7802
        %7995 = vst [vmem:[%s245 + $0x408] sm:$0xff] %v7803
        %7996 = vst [vmem:[%s245 + $0x410] sm:$0xff] %v7804
        %7997 = vst [vmem:[%s245 + $0x418] sm:$0xff] %v7805
        %7998 = vst [vmem:[%s245 + $0x420] sm:$0xff] %v7806
        %7999 = vst [vmem:[%s245 + $0x428] sm:$0xff] %v7807
        %8000 = vst [vmem:[%s245 + $0x430] sm:$0xff] %v7808
        %8001 = vst [vmem:[%s245 + $0x438] sm:$0xff] %v7809
        %8002 = vst [vmem:[%s245 + $0x440] sm:$0xff] %v7810
        %8003 = vst [vmem:[%s245 + $0x448] sm:$0xff] %v7811
        %8004 = vst [vmem:[%s245 + $0x450] sm:$0xff] %v7812
        %8005 = vst [vmem:[%s245 + $0x458] sm:$0xff] %v7813
        %8006 = vst [vmem:[%s245 + $0x460] sm:$0xff] %v7814
        %8007 = vst [vmem:[%s245 + $0x468] sm:$0xff] %v7815
        %8008 = vst [vmem:[%s245 + $0x470] sm:$0xff] %v7816
        %8009 = vst [vmem:[%s245 + $0x478] sm:$0xff] %v7817
        %8010 = vst [vmem:[%s245 + $0x480] sm:$0xff] %v7818
        %8011 = vst [vmem:[%s245 + $0x488] sm:$0xff] %v7819
        %8012 = vst [vmem:[%s245 + $0x490] sm:$0xff] %v7820
        %8013 = vst [vmem:[%s245 + $0x498] sm:$0xff] %v7821
        %8014 = vst [vmem:[%s245 + $0x4a0] sm:$0xff] %v7822
        %8015 = vst [vmem:[%s245 + $0x4a8] sm:$0xff] %v7823
        %8016 = vst [vmem:[%s245 + $0x4b0] sm:$0xff] %v7824
        %8017 = vst [vmem:[%s245 + $0x4b8] sm:$0xff] %v7825
        %8018 = vst [vmem:[%s245 + $0x4c0] sm:$0xff] %v7826
        %8019 = vst [vmem:[%s245 + $0x4c8] sm:$0xff] %v7827
        %8020 = vst [vmem:[%s245 + $0x4d0] sm:$0xff] %v7828
        %8021 = vst [vmem:[%s245 + $0x4d8] sm:$0xff] %v7829
        %8022 = vst [vmem:[%s245 + $0x4e0] sm:$0xff] %v7830
        %8023 = vst [vmem:[%s245 + $0x4e8] sm:$0xff] %v7831
        %8024 = vst [vmem:[%s245 + $0x4f0] sm:$0xff] %v7832
        %8025 = vst [vmem:[%s245 + $0x4f8] sm:$0xff] %v7833
        %8026 = vst [vmem:[%s245 + $0x500] sm:$0xff] %v7834
        %8027 = vst [vmem:[%s245 + $0x508] sm:$0xff] %v7835
        %8028 = vst [vmem:[%s245 + $0x510] sm:$0xff] %v7836
        %8029 = vst [vmem:[%s245 + $0x518] sm:$0xff] %v7837
        %8030 = vst [vmem:[%s245 + $0x520] sm:$0xff] %v7838
        %8031 = vst [vmem:[%s245 + $0x528] sm:$0xff] %v7839
        %8032 = vst [vmem:[%s245 + $0x530] sm:$0xff] %v7840
        %8033 = vst [vmem:[%s245 + $0x538] sm:$0xff] %v7841
        %8034 = vst [vmem:[%s245 + $0x540] sm:$0xff] %v7842
        %8035 = vst [vmem:[%s245 + $0x548] sm:$0xff] %v7843
        %8036 = vst [vmem:[%s245 + $0x550] sm:$0xff] %v7844
        %8037 = vst [vmem:[%s245 + $0x558] sm:$0xff] %v7845
        %8038 = vst [vmem:[%s245 + $0x560] sm:$0xff] %v7846
        %8039 = vst [vmem:[%s245 + $0x568] sm:$0xff] %v7847
        %8040 = vst [vmem:[%s245 + $0x570] sm:$0xff] %v7848
        %8041 = vst [vmem:[%s245 + $0x578] sm:$0xff] %v7849
        %8042 = vst [vmem:[%s245 + $0x580] sm:$0xff] %v7850
        %8043 = vst [vmem:[%s245 + $0x588] sm:$0xff] %v7851
        %8044 = vst [vmem:[%s245 + $0x590] sm:$0xff] %v7852
        %8045 = vst [vmem:[%s245 + $0x598] sm:$0xff] %v7853
        %8046 = vst [vmem:[%s245 + $0x5a0] sm:$0xff] %v7854
        %8047 = vst [vmem:[%s245 + $0x5a8] sm:$0xff] %v7855
        %8048 = vst [vmem:[%s245 + $0x5b0] sm:$0xff] %v7856
        %8049 = vst [vmem:[%s245 + $0x5b8] sm:$0xff] %v7857
        %8050 = vst [vmem:[%s245 + $0x5c0] sm:$0xff] %v7858
        %8051 = vst [vmem:[%s245 + $0x5c8] sm:$0xff] %v7859
        %8052 = vst [vmem:[%s245 + $0x5d0] sm:$0xff] %v7860
        %8053 = vst [vmem:[%s245 + $0x5d8] sm:$0xff] %v7861
        %8054 = vst [vmem:[%s245 + $0x5e0] sm:$0xff] %v7862
        %8055 = vst [vmem:[%s245 + $0x5e8] sm:$0xff] %v7863
        %8056 = vst [vmem:[%s245 + $0x5f0] sm:$0xff] %v7864
        %8057 = vst [vmem:[%s245 + $0x5f8] sm:$0xff] %v7865
        %s8058 = sand.u32 %s140, 1
        %s8059 = scalar_lea.sflag [#allocation4], %s8058
        %s8060 = sand.u32 %s140, 1
        %s8061 = smul.addr %s8060, 1536
        %s8062 = scalar_lea.vmem [#allocation5], %s8061
        // Predicated region
        $region45: #{tpu_custom_call.1} parent=39 // pred_check
          %p8063 = pneg %p150
        $region46: #{tpu_custom_call.1} parent=39 // pred_check_branch
          %8065 = sbr.rel (%p8063) target = $region48
        $region47: #{tpu_custom_call.1} parent=39 // pred_region
          %s8066 = smul.u32 64, %s22
          %8068 = vsyncadd %s8059, 0
          %s8069 = smul.addr %s8066, 3
          %s8070 = smul.addr %s8069, 8
          %s8071 = scalar_lea.hbm %s5, %s8070
          %s8072 = sshll.u32 %s8062, 4
          %s8073 = int_to_ptr.vmem [resolvable:$true] %s8072
          %s8074 = sshll.u32 %s8071, 4
          %s8075 = int_to_ptr.hbm [resolvable:$true] %s8074
          %8080 = dma.vmem_to_hbm [thread:$0]  %s8073, 24576, %s8075, %s8059, 384, 384, 24
        $region48: #{tpu_custom_call.1} parent=39 // pred_fallthru
          _
      $region40: #{tpu_custom_call.1} parent=5 // pred_fallthru
        _
      %p8081 = scmp.le.s32.totalorder 2, %s17
      // Predicated region
      $region49: #{tpu_custom_call.1} parent=5 // pred_check
        %p8082 = pneg %p8081
      $region50: #{tpu_custom_call.1} parent=5 // pred_check_branch
        %8084 = sbr.rel (%p8082) target = $region52
      $region51: #{tpu_custom_call.1} parent=5 // pred_region
        %s8085 = ssub.s32 %s17, 2
        // Predicated region
        $region53: #{tpu_custom_call.1} parent=51 // pred_check
          %p8086 = pneg %p156
        $region54: #{tpu_custom_call.1} parent=51 // pred_check_branch
          %8088 = sbr.rel (%p8086) target = $region56
        $region55: #{tpu_custom_call.1} parent=51 // pred_region
          %s8089 = sand.u32 %s141, 1
          %s8090 = scalar_lea.sflag [#allocation4], %s8089
          %s8091 = sand.u32 %s141, 1
          %s8092 = smul.addr %s8091, 1536
          %s8093 = scalar_lea.vmem [#allocation5], %s8092
          %8095 = dma.done %s8090, 24576
        $region56: #{tpu_custom_call.1} parent=51 // pred_fallthru
          _
      $region52: #{tpu_custom_call.1} parent=5 // pred_fallthru
        _
    $region6: #{tpu_custom_call.1} parent=1 // loop_footer
      %s21 = sadd.s32 1, %s17
    $region7: #{tpu_custom_call.1} parent=1 // loop_footer_branch
      %16 = sbr.rel target = $region3
    $region8: #{tpu_custom_call.1} parent=1 // loop_exit
      _
    %8096 = vsyncpa [#allocation3], 1
    %s8097 = scalar_lea.sflag [#allocation3], 1
    %8098 = vsyncpa %s8097, 1
    %8099 = vsyncpa [#allocation4], 1
    %s8100 = scalar_lea.sflag [#allocation4], 1
    %8101 = vsyncpa %s8100, 1

</llo_original>
